<compile_context>
chip_gen: v7x
topology: tpu7x:2x2x1
jax: 0.10.0
libtpu: 0.0.40
codegen_flags: <defaults>
</compile_context>

<pallas_src>
import functools
import math

import jax
import jax.numpy as jnp
import numpy as np
from jax.experimental import pallas as pl
from jax.experimental.pallas import tpu as pltpu

POOL = 2           # upsamples[0]
NUM_CONVS = 3      # convBlock default
HIGHEST = jax.lax.Precision.HIGHEST


# ----------------------------------------------------------------------------
# In-kernel helpers (trace-time Python, fully unrolled)
# ----------------------------------------------------------------------------
def _max_pool_2d(res, H, W, C, pool):
    """MaxPool2d(pool): (H*W, C) NHWC-flattened -> (Ho*Wo, C). Pure VPU."""
    Ho, Wo = H // pool, W // pool
    t = jnp.max(res.reshape(H * Wo, pool, C), axis=1)      # pool along W
    t = jnp.max(t.reshape(Ho, pool, Wo, C), axis=1)        # pool along H
    return t.reshape(Ho * Wo, C)


def _conv_block_pool(x, H, W, wup_ref, bup_ref, wc_ref, bc_ref, wt_ref,
                     pad_ref, *, pool):
    """convBlock + MaxPool2d(pool) for one sample.

    x       : (H*W, Cin) f32 activations (NHWC-flattened)
    wup_ref : (Cin, Cout) bf16                 1x1 "upchannels" weight
    bup_ref : (1, Cout) f32                    its bias
    wc_ref  : (num_convs, 9*Cout, Cout) bf16   im2col-reshaped 3x3 weights
    bc_ref  : (num_convs, 1, Cout) f32         3x3 conv biases
    wt_ref  : (1, 1) f32                       scalar residual gate
    pad_ref : VMEM scratch (H+2, W+2, Cout) f32  zero-padded conv input
    """
    Cout = wup_ref.shape[1]
    HW = H * W

    # 1x1 conv (upchannels) as a single bf16 matmul with f32 accumulation.
    xu = jnp.dot(x.astype(jnp.bfloat16), wup_ref[...],
                 preferred_element_type=jnp.float32) + bup_ref[...]

    # Zero the padded scratch ONCE per block: the 1-px border stays zero and
    # the interior is fully overwritten by every conv layer.
    pad_ref[...] = jnp.zeros(pad_ref.shape, pad_ref.dtype)

    cur = xu
    num_convs = wc_ref.shape[0]
    for l in range(num_convs):
        pad_ref[1:H + 1, 1:W + 1, :] = cur.reshape(H, W, Cout)
        # im2col: 9 shifted SAME-padding windows -> ONE (HW, 9C) @ (9C, C)
        # matmul instead of 9 tiny per-tap matmuls.
        patches = [pad_ref[kh:kh + H, kw:kw + W, :].reshape(HW, Cout)
                   for kh in range(3) for kw in range(3)]
        col = jnp.concatenate(patches, axis=-1).astype(jnp.bfloat16)
        cur = jnp.dot(col, wc_ref[l], preferred_element_type=jnp.float32)
        cur = jnp.maximum(cur + bc_ref[l], 0.0)            # conv bias + ReLU

    res = cur + wt_ref[...] * xu                           # out + weight * x1
    return _max_pool_2d(res, H, W, Cout, pool), H // pool, W // pool


# ----------------------------------------------------------------------------
# Fused Pallas kernel: whole Encoder forward for one batch element
# ----------------------------------------------------------------------------
def encoder_kernel(*refs, num_blocks, pool):
    x_ref = refs[0]
    wfc_ref = refs[1 + 5 * num_blocks]       # (flat_dim, 2*zsize) bf16
    bfc_ref = refs[2 + 5 * num_blocks]       # (1, 2*zsize) f32
    z_ref = refs[3 + 5 * num_blocks]         # out (1, 1, 2*zsize) f32
    *pad_refs, flat_ref = refs[4 + 5 * num_blocks:]

    _, H, W, Cin = x_ref.shape
    cur = x_ref[...].reshape(H * W, Cin)
    for b in range(num_blocks):
        wup, bup, wc, bc, wt = refs[1 + 5 * b: 6 + 5 * b]
        cur, H, W = _conv_block_pool(cur, H, W, wup, bup, wc, bc, wt,
                                     pad_refs[b], pool=pool)

    # Flatten in NHWC order (the fc weight rows were permuted on the host so
    # this matches torch's NCHW x.view(N, -1)) and apply the final Linear.
    Sf, Cf = cur.shape
    flat_ref[...] = cur
    flat = jnp.concatenate([flat_ref[s:s + 1, :] for s in range(Sf)], axis=-1)
    z = jnp.dot(flat.astype(jnp.bfloat16), wfc_ref[...],
                preferred_element_type=jnp.float32) + bfc_ref[...]
    z_ref[...] = z.reshape(z_ref.shape)


# ----------------------------------------------------------------------------
# Wrapper (single pallas_call for the whole forward)
# ----------------------------------------------------------------------------
def _zero_map(ndim):
    return lambda n: (0,) * ndim


def encoder_forward(x_nchw, params, *, zsize, pool=POOL):
    N, Cin, H, W = x_nchw.shape
    # NCHW -> NHWC (a free reshape because the Encoder input has 1 channel).
    x = (x_nchw.reshape(N, H, W, Cin) if Cin == 1
         else jnp.transpose(x_nchw, (0, 2, 3, 1)))

    blocks = params["blocks"]
    num_blocks = len(blocks)

    flat_in = [x]
    in_specs = [pl.BlockSpec((1, H, W, Cin), lambda n: (n, 0, 0, 0))]
    scratch = []
    h, w = H, W
    for (wup, bup, wc, bc, wt) in blocks:
        C = wup.shape[1]
        # Host-side prep (free): im2col weight layout + bf16 cast.
        args = (wup.astype(jnp.bfloat16), bup,
                wc.reshape(wc.shape[0], 9 * C, C).astype(jnp.bfloat16), bc, wt)
        for a in args:
            flat_in.append(a)
            in_specs.append(pl.BlockSpec(a.shape, _zero_map(a.ndim)))
        scratch.append(pltpu.VMEM((h + 2, w + 2, C), jnp.float32))
        h //= pool
        w //= pool

    # Permute fc rows once so the kernel's NHWC flatten matches torch's
    # x.view(N, -1) on NCHW (zero runtime cost inside the kernel).
    Cf = blocks[-1][0].shape[1]
    perm = np.transpose(np.arange(Cf * h * w).reshape(Cf, h, w),
                        (1, 2, 0)).reshape(-1)
    w_fc = params["w_fc"][perm, :].astype(jnp.bfloat16)
    b_fc = params["b_fc"]
    flat_in += [w_fc, b_fc]
    in_specs += [pl.BlockSpec(w_fc.shape, _zero_map(2)),
                 pl.BlockSpec(b_fc.shape, _zero_map(2))]
    scratch.append(pltpu.VMEM((h * w, Cf), jnp.float32))   # final flatten buf

    z2 = w_fc.shape[1]
    kernel = functools.partial(encoder_kernel, num_blocks=num_blocks,
                               pool=pool)
    z = pl.pallas_call(
        kernel,
        out_shape=jax.ShapeDtypeStruct((N, 1, z2), jnp.float32),
        grid=(N,),
        in_specs=in_specs,
        out_specs=pl.BlockSpec((1, 1, z2), lambda n: (n, 0, 0)),
        scratch_shapes=scratch,
        compiler_params=pltpu.CompilerParams(
            dimension_semantics=("parallel",)),   # batch across TCs on v7x
    )(*flat_in)
    z = z.reshape(N, z2)
    return z[:, :zsize], z[:, zsize:]


# ----------------------------------------------------------------------------
# Pure-JAX reference (fp32, NCHW flatten with the original fc weight)
# ----------------------------------------------------------------------------
def encoder_forward_ref(x_nchw, params, *, zsize, pool=POOL):
    x = jnp.transpose(x_nchw, (0, 2, 3, 1))
    for (wup, bup, wc, bc, wt) in params["blocks"]:
        xu = jnp.einsum("nhwc,cd->nhwd", x, wup,
                        precision=HIGHEST) + bup.reshape(1, 1, 1, -1)
        cur = xu
        for l in range(wc.shape[0]):
            cur = jax.lax.conv_general_dilated(
                cur, wc[l], window_strides=(1, 1), padding="SAME",
                dimension_numbers=("NHWC", "HWIO", "NHWC"),
                precision=HIGHEST)
            cur = jnp.maximum(cur + bc[l].reshape(1, 1, 1, -1), 0.0)
        res = cur + wt[0, 0] * xu
        x = jax.lax.reduce_window(res, jnp.float32(-jnp.inf), jax.lax.max,
                                  (1, pool, pool, 1), (1, pool, pool, 1),
                                  "VALID")
    flat = jnp.transpose(x, (0, 3, 1, 2)).reshape(x.shape[0], -1)
    zcomb = flat @ params["w_fc"] + params["b_fc"]
    return zcomb[:, :zsize], zcomb[:, zsize:]


# ----------------------------------------------------------------------------
# Deterministic synthetic parameters (shapes follow the module's __init__)
# ----------------------------------------------------------------------------
def init_params(key, channel_sizes, features, timesteps, pool, zsize,
                num_convs=NUM_CONVS):
    keys = iter(jax.random.split(key, 5 * len(channel_sizes) + 2))
    blocks = []
    in_ch = 1
    for out_ch in channel_sizes:
        wup = 0.3 * jax.random.normal(next(keys), (in_ch, out_ch), jnp.float32)
        bup = 0.1 * jax.random.normal(next(keys), (1, out_ch), jnp.float32)
        wc = (0.3 / math.sqrt(9 * out_ch)) * jax.random.normal(
            next(keys), (num_convs, 3, 3, out_ch, out_ch), jnp.float32)
        bc = 0.1 * jax.random.normal(next(keys), (num_convs, 1, out_ch),
                                     jnp.float32)
        wt = jax.random.normal(next(keys), (1, 1), jnp.float32)
        blocks.append((wup, bup, wc, bc, wt))
        in_ch = out_ch
    h_final = features // pool ** 3
    w_final = timesteps // pool ** 3
    flat_dim = h_final * w_final * channel_sizes[-1]
    w_fc = 0.1 * jax.random.normal(next(keys), (flat_dim, 2 * zsize),
                                   jnp.float32)
    b_fc = 0.1 * jax.random.normal(next(keys), (1, 2 * zsize), jnp.float32)
    return {"blocks": blocks, "w_fc": w_fc, "b_fc": b_fc}


# ----------------------------------------------------------------------------
if __name__ == "__main__":
    N = 2
    FEATURES, TIMESTEPS = 16, 16          # input_size
    CHANNEL_SIZES = [4, 8, 8]
    UPSAMPLES = [2, 2, 2]                 # module only uses upsamples[0]
    ZSIZE = 8

    root = jax.random.PRNGKey(0)
    kx, kp = jax.random.split(root)
    x = jax.random.normal(kx, (N, 1, FEATURES, TIMESTEPS), jnp.float32)  # NCHW
    params = init_params(kp, CHANNEL_SIZES, FEATURES, TIMESTEPS,
                         UPSAMPLES[0], ZSIZE)

    fwd = jax.jit(functools.partial(encoder_forward, zsize=ZSIZE,
                                    pool=UPSAMPLES[0]))
    mu, logvar = jax.block_until_ready(fwd(x, params))
    assert mu.shape == (N, ZSIZE) and logvar.shape == (N, ZSIZE)

    mu_ref, logvar_ref = encoder_forward_ref(x, params, zsize=ZSIZE,
                                             pool=UPSAMPLES[0])
    np.testing.assert_allclose(np.asarray(mu), np.asarray(mu_ref),
                               rtol=3e-2, atol=3e-2)
    np.testing.assert_allclose(np.asarray(logvar), np.asarray(logvar_ref),
                               rtol=3e-2, atol=3e-2)
    print("KERNEL_OK")
</pallas_src>

<mosaic_0001>
module attributes {stable_mosaic.version = 11 : i64} {
  func.func @encoder_kernel(%arg0: i32, %arg1: memref<1x16x16x1xf32, #tpu.memory_space<vmem>>, %arg2: memref<1x4xbf16, #tpu.memory_space<vmem>>, %arg3: memref<1x4xf32, #tpu.memory_space<vmem>>, %arg4: memref<3x36x4xbf16, #tpu.memory_space<vmem>>, %arg5: memref<3x1x4xf32, #tpu.memory_space<vmem>>, %arg6: memref<1x1xf32, #tpu.memory_space<vmem>>, %arg7: memref<4x8xbf16, #tpu.memory_space<vmem>>, %arg8: memref<1x8xf32, #tpu.memory_space<vmem>>, %arg9: memref<3x72x8xbf16, #tpu.memory_space<vmem>>, %arg10: memref<3x1x8xf32, #tpu.memory_space<vmem>>, %arg11: memref<1x1xf32, #tpu.memory_space<vmem>>, %arg12: memref<8x8xbf16, #tpu.memory_space<vmem>>, %arg13: memref<1x8xf32, #tpu.memory_space<vmem>>, %arg14: memref<3x72x8xbf16, #tpu.memory_space<vmem>>, %arg15: memref<3x1x8xf32, #tpu.memory_space<vmem>>, %arg16: memref<1x1xf32, #tpu.memory_space<vmem>>, %arg17: memref<32x16xbf16, #tpu.memory_space<vmem>>, %arg18: memref<1x16xf32, #tpu.memory_space<vmem>>, %arg19: memref<1x1x16xf32, #tpu.memory_space<vmem>>, %arg20: memref<18x18x4xf32, #tpu.memory_space<vmem>>, %arg21: memref<10x10x8xf32, #tpu.memory_space<vmem>>, %arg22: memref<6x6x8xf32, #tpu.memory_space<vmem>>, %arg23: memref<4x8xf32, #tpu.memory_space<vmem>>) attributes {dimension_semantics = [#tpu.dimension_semantics<parallel>], iteration_bounds = array<i64: 2>, scalar_prefetch = 0 : i64, scratch_operands = 4 : i64, tpu.core_type = #tpu.core_type<tc>, window_params = [{transform_indices = @transform_0, window_bounds = array<i64: 1, 16, 16, 1>}, {pipeline_mode = #tpu.pipeline_mode<synchronous>, transform_indices = @transform_1, window_bounds = array<i64: 1, 4>}, {pipeline_mode = #tpu.pipeline_mode<synchronous>, transform_indices = @transform_2, window_bounds = array<i64: 1, 4>}, {pipeline_mode = #tpu.pipeline_mode<synchronous>, transform_indices = @transform_3, window_bounds = array<i64: 3, 36, 4>}, {pipeline_mode = #tpu.pipeline_mode<synchronous>, transform_indices = @transform_4, window_bounds = array<i64: 3, 1, 4>}, {pipeline_mode = #tpu.pipeline_mode<synchronous>, transform_indices = @transform_5, window_bounds = array<i64: 1, 1>}, {pipeline_mode = #tpu.pipeline_mode<synchronous>, transform_indices = @transform_6, window_bounds = array<i64: 4, 8>}, {pipeline_mode = #tpu.pipeline_mode<synchronous>, transform_indices = @transform_7, window_bounds = array<i64: 1, 8>}, {pipeline_mode = #tpu.pipeline_mode<synchronous>, transform_indices = @transform_8, window_bounds = array<i64: 3, 72, 8>}, {pipeline_mode = #tpu.pipeline_mode<synchronous>, transform_indices = @transform_9, window_bounds = array<i64: 3, 1, 8>}, {pipeline_mode = #tpu.pipeline_mode<synchronous>, transform_indices = @transform_10, window_bounds = array<i64: 1, 1>}, {pipeline_mode = #tpu.pipeline_mode<synchronous>, transform_indices = @transform_11, window_bounds = array<i64: 8, 8>}, {pipeline_mode = #tpu.pipeline_mode<synchronous>, transform_indices = @transform_12, window_bounds = array<i64: 1, 8>}, {pipeline_mode = #tpu.pipeline_mode<synchronous>, transform_indices = @transform_13, window_bounds = array<i64: 3, 72, 8>}, {pipeline_mode = #tpu.pipeline_mode<synchronous>, transform_indices = @transform_14, window_bounds = array<i64: 3, 1, 8>}, {pipeline_mode = #tpu.pipeline_mode<synchronous>, transform_indices = @transform_15, window_bounds = array<i64: 1, 1>}, {pipeline_mode = #tpu.pipeline_mode<synchronous>, transform_indices = @transform_16, window_bounds = array<i64: 32, 16>}, {pipeline_mode = #tpu.pipeline_mode<synchronous>, transform_indices = @transform_17, window_bounds = array<i64: 1, 16>}, {transform_indices = @transform_18, window_bounds = array<i64: 1, 1, 16>}]} {
    %c0 = arith.constant 0 : index
    %c0_0 = arith.constant 0 : index
    %c0_1 = arith.constant 0 : index
    %c0_2 = arith.constant 0 : index
    %0 = vector.load %arg1[%c0, %c0_0, %c0_1, %c0_2] : memref<1x16x16x1xf32, #tpu.memory_space<vmem>>, vector<1x16x16x1xf32>
    %1 = vector.shape_cast %0 : vector<1x16x16x1xf32> to vector<256x1xf32>
    %2 = arith.truncf %1 : vector<256x1xf32> to vector<256x1xbf16>
    %c0_3 = arith.constant 0 : index
    %c0_4 = arith.constant 0 : index
    %3 = vector.load %arg2[%c0_3, %c0_4] : memref<1x4xbf16, #tpu.memory_space<vmem>>, vector<1x4xbf16>
    %cst = arith.constant dense<0.000000e+00> : vector<256x4xf32>
    %4 = tpu.matmul %2, %3, %cst {dimension_numbers = #tpu.dot_dimension_numbers<[1], [0], [0], [1], [0, 0, 1, 1], [], []>} : vector<256x1xbf16>, vector<1x4xbf16>, vector<256x4xf32> -> vector<256x4xf32>
    %c0_5 = arith.constant 0 : index
    %c0_6 = arith.constant 0 : index
    %5 = vector.load %arg3[%c0_5, %c0_6] : memref<1x4xf32, #tpu.memory_space<vmem>>, vector<1x4xf32>
    %6 = vector.broadcast %5 : vector<1x4xf32> to vector<256x4xf32>
    %7 = arith.addf %4, %6 : vector<256x4xf32>
    %cst_7 = arith.constant 0.000000e+00 : f32
    %8 = vector.broadcast %cst_7 : f32 to vector<18x18x4xf32>
    %c0_8 = arith.constant 0 : index
    %c0_9 = arith.constant 0 : index
    %c0_10 = arith.constant 0 : index
    %9 = vector.load %arg20[%c0_8, %c0_9, %c0_10] : memref<18x18x4xf32, #tpu.memory_space<vmem>>, vector<18x18x4xf32>
    tpu.vector_store %arg20[%c0_8, %c0_9, %c0_10], %8 {strides = array<i32>} : memref<18x18x4xf32, #tpu.memory_space<vmem>>, vector<18x18x4xf32>,
    %10 = vector.shape_cast %7 : vector<256x4xf32> to vector<16x16x4xf32>
    %c1 = arith.constant 1 : index
    %c1_11 = arith.constant 1 : index
    %c0_12 = arith.constant 0 : index
    %11 = vector.load %arg20[%c1, %c1_11, %c0_12] : memref<18x18x4xf32, #tpu.memory_space<vmem>>, vector<16x16x4xf32>
    tpu.vector_store %arg20[%c1, %c1_11, %c0_12], %10 {strides = array<i32>} : memref<18x18x4xf32, #tpu.memory_space<vmem>>, vector<16x16x4xf32>,
    %c0_13 = arith.constant 0 : index
    %c0_14 = arith.constant 0 : index
    %c0_15 = arith.constant 0 : index
    %12 = vector.load %arg20[%c0_13, %c0_14, %c0_15] : memref<18x18x4xf32, #tpu.memory_space<vmem>>, vector<16x16x4xf32>
    %13 = vector.shape_cast %12 : vector<16x16x4xf32> to vector<256x4xf32>
    %c0_16 = arith.constant 0 : index
    %c1_17 = arith.constant 1 : index
    %c0_18 = arith.constant 0 : index
    %14 = vector.load %arg20[%c0_16, %c1_17, %c0_18] : memref<18x18x4xf32, #tpu.memory_space<vmem>>, vector<16x16x4xf32>
    %15 = vector.shape_cast %14 : vector<16x16x4xf32> to vector<256x4xf32>
    %c0_19 = arith.constant 0 : index
    %c2 = arith.constant 2 : index
    %c0_20 = arith.constant 0 : index
    %16 = vector.load %arg20[%c0_19, %c2, %c0_20] : memref<18x18x4xf32, #tpu.memory_space<vmem>>, vector<16x16x4xf32>
    %17 = vector.shape_cast %16 : vector<16x16x4xf32> to vector<256x4xf32>
    %c1_21 = arith.constant 1 : index
    %c0_22 = arith.constant 0 : index
    %c0_23 = arith.constant 0 : index
    %18 = vector.load %arg20[%c1_21, %c0_22, %c0_23] : memref<18x18x4xf32, #tpu.memory_space<vmem>>, vector<16x16x4xf32>
    %19 = vector.shape_cast %18 : vector<16x16x4xf32> to vector<256x4xf32>
    %c1_24 = arith.constant 1 : index
    %c1_25 = arith.constant 1 : index
    %c0_26 = arith.constant 0 : index
    %20 = vector.load %arg20[%c1_24, %c1_25, %c0_26] : memref<18x18x4xf32, #tpu.memory_space<vmem>>, vector<16x16x4xf32>
    %21 = vector.shape_cast %20 : vector<16x16x4xf32> to vector<256x4xf32>
    %c1_27 = arith.constant 1 : index
    %c2_28 = arith.constant 2 : index
    %c0_29 = arith.constant 0 : index
    %22 = vector.load %arg20[%c1_27, %c2_28, %c0_29] : memref<18x18x4xf32, #tpu.memory_space<vmem>>, vector<16x16x4xf32>
    %23 = vector.shape_cast %22 : vector<16x16x4xf32> to vector<256x4xf32>
    %c2_30 = arith.constant 2 : index
    %c0_31 = arith.constant 0 : index
    %c0_32 = arith.constant 0 : index
    %24 = vector.load %arg20[%c2_30, %c0_31, %c0_32] : memref<18x18x4xf32, #tpu.memory_space<vmem>>, vector<16x16x4xf32>
    %25 = vector.shape_cast %24 : vector<16x16x4xf32> to vector<256x4xf32>
    %c2_33 = arith.constant 2 : index
    %c1_34 = arith.constant 1 : index
    %c0_35 = arith.constant 0 : index
    %26 = vector.load %arg20[%c2_33, %c1_34, %c0_35] : memref<18x18x4xf32, #tpu.memory_space<vmem>>, vector<16x16x4xf32>
    %27 = vector.shape_cast %26 : vector<16x16x4xf32> to vector<256x4xf32>
    %c2_36 = arith.constant 2 : index
    %c2_37 = arith.constant 2 : index
    %c0_38 = arith.constant 0 : index
    %28 = vector.load %arg20[%c2_36, %c2_37, %c0_38] : memref<18x18x4xf32, #tpu.memory_space<vmem>>, vector<16x16x4xf32>
    %29 = vector.shape_cast %28 : vector<16x16x4xf32> to vector<256x4xf32>
    %30 = tpu.concatenate %13, %15, %17, %19, %21, %23, %25, %27, %29 in 1 : vector<256x4xf32>, vector<256x4xf32>, vector<256x4xf32>, vector<256x4xf32>, vector<256x4xf32>, vector<256x4xf32>, vector<256x4xf32>, vector<256x4xf32>, vector<256x4xf32> -> vector<256x36xf32>
    %31 = arith.truncf %30 : vector<256x36xf32> to vector<256x36xbf16>
    %c0_39 = arith.constant 0 : index
    %c0_40 = arith.constant 0 : index
    %c0_41 = arith.constant 0 : index
    %32 = vector.load %arg4[%c0_39, %c0_40, %c0_41] : memref<3x36x4xbf16, #tpu.memory_space<vmem>>, vector<1x36x4xbf16>
    %33 = vector.shape_cast %32 : vector<1x36x4xbf16> to vector<36x4xbf16>
    %cst_42 = arith.constant dense<0.000000e+00> : vector<256x4xf32>
    %34 = tpu.matmul %31, %33, %cst_42 {dimension_numbers = #tpu.dot_dimension_numbers<[1], [0], [0], [1], [0, 0, 1, 1], [], []>} : vector<256x36xbf16>, vector<36x4xbf16>, vector<256x4xf32> -> vector<256x4xf32>
    %c0_43 = arith.constant 0 : index
    %c0_44 = arith.constant 0 : index
    %c0_45 = arith.constant 0 : index
    %35 = vector.load %arg5[%c0_43, %c0_44, %c0_45] : memref<3x1x4xf32, #tpu.memory_space<vmem>>, vector<1x1x4xf32>
    %36 = vector.shape_cast %35 : vector<1x1x4xf32> to vector<1x4xf32>
    %37 = vector.broadcast %36 : vector<1x4xf32> to vector<256x4xf32>
    %38 = arith.addf %34, %37 : vector<256x4xf32>
    %cst_46 = arith.constant 0.000000e+00 : f32
    %39 = vector.broadcast %cst_46 : f32 to vector<256x4xf32>
    %40 = arith.maximumf %38, %39 : vector<256x4xf32>
    %41 = vector.shape_cast %40 : vector<256x4xf32> to vector<16x16x4xf32>
    %c1_47 = arith.constant 1 : index
    %c1_48 = arith.constant 1 : index
    %c0_49 = arith.constant 0 : index
    %42 = vector.load %arg20[%c1_47, %c1_48, %c0_49] : memref<18x18x4xf32, #tpu.memory_space<vmem>>, vector<16x16x4xf32>
    tpu.vector_store %arg20[%c1_47, %c1_48, %c0_49], %41 {strides = array<i32>} : memref<18x18x4xf32, #tpu.memory_space<vmem>>, vector<16x16x4xf32>,
    %c0_50 = arith.constant 0 : index
    %c0_51 = arith.constant 0 : index
    %c0_52 = arith.constant 0 : index
    %43 = vector.load %arg20[%c0_50, %c0_51, %c0_52] : memref<18x18x4xf32, #tpu.memory_space<vmem>>, vector<16x16x4xf32>
    %44 = vector.shape_cast %43 : vector<16x16x4xf32> to vector<256x4xf32>
    %c0_53 = arith.constant 0 : index
    %c1_54 = arith.constant 1 : index
    %c0_55 = arith.constant 0 : index
    %45 = vector.load %arg20[%c0_53, %c1_54, %c0_55] : memref<18x18x4xf32, #tpu.memory_space<vmem>>, vector<16x16x4xf32>
    %46 = vector.shape_cast %45 : vector<16x16x4xf32> to vector<256x4xf32>
    %c0_56 = arith.constant 0 : index
    %c2_57 = arith.constant 2 : index
    %c0_58 = arith.constant 0 : index
    %47 = vector.load %arg20[%c0_56, %c2_57, %c0_58] : memref<18x18x4xf32, #tpu.memory_space<vmem>>, vector<16x16x4xf32>
    %48 = vector.shape_cast %47 : vector<16x16x4xf32> to vector<256x4xf32>
    %c1_59 = arith.constant 1 : index
    %c0_60 = arith.constant 0 : index
    %c0_61 = arith.constant 0 : index
    %49 = vector.load %arg20[%c1_59, %c0_60, %c0_61] : memref<18x18x4xf32, #tpu.memory_space<vmem>>, vector<16x16x4xf32>
    %50 = vector.shape_cast %49 : vector<16x16x4xf32> to vector<256x4xf32>
    %c1_62 = arith.constant 1 : index
    %c1_63 = arith.constant 1 : index
    %c0_64 = arith.constant 0 : index
    %51 = vector.load %arg20[%c1_62, %c1_63, %c0_64] : memref<18x18x4xf32, #tpu.memory_space<vmem>>, vector<16x16x4xf32>
    %52 = vector.shape_cast %51 : vector<16x16x4xf32> to vector<256x4xf32>
    %c1_65 = arith.constant 1 : index
    %c2_66 = arith.constant 2 : index
    %c0_67 = arith.constant 0 : index
    %53 = vector.load %arg20[%c1_65, %c2_66, %c0_67] : memref<18x18x4xf32, #tpu.memory_space<vmem>>, vector<16x16x4xf32>
    %54 = vector.shape_cast %53 : vector<16x16x4xf32> to vector<256x4xf32>
    %c2_68 = arith.constant 2 : index
    %c0_69 = arith.constant 0 : index
    %c0_70 = arith.constant 0 : index
    %55 = vector.load %arg20[%c2_68, %c0_69, %c0_70] : memref<18x18x4xf32, #tpu.memory_space<vmem>>, vector<16x16x4xf32>
    %56 = vector.shape_cast %55 : vector<16x16x4xf32> to vector<256x4xf32>
    %c2_71 = arith.constant 2 : index
    %c1_72 = arith.constant 1 : index
    %c0_73 = arith.constant 0 : index
    %57 = vector.load %arg20[%c2_71, %c1_72, %c0_73] : memref<18x18x4xf32, #tpu.memory_space<vmem>>, vector<16x16x4xf32>
    %58 = vector.shape_cast %57 : vector<16x16x4xf32> to vector<256x4xf32>
    %c2_74 = arith.constant 2 : index
    %c2_75 = arith.constant 2 : index
    %c0_76 = arith.constant 0 : index
    %59 = vector.load %arg20[%c2_74, %c2_75, %c0_76] : memref<18x18x4xf32, #tpu.memory_space<vmem>>, vector<16x16x4xf32>
    %60 = vector.shape_cast %59 : vector<16x16x4xf32> to vector<256x4xf32>
    %61 = tpu.concatenate %44, %46, %48, %50, %52, %54, %56, %58, %60 in 1 : vector<256x4xf32>, vector<256x4xf32>, vector<256x4xf32>, vector<256x4xf32>, vector<256x4xf32>, vector<256x4xf32>, vector<256x4xf32>, vector<256x4xf32>, vector<256x4xf32> -> vector<256x36xf32>
    %62 = arith.truncf %61 : vector<256x36xf32> to vector<256x36xbf16>
    %c1_77 = arith.constant 1 : index
    %c0_78 = arith.constant 0 : index
    %c0_79 = arith.constant 0 : index
    %63 = vector.load %arg4[%c1_77, %c0_78, %c0_79] : memref<3x36x4xbf16, #tpu.memory_space<vmem>>, vector<1x36x4xbf16>
    %64 = vector.shape_cast %63 : vector<1x36x4xbf16> to vector<36x4xbf16>
    %cst_80 = arith.constant dense<0.000000e+00> : vector<256x4xf32>
    %65 = tpu.matmul %62, %64, %cst_80 {dimension_numbers = #tpu.dot_dimension_numbers<[1], [0], [0], [1], [0, 0, 1, 1], [], []>} : vector<256x36xbf16>, vector<36x4xbf16>, vector<256x4xf32> -> vector<256x4xf32>
    %c1_81 = arith.constant 1 : index
    %c0_82 = arith.constant 0 : index
    %c0_83 = arith.constant 0 : index
    %66 = vector.load %arg5[%c1_81, %c0_82, %c0_83] : memref<3x1x4xf32, #tpu.memory_space<vmem>>, vector<1x1x4xf32>
    %67 = vector.shape_cast %66 : vector<1x1x4xf32> to vector<1x4xf32>
    %68 = vector.broadcast %67 : vector<1x4xf32> to vector<256x4xf32>
    %69 = arith.addf %65, %68 : vector<256x4xf32>
    %cst_84 = arith.constant 0.000000e+00 : f32
    %70 = vector.broadcast %cst_84 : f32 to vector<256x4xf32>
    %71 = arith.maximumf %69, %70 : vector<256x4xf32>
    %72 = vector.shape_cast %71 : vector<256x4xf32> to vector<16x16x4xf32>
    %c1_85 = arith.constant 1 : index
    %c1_86 = arith.constant 1 : index
    %c0_87 = arith.constant 0 : index
    %73 = vector.load %arg20[%c1_85, %c1_86, %c0_87] : memref<18x18x4xf32, #tpu.memory_space<vmem>>, vector<16x16x4xf32>
    tpu.vector_store %arg20[%c1_85, %c1_86, %c0_87], %72 {strides = array<i32>} : memref<18x18x4xf32, #tpu.memory_space<vmem>>, vector<16x16x4xf32>,
    %c0_88 = arith.constant 0 : index
    %c0_89 = arith.constant 0 : index
    %c0_90 = arith.constant 0 : index
    %74 = vector.load %arg20[%c0_88, %c0_89, %c0_90] : memref<18x18x4xf32, #tpu.memory_space<vmem>>, vector<16x16x4xf32>
    %75 = vector.shape_cast %74 : vector<16x16x4xf32> to vector<256x4xf32>
    %c0_91 = arith.constant 0 : index
    %c1_92 = arith.constant 1 : index
    %c0_93 = arith.constant 0 : index
    %76 = vector.load %arg20[%c0_91, %c1_92, %c0_93] : memref<18x18x4xf32, #tpu.memory_space<vmem>>, vector<16x16x4xf32>
    %77 = vector.shape_cast %76 : vector<16x16x4xf32> to vector<256x4xf32>
    %c0_94 = arith.constant 0 : index
    %c2_95 = arith.constant 2 : index
    %c0_96 = arith.constant 0 : index
    %78 = vector.load %arg20[%c0_94, %c2_95, %c0_96] : memref<18x18x4xf32, #tpu.memory_space<vmem>>, vector<16x16x4xf32>
    %79 = vector.shape_cast %78 : vector<16x16x4xf32> to vector<256x4xf32>
    %c1_97 = arith.constant 1 : index
    %c0_98 = arith.constant 0 : index
    %c0_99 = arith.constant 0 : index
    %80 = vector.load %arg20[%c1_97, %c0_98, %c0_99] : memref<18x18x4xf32, #tpu.memory_space<vmem>>, vector<16x16x4xf32>
    %81 = vector.shape_cast %80 : vector<16x16x4xf32> to vector<256x4xf32>
    %c1_100 = arith.constant 1 : index
    %c1_101 = arith.constant 1 : index
    %c0_102 = arith.constant 0 : index
    %82 = vector.load %arg20[%c1_100, %c1_101, %c0_102] : memref<18x18x4xf32, #tpu.memory_space<vmem>>, vector<16x16x4xf32>
    %83 = vector.shape_cast %82 : vector<16x16x4xf32> to vector<256x4xf32>
    %c1_103 = arith.constant 1 : index
    %c2_104 = arith.constant 2 : index
    %c0_105 = arith.constant 0 : index
    %84 = vector.load %arg20[%c1_103, %c2_104, %c0_105] : memref<18x18x4xf32, #tpu.memory_space<vmem>>, vector<16x16x4xf32>
    %85 = vector.shape_cast %84 : vector<16x16x4xf32> to vector<256x4xf32>
    %c2_106 = arith.constant 2 : index
    %c0_107 = arith.constant 0 : index
    %c0_108 = arith.constant 0 : index
    %86 = vector.load %arg20[%c2_106, %c0_107, %c0_108] : memref<18x18x4xf32, #tpu.memory_space<vmem>>, vector<16x16x4xf32>
    %87 = vector.shape_cast %86 : vector<16x16x4xf32> to vector<256x4xf32>
    %c2_109 = arith.constant 2 : index
    %c1_110 = arith.constant 1 : index
    %c0_111 = arith.constant 0 : index
    %88 = vector.load %arg20[%c2_109, %c1_110, %c0_111] : memref<18x18x4xf32, #tpu.memory_space<vmem>>, vector<16x16x4xf32>
    %89 = vector.shape_cast %88 : vector<16x16x4xf32> to vector<256x4xf32>
    %c2_112 = arith.constant 2 : index
    %c2_113 = arith.constant 2 : index
    %c0_114 = arith.constant 0 : index
    %90 = vector.load %arg20[%c2_112, %c2_113, %c0_114] : memref<18x18x4xf32, #tpu.memory_space<vmem>>, vector<16x16x4xf32>
    %91 = vector.shape_cast %90 : vector<16x16x4xf32> to vector<256x4xf32>
    %92 = tpu.concatenate %75, %77, %79, %81, %83, %85, %87, %89, %91 in 1 : vector<256x4xf32>, vector<256x4xf32>, vector<256x4xf32>, vector<256x4xf32>, vector<256x4xf32>, vector<256x4xf32>, vector<256x4xf32>, vector<256x4xf32>, vector<256x4xf32> -> vector<256x36xf32>
    %93 = arith.truncf %92 : vector<256x36xf32> to vector<256x36xbf16>
    %c2_115 = arith.constant 2 : index
    %c0_116 = arith.constant 0 : index
    %c0_117 = arith.constant 0 : index
    %94 = vector.load %arg4[%c2_115, %c0_116, %c0_117] : memref<3x36x4xbf16, #tpu.memory_space<vmem>>, vector<1x36x4xbf16>
    %95 = vector.shape_cast %94 : vector<1x36x4xbf16> to vector<36x4xbf16>
    %cst_118 = arith.constant dense<0.000000e+00> : vector<256x4xf32>
    %96 = tpu.matmul %93, %95, %cst_118 {dimension_numbers = #tpu.dot_dimension_numbers<[1], [0], [0], [1], [0, 0, 1, 1], [], []>} : vector<256x36xbf16>, vector<36x4xbf16>, vector<256x4xf32> -> vector<256x4xf32>
    %c2_119 = arith.constant 2 : index
    %c0_120 = arith.constant 0 : index
    %c0_121 = arith.constant 0 : index
    %97 = vector.load %arg5[%c2_119, %c0_120, %c0_121] : memref<3x1x4xf32, #tpu.memory_space<vmem>>, vector<1x1x4xf32>
    %98 = vector.shape_cast %97 : vector<1x1x4xf32> to vector<1x4xf32>
    %99 = vector.broadcast %98 : vector<1x4xf32> to vector<256x4xf32>
    %100 = arith.addf %96, %99 : vector<256x4xf32>
    %cst_122 = arith.constant 0.000000e+00 : f32
    %101 = vector.broadcast %cst_122 : f32 to vector<256x4xf32>
    %102 = arith.maximumf %100, %101 : vector<256x4xf32>
    %c0_123 = arith.constant 0 : index
    %c0_124 = arith.constant 0 : index
    %103 = vector.load %arg6[%c0_123, %c0_124] : memref<1x1xf32, #tpu.memory_space<vmem>>, vector<1x1xf32>
    %104 = vector.broadcast %103 : vector<1x1xf32> to vector<256x4xf32>
    %105 = arith.mulf %104, %7 : vector<256x4xf32>
    %106 = arith.addf %102, %105 : vector<256x4xf32>
    %107 = vector.shape_cast %106 : vector<256x4xf32> to vector<128x2x4xf32>
    %cst_125 = arith.constant dense<0xFF800000> : vector<128x4xf32>
    %108 = vector.multi_reduction <maximumf>, %107, %cst_125 [1] : vector<128x2x4xf32> to vector<128x4xf32>
    %109 = vector.shape_cast %108 : vector<128x4xf32> to vector<8x2x8x4xf32>
    %cst_126 = arith.constant dense<0xFF800000> : vector<8x8x4xf32>
    %110 = vector.multi_reduction <maximumf>, %109, %cst_126 [1] : vector<8x2x8x4xf32> to vector<8x8x4xf32>
    %111 = vector.shape_cast %110 : vector<8x8x4xf32> to vector<64x4xf32>
    %112 = arith.truncf %111 : vector<64x4xf32> to vector<64x4xbf16>
    %c0_127 = arith.constant 0 : index
    %c0_128 = arith.constant 0 : index
    %113 = vector.load %arg7[%c0_127, %c0_128] : memref<4x8xbf16, #tpu.memory_space<vmem>>, vector<4x8xbf16>
    %cst_129 = arith.constant dense<0.000000e+00> : vector<64x8xf32>
    %114 = tpu.matmul %112, %113, %cst_129 {dimension_numbers = #tpu.dot_dimension_numbers<[1], [0], [0], [1], [0, 0, 1, 1], [], []>} : vector<64x4xbf16>, vector<4x8xbf16>, vector<64x8xf32> -> vector<64x8xf32>
    %c0_130 = arith.constant 0 : index
    %c0_131 = arith.constant 0 : index
    %115 = vector.load %arg8[%c0_130, %c0_131] : memref<1x8xf32, #tpu.memory_space<vmem>>, vector<1x8xf32>
    %116 = vector.broadcast %115 : vector<1x8xf32> to vector<64x8xf32>
    %117 = arith.addf %114, %116 : vector<64x8xf32>
    %cst_132 = arith.constant 0.000000e+00 : f32
    %118 = vector.broadcast %cst_132 : f32 to vector<10x10x8xf32>
    %c0_133 = arith.constant 0 : index
    %c0_134 = arith.constant 0 : index
    %c0_135 = arith.constant 0 : index
    %119 = vector.load %arg21[%c0_133, %c0_134, %c0_135] : memref<10x10x8xf32, #tpu.memory_space<vmem>>, vector<10x10x8xf32>
    tpu.vector_store %arg21[%c0_133, %c0_134, %c0_135], %118 {strides = array<i32>} : memref<10x10x8xf32, #tpu.memory_space<vmem>>, vector<10x10x8xf32>,
    %120 = vector.shape_cast %117 : vector<64x8xf32> to vector<8x8x8xf32>
    %c1_136 = arith.constant 1 : index
    %c1_137 = arith.constant 1 : index
    %c0_138 = arith.constant 0 : index
    %121 = vector.load %arg21[%c1_136, %c1_137, %c0_138] : memref<10x10x8xf32, #tpu.memory_space<vmem>>, vector<8x8x8xf32>
    tpu.vector_store %arg21[%c1_136, %c1_137, %c0_138], %120 {strides = array<i32>} : memref<10x10x8xf32, #tpu.memory_space<vmem>>, vector<8x8x8xf32>,
    %c0_139 = arith.constant 0 : index
    %c0_140 = arith.constant 0 : index
    %c0_141 = arith.constant 0 : index
    %122 = vector.load %arg21[%c0_139, %c0_140, %c0_141] : memref<10x10x8xf32, #tpu.memory_space<vmem>>, vector<8x8x8xf32>
    %123 = vector.shape_cast %122 : vector<8x8x8xf32> to vector<64x8xf32>
    %c0_142 = arith.constant 0 : index
    %c1_143 = arith.constant 1 : index
    %c0_144 = arith.constant 0 : index
    %124 = vector.load %arg21[%c0_142, %c1_143, %c0_144] : memref<10x10x8xf32, #tpu.memory_space<vmem>>, vector<8x8x8xf32>
    %125 = vector.shape_cast %124 : vector<8x8x8xf32> to vector<64x8xf32>
    %c0_145 = arith.constant 0 : index
    %c2_146 = arith.constant 2 : index
    %c0_147 = arith.constant 0 : index
    %126 = vector.load %arg21[%c0_145, %c2_146, %c0_147] : memref<10x10x8xf32, #tpu.memory_space<vmem>>, vector<8x8x8xf32>
    %127 = vector.shape_cast %126 : vector<8x8x8xf32> to vector<64x8xf32>
    %c1_148 = arith.constant 1 : index
    %c0_149 = arith.constant 0 : index
    %c0_150 = arith.constant 0 : index
    %128 = vector.load %arg21[%c1_148, %c0_149, %c0_150] : memref<10x10x8xf32, #tpu.memory_space<vmem>>, vector<8x8x8xf32>
    %129 = vector.shape_cast %128 : vector<8x8x8xf32> to vector<64x8xf32>
    %c1_151 = arith.constant 1 : index
    %c1_152 = arith.constant 1 : index
    %c0_153 = arith.constant 0 : index
    %130 = vector.load %arg21[%c1_151, %c1_152, %c0_153] : memref<10x10x8xf32, #tpu.memory_space<vmem>>, vector<8x8x8xf32>
    %131 = vector.shape_cast %130 : vector<8x8x8xf32> to vector<64x8xf32>
    %c1_154 = arith.constant 1 : index
    %c2_155 = arith.constant 2 : index
    %c0_156 = arith.constant 0 : index
    %132 = vector.load %arg21[%c1_154, %c2_155, %c0_156] : memref<10x10x8xf32, #tpu.memory_space<vmem>>, vector<8x8x8xf32>
    %133 = vector.shape_cast %132 : vector<8x8x8xf32> to vector<64x8xf32>
    %c2_157 = arith.constant 2 : index
    %c0_158 = arith.constant 0 : index
    %c0_159 = arith.constant 0 : index
    %134 = vector.load %arg21[%c2_157, %c0_158, %c0_159] : memref<10x10x8xf32, #tpu.memory_space<vmem>>, vector<8x8x8xf32>
    %135 = vector.shape_cast %134 : vector<8x8x8xf32> to vector<64x8xf32>
    %c2_160 = arith.constant 2 : index
    %c1_161 = arith.constant 1 : index
    %c0_162 = arith.constant 0 : index
    %136 = vector.load %arg21[%c2_160, %c1_161, %c0_162] : memref<10x10x8xf32, #tpu.memory_space<vmem>>, vector<8x8x8xf32>
    %137 = vector.shape_cast %136 : vector<8x8x8xf32> to vector<64x8xf32>
    %c2_163 = arith.constant 2 : index
    %c2_164 = arith.constant 2 : index
    %c0_165 = arith.constant 0 : index
    %138 = vector.load %arg21[%c2_163, %c2_164, %c0_165] : memref<10x10x8xf32, #tpu.memory_space<vmem>>, vector<8x8x8xf32>
    %139 = vector.shape_cast %138 : vector<8x8x8xf32> to vector<64x8xf32>
    %140 = tpu.concatenate %123, %125, %127, %129, %131, %133, %135, %137, %139 in 1 : vector<64x8xf32>, vector<64x8xf32>, vector<64x8xf32>, vector<64x8xf32>, vector<64x8xf32>, vector<64x8xf32>, vector<64x8xf32>, vector<64x8xf32>, vector<64x8xf32> -> vector<64x72xf32>
    %141 = arith.truncf %140 : vector<64x72xf32> to vector<64x72xbf16>
    %c0_166 = arith.constant 0 : index
    %c0_167 = arith.constant 0 : index
    %c0_168 = arith.constant 0 : index
    %142 = vector.load %arg9[%c0_166, %c0_167, %c0_168] : memref<3x72x8xbf16, #tpu.memory_space<vmem>>, vector<1x72x8xbf16>
    %143 = vector.shape_cast %142 : vector<1x72x8xbf16> to vector<72x8xbf16>
    %cst_169 = arith.constant dense<0.000000e+00> : vector<64x8xf32>
    %144 = tpu.matmul %141, %143, %cst_169 {dimension_numbers = #tpu.dot_dimension_numbers<[1], [0], [0], [1], [0, 0, 1, 1], [], []>} : vector<64x72xbf16>, vector<72x8xbf16>, vector<64x8xf32> -> vector<64x8xf32>
    %c0_170 = arith.constant 0 : index
    %c0_171 = arith.constant 0 : index
    %c0_172 = arith.constant 0 : index
    %145 = vector.load %arg10[%c0_170, %c0_171, %c0_172] : memref<3x1x8xf32, #tpu.memory_space<vmem>>, vector<1x1x8xf32>
    %146 = vector.shape_cast %145 : vector<1x1x8xf32> to vector<1x8xf32>
    %147 = vector.broadcast %146 : vector<1x8xf32> to vector<64x8xf32>
    %148 = arith.addf %144, %147 : vector<64x8xf32>
    %cst_173 = arith.constant 0.000000e+00 : f32
    %149 = vector.broadcast %cst_173 : f32 to vector<64x8xf32>
    %150 = arith.maximumf %148, %149 : vector<64x8xf32>
    %151 = vector.shape_cast %150 : vector<64x8xf32> to vector<8x8x8xf32>
    %c1_174 = arith.constant 1 : index
    %c1_175 = arith.constant 1 : index
    %c0_176 = arith.constant 0 : index
    %152 = vector.load %arg21[%c1_174, %c1_175, %c0_176] : memref<10x10x8xf32, #tpu.memory_space<vmem>>, vector<8x8x8xf32>
    tpu.vector_store %arg21[%c1_174, %c1_175, %c0_176], %151 {strides = array<i32>} : memref<10x10x8xf32, #tpu.memory_space<vmem>>, vector<8x8x8xf32>,
    %c0_177 = arith.constant 0 : index
    %c0_178 = arith.constant 0 : index
    %c0_179 = arith.constant 0 : index
    %153 = vector.load %arg21[%c0_177, %c0_178, %c0_179] : memref<10x10x8xf32, #tpu.memory_space<vmem>>, vector<8x8x8xf32>
    %154 = vector.shape_cast %153 : vector<8x8x8xf32> to vector<64x8xf32>
    %c0_180 = arith.constant 0 : index
    %c1_181 = arith.constant 1 : index
    %c0_182 = arith.constant 0 : index
    %155 = vector.load %arg21[%c0_180, %c1_181, %c0_182] : memref<10x10x8xf32, #tpu.memory_space<vmem>>, vector<8x8x8xf32>
    %156 = vector.shape_cast %155 : vector<8x8x8xf32> to vector<64x8xf32>
    %c0_183 = arith.constant 0 : index
    %c2_184 = arith.constant 2 : index
    %c0_185 = arith.constant 0 : index
    %157 = vector.load %arg21[%c0_183, %c2_184, %c0_185] : memref<10x10x8xf32, #tpu.memory_space<vmem>>, vector<8x8x8xf32>
    %158 = vector.shape_cast %157 : vector<8x8x8xf32> to vector<64x8xf32>
    %c1_186 = arith.constant 1 : index
    %c0_187 = arith.constant 0 : index
    %c0_188 = arith.constant 0 : index
    %159 = vector.load %arg21[%c1_186, %c0_187, %c0_188] : memref<10x10x8xf32, #tpu.memory_space<vmem>>, vector<8x8x8xf32>
    %160 = vector.shape_cast %159 : vector<8x8x8xf32> to vector<64x8xf32>
    %c1_189 = arith.constant 1 : index
    %c1_190 = arith.constant 1 : index
    %c0_191 = arith.constant 0 : index
    %161 = vector.load %arg21[%c1_189, %c1_190, %c0_191] : memref<10x10x8xf32, #tpu.memory_space<vmem>>, vector<8x8x8xf32>
    %162 = vector.shape_cast %161 : vector<8x8x8xf32> to vector<64x8xf32>
    %c1_192 = arith.constant 1 : index
    %c2_193 = arith.constant 2 : index
    %c0_194 = arith.constant 0 : index
    %163 = vector.load %arg21[%c1_192, %c2_193, %c0_194] : memref<10x10x8xf32, #tpu.memory_space<vmem>>, vector<8x8x8xf32>
    %164 = vector.shape_cast %163 : vector<8x8x8xf32> to vector<64x8xf32>
    %c2_195 = arith.constant 2 : index
    %c0_196 = arith.constant 0 : index
    %c0_197 = arith.constant 0 : index
    %165 = vector.load %arg21[%c2_195, %c0_196, %c0_197] : memref<10x10x8xf32, #tpu.memory_space<vmem>>, vector<8x8x8xf32>
    %166 = vector.shape_cast %165 : vector<8x8x8xf32> to vector<64x8xf32>
    %c2_198 = arith.constant 2 : index
    %c1_199 = arith.constant 1 : index
    %c0_200 = arith.constant 0 : index
    %167 = vector.load %arg21[%c2_198, %c1_199, %c0_200] : memref<10x10x8xf32, #tpu.memory_space<vmem>>, vector<8x8x8xf32>
    %168 = vector.shape_cast %167 : vector<8x8x8xf32> to vector<64x8xf32>
    %c2_201 = arith.constant 2 : index
    %c2_202 = arith.constant 2 : index
    %c0_203 = arith.constant 0 : index
    %169 = vector.load %arg21[%c2_201, %c2_202, %c0_203] : memref<10x10x8xf32, #tpu.memory_space<vmem>>, vector<8x8x8xf32>
    %170 = vector.shape_cast %169 : vector<8x8x8xf32> to vector<64x8xf32>
    %171 = tpu.concatenate %154, %156, %158, %160, %162, %164, %166, %168, %170 in 1 : vector<64x8xf32>, vector<64x8xf32>, vector<64x8xf32>, vector<64x8xf32>, vector<64x8xf32>, vector<64x8xf32>, vector<64x8xf32>, vector<64x8xf32>, vector<64x8xf32> -> vector<64x72xf32>
    %172 = arith.truncf %171 : vector<64x72xf32> to vector<64x72xbf16>
    %c1_204 = arith.constant 1 : index
    %c0_205 = arith.constant 0 : index
    %c0_206 = arith.constant 0 : index
    %173 = vector.load %arg9[%c1_204, %c0_205, %c0_206] : memref<3x72x8xbf16, #tpu.memory_space<vmem>>, vector<1x72x8xbf16>
    %174 = vector.shape_cast %173 : vector<1x72x8xbf16> to vector<72x8xbf16>
    %cst_207 = arith.constant dense<0.000000e+00> : vector<64x8xf32>
    %175 = tpu.matmul %172, %174, %cst_207 {dimension_numbers = #tpu.dot_dimension_numbers<[1], [0], [0], [1], [0, 0, 1, 1], [], []>} : vector<64x72xbf16>, vector<72x8xbf16>, vector<64x8xf32> -> vector<64x8xf32>
    %c1_208 = arith.constant 1 : index
    %c0_209 = arith.constant 0 : index
    %c0_210 = arith.constant 0 : index
    %176 = vector.load %arg10[%c1_208, %c0_209, %c0_210] : memref<3x1x8xf32, #tpu.memory_space<vmem>>, vector<1x1x8xf32>
    %177 = vector.shape_cast %176 : vector<1x1x8xf32> to vector<1x8xf32>
    %178 = vector.broadcast %177 : vector<1x8xf32> to vector<64x8xf32>
    %179 = arith.addf %175, %178 : vector<64x8xf32>
    %cst_211 = arith.constant 0.000000e+00 : f32
    %180 = vector.broadcast %cst_211 : f32 to vector<64x8xf32>
    %181 = arith.maximumf %179, %180 : vector<64x8xf32>
    %182 = vector.shape_cast %181 : vector<64x8xf32> to vector<8x8x8xf32>
    %c1_212 = arith.constant 1 : index
    %c1_213 = arith.constant 1 : index
    %c0_214 = arith.constant 0 : index
    %183 = vector.load %arg21[%c1_212, %c1_213, %c0_214] : memref<10x10x8xf32, #tpu.memory_space<vmem>>, vector<8x8x8xf32>
    tpu.vector_store %arg21[%c1_212, %c1_213, %c0_214], %182 {strides = array<i32>} : memref<10x10x8xf32, #tpu.memory_space<vmem>>, vector<8x8x8xf32>,
    %c0_215 = arith.constant 0 : index
    %c0_216 = arith.constant 0 : index
    %c0_217 = arith.constant 0 : index
    %184 = vector.load %arg21[%c0_215, %c0_216, %c0_217] : memref<10x10x8xf32, #tpu.memory_space<vmem>>, vector<8x8x8xf32>
    %185 = vector.shape_cast %184 : vector<8x8x8xf32> to vector<64x8xf32>
    %c0_218 = arith.constant 0 : index
    %c1_219 = arith.constant 1 : index
    %c0_220 = arith.constant 0 : index
    %186 = vector.load %arg21[%c0_218, %c1_219, %c0_220] : memref<10x10x8xf32, #tpu.memory_space<vmem>>, vector<8x8x8xf32>
    %187 = vector.shape_cast %186 : vector<8x8x8xf32> to vector<64x8xf32>
    %c0_221 = arith.constant 0 : index
    %c2_222 = arith.constant 2 : index
    %c0_223 = arith.constant 0 : index
    %188 = vector.load %arg21[%c0_221, %c2_222, %c0_223] : memref<10x10x8xf32, #tpu.memory_space<vmem>>, vector<8x8x8xf32>
    %189 = vector.shape_cast %188 : vector<8x8x8xf32> to vector<64x8xf32>
    %c1_224 = arith.constant 1 : index
    %c0_225 = arith.constant 0 : index
    %c0_226 = arith.constant 0 : index
    %190 = vector.load %arg21[%c1_224, %c0_225, %c0_226] : memref<10x10x8xf32, #tpu.memory_space<vmem>>, vector<8x8x8xf32>
    %191 = vector.shape_cast %190 : vector<8x8x8xf32> to vector<64x8xf32>
    %c1_227 = arith.constant 1 : index
    %c1_228 = arith.constant 1 : index
    %c0_229 = arith.constant 0 : index
    %192 = vector.load %arg21[%c1_227, %c1_228, %c0_229] : memref<10x10x8xf32, #tpu.memory_space<vmem>>, vector<8x8x8xf32>
    %193 = vector.shape_cast %192 : vector<8x8x8xf32> to vector<64x8xf32>
    %c1_230 = arith.constant 1 : index
    %c2_231 = arith.constant 2 : index
    %c0_232 = arith.constant 0 : index
    %194 = vector.load %arg21[%c1_230, %c2_231, %c0_232] : memref<10x10x8xf32, #tpu.memory_space<vmem>>, vector<8x8x8xf32>
    %195 = vector.shape_cast %194 : vector<8x8x8xf32> to vector<64x8xf32>
    %c2_233 = arith.constant 2 : index
    %c0_234 = arith.constant 0 : index
    %c0_235 = arith.constant 0 : index
    %196 = vector.load %arg21[%c2_233, %c0_234, %c0_235] : memref<10x10x8xf32, #tpu.memory_space<vmem>>, vector<8x8x8xf32>
    %197 = vector.shape_cast %196 : vector<8x8x8xf32> to vector<64x8xf32>
    %c2_236 = arith.constant 2 : index
    %c1_237 = arith.constant 1 : index
    %c0_238 = arith.constant 0 : index
    %198 = vector.load %arg21[%c2_236, %c1_237, %c0_238] : memref<10x10x8xf32, #tpu.memory_space<vmem>>, vector<8x8x8xf32>
    %199 = vector.shape_cast %198 : vector<8x8x8xf32> to vector<64x8xf32>
    %c2_239 = arith.constant 2 : index
    %c2_240 = arith.constant 2 : index
    %c0_241 = arith.constant 0 : index
    %200 = vector.load %arg21[%c2_239, %c2_240, %c0_241] : memref<10x10x8xf32, #tpu.memory_space<vmem>>, vector<8x8x8xf32>
    %201 = vector.shape_cast %200 : vector<8x8x8xf32> to vector<64x8xf32>
    %202 = tpu.concatenate %185, %187, %189, %191, %193, %195, %197, %199, %201 in 1 : vector<64x8xf32>, vector<64x8xf32>, vector<64x8xf32>, vector<64x8xf32>, vector<64x8xf32>, vector<64x8xf32>, vector<64x8xf32>, vector<64x8xf32>, vector<64x8xf32> -> vector<64x72xf32>
    %203 = arith.truncf %202 : vector<64x72xf32> to vector<64x72xbf16>
    %c2_242 = arith.constant 2 : index
    %c0_243 = arith.constant 0 : index
    %c0_244 = arith.constant 0 : index
    %204 = vector.load %arg9[%c2_242, %c0_243, %c0_244] : memref<3x72x8xbf16, #tpu.memory_space<vmem>>, vector<1x72x8xbf16>
    %205 = vector.shape_cast %204 : vector<1x72x8xbf16> to vector<72x8xbf16>
    %cst_245 = arith.constant dense<0.000000e+00> : vector<64x8xf32>
    %206 = tpu.matmul %203, %205, %cst_245 {dimension_numbers = #tpu.dot_dimension_numbers<[1], [0], [0], [1], [0, 0, 1, 1], [], []>} : vector<64x72xbf16>, vector<72x8xbf16>, vector<64x8xf32> -> vector<64x8xf32>
    %c2_246 = arith.constant 2 : index
    %c0_247 = arith.constant 0 : index
    %c0_248 = arith.constant 0 : index
    %207 = vector.load %arg10[%c2_246, %c0_247, %c0_248] : memref<3x1x8xf32, #tpu.memory_space<vmem>>, vector<1x1x8xf32>
    %208 = vector.shape_cast %207 : vector<1x1x8xf32> to vector<1x8xf32>
    %209 = vector.broadcast %208 : vector<1x8xf32> to vector<64x8xf32>
    %210 = arith.addf %206, %209 : vector<64x8xf32>
    %cst_249 = arith.constant 0.000000e+00 : f32
    %211 = vector.broadcast %cst_249 : f32 to vector<64x8xf32>
    %212 = arith.maximumf %210, %211 : vector<64x8xf32>
    %c0_250 = arith.constant 0 : index
    %c0_251 = arith.constant 0 : index
    %213 = vector.load %arg11[%c0_250, %c0_251] : memref<1x1xf32, #tpu.memory_space<vmem>>, vector<1x1xf32>
    %214 = vector.broadcast %213 : vector<1x1xf32> to vector<64x8xf32>
    %215 = arith.mulf %214, %117 : vector<64x8xf32>
    %216 = arith.addf %212, %215 : vector<64x8xf32>
    %217 = vector.shape_cast %216 : vector<64x8xf32> to vector<32x2x8xf32>
    %cst_252 = arith.constant dense<0xFF800000> : vector<32x8xf32>
    %218 = vector.multi_reduction <maximumf>, %217, %cst_252 [1] : vector<32x2x8xf32> to vector<32x8xf32>
    %219 = vector.shape_cast %218 : vector<32x8xf32> to vector<4x2x4x8xf32>
    %cst_253 = arith.constant dense<0xFF800000> : vector<4x4x8xf32>
    %220 = vector.multi_reduction <maximumf>, %219, %cst_253 [1] : vector<4x2x4x8xf32> to vector<4x4x8xf32>
    %221 = vector.shape_cast %220 : vector<4x4x8xf32> to vector<16x8xf32>
    %222 = arith.truncf %221 : vector<16x8xf32> to vector<16x8xbf16>
    %c0_254 = arith.constant 0 : index
    %c0_255 = arith.constant 0 : index
    %223 = vector.load %arg12[%c0_254, %c0_255] : memref<8x8xbf16, #tpu.memory_space<vmem>>, vector<8x8xbf16>
    %cst_256 = arith.constant dense<0.000000e+00> : vector<16x8xf32>
    %224 = tpu.matmul %222, %223, %cst_256 {dimension_numbers = #tpu.dot_dimension_numbers<[1], [0], [0], [1], [0, 0, 1, 1], [], []>} : vector<16x8xbf16>, vector<8x8xbf16>, vector<16x8xf32> -> vector<16x8xf32>
    %c0_257 = arith.constant 0 : index
    %c0_258 = arith.constant 0 : index
    %225 = vector.load %arg13[%c0_257, %c0_258] : memref<1x8xf32, #tpu.memory_space<vmem>>, vector<1x8xf32>
    %226 = vector.broadcast %225 : vector<1x8xf32> to vector<16x8xf32>
    %227 = arith.addf %224, %226 : vector<16x8xf32>
    %cst_259 = arith.constant 0.000000e+00 : f32
    %228 = vector.broadcast %cst_259 : f32 to vector<6x6x8xf32>
    %c0_260 = arith.constant 0 : index
    %c0_261 = arith.constant 0 : index
    %c0_262 = arith.constant 0 : index
    %229 = vector.load %arg22[%c0_260, %c0_261, %c0_262] : memref<6x6x8xf32, #tpu.memory_space<vmem>>, vector<6x6x8xf32>
    tpu.vector_store %arg22[%c0_260, %c0_261, %c0_262], %228 {strides = array<i32>} : memref<6x6x8xf32, #tpu.memory_space<vmem>>, vector<6x6x8xf32>,
    %230 = vector.shape_cast %227 : vector<16x8xf32> to vector<4x4x8xf32>
    %c1_263 = arith.constant 1 : index
    %c1_264 = arith.constant 1 : index
    %c0_265 = arith.constant 0 : index
    %231 = vector.load %arg22[%c1_263, %c1_264, %c0_265] : memref<6x6x8xf32, #tpu.memory_space<vmem>>, vector<4x4x8xf32>
    tpu.vector_store %arg22[%c1_263, %c1_264, %c0_265], %230 {strides = array<i32>} : memref<6x6x8xf32, #tpu.memory_space<vmem>>, vector<4x4x8xf32>,
    %c0_266 = arith.constant 0 : index
    %c0_267 = arith.constant 0 : index
    %c0_268 = arith.constant 0 : index
    %232 = vector.load %arg22[%c0_266, %c0_267, %c0_268] : memref<6x6x8xf32, #tpu.memory_space<vmem>>, vector<4x4x8xf32>
    %233 = vector.shape_cast %232 : vector<4x4x8xf32> to vector<16x8xf32>
    %c0_269 = arith.constant 0 : index
    %c1_270 = arith.constant 1 : index
    %c0_271 = arith.constant 0 : index
    %234 = vector.load %arg22[%c0_269, %c1_270, %c0_271] : memref<6x6x8xf32, #tpu.memory_space<vmem>>, vector<4x4x8xf32>
    %235 = vector.shape_cast %234 : vector<4x4x8xf32> to vector<16x8xf32>
    %c0_272 = arith.constant 0 : index
    %c2_273 = arith.constant 2 : index
    %c0_274 = arith.constant 0 : index
    %236 = vector.load %arg22[%c0_272, %c2_273, %c0_274] : memref<6x6x8xf32, #tpu.memory_space<vmem>>, vector<4x4x8xf32>
    %237 = vector.shape_cast %236 : vector<4x4x8xf32> to vector<16x8xf32>
    %c1_275 = arith.constant 1 : index
    %c0_276 = arith.constant 0 : index
    %c0_277 = arith.constant 0 : index
    %238 = vector.load %arg22[%c1_275, %c0_276, %c0_277] : memref<6x6x8xf32, #tpu.memory_space<vmem>>, vector<4x4x8xf32>
    %239 = vector.shape_cast %238 : vector<4x4x8xf32> to vector<16x8xf32>
    %c1_278 = arith.constant 1 : index
    %c1_279 = arith.constant 1 : index
    %c0_280 = arith.constant 0 : index
    %240 = vector.load %arg22[%c1_278, %c1_279, %c0_280] : memref<6x6x8xf32, #tpu.memory_space<vmem>>, vector<4x4x8xf32>
    %241 = vector.shape_cast %240 : vector<4x4x8xf32> to vector<16x8xf32>
    %c1_281 = arith.constant 1 : index
    %c2_282 = arith.constant 2 : index
    %c0_283 = arith.constant 0 : index
    %242 = vector.load %arg22[%c1_281, %c2_282, %c0_283] : memref<6x6x8xf32, #tpu.memory_space<vmem>>, vector<4x4x8xf32>
    %243 = vector.shape_cast %242 : vector<4x4x8xf32> to vector<16x8xf32>
    %c2_284 = arith.constant 2 : index
    %c0_285 = arith.constant 0 : index
    %c0_286 = arith.constant 0 : index
    %244 = vector.load %arg22[%c2_284, %c0_285, %c0_286] : memref<6x6x8xf32, #tpu.memory_space<vmem>>, vector<4x4x8xf32>
    %245 = vector.shape_cast %244 : vector<4x4x8xf32> to vector<16x8xf32>
    %c2_287 = arith.constant 2 : index
    %c1_288 = arith.constant 1 : index
    %c0_289 = arith.constant 0 : index
    %246 = vector.load %arg22[%c2_287, %c1_288, %c0_289] : memref<6x6x8xf32, #tpu.memory_space<vmem>>, vector<4x4x8xf32>
    %247 = vector.shape_cast %246 : vector<4x4x8xf32> to vector<16x8xf32>
    %c2_290 = arith.constant 2 : index
    %c2_291 = arith.constant 2 : index
    %c0_292 = arith.constant 0 : index
    %248 = vector.load %arg22[%c2_290, %c2_291, %c0_292] : memref<6x6x8xf32, #tpu.memory_space<vmem>>, vector<4x4x8xf32>
    %249 = vector.shape_cast %248 : vector<4x4x8xf32> to vector<16x8xf32>
    %250 = tpu.concatenate %233, %235, %237, %239, %241, %243, %245, %247, %249 in 1 : vector<16x8xf32>, vector<16x8xf32>, vector<16x8xf32>, vector<16x8xf32>, vector<16x8xf32>, vector<16x8xf32>, vector<16x8xf32>, vector<16x8xf32>, vector<16x8xf32> -> vector<16x72xf32>
    %251 = arith.truncf %250 : vector<16x72xf32> to vector<16x72xbf16>
    %c0_293 = arith.constant 0 : index
    %c0_294 = arith.constant 0 : index
    %c0_295 = arith.constant 0 : index
    %252 = vector.load %arg14[%c0_293, %c0_294, %c0_295] : memref<3x72x8xbf16, #tpu.memory_space<vmem>>, vector<1x72x8xbf16>
    %253 = vector.shape_cast %252 : vector<1x72x8xbf16> to vector<72x8xbf16>
    %cst_296 = arith.constant dense<0.000000e+00> : vector<16x8xf32>
    %254 = tpu.matmul %251, %253, %cst_296 {dimension_numbers = #tpu.dot_dimension_numbers<[1], [0], [0], [1], [0, 0, 1, 1], [], []>} : vector<16x72xbf16>, vector<72x8xbf16>, vector<16x8xf32> -> vector<16x8xf32>
    %c0_297 = arith.constant 0 : index
    %c0_298 = arith.constant 0 : index
    %c0_299 = arith.constant 0 : index
    %255 = vector.load %arg15[%c0_297, %c0_298, %c0_299] : memref<3x1x8xf32, #tpu.memory_space<vmem>>, vector<1x1x8xf32>
    %256 = vector.shape_cast %255 : vector<1x1x8xf32> to vector<1x8xf32>
    %257 = vector.broadcast %256 : vector<1x8xf32> to vector<16x8xf32>
    %258 = arith.addf %254, %257 : vector<16x8xf32>
    %cst_300 = arith.constant 0.000000e+00 : f32
    %259 = vector.broadcast %cst_300 : f32 to vector<16x8xf32>
    %260 = arith.maximumf %258, %259 : vector<16x8xf32>
    %261 = vector.shape_cast %260 : vector<16x8xf32> to vector<4x4x8xf32>
    %c1_301 = arith.constant 1 : index
    %c1_302 = arith.constant 1 : index
    %c0_303 = arith.constant 0 : index
    %262 = vector.load %arg22[%c1_301, %c1_302, %c0_303] : memref<6x6x8xf32, #tpu.memory_space<vmem>>, vector<4x4x8xf32>
    tpu.vector_store %arg22[%c1_301, %c1_302, %c0_303], %261 {strides = array<i32>} : memref<6x6x8xf32, #tpu.memory_space<vmem>>, vector<4x4x8xf32>,
    %c0_304 = arith.constant 0 : index
    %c0_305 = arith.constant 0 : index
    %c0_306 = arith.constant 0 : index
    %263 = vector.load %arg22[%c0_304, %c0_305, %c0_306] : memref<6x6x8xf32, #tpu.memory_space<vmem>>, vector<4x4x8xf32>
    %264 = vector.shape_cast %263 : vector<4x4x8xf32> to vector<16x8xf32>
    %c0_307 = arith.constant 0 : index
    %c1_308 = arith.constant 1 : index
    %c0_309 = arith.constant 0 : index
    %265 = vector.load %arg22[%c0_307, %c1_308, %c0_309] : memref<6x6x8xf32, #tpu.memory_space<vmem>>, vector<4x4x8xf32>
    %266 = vector.shape_cast %265 : vector<4x4x8xf32> to vector<16x8xf32>
    %c0_310 = arith.constant 0 : index
    %c2_311 = arith.constant 2 : index
    %c0_312 = arith.constant 0 : index
    %267 = vector.load %arg22[%c0_310, %c2_311, %c0_312] : memref<6x6x8xf32, #tpu.memory_space<vmem>>, vector<4x4x8xf32>
    %268 = vector.shape_cast %267 : vector<4x4x8xf32> to vector<16x8xf32>
    %c1_313 = arith.constant 1 : index
    %c0_314 = arith.constant 0 : index
    %c0_315 = arith.constant 0 : index
    %269 = vector.load %arg22[%c1_313, %c0_314, %c0_315] : memref<6x6x8xf32, #tpu.memory_space<vmem>>, vector<4x4x8xf32>
    %270 = vector.shape_cast %269 : vector<4x4x8xf32> to vector<16x8xf32>
    %c1_316 = arith.constant 1 : index
    %c1_317 = arith.constant 1 : index
    %c0_318 = arith.constant 0 : index
    %271 = vector.load %arg22[%c1_316, %c1_317, %c0_318] : memref<6x6x8xf32, #tpu.memory_space<vmem>>, vector<4x4x8xf32>
    %272 = vector.shape_cast %271 : vector<4x4x8xf32> to vector<16x8xf32>
    %c1_319 = arith.constant 1 : index
    %c2_320 = arith.constant 2 : index
    %c0_321 = arith.constant 0 : index
    %273 = vector.load %arg22[%c1_319, %c2_320, %c0_321] : memref<6x6x8xf32, #tpu.memory_space<vmem>>, vector<4x4x8xf32>
    %274 = vector.shape_cast %273 : vector<4x4x8xf32> to vector<16x8xf32>
    %c2_322 = arith.constant 2 : index
    %c0_323 = arith.constant 0 : index
    %c0_324 = arith.constant 0 : index
    %275 = vector.load %arg22[%c2_322, %c0_323, %c0_324] : memref<6x6x8xf32, #tpu.memory_space<vmem>>, vector<4x4x8xf32>
    %276 = vector.shape_cast %275 : vector<4x4x8xf32> to vector<16x8xf32>
    %c2_325 = arith.constant 2 : index
    %c1_326 = arith.constant 1 : index
    %c0_327 = arith.constant 0 : index
    %277 = vector.load %arg22[%c2_325, %c1_326, %c0_327] : memref<6x6x8xf32, #tpu.memory_space<vmem>>, vector<4x4x8xf32>
    %278 = vector.shape_cast %277 : vector<4x4x8xf32> to vector<16x8xf32>
    %c2_328 = arith.constant 2 : index
    %c2_329 = arith.constant 2 : index
    %c0_330 = arith.constant 0 : index
    %279 = vector.load %arg22[%c2_328, %c2_329, %c0_330] : memref<6x6x8xf32, #tpu.memory_space<vmem>>, vector<4x4x8xf32>
    %280 = vector.shape_cast %279 : vector<4x4x8xf32> to vector<16x8xf32>
    %281 = tpu.concatenate %264, %266, %268, %270, %272, %274, %276, %278, %280 in 1 : vector<16x8xf32>, vector<16x8xf32>, vector<16x8xf32>, vector<16x8xf32>, vector<16x8xf32>, vector<16x8xf32>, vector<16x8xf32>, vector<16x8xf32>, vector<16x8xf32> -> vector<16x72xf32>
    %282 = arith.truncf %281 : vector<16x72xf32> to vector<16x72xbf16>
    %c1_331 = arith.constant 1 : index
    %c0_332 = arith.constant 0 : index
    %c0_333 = arith.constant 0 : index
    %283 = vector.load %arg14[%c1_331, %c0_332, %c0_333] : memref<3x72x8xbf16, #tpu.memory_space<vmem>>, vector<1x72x8xbf16>
    %284 = vector.shape_cast %283 : vector<1x72x8xbf16> to vector<72x8xbf16>
    %cst_334 = arith.constant dense<0.000000e+00> : vector<16x8xf32>
    %285 = tpu.matmul %282, %284, %cst_334 {dimension_numbers = #tpu.dot_dimension_numbers<[1], [0], [0], [1], [0, 0, 1, 1], [], []>} : vector<16x72xbf16>, vector<72x8xbf16>, vector<16x8xf32> -> vector<16x8xf32>
    %c1_335 = arith.constant 1 : index
    %c0_336 = arith.constant 0 : index
    %c0_337 = arith.constant 0 : index
    %286 = vector.load %arg15[%c1_335, %c0_336, %c0_337] : memref<3x1x8xf32, #tpu.memory_space<vmem>>, vector<1x1x8xf32>
    %287 = vector.shape_cast %286 : vector<1x1x8xf32> to vector<1x8xf32>
    %288 = vector.broadcast %287 : vector<1x8xf32> to vector<16x8xf32>
    %289 = arith.addf %285, %288 : vector<16x8xf32>
    %cst_338 = arith.constant 0.000000e+00 : f32
    %290 = vector.broadcast %cst_338 : f32 to vector<16x8xf32>
    %291 = arith.maximumf %289, %290 : vector<16x8xf32>
    %292 = vector.shape_cast %291 : vector<16x8xf32> to vector<4x4x8xf32>
    %c1_339 = arith.constant 1 : index
    %c1_340 = arith.constant 1 : index
    %c0_341 = arith.constant 0 : index
    %293 = vector.load %arg22[%c1_339, %c1_340, %c0_341] : memref<6x6x8xf32, #tpu.memory_space<vmem>>, vector<4x4x8xf32>
    tpu.vector_store %arg22[%c1_339, %c1_340, %c0_341], %292 {strides = array<i32>} : memref<6x6x8xf32, #tpu.memory_space<vmem>>, vector<4x4x8xf32>,
    %c0_342 = arith.constant 0 : index
    %c0_343 = arith.constant 0 : index
    %c0_344 = arith.constant 0 : index
    %294 = vector.load %arg22[%c0_342, %c0_343, %c0_344] : memref<6x6x8xf32, #tpu.memory_space<vmem>>, vector<4x4x8xf32>
    %295 = vector.shape_cast %294 : vector<4x4x8xf32> to vector<16x8xf32>
    %c0_345 = arith.constant 0 : index
    %c1_346 = arith.constant 1 : index
    %c0_347 = arith.constant 0 : index
    %296 = vector.load %arg22[%c0_345, %c1_346, %c0_347] : memref<6x6x8xf32, #tpu.memory_space<vmem>>, vector<4x4x8xf32>
    %297 = vector.shape_cast %296 : vector<4x4x8xf32> to vector<16x8xf32>
    %c0_348 = arith.constant 0 : index
    %c2_349 = arith.constant 2 : index
    %c0_350 = arith.constant 0 : index
    %298 = vector.load %arg22[%c0_348, %c2_349, %c0_350] : memref<6x6x8xf32, #tpu.memory_space<vmem>>, vector<4x4x8xf32>
    %299 = vector.shape_cast %298 : vector<4x4x8xf32> to vector<16x8xf32>
    %c1_351 = arith.constant 1 : index
    %c0_352 = arith.constant 0 : index
    %c0_353 = arith.constant 0 : index
    %300 = vector.load %arg22[%c1_351, %c0_352, %c0_353] : memref<6x6x8xf32, #tpu.memory_space<vmem>>, vector<4x4x8xf32>
    %301 = vector.shape_cast %300 : vector<4x4x8xf32> to vector<16x8xf32>
    %c1_354 = arith.constant 1 : index
    %c1_355 = arith.constant 1 : index
    %c0_356 = arith.constant 0 : index
    %302 = vector.load %arg22[%c1_354, %c1_355, %c0_356] : memref<6x6x8xf32, #tpu.memory_space<vmem>>, vector<4x4x8xf32>
    %303 = vector.shape_cast %302 : vector<4x4x8xf32> to vector<16x8xf32>
    %c1_357 = arith.constant 1 : index
    %c2_358 = arith.constant 2 : index
    %c0_359 = arith.constant 0 : index
    %304 = vector.load %arg22[%c1_357, %c2_358, %c0_359] : memref<6x6x8xf32, #tpu.memory_space<vmem>>, vector<4x4x8xf32>
    %305 = vector.shape_cast %304 : vector<4x4x8xf32> to vector<16x8xf32>
    %c2_360 = arith.constant 2 : index
    %c0_361 = arith.constant 0 : index
    %c0_362 = arith.constant 0 : index
    %306 = vector.load %arg22[%c2_360, %c0_361, %c0_362] : memref<6x6x8xf32, #tpu.memory_space<vmem>>, vector<4x4x8xf32>
    %307 = vector.shape_cast %306 : vector<4x4x8xf32> to vector<16x8xf32>
    %c2_363 = arith.constant 2 : index
    %c1_364 = arith.constant 1 : index
    %c0_365 = arith.constant 0 : index
    %308 = vector.load %arg22[%c2_363, %c1_364, %c0_365] : memref<6x6x8xf32, #tpu.memory_space<vmem>>, vector<4x4x8xf32>
    %309 = vector.shape_cast %308 : vector<4x4x8xf32> to vector<16x8xf32>
    %c2_366 = arith.constant 2 : index
    %c2_367 = arith.constant 2 : index
    %c0_368 = arith.constant 0 : index
    %310 = vector.load %arg22[%c2_366, %c2_367, %c0_368] : memref<6x6x8xf32, #tpu.memory_space<vmem>>, vector<4x4x8xf32>
    %311 = vector.shape_cast %310 : vector<4x4x8xf32> to vector<16x8xf32>
    %312 = tpu.concatenate %295, %297, %299, %301, %303, %305, %307, %309, %311 in 1 : vector<16x8xf32>, vector<16x8xf32>, vector<16x8xf32>, vector<16x8xf32>, vector<16x8xf32>, vector<16x8xf32>, vector<16x8xf32>, vector<16x8xf32>, vector<16x8xf32> -> vector<16x72xf32>
    %313 = arith.truncf %312 : vector<16x72xf32> to vector<16x72xbf16>
    %c2_369 = arith.constant 2 : index
    %c0_370 = arith.constant 0 : index
    %c0_371 = arith.constant 0 : index
    %314 = vector.load %arg14[%c2_369, %c0_370, %c0_371] : memref<3x72x8xbf16, #tpu.memory_space<vmem>>, vector<1x72x8xbf16>
    %315 = vector.shape_cast %314 : vector<1x72x8xbf16> to vector<72x8xbf16>
    %cst_372 = arith.constant dense<0.000000e+00> : vector<16x8xf32>
    %316 = tpu.matmul %313, %315, %cst_372 {dimension_numbers = #tpu.dot_dimension_numbers<[1], [0], [0], [1], [0, 0, 1, 1], [], []>} : vector<16x72xbf16>, vector<72x8xbf16>, vector<16x8xf32> -> vector<16x8xf32>
    %c2_373 = arith.constant 2 : index
    %c0_374 = arith.constant 0 : index
    %c0_375 = arith.constant 0 : index
    %317 = vector.load %arg15[%c2_373, %c0_374, %c0_375] : memref<3x1x8xf32, #tpu.memory_space<vmem>>, vector<1x1x8xf32>
    %318 = vector.shape_cast %317 : vector<1x1x8xf32> to vector<1x8xf32>
    %319 = vector.broadcast %318 : vector<1x8xf32> to vector<16x8xf32>
    %320 = arith.addf %316, %319 : vector<16x8xf32>
    %cst_376 = arith.constant 0.000000e+00 : f32
    %321 = vector.broadcast %cst_376 : f32 to vector<16x8xf32>
    %322 = arith.maximumf %320, %321 : vector<16x8xf32>
    %c0_377 = arith.constant 0 : index
    %c0_378 = arith.constant 0 : index
    %323 = vector.load %arg16[%c0_377, %c0_378] : memref<1x1xf32, #tpu.memory_space<vmem>>, vector<1x1xf32>
    %324 = vector.broadcast %323 : vector<1x1xf32> to vector<16x8xf32>
    %325 = arith.mulf %324, %227 : vector<16x8xf32>
    %326 = arith.addf %322, %325 : vector<16x8xf32>
    %327 = vector.shape_cast %326 : vector<16x8xf32> to vector<8x2x8xf32>
    %cst_379 = arith.constant dense<0xFF800000> : vector<8x8xf32>
    %328 = vector.multi_reduction <maximumf>, %327, %cst_379 [1] : vector<8x2x8xf32> to vector<8x8xf32>
    %329 = vector.shape_cast %328 : vector<8x8xf32> to vector<2x2x2x8xf32>
    %cst_380 = arith.constant dense<0xFF800000> : vector<2x2x8xf32>
    %330 = vector.multi_reduction <maximumf>, %329, %cst_380 [1] : vector<2x2x2x8xf32> to vector<2x2x8xf32>
    %331 = vector.shape_cast %330 : vector<2x2x8xf32> to vector<4x8xf32>
    %c0_381 = arith.constant 0 : index
    %c0_382 = arith.constant 0 : index
    %332 = vector.load %arg23[%c0_381, %c0_382] : memref<4x8xf32, #tpu.memory_space<vmem>>, vector<4x8xf32>
    tpu.vector_store %arg23[%c0_381, %c0_382], %331 {strides = array<i32>} : memref<4x8xf32, #tpu.memory_space<vmem>>, vector<4x8xf32>,
    %c0_383 = arith.constant 0 : index
    %c0_384 = arith.constant 0 : index
    %333 = vector.load %arg23[%c0_383, %c0_384] : memref<4x8xf32, #tpu.memory_space<vmem>>, vector<1x8xf32>
    %c1_385 = arith.constant 1 : index
    %c0_386 = arith.constant 0 : index
    %334 = vector.load %arg23[%c1_385, %c0_386] : memref<4x8xf32, #tpu.memory_space<vmem>>, vector<1x8xf32>
    %c2_387 = arith.constant 2 : index
    %c0_388 = arith.constant 0 : index
    %335 = vector.load %arg23[%c2_387, %c0_388] : memref<4x8xf32, #tpu.memory_space<vmem>>, vector<1x8xf32>
    %c3 = arith.constant 3 : index
    %c0_389 = arith.constant 0 : index
    %336 = vector.load %arg23[%c3, %c0_389] : memref<4x8xf32, #tpu.memory_space<vmem>>, vector<1x8xf32>
    %337 = tpu.concatenate %333, %334, %335, %336 in 1 : vector<1x8xf32>, vector<1x8xf32>, vector<1x8xf32>, vector<1x8xf32> -> vector<1x32xf32>
    %338 = arith.truncf %337 : vector<1x32xf32> to vector<1x32xbf16>
    %c0_390 = arith.constant 0 : index
    %c0_391 = arith.constant 0 : index
    %339 = vector.load %arg17[%c0_390, %c0_391] : memref<32x16xbf16, #tpu.memory_space<vmem>>, vector<32x16xbf16>
    %cst_392 = arith.constant dense<0.000000e+00> : vector<1x16xf32>
    %340 = tpu.matmul %338, %339, %cst_392 {dimension_numbers = #tpu.dot_dimension_numbers<[1], [0], [0], [1], [0, 0, 1, 1], [], []>} : vector<1x32xbf16>, vector<32x16xbf16>, vector<1x16xf32> -> vector<1x16xf32>
    %c0_393 = arith.constant 0 : index
    %c0_394 = arith.constant 0 : index
    %341 = vector.load %arg18[%c0_393, %c0_394] : memref<1x16xf32, #tpu.memory_space<vmem>>, vector<1x16xf32>
    %342 = arith.addf %340, %341 : vector<1x16xf32>
    %343 = vector.shape_cast %342 : vector<1x16xf32> to vector<1x1x16xf32>
    %c0_395 = arith.constant 0 : index
    %c0_396 = arith.constant 0 : index
    %c0_397 = arith.constant 0 : index
    %344 = vector.load %arg19[%c0_395, %c0_396, %c0_397] : memref<1x1x16xf32, #tpu.memory_space<vmem>>, vector<1x1x16xf32>
    tpu.vector_store %arg19[%c0_395, %c0_396, %c0_397], %343 {strides = array<i32>} : memref<1x1x16xf32, #tpu.memory_space<vmem>>, vector<1x1x16xf32>,
    return
  }
  func.func @transform_0(%arg0: i32) -> (i32, i32, i32, i32) {
    %c0_i32 = arith.constant 0 : i32
    %c0_i32_0 = arith.constant 0 : i32
    %c0_i32_1 = arith.constant 0 : i32
    %c0_i32_2 = arith.constant 0 : i32
    return %arg0, %c0_i32, %c0_i32_0, %c0_i32_1 : i32, i32, i32, i32
  }
  func.func @transform_1(%arg0: i32) -> (i32, i32) {
    %c0_i32 = arith.constant 0 : i32
    %c0_i32_0 = arith.constant 0 : i32
    %c0_i32_1 = arith.constant 0 : i32
    return %c0_i32, %c0_i32_0 : i32, i32
  }
  func.func @transform_2(%arg0: i32) -> (i32, i32) {
    %c0_i32 = arith.constant 0 : i32
    %c0_i32_0 = arith.constant 0 : i32
    %c0_i32_1 = arith.constant 0 : i32
    return %c0_i32, %c0_i32_0 : i32, i32
  }
  func.func @transform_3(%arg0: i32) -> (i32, i32, i32) {
    %c0_i32 = arith.constant 0 : i32
    %c0_i32_0 = arith.constant 0 : i32
    %c0_i32_1 = arith.constant 0 : i32
    %c0_i32_2 = arith.constant 0 : i32
    return %c0_i32, %c0_i32_0, %c0_i32_1 : i32, i32, i32
  }
  func.func @transform_4(%arg0: i32) -> (i32, i32, i32) {
    %c0_i32 = arith.constant 0 : i32
    %c0_i32_0 = arith.constant 0 : i32
    %c0_i32_1 = arith.constant 0 : i32
    %c0_i32_2 = arith.constant 0 : i32
    return %c0_i32, %c0_i32_0, %c0_i32_1 : i32, i32, i32
  }
  func.func @transform_5(%arg0: i32) -> (i32, i32) {
    %c0_i32 = arith.constant 0 : i32
    %c0_i32_0 = arith.constant 0 : i32
    %c0_i32_1 = arith.constant 0 : i32
    return %c0_i32, %c0_i32_0 : i32, i32
  }
  func.func @transform_6(%arg0: i32) -> (i32, i32) {
    %c0_i32 = arith.constant 0 : i32
    %c0_i32_0 = arith.constant 0 : i32
    %c0_i32_1 = arith.constant 0 : i32
    return %c0_i32, %c0_i32_0 : i32, i32
  }
  func.func @transform_7(%arg0: i32) -> (i32, i32) {
    %c0_i32 = arith.constant 0 : i32
    %c0_i32_0 = arith.constant 0 : i32
    %c0_i32_1 = arith.constant 0 : i32
    return %c0_i32, %c0_i32_0 : i32, i32
  }
  func.func @transform_8(%arg0: i32) -> (i32, i32, i32) {
    %c0_i32 = arith.constant 0 : i32
    %c0_i32_0 = arith.constant 0 : i32
    %c0_i32_1 = arith.constant 0 : i32
    %c0_i32_2 = arith.constant 0 : i32
    return %c0_i32, %c0_i32_0, %c0_i32_1 : i32, i32, i32
  }
  func.func @transform_9(%arg0: i32) -> (i32, i32, i32) {
    %c0_i32 = arith.constant 0 : i32
    %c0_i32_0 = arith.constant 0 : i32
    %c0_i32_1 = arith.constant 0 : i32
    %c0_i32_2 = arith.constant 0 : i32
    return %c0_i32, %c0_i32_0, %c0_i32_1 : i32, i32, i32
  }
  func.func @transform_10(%arg0: i32) -> (i32, i32) {
    %c0_i32 = arith.constant 0 : i32
    %c0_i32_0 = arith.constant 0 : i32
    %c0_i32_1 = arith.constant 0 : i32
    return %c0_i32, %c0_i32_0 : i32, i32
  }
  func.func @transform_11(%arg0: i32) -> (i32, i32) {
    %c0_i32 = arith.constant 0 : i32
    %c0_i32_0 = arith.constant 0 : i32
    %c0_i32_1 = arith.constant 0 : i32
    return %c0_i32, %c0_i32_0 : i32, i32
  }
  func.func @transform_12(%arg0: i32) -> (i32, i32) {
    %c0_i32 = arith.constant 0 : i32
    %c0_i32_0 = arith.constant 0 : i32
    %c0_i32_1 = arith.constant 0 : i32
    return %c0_i32, %c0_i32_0 : i32, i32
  }
  func.func @transform_13(%arg0: i32) -> (i32, i32, i32) {
    %c0_i32 = arith.constant 0 : i32
    %c0_i32_0 = arith.constant 0 : i32
    %c0_i32_1 = arith.constant 0 : i32
    %c0_i32_2 = arith.constant 0 : i32
    return %c0_i32, %c0_i32_0, %c0_i32_1 : i32, i32, i32
  }
  func.func @transform_14(%arg0: i32) -> (i32, i32, i32) {
    %c0_i32 = arith.constant 0 : i32
    %c0_i32_0 = arith.constant 0 : i32
    %c0_i32_1 = arith.constant 0 : i32
    %c0_i32_2 = arith.constant 0 : i32
    return %c0_i32, %c0_i32_0, %c0_i32_1 : i32, i32, i32
  }
  func.func @transform_15(%arg0: i32) -> (i32, i32) {
    %c0_i32 = arith.constant 0 : i32
    %c0_i32_0 = arith.constant 0 : i32
    %c0_i32_1 = arith.constant 0 : i32
    return %c0_i32, %c0_i32_0 : i32, i32
  }
  func.func @transform_16(%arg0: i32) -> (i32, i32) {
    %c0_i32 = arith.constant 0 : i32
    %c0_i32_0 = arith.constant 0 : i32
    %c0_i32_1 = arith.constant 0 : i32
    return %c0_i32, %c0_i32_0 : i32, i32
  }
  func.func @transform_17(%arg0: i32) -> (i32, i32) {
    %c0_i32 = arith.constant 0 : i32
    %c0_i32_0 = arith.constant 0 : i32
    %c0_i32_1 = arith.constant 0 : i32
    return %c0_i32, %c0_i32_0 : i32, i32
  }
  func.func @transform_18(%arg0: i32) -> (i32, i32, i32) {
    %c0_i32 = arith.constant 0 : i32
    %c0_i32_0 = arith.constant 0 : i32
    %c0_i32_1 = arith.constant 0 : i32
    return %arg0, %c0_i32, %c0_i32_0 : i32, i32, i32
  }
}

</mosaic_0001>

<llo_original>
// kernel: encoder_forward.1
$region0: #{encoder_forward.1}
  #allocation0 [shape = 'u32[]', space=smem, size = 0x4, offset = 0x4, fixed_abs, tag = 'smem constant byte address 0x4 - core index']
  #allocation1 [shape = 'u32[144,128]{1,0:T(1,128)}', space=vmem, size = 0x12000, scoped, tag = 'internal scratch']
  #allocation2 [shape = 'f32[18,18,4]{2,1,0:T(8,128)}', space=vmem, size = 0x36000, scoped, tag = 'scratch operand']
  #allocation3 [shape = 'f32[10,10,8]{2,1,0:T(8,128)}', space=vmem, size = 0x14000, scoped, tag = 'scratch operand']
  #allocation4 [shape = 'f32[6,6,8]{2,1,0:T(8,128)}', space=vmem, size = 0x6000, scoped, tag = 'scratch operand']
  #allocation5 [shape = 'f32[4,8]{1,0:T(4,128)}', space=vmem, size = 0x800, scoped, tag = 'scratch operand']
  #allocation6 [shape = 'f32[1,1]{1,0:T(1,128)S(1)}', space=vmem, size = 0x200, scoped, tag = 'scoped memory for encoder_forward.1']
  #allocation7 [shape = 'f32[1,1]{1,0:T(1,128)S(1)}', space=vmem, size = 0x200, scoped, tag = 'scoped memory for encoder_forward.1']
  #allocation8 [shape = 'f32[1,1]{1,0:T(1,128)S(1)}', space=vmem, size = 0x200, scoped, tag = 'scoped memory for encoder_forward.1']
  %s0 = inlined_call_operand.vmem [shape: f32[2,16,16,1], index: 0, kind: input, shape index: {}]
  %s1 = inlined_call_operand.vmem [shape: bf16[1,4], index: 1, kind: input, shape index: {}]
  %s2 = inlined_call_operand.vmem [shape: f32[1,4], index: 2, kind: input, shape index: {}]
  %s3 = inlined_call_operand.vmem [shape: bf16[3,36,4], index: 3, kind: input, shape index: {}]
  %s4 = inlined_call_operand.vmem [shape: f32[3,1,4], index: 4, kind: input, shape index: {}]
  %s5 = inlined_call_operand.<no memory space> [shape: f32[1,1], index: 5, kind: input, shape index: {}]
  %s6 = inlined_call_operand.vmem [shape: bf16[4,8], index: 6, kind: input, shape index: {}]
  %s7 = inlined_call_operand.vmem [shape: f32[1,8], index: 7, kind: input, shape index: {}]
  %s8 = inlined_call_operand.vmem [shape: bf16[3,72,8], index: 8, kind: input, shape index: {}]
  %s9 = inlined_call_operand.vmem [shape: f32[3,1,8], index: 9, kind: input, shape index: {}]
  %s10 = inlined_call_operand.<no memory space> [shape: f32[1,1], index: 10, kind: input, shape index: {}]
  %s11 = inlined_call_operand.vmem [shape: bf16[8,8], index: 11, kind: input, shape index: {}]
  %s12 = inlined_call_operand.vmem [shape: f32[1,8], index: 12, kind: input, shape index: {}]
  %s13 = inlined_call_operand.vmem [shape: bf16[3,72,8], index: 13, kind: input, shape index: {}]
  %s14 = inlined_call_operand.vmem [shape: f32[3,1,8], index: 14, kind: input, shape index: {}]
  %s15 = inlined_call_operand.<no memory space> [shape: f32[1,1], index: 15, kind: input, shape index: {}]
  %s16 = inlined_call_operand.vmem [shape: bf16[32,16], index: 16, kind: input, shape index: {}]
  %s17 = inlined_call_operand.vmem [shape: f32[1,16], index: 17, kind: input, shape index: {}]
  %s18 = inlined_call_operand.vmem [shape: f32[2,1,16], index: 18, kind: output, shape index: {}]
  %s19 = sld [smem:[#allocation0]]
  $region105: #{encoder_forward.1} parent=0
    _
  %s21 = ssub.s32 1, %s19
  %s22 = scalar_select 0, %s21, %s19
  %v23 = vstv %s5
  %24 = vst [vmem:[#allocation6] sm:$0x1] %v23
  %v25 = vstv %s10
  %26 = vst [vmem:[#allocation7] sm:$0x1] %v25
  %v27 = vstv %s15
  %28 = vst [vmem:[#allocation8] sm:$0x1] %v27
  loop: start=0, step=1, limit=4
  $region2: #{encoder_forward.1} parent=0 // loop_pre_header
    _
  $region3: #{encoder_forward.1} parent=0 // loop_header
    %s30 = sphi 0, %s34
    %p31 = scmp.ge.s32.totalorder %s30, 4
    %s40 = sphi 0, %s42
    %s43 = sphi 0, %s40
    %s44 = sphi 0, %s43
    %s60 = sphi 0, %s44
    %s64 = sphi 0, %s64
    %s66 = sphi 0, %s64
    %s67 = sphi 0, %s66
    %s81 = sphi 0, %s67
    %s85 = sphi 0, %s85
    %s87 = sphi 0, %s85
    %s88 = sphi 0, %s87
    %s102 = sphi 0, %s88
    %s106 = sphi 0, %s106
    %s108 = sphi 0, %s106
    %s109 = sphi 0, %s108
    %s123 = sphi 0, %s109
    %s127 = sphi 0, %s127
    %s129 = sphi 0, %s127
    %s130 = sphi 0, %s129
    %s144 = sphi 0, %s130
    %s148 = sphi 0, %s148
    %s150 = sphi 0, %s148
    %s151 = sphi 0, %s150
    %s165 = sphi 0, %s151
    %s169 = sphi 0, %s169
    %s171 = sphi 0, %s169
    %s172 = sphi 0, %s171
    %s186 = sphi 0, %s172
    %s190 = sphi 0, %s190
    %s192 = sphi 0, %s190
    %s193 = sphi 0, %s192
    %s207 = sphi 0, %s193
    %s211 = sphi 0, %s211
    %s213 = sphi 0, %s211
    %s214 = sphi 0, %s213
    %s228 = sphi 0, %s214
    %s232 = sphi 0, %s232
    %s234 = sphi 0, %s232
    %s235 = sphi 0, %s234
    %s249 = sphi 0, %s235
    %s253 = sphi 0, %s253
    %s255 = sphi 0, %s253
    %s256 = sphi 0, %s255
    %s270 = sphi 0, %s256
    %s274 = sphi 0, %s274
    %s276 = sphi 0, %s274
    %s277 = sphi 0, %s276
    %s291 = sphi 0, %s277
    %s295 = sphi 0, %s295
    %s297 = sphi 0, %s295
    %s298 = sphi 0, %s297
    %s312 = sphi 0, %s298
    %s316 = sphi 0, %s316
    %s318 = sphi 0, %s316
    %s319 = sphi 0, %s318
    %s333 = sphi 0, %s319
    %s337 = sphi 0, %s337
    %s339 = sphi 0, %s337
    %s340 = sphi 0, %s339
    %s354 = sphi 0, %s340
    %s358 = sphi 0, %s358
    %s360 = sphi 0, %s358
    %s361 = sphi 0, %s360
    %s375 = sphi 0, %s361
    %s379 = sphi 0, %s379
    %s381 = sphi 0, %s379
    %s382 = sphi 0, %s381
    %s396 = sphi 0, %s382
    %s400 = sphi 0, %s400
    %s402 = sphi 0, %s400
    %s403 = sphi 0, %s402
    %s417 = sphi 0, %s403
    %s423 = sphi 0, %s425
    %s426 = sphi 0, %s423
    %s427 = sphi 0, %s426
    %s443 = sphi 0, %s427
  $region4: #{encoder_forward.1} parent=0 // loop_header_branch
    %33 = sbr.rel (%p31) target = $region8
  $region5: #{encoder_forward.1} parent=0 // loop_body
    %s35 = ssub.s32 %s30, 1
    %s36 = ssub.s32 %s30, 2
    %s37 = sadd.s32 %s30, 1
    %s38 = ssub.s32 %s30, %s37
    %p39 = scmp.eq.s32.totalorder %s38, 0
    %s41 = sadd.s32 %s40, 1
    %s42 = scalar_select %p39, %s40, %s41
    %p45 = pneg %p39
    %p46 = scmp.eq.s32.totalorder %s30, 1
    %p47 = por %p45, %p46
    %p48 = scmp.ne.s32.totalorder %s40, %s43
    %p49 = scmp.eq.s32.totalorder %s30, 0
    %p50 = por %p48, %p49
    %p51 = scmp.ne.s32.totalorder %s40, %s43
    %p52 = scmp.eq.s32.totalorder %s35, 1
    %p53 = por %p51, %p52
    %p54 = scmp.ne.s32.totalorder %s43, %s44
    %p55 = scmp.eq.s32.totalorder %s35, 0
    %p56 = por %p54, %p55
    %p57 = scmp.ne.s32.totalorder %s43, %s44
    %p58 = scmp.eq.s32.totalorder %s36, 1
    %p59 = por %p57, %p58
    %p61 = scmp.ne.s32.totalorder %s44, %s60
    %p62 = scmp.eq.s32.totalorder %s36, 0
    %p63 = por %p61, %p62
    %s65 = sadd.s32 %s64, 1
    %p68 = scmp.eq.s32.totalorder %s30, 1
    %p69 = scmp.ne.s32.totalorder %s64, %s66
    %p70 = scmp.eq.s32.totalorder %s30, 0
    %p71 = por %p69, %p70
    %p72 = scmp.ne.s32.totalorder %s64, %s66
    %p73 = scmp.eq.s32.totalorder %s35, 1
    %p74 = por %p72, %p73
    %p75 = scmp.ne.s32.totalorder %s66, %s67
    %p76 = scmp.eq.s32.totalorder %s35, 0
    %p77 = por %p75, %p76
    %p78 = scmp.ne.s32.totalorder %s66, %s67
    %p79 = scmp.eq.s32.totalorder %s36, 1
    %p80 = por %p78, %p79
    %p82 = scmp.ne.s32.totalorder %s67, %s81
    %p83 = scmp.eq.s32.totalorder %s36, 0
    %p84 = por %p82, %p83
    %s86 = sadd.s32 %s85, 1
    %p89 = scmp.eq.s32.totalorder %s30, 1
    %p90 = scmp.ne.s32.totalorder %s85, %s87
    %p91 = scmp.eq.s32.totalorder %s30, 0
    %p92 = por %p90, %p91
    %p93 = scmp.ne.s32.totalorder %s85, %s87
    %p94 = scmp.eq.s32.totalorder %s35, 1
    %p95 = por %p93, %p94
    %p96 = scmp.ne.s32.totalorder %s87, %s88
    %p97 = scmp.eq.s32.totalorder %s35, 0
    %p98 = por %p96, %p97
    %p99 = scmp.ne.s32.totalorder %s87, %s88
    %p100 = scmp.eq.s32.totalorder %s36, 1
    %p101 = por %p99, %p100
    %p103 = scmp.ne.s32.totalorder %s88, %s102
    %p104 = scmp.eq.s32.totalorder %s36, 0
    %p105 = por %p103, %p104
    %s107 = sadd.s32 %s106, 1
    %p110 = scmp.eq.s32.totalorder %s30, 1
    %p111 = scmp.ne.s32.totalorder %s106, %s108
    %p112 = scmp.eq.s32.totalorder %s30, 0
    %p113 = por %p111, %p112
    %p114 = scmp.ne.s32.totalorder %s106, %s108
    %p115 = scmp.eq.s32.totalorder %s35, 1
    %p116 = por %p114, %p115
    %p117 = scmp.ne.s32.totalorder %s108, %s109
    %p118 = scmp.eq.s32.totalorder %s35, 0
    %p119 = por %p117, %p118
    %p120 = scmp.ne.s32.totalorder %s108, %s109
    %p121 = scmp.eq.s32.totalorder %s36, 1
    %p122 = por %p120, %p121
    %p124 = scmp.ne.s32.totalorder %s109, %s123
    %p125 = scmp.eq.s32.totalorder %s36, 0
    %p126 = por %p124, %p125
    %s128 = sadd.s32 %s127, 1
    %p131 = scmp.eq.s32.totalorder %s30, 1
    %p132 = scmp.ne.s32.totalorder %s127, %s129
    %p133 = scmp.eq.s32.totalorder %s30, 0
    %p134 = por %p132, %p133
    %p135 = scmp.ne.s32.totalorder %s127, %s129
    %p136 = scmp.eq.s32.totalorder %s35, 1
    %p137 = por %p135, %p136
    %p138 = scmp.ne.s32.totalorder %s129, %s130
    %p139 = scmp.eq.s32.totalorder %s35, 0
    %p140 = por %p138, %p139
    %p141 = scmp.ne.s32.totalorder %s129, %s130
    %p142 = scmp.eq.s32.totalorder %s36, 1
    %p143 = por %p141, %p142
    %p145 = scmp.ne.s32.totalorder %s130, %s144
    %p146 = scmp.eq.s32.totalorder %s36, 0
    %p147 = por %p145, %p146
    %s149 = sadd.s32 %s148, 1
    %p152 = scmp.eq.s32.totalorder %s30, 1
    %p153 = scmp.ne.s32.totalorder %s148, %s150
    %p154 = scmp.eq.s32.totalorder %s30, 0
    %p155 = por %p153, %p154
    %p156 = scmp.ne.s32.totalorder %s148, %s150
    %p157 = scmp.eq.s32.totalorder %s35, 1
    %p158 = por %p156, %p157
    %p159 = scmp.ne.s32.totalorder %s150, %s151
    %p160 = scmp.eq.s32.totalorder %s35, 0
    %p161 = por %p159, %p160
    %p162 = scmp.ne.s32.totalorder %s150, %s151
    %p163 = scmp.eq.s32.totalorder %s36, 1
    %p164 = por %p162, %p163
    %p166 = scmp.ne.s32.totalorder %s151, %s165
    %p167 = scmp.eq.s32.totalorder %s36, 0
    %p168 = por %p166, %p167
    %s170 = sadd.s32 %s169, 1
    %p173 = scmp.eq.s32.totalorder %s30, 1
    %p174 = scmp.ne.s32.totalorder %s169, %s171
    %p175 = scmp.eq.s32.totalorder %s30, 0
    %p176 = por %p174, %p175
    %p177 = scmp.ne.s32.totalorder %s169, %s171
    %p178 = scmp.eq.s32.totalorder %s35, 1
    %p179 = por %p177, %p178
    %p180 = scmp.ne.s32.totalorder %s171, %s172
    %p181 = scmp.eq.s32.totalorder %s35, 0
    %p182 = por %p180, %p181
    %p183 = scmp.ne.s32.totalorder %s171, %s172
    %p184 = scmp.eq.s32.totalorder %s36, 1
    %p185 = por %p183, %p184
    %p187 = scmp.ne.s32.totalorder %s172, %s186
    %p188 = scmp.eq.s32.totalorder %s36, 0
    %p189 = por %p187, %p188
    %s191 = sadd.s32 %s190, 1
    %p194 = scmp.eq.s32.totalorder %s30, 1
    %p195 = scmp.ne.s32.totalorder %s190, %s192
    %p196 = scmp.eq.s32.totalorder %s30, 0
    %p197 = por %p195, %p196
    %p198 = scmp.ne.s32.totalorder %s190, %s192
    %p199 = scmp.eq.s32.totalorder %s35, 1
    %p200 = por %p198, %p199
    %p201 = scmp.ne.s32.totalorder %s192, %s193
    %p202 = scmp.eq.s32.totalorder %s35, 0
    %p203 = por %p201, %p202
    %p204 = scmp.ne.s32.totalorder %s192, %s193
    %p205 = scmp.eq.s32.totalorder %s36, 1
    %p206 = por %p204, %p205
    %p208 = scmp.ne.s32.totalorder %s193, %s207
    %p209 = scmp.eq.s32.totalorder %s36, 0
    %p210 = por %p208, %p209
    %s212 = sadd.s32 %s211, 1
    %p215 = scmp.eq.s32.totalorder %s30, 1
    %p216 = scmp.ne.s32.totalorder %s211, %s213
    %p217 = scmp.eq.s32.totalorder %s30, 0
    %p218 = por %p216, %p217
    %p219 = scmp.ne.s32.totalorder %s211, %s213
    %p220 = scmp.eq.s32.totalorder %s35, 1
    %p221 = por %p219, %p220
    %p222 = scmp.ne.s32.totalorder %s213, %s214
    %p223 = scmp.eq.s32.totalorder %s35, 0
    %p224 = por %p222, %p223
    %p225 = scmp.ne.s32.totalorder %s213, %s214
    %p226 = scmp.eq.s32.totalorder %s36, 1
    %p227 = por %p225, %p226
    %p229 = scmp.ne.s32.totalorder %s214, %s228
    %p230 = scmp.eq.s32.totalorder %s36, 0
    %p231 = por %p229, %p230
    %s233 = sadd.s32 %s232, 1
    %p236 = scmp.eq.s32.totalorder %s30, 1
    %p237 = scmp.ne.s32.totalorder %s232, %s234
    %p238 = scmp.eq.s32.totalorder %s30, 0
    %p239 = por %p237, %p238
    %p240 = scmp.ne.s32.totalorder %s232, %s234
    %p241 = scmp.eq.s32.totalorder %s35, 1
    %p242 = por %p240, %p241
    %p243 = scmp.ne.s32.totalorder %s234, %s235
    %p244 = scmp.eq.s32.totalorder %s35, 0
    %p245 = por %p243, %p244
    %p246 = scmp.ne.s32.totalorder %s234, %s235
    %p247 = scmp.eq.s32.totalorder %s36, 1
    %p248 = por %p246, %p247
    %p250 = scmp.ne.s32.totalorder %s235, %s249
    %p251 = scmp.eq.s32.totalorder %s36, 0
    %p252 = por %p250, %p251
    %s254 = sadd.s32 %s253, 1
    %p257 = scmp.eq.s32.totalorder %s30, 1
    %p258 = scmp.ne.s32.totalorder %s253, %s255
    %p259 = scmp.eq.s32.totalorder %s30, 0
    %p260 = por %p258, %p259
    %p261 = scmp.ne.s32.totalorder %s253, %s255
    %p262 = scmp.eq.s32.totalorder %s35, 1
    %p263 = por %p261, %p262
    %p264 = scmp.ne.s32.totalorder %s255, %s256
    %p265 = scmp.eq.s32.totalorder %s35, 0
    %p266 = por %p264, %p265
    %p267 = scmp.ne.s32.totalorder %s255, %s256
    %p268 = scmp.eq.s32.totalorder %s36, 1
    %p269 = por %p267, %p268
    %p271 = scmp.ne.s32.totalorder %s256, %s270
    %p272 = scmp.eq.s32.totalorder %s36, 0
    %p273 = por %p271, %p272
    %s275 = sadd.s32 %s274, 1
    %p278 = scmp.eq.s32.totalorder %s30, 1
    %p279 = scmp.ne.s32.totalorder %s274, %s276
    %p280 = scmp.eq.s32.totalorder %s30, 0
    %p281 = por %p279, %p280
    %p282 = scmp.ne.s32.totalorder %s274, %s276
    %p283 = scmp.eq.s32.totalorder %s35, 1
    %p284 = por %p282, %p283
    %p285 = scmp.ne.s32.totalorder %s276, %s277
    %p286 = scmp.eq.s32.totalorder %s35, 0
    %p287 = por %p285, %p286
    %p288 = scmp.ne.s32.totalorder %s276, %s277
    %p289 = scmp.eq.s32.totalorder %s36, 1
    %p290 = por %p288, %p289
    %p292 = scmp.ne.s32.totalorder %s277, %s291
    %p293 = scmp.eq.s32.totalorder %s36, 0
    %p294 = por %p292, %p293
    %s296 = sadd.s32 %s295, 1
    %p299 = scmp.eq.s32.totalorder %s30, 1
    %p300 = scmp.ne.s32.totalorder %s295, %s297
    %p301 = scmp.eq.s32.totalorder %s30, 0
    %p302 = por %p300, %p301
    %p303 = scmp.ne.s32.totalorder %s295, %s297
    %p304 = scmp.eq.s32.totalorder %s35, 1
    %p305 = por %p303, %p304
    %p306 = scmp.ne.s32.totalorder %s297, %s298
    %p307 = scmp.eq.s32.totalorder %s35, 0
    %p308 = por %p306, %p307
    %p309 = scmp.ne.s32.totalorder %s297, %s298
    %p310 = scmp.eq.s32.totalorder %s36, 1
    %p311 = por %p309, %p310
    %p313 = scmp.ne.s32.totalorder %s298, %s312
    %p314 = scmp.eq.s32.totalorder %s36, 0
    %p315 = por %p313, %p314
    %s317 = sadd.s32 %s316, 1
    %p320 = scmp.eq.s32.totalorder %s30, 1
    %p321 = scmp.ne.s32.totalorder %s316, %s318
    %p322 = scmp.eq.s32.totalorder %s30, 0
    %p323 = por %p321, %p322
    %p324 = scmp.ne.s32.totalorder %s316, %s318
    %p325 = scmp.eq.s32.totalorder %s35, 1
    %p326 = por %p324, %p325
    %p327 = scmp.ne.s32.totalorder %s318, %s319
    %p328 = scmp.eq.s32.totalorder %s35, 0
    %p329 = por %p327, %p328
    %p330 = scmp.ne.s32.totalorder %s318, %s319
    %p331 = scmp.eq.s32.totalorder %s36, 1
    %p332 = por %p330, %p331
    %p334 = scmp.ne.s32.totalorder %s319, %s333
    %p335 = scmp.eq.s32.totalorder %s36, 0
    %p336 = por %p334, %p335
    %s338 = sadd.s32 %s337, 1
    %p341 = scmp.eq.s32.totalorder %s30, 1
    %p342 = scmp.ne.s32.totalorder %s337, %s339
    %p343 = scmp.eq.s32.totalorder %s30, 0
    %p344 = por %p342, %p343
    %p345 = scmp.ne.s32.totalorder %s337, %s339
    %p346 = scmp.eq.s32.totalorder %s35, 1
    %p347 = por %p345, %p346
    %p348 = scmp.ne.s32.totalorder %s339, %s340
    %p349 = scmp.eq.s32.totalorder %s35, 0
    %p350 = por %p348, %p349
    %p351 = scmp.ne.s32.totalorder %s339, %s340
    %p352 = scmp.eq.s32.totalorder %s36, 1
    %p353 = por %p351, %p352
    %p355 = scmp.ne.s32.totalorder %s340, %s354
    %p356 = scmp.eq.s32.totalorder %s36, 0
    %p357 = por %p355, %p356
    %s359 = sadd.s32 %s358, 1
    %p362 = scmp.eq.s32.totalorder %s30, 1
    %p363 = scmp.ne.s32.totalorder %s358, %s360
    %p364 = scmp.eq.s32.totalorder %s30, 0
    %p365 = por %p363, %p364
    %p366 = scmp.ne.s32.totalorder %s358, %s360
    %p367 = scmp.eq.s32.totalorder %s35, 1
    %p368 = por %p366, %p367
    %p369 = scmp.ne.s32.totalorder %s360, %s361
    %p370 = scmp.eq.s32.totalorder %s35, 0
    %p371 = por %p369, %p370
    %p372 = scmp.ne.s32.totalorder %s360, %s361
    %p373 = scmp.eq.s32.totalorder %s36, 1
    %p374 = por %p372, %p373
    %p376 = scmp.ne.s32.totalorder %s361, %s375
    %p377 = scmp.eq.s32.totalorder %s36, 0
    %p378 = por %p376, %p377
    %s380 = sadd.s32 %s379, 1
    %p383 = scmp.eq.s32.totalorder %s30, 1
    %p384 = scmp.ne.s32.totalorder %s379, %s381
    %p385 = scmp.eq.s32.totalorder %s30, 0
    %p386 = por %p384, %p385
    %p387 = scmp.ne.s32.totalorder %s379, %s381
    %p388 = scmp.eq.s32.totalorder %s35, 1
    %p389 = por %p387, %p388
    %p390 = scmp.ne.s32.totalorder %s381, %s382
    %p391 = scmp.eq.s32.totalorder %s35, 0
    %p392 = por %p390, %p391
    %p393 = scmp.ne.s32.totalorder %s381, %s382
    %p394 = scmp.eq.s32.totalorder %s36, 1
    %p395 = por %p393, %p394
    %p397 = scmp.ne.s32.totalorder %s382, %s396
    %p398 = scmp.eq.s32.totalorder %s36, 0
    %p399 = por %p397, %p398
    %s401 = sadd.s32 %s400, 1
    %p404 = scmp.eq.s32.totalorder %s30, 1
    %p405 = scmp.ne.s32.totalorder %s400, %s402
    %p406 = scmp.eq.s32.totalorder %s30, 0
    %p407 = por %p405, %p406
    %p408 = scmp.ne.s32.totalorder %s400, %s402
    %p409 = scmp.eq.s32.totalorder %s35, 1
    %p410 = por %p408, %p409
    %p411 = scmp.ne.s32.totalorder %s402, %s403
    %p412 = scmp.eq.s32.totalorder %s35, 0
    %p413 = por %p411, %p412
    %p414 = scmp.ne.s32.totalorder %s402, %s403
    %p415 = scmp.eq.s32.totalorder %s36, 1
    %p416 = por %p414, %p415
    %p418 = scmp.ne.s32.totalorder %s403, %s417
    %p419 = scmp.eq.s32.totalorder %s36, 0
    %p420 = por %p418, %p419
    %s421 = ssub.s32 %s30, %s37
    %p422 = scmp.eq.s32.totalorder %s421, 0
    %s424 = sadd.s32 %s423, 1
    %s425 = scalar_select %p422, %s423, %s424
    %p428 = pneg %p422
    %p429 = scmp.eq.s32.totalorder %s30, 1
    %p430 = por %p428, %p429
    %p431 = scmp.ne.s32.totalorder %s423, %s426
    %p432 = scmp.eq.s32.totalorder %s30, 0
    %p433 = por %p431, %p432
    %p434 = scmp.ne.s32.totalorder %s423, %s426
    %p435 = scmp.eq.s32.totalorder %s35, 1
    %p436 = por %p434, %p435
    %p437 = scmp.ne.s32.totalorder %s426, %s427
    %p438 = scmp.eq.s32.totalorder %s35, 0
    %p439 = por %p437, %p438
    %p440 = scmp.ne.s32.totalorder %s426, %s427
    %p441 = scmp.eq.s32.totalorder %s36, 1
    %p442 = por %p440, %p441
    %p444 = scmp.ne.s32.totalorder %s427, %s443
    %p445 = scmp.eq.s32.totalorder %s36, 0
    %p446 = por %p444, %p445
    %p447 = scmp.le.s32.totalorder 1, %s30
    %p448 = scmp.lt.s32.totalorder %s30, 3
    %p449 = pnand %p447, %p448
    %p450 = pneg %p449
    // Predicated region
    $region9: #{encoder_forward.1} parent=5 // pred_check
      _
    $region10: #{encoder_forward.1} parent=5 // pred_check_branch
      %452 = sbr.rel (%p449) target = $region12
    $region11: #{encoder_forward.1} parent=5 // pred_region
      %s453 = ssub.s32 %s30, 1
      // Predicated region
      $region13: #{encoder_forward.1} parent=11 // pred_check
        %p454 = pneg %p77
      $region14: #{encoder_forward.1} parent=11 // pred_check_branch
        %456 = sbr.rel (%p454) target = $region16
      $region15: #{encoder_forward.1} parent=11 // pred_region
        _
      $region16: #{encoder_forward.1} parent=11 // pred_fallthru
        _
      // Predicated region
      $region17: #{encoder_forward.1} parent=11 // pred_check
        %p457 = pneg %p98
      $region18: #{encoder_forward.1} parent=11 // pred_check_branch
        %459 = sbr.rel (%p457) target = $region20
      $region19: #{encoder_forward.1} parent=11 // pred_region
        _
      $region20: #{encoder_forward.1} parent=11 // pred_fallthru
        _
      // Predicated region
      $region21: #{encoder_forward.1} parent=11 // pred_check
        %p460 = pneg %p119
      $region22: #{encoder_forward.1} parent=11 // pred_check_branch
        %462 = sbr.rel (%p460) target = $region24
      $region23: #{encoder_forward.1} parent=11 // pred_region
        _
      $region24: #{encoder_forward.1} parent=11 // pred_fallthru
        _
      // Predicated region
      $region25: #{encoder_forward.1} parent=11 // pred_check
        %p463 = pneg %p140
      $region26: #{encoder_forward.1} parent=11 // pred_check_branch
        %465 = sbr.rel (%p463) target = $region28
      $region27: #{encoder_forward.1} parent=11 // pred_region
        _
      $region28: #{encoder_forward.1} parent=11 // pred_fallthru
        _
      // Predicated region
      $region29: #{encoder_forward.1} parent=11 // pred_check
        %p466 = pneg %p161
      $region30: #{encoder_forward.1} parent=11 // pred_check_branch
        %468 = sbr.rel (%p466) target = $region32
      $region31: #{encoder_forward.1} parent=11 // pred_region
        _
      $region32: #{encoder_forward.1} parent=11 // pred_fallthru
        _
      // Predicated region
      $region33: #{encoder_forward.1} parent=11 // pred_check
        %p469 = pneg %p182
      $region34: #{encoder_forward.1} parent=11 // pred_check_branch
        %471 = sbr.rel (%p469) target = $region36
      $region35: #{encoder_forward.1} parent=11 // pred_region
        _
      $region36: #{encoder_forward.1} parent=11 // pred_fallthru
        _
      // Predicated region
      $region37: #{encoder_forward.1} parent=11 // pred_check
        %p472 = pneg %p203
      $region38: #{encoder_forward.1} parent=11 // pred_check_branch
        %474 = sbr.rel (%p472) target = $region40
      $region39: #{encoder_forward.1} parent=11 // pred_region
        _
      $region40: #{encoder_forward.1} parent=11 // pred_fallthru
        _
      // Predicated region
      $region41: #{encoder_forward.1} parent=11 // pred_check
        %p475 = pneg %p224
      $region42: #{encoder_forward.1} parent=11 // pred_check_branch
        %477 = sbr.rel (%p475) target = $region44
      $region43: #{encoder_forward.1} parent=11 // pred_region
        _
      $region44: #{encoder_forward.1} parent=11 // pred_fallthru
        _
      // Predicated region
      $region45: #{encoder_forward.1} parent=11 // pred_check
        %p478 = pneg %p245
      $region46: #{encoder_forward.1} parent=11 // pred_check_branch
        %480 = sbr.rel (%p478) target = $region48
      $region47: #{encoder_forward.1} parent=11 // pred_region
        _
      $region48: #{encoder_forward.1} parent=11 // pred_fallthru
        _
      // Predicated region
      $region49: #{encoder_forward.1} parent=11 // pred_check
        %p481 = pneg %p266
      $region50: #{encoder_forward.1} parent=11 // pred_check_branch
        %483 = sbr.rel (%p481) target = $region52
      $region51: #{encoder_forward.1} parent=11 // pred_region
        _
      $region52: #{encoder_forward.1} parent=11 // pred_fallthru
        _
      // Predicated region
      $region53: #{encoder_forward.1} parent=11 // pred_check
        %p484 = pneg %p287
      $region54: #{encoder_forward.1} parent=11 // pred_check_branch
        %486 = sbr.rel (%p484) target = $region56
      $region55: #{encoder_forward.1} parent=11 // pred_region
        _
      $region56: #{encoder_forward.1} parent=11 // pred_fallthru
        _
      // Predicated region
      $region57: #{encoder_forward.1} parent=11 // pred_check
        %p487 = pneg %p308
      $region58: #{encoder_forward.1} parent=11 // pred_check_branch
        %489 = sbr.rel (%p487) target = $region60
      $region59: #{encoder_forward.1} parent=11 // pred_region
        _
      $region60: #{encoder_forward.1} parent=11 // pred_fallthru
        _
      // Predicated region
      $region61: #{encoder_forward.1} parent=11 // pred_check
        %p490 = pneg %p329
      $region62: #{encoder_forward.1} parent=11 // pred_check_branch
        %492 = sbr.rel (%p490) target = $region64
      $region63: #{encoder_forward.1} parent=11 // pred_region
        _
      $region64: #{encoder_forward.1} parent=11 // pred_fallthru
        _
      // Predicated region
      $region65: #{encoder_forward.1} parent=11 // pred_check
        %p493 = pneg %p350
      $region66: #{encoder_forward.1} parent=11 // pred_check_branch
        %495 = sbr.rel (%p493) target = $region68
      $region67: #{encoder_forward.1} parent=11 // pred_region
        _
      $region68: #{encoder_forward.1} parent=11 // pred_fallthru
        _
      // Predicated region
      $region69: #{encoder_forward.1} parent=11 // pred_check
        %p496 = pneg %p371
      $region70: #{encoder_forward.1} parent=11 // pred_check_branch
        %498 = sbr.rel (%p496) target = $region72
      $region71: #{encoder_forward.1} parent=11 // pred_region
        _
      $region72: #{encoder_forward.1} parent=11 // pred_fallthru
        _
      // Predicated region
      $region73: #{encoder_forward.1} parent=11 // pred_check
        %p499 = pneg %p392
      $region74: #{encoder_forward.1} parent=11 // pred_check_branch
        %501 = sbr.rel (%p499) target = $region76
      $region75: #{encoder_forward.1} parent=11 // pred_region
        _
      $region76: #{encoder_forward.1} parent=11 // pred_fallthru
        _
      // Predicated region
      $region77: #{encoder_forward.1} parent=11 // pred_check
        %p502 = pneg %p413
      $region78: #{encoder_forward.1} parent=11 // pred_check_branch
        %504 = sbr.rel (%p502) target = $region80
      $region79: #{encoder_forward.1} parent=11 // pred_region
        _
      $region80: #{encoder_forward.1} parent=11 // pred_fallthru
        _
    $region12: #{encoder_forward.1} parent=5 // pred_fallthru
      _
    %p505 = scmp.lt.s32.totalorder %s30, 2
    // Predicated region
    $region81: #{encoder_forward.1} parent=5 // pred_check
      %p506 = pneg %p505
    $region82: #{encoder_forward.1} parent=5 // pred_check_branch
      %508 = sbr.rel (%p506) target = $region84
    $region83: #{encoder_forward.1} parent=5 // pred_region
      // Predicated region
      $region85: #{encoder_forward.1} parent=83 // pred_check
        %p509 = pneg %p50
      $region86: #{encoder_forward.1} parent=83 // pred_check_branch
        %511 = sbr.rel (%p509) target = $region88
      $region87: #{encoder_forward.1} parent=83 // pred_region
        %p512 = scmp.lt.s32.totalorder %s30, 1
        %s513 = scalar_select %p512, %s30, 1
        %s514 = smul.addr %s513, 32
        %s515 = smul.addr %s514, 8
        %s516 = scalar_lea.vmem %s0, %s515
      $region88: #{encoder_forward.1} parent=83 // pred_fallthru
        _
    $region84: #{encoder_forward.1} parent=5 // pred_fallthru
      _
    %p517 = scmp.le.s32.totalorder 1, %s30
    %p518 = scmp.lt.s32.totalorder %s30, 3
    %p519 = pnand %p517, %p518
    %p520 = pneg %p519
    // Predicated region
    $region89: #{encoder_forward.1} parent=5 // pred_check
      _
    $region90: #{encoder_forward.1} parent=5 // pred_check_branch
      %522 = sbr.rel (%p519) target = $region92
    $region91: #{encoder_forward.1} parent=5 // pred_region
      %s523 = ssub.s32 %s30, 1
      %p524 = scmp.lt.s32.totalorder %s35, 1
      %s525 = scalar_select %p524, %s35, 1
      %s526 = smul.addr %s525, 32
      %s527 = smul.addr %s526, 8
      %s528 = scalar_lea.vmem %s0, %s527
      %p529 = pneg %p56
      %p530 = pneg %p53
      %p531 = pneg %p77
      %p532 = pneg %p74
      %p533 = pneg %p98
      %p534 = pneg %p95
      %p535 = pneg %p119
      %p536 = pneg %p116
      %p537 = pneg %p140
      %p538 = pneg %p137
      %p539 = pneg %p161
      %p540 = pneg %p158
      %p541 = pneg %p182
      %p542 = pneg %p179
      %p543 = pneg %p203
      %p544 = pneg %p200
      %p545 = pneg %p224
      %p546 = pneg %p221
      %p547 = pneg %p245
      %p548 = pneg %p242
      %p549 = pneg %p266
      %p550 = pneg %p263
      %p551 = pneg %p287
      %p552 = pneg %p284
      %p553 = pneg %p308
      %p554 = pneg %p305
      %p555 = pneg %p329
      %p556 = pneg %p326
      %p557 = pneg %p350
      %p558 = pneg %p347
      %p559 = pneg %p371
      %p560 = pneg %p368
      %p561 = pneg %p392
      %p562 = pneg %p389
      %p563 = pneg %p413
      %p564 = pneg %p410
      %p565 = pneg %p439
      %p566 = pneg %p436
      %p567 = scmp.lt.s32.totalorder %s35, 1
      %s568 = scalar_select %p567, %s35, 1
      %s569 = scalar_lea.vmem %s18, %s568
      %p570 = scmp.lt.s32.totalorder %s35, 1
      %s571 = scalar_select %p570, %s35, 1
      %s572 = smul.addr %s571, 32
      %s573 = smul.addr %s572, 8
      %s574 = scalar_lea.vmem %s0, %s573
      %p575 = scmp.lt.s32.totalorder %s35, 1
      %s576 = scalar_select %p575, %s35, 1
      %s577 = scalar_lea.vmem %s18, %s576
      %v579 = vld [vmem:[%s574] sm:$0xff]
      %v580 = vld [vmem:[%s574 + $0x8] sm:$0xff]
      %v581 = vld [vmem:[%s574 + $0x10] sm:$0xff]
      %v582 = vld [vmem:[%s574 + $0x18] sm:$0xff]
      %v583 = vld [vmem:[%s574 + $0x20] sm:$0xff]
      %v584 = vld [vmem:[%s574 + $0x28] sm:$0xff]
      %v585 = vld [vmem:[%s574 + $0x30] sm:$0xff]
      %v586 = vld [vmem:[%s574 + $0x38] sm:$0xff]
      %v587 = vld [vmem:[%s574 + $0x40] sm:$0xff]
      %v588 = vld [vmem:[%s574 + $0x48] sm:$0xff]
      %v589 = vld [vmem:[%s574 + $0x50] sm:$0xff]
      %v590 = vld [vmem:[%s574 + $0x58] sm:$0xff]
      %v591 = vld [vmem:[%s574 + $0x60] sm:$0xff]
      %v592 = vld [vmem:[%s574 + $0x68] sm:$0xff]
      %v593 = vld [vmem:[%s574 + $0x70] sm:$0xff]
      %v594 = vld [vmem:[%s574 + $0x78] sm:$0xff]
      %v595 = vld [vmem:[%s574 + $0x80] sm:$0xff]
      %v596 = vld [vmem:[%s574 + $0x88] sm:$0xff]
      %v597 = vld [vmem:[%s574 + $0x90] sm:$0xff]
      %v598 = vld [vmem:[%s574 + $0x98] sm:$0xff]
      %v599 = vld [vmem:[%s574 + $0xa0] sm:$0xff]
      %v600 = vld [vmem:[%s574 + $0xa8] sm:$0xff]
      %v601 = vld [vmem:[%s574 + $0xb0] sm:$0xff]
      %v602 = vld [vmem:[%s574 + $0xb8] sm:$0xff]
      %v603 = vld [vmem:[%s574 + $0xc0] sm:$0xff]
      %v604 = vld [vmem:[%s574 + $0xc8] sm:$0xff]
      %v605 = vld [vmem:[%s574 + $0xd0] sm:$0xff]
      %v606 = vld [vmem:[%s574 + $0xd8] sm:$0xff]
      %v607 = vld [vmem:[%s574 + $0xe0] sm:$0xff]
      %v608 = vld [vmem:[%s574 + $0xe8] sm:$0xff]
      %v609 = vld [vmem:[%s574 + $0xf0] sm:$0xff]
      %v610 = vld [vmem:[%s574 + $0xf8] sm:$0xff]
      %v611 = vpack.c.bf16 %v580, %v579
      %v612 = vpack.c.bf16 %v582, %v581
      %v613 = vpack.c.bf16 %v584, %v583
      %v614 = vpack.c.bf16 %v586, %v585
      %v615 = vpack.c.bf16 %v588, %v587
      %v616 = vpack.c.bf16 %v590, %v589
      %v617 = vpack.c.bf16 %v592, %v591
      %v618 = vpack.c.bf16 %v594, %v593
      %v619 = vpack.c.bf16 %v596, %v595
      %v620 = vpack.c.bf16 %v598, %v597
      %v621 = vpack.c.bf16 %v600, %v599
      %v622 = vpack.c.bf16 %v602, %v601
      %v623 = vpack.c.bf16 %v604, %v603
      %v624 = vpack.c.bf16 %v606, %v605
      %v625 = vpack.c.bf16 %v608, %v607
      %v626 = vpack.c.bf16 %v610, %v609
      %v627 = vld [vmem:[%s1] sm:$0x1]
      %v628 = vld [vmem:[%s2] sm:$0x1]
      %v630 = vlaneseq
      %v631 = vshrl.u32 %v630, 7
      %v632 = vsub.s32 0, %v631
      %v633 = vrot.slane %v628, %v632
      %vm635 = vcmask 7168
      %v637 = vsel %vm635, %v611, 0
      %v640 = vsel %vm635, %v612, 0
      %v643 = vsel %vm635, %v613, 0
      %v646 = vsel %vm635, %v614, 0
      %v649 = vsel %vm635, %v615, 0
      %v652 = vsel %vm635, %v616, 0
      %v655 = vsel %vm635, %v617, 0
      %v658 = vsel %vm635, %v618, 0
      %v661 = vsel %vm635, %v619, 0
      %v664 = vsel %vm635, %v620, 0
      %v667 = vsel %vm635, %v621, 0
      %v670 = vsel %vm635, %v622, 0
      %v673 = vsel %vm635, %v623, 0
      %v676 = vsel %vm635, %v624, 0
      %v679 = vsel %vm635, %v625, 0
      %v682 = vsel %vm635, %v626, 0
      %vm684 = vcmask 1040384
      %v685 = vsel 0, 4294967295, 65535
      %v686 = vsel %vm684, %v685, 0
      %v688 = vand.u32 %v627, %v686
      %690 = vmatprep.subr.bf16.mxu0 0
      %691 = vmatpush1.bf16.msra.mxu0 %v688
      %692 = vmatprep.subr.bf16.mxu0 0
      %693 = vmatpush1.bf16.msra.mxu0 0
      %694 = vmatprep.subr.bf16.mxu0 0
      %695 = vmatpush1.bf16.msra.mxu0 0
      %696 = vmatprep.subr.bf16.mxu0 0
      %697 = vmatpush1.bf16.msra.mxu0 0
      %698 = vmatprep.subr.bf16.mxu0 0
      %699 = vmatpush1.bf16.msra.mxu0 0
      %700 = vmatprep.subr.bf16.mxu0 0
      %701 = vmatpush1.bf16.msra.mxu0 0
      %702 = vmatprep.subr.bf16.mxu0 0
      %703 = vmatpush1.bf16.msra.mxu0 0
      %704 = vmatprep.subr.bf16.mxu0 0
      %705 = vmatpush1.bf16.msra.mxu0 0
      %706 = vmatprep.subr.bf16.mxu0 0
      %707 = vmatpush1.bf16.msra.mxu0 0
      %708 = vmatprep.subr.bf16.mxu0 0
      %709 = vmatpush1.bf16.msra.mxu0 0
      %710 = vmatprep.subr.bf16.mxu0 0
      %711 = vmatpush1.bf16.msra.mxu0 0
      %712 = vmatprep.subr.bf16.mxu0 0
      %713 = vmatpush1.bf16.msra.mxu0 0
      %714 = vmatprep.subr.bf16.mxu0 0
      %715 = vmatpush1.bf16.msra.mxu0 0
      %716 = vmatprep.subr.bf16.mxu0 0
      %717 = vmatpush1.bf16.msra.mxu0 0
      %718 = vmatprep.subr.bf16.mxu0 0
      %719 = vmatpush1.bf16.msra.mxu0 0
      %720 = vmatprep.subr.bf16.mxu0 0
      %721 = vmatpush1.bf16.msra.mxu0 0
      %722 = vmatprep.mubr.bf16.mxu0 0
      %723 = vmatmul.mubr.bf16.gmra.mrb[0].mxu0 %v637
      %v724 = vpop.f32.mrb[0].mxu0
      %v725 = vadd.f32 %v633, %v724
      %v726 = vpop.f32.mrb[0].mxu0
      %v727 = vpop.f32.mrb[0].mxu0
      %v728 = vadd.f32 %v633, %v727
      %v729 = vpop.f32.mrb[0].mxu0
      %730 = vmatprep.mubr.bf16.mxu0 0
      %731 = vmatmul.mubr.bf16.gmra.mrb[0].mxu0 %v640
      %v732 = vpop.f32.mrb[0].mxu0
      %v733 = vadd.f32 %v633, %v732
      %v734 = vpop.f32.mrb[0].mxu0
      %v735 = vpop.f32.mrb[0].mxu0
      %v736 = vadd.f32 %v633, %v735
      %v737 = vpop.f32.mrb[0].mxu0
      %738 = vmatprep.mubr.bf16.mxu0 0
      %739 = vmatmul.mubr.bf16.gmra.mrb[0].mxu0 %v643
      %v740 = vpop.f32.mrb[0].mxu0
      %v741 = vadd.f32 %v633, %v740
      %v742 = vpop.f32.mrb[0].mxu0
      %v743 = vpop.f32.mrb[0].mxu0
      %v744 = vadd.f32 %v633, %v743
      %v745 = vpop.f32.mrb[0].mxu0
      %746 = vmatprep.mubr.bf16.mxu0 0
      %747 = vmatmul.mubr.bf16.gmra.mrb[0].mxu0 %v646
      %v748 = vpop.f32.mrb[0].mxu0
      %v749 = vadd.f32 %v633, %v748
      %v750 = vpop.f32.mrb[0].mxu0
      %v751 = vpop.f32.mrb[0].mxu0
      %v752 = vadd.f32 %v633, %v751
      %v753 = vpop.f32.mrb[0].mxu0
      %754 = vmatprep.mubr.bf16.mxu0 0
      %755 = vmatmul.mubr.bf16.gmra.mrb[0].mxu0 %v649
      %v756 = vpop.f32.mrb[0].mxu0
      %v757 = vadd.f32 %v633, %v756
      %v758 = vpop.f32.mrb[0].mxu0
      %v759 = vpop.f32.mrb[0].mxu0
      %v760 = vadd.f32 %v633, %v759
      %v761 = vpop.f32.mrb[0].mxu0
      %762 = vmatprep.mubr.bf16.mxu0 0
      %763 = vmatmul.mubr.bf16.gmra.mrb[0].mxu0 %v652
      %v764 = vpop.f32.mrb[0].mxu0
      %v765 = vadd.f32 %v633, %v764
      %v766 = vpop.f32.mrb[0].mxu0
      %v767 = vpop.f32.mrb[0].mxu0
      %v768 = vadd.f32 %v633, %v767
      %v769 = vpop.f32.mrb[0].mxu0
      %770 = vmatprep.mubr.bf16.mxu0 0
      %771 = vmatmul.mubr.bf16.gmra.mrb[0].mxu0 %v655
      %v772 = vpop.f32.mrb[0].mxu0
      %v773 = vadd.f32 %v633, %v772
      %v774 = vpop.f32.mrb[0].mxu0
      %v775 = vpop.f32.mrb[0].mxu0
      %v776 = vadd.f32 %v633, %v775
      %v777 = vpop.f32.mrb[0].mxu0
      %778 = vmatprep.mubr.bf16.mxu0 0
      %779 = vmatmul.mubr.bf16.gmra.mrb[0].mxu0 %v658
      %v780 = vpop.f32.mrb[0].mxu0
      %v781 = vadd.f32 %v633, %v780
      %v782 = vpop.f32.mrb[0].mxu0
      %v783 = vpop.f32.mrb[0].mxu0
      %v784 = vadd.f32 %v633, %v783
      %v785 = vpop.f32.mrb[0].mxu0
      %786 = vmatprep.mubr.bf16.mxu0 0
      %787 = vmatmul.mubr.bf16.gmra.mrb[0].mxu0 %v661
      %v788 = vpop.f32.mrb[0].mxu0
      %v789 = vadd.f32 %v633, %v788
      %v790 = vpop.f32.mrb[0].mxu0
      %v791 = vpop.f32.mrb[0].mxu0
      %v792 = vadd.f32 %v633, %v791
      %v793 = vpop.f32.mrb[0].mxu0
      %794 = vmatprep.mubr.bf16.mxu0 0
      %795 = vmatmul.mubr.bf16.gmra.mrb[0].mxu0 %v664
      %v796 = vpop.f32.mrb[0].mxu0
      %v797 = vadd.f32 %v633, %v796
      %v798 = vpop.f32.mrb[0].mxu0
      %v799 = vpop.f32.mrb[0].mxu0
      %v800 = vadd.f32 %v633, %v799
      %v801 = vpop.f32.mrb[0].mxu0
      %802 = vmatprep.mubr.bf16.mxu0 0
      %803 = vmatmul.mubr.bf16.gmra.mrb[0].mxu0 %v667
      %v804 = vpop.f32.mrb[0].mxu0
      %v805 = vadd.f32 %v633, %v804
      %v806 = vpop.f32.mrb[0].mxu0
      %v807 = vpop.f32.mrb[0].mxu0
      %v808 = vadd.f32 %v633, %v807
      %v809 = vpop.f32.mrb[0].mxu0
      %810 = vmatprep.mubr.bf16.mxu0 0
      %811 = vmatmul.mubr.bf16.gmra.mrb[0].mxu0 %v670
      %v812 = vpop.f32.mrb[0].mxu0
      %v813 = vadd.f32 %v633, %v812
      %v814 = vpop.f32.mrb[0].mxu0
      %v815 = vpop.f32.mrb[0].mxu0
      %v816 = vadd.f32 %v633, %v815
      %v817 = vpop.f32.mrb[0].mxu0
      %818 = vmatprep.mubr.bf16.mxu0 0
      %819 = vmatmul.mubr.bf16.gmra.mrb[0].mxu0 %v673
      %v820 = vpop.f32.mrb[0].mxu0
      %v821 = vadd.f32 %v633, %v820
      %v822 = vpop.f32.mrb[0].mxu0
      %v823 = vpop.f32.mrb[0].mxu0
      %v824 = vadd.f32 %v633, %v823
      %v825 = vpop.f32.mrb[0].mxu0
      %826 = vmatprep.mubr.bf16.mxu0 0
      %827 = vmatmul.mubr.bf16.gmra.mrb[0].mxu0 %v676
      %v828 = vpop.f32.mrb[0].mxu0
      %v829 = vadd.f32 %v633, %v828
      %v830 = vpop.f32.mrb[0].mxu0
      %v831 = vpop.f32.mrb[0].mxu0
      %v832 = vadd.f32 %v633, %v831
      %v833 = vpop.f32.mrb[0].mxu0
      %834 = vmatprep.mubr.bf16.mxu0 0
      %835 = vmatmul.mubr.bf16.gmra.mrb[0].mxu0 %v679
      %v836 = vpop.f32.mrb[0].mxu0
      %v837 = vadd.f32 %v633, %v836
      %v838 = vpop.f32.mrb[0].mxu0
      %v839 = vpop.f32.mrb[0].mxu0
      %v840 = vadd.f32 %v633, %v839
      %v841 = vpop.f32.mrb[0].mxu0
      %842 = vmatprep.mubr.bf16.mxu0 0
      %843 = vmatmul.mubr.bf16.gmra.mrb[0].mxu0 %v682
      %v844 = vpop.f32.mrb[0].mxu0
      %v845 = vadd.f32 %v633, %v844
      %v846 = vpop.f32.mrb[0].mxu0
      %v847 = vpop.f32.mrb[0].mxu0
      %v848 = vadd.f32 %v633, %v847
      %v849 = vpop.f32.mrb[0].mxu0
      %850 = vdwg.mxu0
      %vm851 = vcmask 31744
      %852 = vst.msk [vmem:[#allocation2] sm:$0xff] %vm851, 0.0
      %853 = vst.msk [vmem:[#allocation2 + $0x8] sm:$0xff] %vm851, 0.0
      %vm854 = vcmask 25600
      %855 = vst.msk [vmem:[#allocation2 + $0x10] sm:$0x3] %vm854, 0.0
      %856 = vst.msk [vmem:[#allocation2 + $0x18] sm:$0xff] %vm851, 0.0
      %857 = vst.msk [vmem:[#allocation2 + $0x20] sm:$0xff] %vm851, 0.0
      %858 = vst.msk [vmem:[#allocation2 + $0x28] sm:$0x3] %vm854, 0.0
      %859 = vst.msk [vmem:[#allocation2 + $0x30] sm:$0xff] %vm851, 0.0
      %860 = vst.msk [vmem:[#allocation2 + $0x38] sm:$0xff] %vm851, 0.0
      %861 = vst.msk [vmem:[#allocation2 + $0x40] sm:$0x3] %vm854, 0.0
      %862 = vst.msk [vmem:[#allocation2 + $0x48] sm:$0xff] %vm851, 0.0
      %863 = vst.msk [vmem:[#allocation2 + $0x50] sm:$0xff] %vm851, 0.0
      %864 = vst.msk [vmem:[#allocation2 + $0x58] sm:$0x3] %vm854, 0.0
      %865 = vst.msk [vmem:[#allocation2 + $0x60] sm:$0xff] %vm851, 0.0
      %866 = vst.msk [vmem:[#allocation2 + $0x68] sm:$0xff] %vm851, 0.0
      %867 = vst.msk [vmem:[#allocation2 + $0x70] sm:$0x3] %vm854, 0.0
      %868 = vst.msk [vmem:[#allocation2 + $0x78] sm:$0xff] %vm851, 0.0
      %869 = vst.msk [vmem:[#allocation2 + $0x80] sm:$0xff] %vm851, 0.0
      %870 = vst.msk [vmem:[#allocation2 + $0x88] sm:$0x3] %vm854, 0.0
      %871 = vst.msk [vmem:[#allocation2 + $0x90] sm:$0xff] %vm851, 0.0
      %872 = vst.msk [vmem:[#allocation2 + $0x98] sm:$0xff] %vm851, 0.0
      %873 = vst.msk [vmem:[#allocation2 + $0xa0] sm:$0x3] %vm854, 0.0
      %874 = vst.msk [vmem:[#allocation2 + $0xa8] sm:$0xff] %vm851, 0.0
      %875 = vst.msk [vmem:[#allocation2 + $0xb0] sm:$0xff] %vm851, 0.0
      %876 = vst.msk [vmem:[#allocation2 + $0xb8] sm:$0x3] %vm854, 0.0
      %877 = vst.msk [vmem:[#allocation2 + $0xc0] sm:$0xff] %vm851, 0.0
      %878 = vst.msk [vmem:[#allocation2 + $0xc8] sm:$0xff] %vm851, 0.0
      %879 = vst.msk [vmem:[#allocation2 + $0xd0] sm:$0x3] %vm854, 0.0
      %880 = vst.msk [vmem:[#allocation2 + $0xd8] sm:$0xff] %vm851, 0.0
      %881 = vst.msk [vmem:[#allocation2 + $0xe0] sm:$0xff] %vm851, 0.0
      %882 = vst.msk [vmem:[#allocation2 + $0xe8] sm:$0x3] %vm854, 0.0
      %883 = vst.msk [vmem:[#allocation2 + $0xf0] sm:$0xff] %vm851, 0.0
      %884 = vst.msk [vmem:[#allocation2 + $0xf8] sm:$0xff] %vm851, 0.0
      %885 = vst.msk [vmem:[#allocation2 + $0x100] sm:$0x3] %vm854, 0.0
      %886 = vst.msk [vmem:[#allocation2 + $0x108] sm:$0xff] %vm851, 0.0
      %887 = vst.msk [vmem:[#allocation2 + $0x110] sm:$0xff] %vm851, 0.0
      %888 = vst.msk [vmem:[#allocation2 + $0x118] sm:$0x3] %vm854, 0.0
      %889 = vst.msk [vmem:[#allocation2 + $0x120] sm:$0xff] %vm851, 0.0
      %890 = vst.msk [vmem:[#allocation2 + $0x128] sm:$0xff] %vm851, 0.0
      %891 = vst.msk [vmem:[#allocation2 + $0x130] sm:$0x3] %vm854, 0.0
      %892 = vst.msk [vmem:[#allocation2 + $0x138] sm:$0xff] %vm851, 0.0
      %893 = vst.msk [vmem:[#allocation2 + $0x140] sm:$0xff] %vm851, 0.0
      %894 = vst.msk [vmem:[#allocation2 + $0x148] sm:$0x3] %vm854, 0.0
      %895 = vst.msk [vmem:[#allocation2 + $0x150] sm:$0xff] %vm851, 0.0
      %896 = vst.msk [vmem:[#allocation2 + $0x158] sm:$0xff] %vm851, 0.0
      %897 = vst.msk [vmem:[#allocation2 + $0x160] sm:$0x3] %vm854, 0.0
      %898 = vst.msk [vmem:[#allocation2 + $0x168] sm:$0xff] %vm851, 0.0
      %899 = vst.msk [vmem:[#allocation2 + $0x170] sm:$0xff] %vm851, 0.0
      %900 = vst.msk [vmem:[#allocation2 + $0x178] sm:$0x3] %vm854, 0.0
      %901 = vst.msk [vmem:[#allocation2 + $0x180] sm:$0xff] %vm851, 0.0
      %902 = vst.msk [vmem:[#allocation2 + $0x188] sm:$0xff] %vm851, 0.0
      %903 = vst.msk [vmem:[#allocation2 + $0x190] sm:$0x3] %vm854, 0.0
      %904 = vst.msk [vmem:[#allocation2 + $0x198] sm:$0xff] %vm851, 0.0
      %905 = vst.msk [vmem:[#allocation2 + $0x1a0] sm:$0xff] %vm851, 0.0
      %906 = vst.msk [vmem:[#allocation2 + $0x1a8] sm:$0x3] %vm854, 0.0
      %s907 = scalar_lea.vmem [#allocation2], 24
      %908 = vst.msk [vmem:[%s907 + $0x1] sm:$0xff] %vm851, %v725
      %909 = vst.msk [vmem:[%s907 + $0x9] sm:$0xff] %vm851, %v728
      %910 = vst.msk [vmem:[%s907 + $0x19] sm:$0xff] %vm851, %v733
      %911 = vst.msk [vmem:[%s907 + $0x21] sm:$0xff] %vm851, %v736
      %912 = vst.msk [vmem:[%s907 + $0x31] sm:$0xff] %vm851, %v741
      %913 = vst.msk [vmem:[%s907 + $0x39] sm:$0xff] %vm851, %v744
      %914 = vst.msk [vmem:[%s907 + $0x49] sm:$0xff] %vm851, %v749
      %915 = vst.msk [vmem:[%s907 + $0x51] sm:$0xff] %vm851, %v752
      %916 = vst.msk [vmem:[%s907 + $0x61] sm:$0xff] %vm851, %v757
      %917 = vst.msk [vmem:[%s907 + $0x69] sm:$0xff] %vm851, %v760
      %918 = vst.msk [vmem:[%s907 + $0x79] sm:$0xff] %vm851, %v765
      %919 = vst.msk [vmem:[%s907 + $0x81] sm:$0xff] %vm851, %v768
      %920 = vst.msk [vmem:[%s907 + $0x91] sm:$0xff] %vm851, %v773
      %921 = vst.msk [vmem:[%s907 + $0x99] sm:$0xff] %vm851, %v776
      %922 = vst.msk [vmem:[%s907 + $0xa9] sm:$0xff] %vm851, %v781
      %923 = vst.msk [vmem:[%s907 + $0xb1] sm:$0xff] %vm851, %v784
      %924 = vst.msk [vmem:[%s907 + $0xc1] sm:$0xff] %vm851, %v789
      %925 = vst.msk [vmem:[%s907 + $0xc9] sm:$0xff] %vm851, %v792
      %926 = vst.msk [vmem:[%s907 + $0xd9] sm:$0xff] %vm851, %v797
      %927 = vst.msk [vmem:[%s907 + $0xe1] sm:$0xff] %vm851, %v800
      %928 = vst.msk [vmem:[%s907 + $0xf1] sm:$0xff] %vm851, %v805
      %929 = vst.msk [vmem:[%s907 + $0xf9] sm:$0xff] %vm851, %v808
      %930 = vst.msk [vmem:[%s907 + $0x109] sm:$0xff] %vm851, %v813
      %931 = vst.msk [vmem:[%s907 + $0x111] sm:$0xff] %vm851, %v816
      %932 = vst.msk [vmem:[%s907 + $0x121] sm:$0xff] %vm851, %v821
      %933 = vst.msk [vmem:[%s907 + $0x129] sm:$0xff] %vm851, %v824
      %934 = vst.msk [vmem:[%s907 + $0x139] sm:$0xff] %vm851, %v829
      %935 = vst.msk [vmem:[%s907 + $0x141] sm:$0xff] %vm851, %v832
      %936 = vst.msk [vmem:[%s907 + $0x151] sm:$0xff] %vm851, %v837
      %937 = vst.msk [vmem:[%s907 + $0x159] sm:$0xff] %vm851, %v840
      %938 = vst.msk [vmem:[%s907 + $0x169] sm:$0xff] %vm851, %v845
      %939 = vst.msk [vmem:[%s907 + $0x171] sm:$0xff] %vm851, %v848
      %v940 = vld [vmem:[#allocation2] sm:$0xff]
      %v941 = vld [vmem:[#allocation2 + $0x8] sm:$0xff]
      %v942 = vld [vmem:[#allocation2 + $0x18] sm:$0xff]
      %v943 = vld [vmem:[#allocation2 + $0x20] sm:$0xff]
      %v944 = vld [vmem:[#allocation2 + $0x30] sm:$0xff]
      %v945 = vld [vmem:[#allocation2 + $0x38] sm:$0xff]
      %v946 = vld [vmem:[#allocation2 + $0x48] sm:$0xff]
      %v947 = vld [vmem:[#allocation2 + $0x50] sm:$0xff]
      %v948 = vld [vmem:[#allocation2 + $0x60] sm:$0xff]
      %v949 = vld [vmem:[#allocation2 + $0x68] sm:$0xff]
      %v950 = vld [vmem:[#allocation2 + $0x78] sm:$0xff]
      %v951 = vld [vmem:[#allocation2 + $0x80] sm:$0xff]
      %v952 = vld [vmem:[#allocation2 + $0x90] sm:$0xff]
      %v953 = vld [vmem:[#allocation2 + $0x98] sm:$0xff]
      %v954 = vld [vmem:[#allocation2 + $0xa8] sm:$0xff]
      %v955 = vld [vmem:[#allocation2 + $0xb0] sm:$0xff]
      %v956 = vld [vmem:[#allocation2 + $0xc0] sm:$0xff]
      %v957 = vld [vmem:[#allocation2 + $0xc8] sm:$0xff]
      %v958 = vld [vmem:[#allocation2 + $0xd8] sm:$0xff]
      %v959 = vld [vmem:[#allocation2 + $0xe0] sm:$0xff]
      %v960 = vld [vmem:[#allocation2 + $0xf0] sm:$0xff]
      %v961 = vld [vmem:[#allocation2 + $0xf8] sm:$0xff]
      %v962 = vld [vmem:[#allocation2 + $0x108] sm:$0xff]
      %v963 = vld [vmem:[#allocation2 + $0x110] sm:$0xff]
      %v964 = vld [vmem:[#allocation2 + $0x120] sm:$0xff]
      %v965 = vld [vmem:[#allocation2 + $0x128] sm:$0xff]
      %v966 = vld [vmem:[#allocation2 + $0x138] sm:$0xff]
      %v967 = vld [vmem:[#allocation2 + $0x140] sm:$0xff]
      %v968 = vld [vmem:[#allocation2 + $0x150] sm:$0xff]
      %v969 = vld [vmem:[#allocation2 + $0x158] sm:$0xff]
      %v970 = vld [vmem:[#allocation2 + $0x168] sm:$0xff]
      %v971 = vld [vmem:[#allocation2 + $0x170] sm:$0xff]
      %v972 = vld [vmem:[#allocation2 + $0x1] sm:$0xff]
      %v973 = vld [vmem:[#allocation2 + $0x9] sm:$0xff]
      %v974 = vld [vmem:[#allocation2 + $0x19] sm:$0xff]
      %v975 = vld [vmem:[#allocation2 + $0x21] sm:$0xff]
      %v976 = vld [vmem:[#allocation2 + $0x31] sm:$0xff]
      %v977 = vld [vmem:[#allocation2 + $0x39] sm:$0xff]
      %v978 = vld [vmem:[#allocation2 + $0x49] sm:$0xff]
      %v979 = vld [vmem:[#allocation2 + $0x51] sm:$0xff]
      %v980 = vld [vmem:[#allocation2 + $0x61] sm:$0xff]
      %v981 = vld [vmem:[#allocation2 + $0x69] sm:$0xff]
      %v982 = vld [vmem:[#allocation2 + $0x79] sm:$0xff]
      %v983 = vld [vmem:[#allocation2 + $0x81] sm:$0xff]
      %v984 = vld [vmem:[#allocation2 + $0x91] sm:$0xff]
      %v985 = vld [vmem:[#allocation2 + $0x99] sm:$0xff]
      %v986 = vld [vmem:[#allocation2 + $0xa9] sm:$0xff]
      %v987 = vld [vmem:[#allocation2 + $0xb1] sm:$0xff]
      %v988 = vld [vmem:[#allocation2 + $0xc1] sm:$0xff]
      %v989 = vld [vmem:[#allocation2 + $0xc9] sm:$0xff]
      %v990 = vld [vmem:[#allocation2 + $0xd9] sm:$0xff]
      %v991 = vld [vmem:[#allocation2 + $0xe1] sm:$0xff]
      %v992 = vld [vmem:[#allocation2 + $0xf1] sm:$0xff]
      %v993 = vld [vmem:[#allocation2 + $0xf9] sm:$0xff]
      %v994 = vld [vmem:[#allocation2 + $0x109] sm:$0xff]
      %v995 = vld [vmem:[#allocation2 + $0x111] sm:$0xff]
      %v996 = vld [vmem:[#allocation2 + $0x121] sm:$0xff]
      %v997 = vld [vmem:[#allocation2 + $0x129] sm:$0xff]
      %v998 = vld [vmem:[#allocation2 + $0x139] sm:$0xff]
      %v999 = vld [vmem:[#allocation2 + $0x141] sm:$0xff]
      %v1000 = vld [vmem:[#allocation2 + $0x151] sm:$0xff]
      %v1001 = vld [vmem:[#allocation2 + $0x159] sm:$0xff]
      %v1002 = vld [vmem:[#allocation2 + $0x169] sm:$0xff]
      %v1003 = vld [vmem:[#allocation2 + $0x171] sm:$0xff]
      %v1004 = vld [vmem:[#allocation2 + $0x2] sm:$0xff]
      %v1005 = vld [vmem:[#allocation2 + $0xa] sm:$0xff]
      %v1006 = vld [vmem:[#allocation2 + $0x1a] sm:$0xff]
      %v1007 = vld [vmem:[#allocation2 + $0x22] sm:$0xff]
      %v1008 = vld [vmem:[#allocation2 + $0x32] sm:$0xff]
      %v1009 = vld [vmem:[#allocation2 + $0x3a] sm:$0xff]
      %v1010 = vld [vmem:[#allocation2 + $0x4a] sm:$0xff]
      %v1011 = vld [vmem:[#allocation2 + $0x52] sm:$0xff]
      %v1012 = vld [vmem:[#allocation2 + $0x62] sm:$0xff]
      %v1013 = vld [vmem:[#allocation2 + $0x6a] sm:$0xff]
      %v1014 = vld [vmem:[#allocation2 + $0x7a] sm:$0xff]
      %v1015 = vld [vmem:[#allocation2 + $0x82] sm:$0xff]
      %v1016 = vld [vmem:[#allocation2 + $0x92] sm:$0xff]
      %v1017 = vld [vmem:[#allocation2 + $0x9a] sm:$0xff]
      %v1018 = vld [vmem:[#allocation2 + $0xaa] sm:$0xff]
      %v1019 = vld [vmem:[#allocation2 + $0xb2] sm:$0xff]
      %v1020 = vld [vmem:[#allocation2 + $0xc2] sm:$0xff]
      %v1021 = vld [vmem:[#allocation2 + $0xca] sm:$0xff]
      %v1022 = vld [vmem:[#allocation2 + $0xda] sm:$0xff]
      %v1023 = vld [vmem:[#allocation2 + $0xe2] sm:$0xff]
      %v1024 = vld [vmem:[#allocation2 + $0xf2] sm:$0xff]
      %v1025 = vld [vmem:[#allocation2 + $0xfa] sm:$0xff]
      %v1026 = vld [vmem:[#allocation2 + $0x10a] sm:$0xff]
      %v1027 = vld [vmem:[#allocation2 + $0x112] sm:$0xff]
      %v1028 = vld [vmem:[#allocation2 + $0x122] sm:$0xff]
      %v1029 = vld [vmem:[#allocation2 + $0x12a] sm:$0xff]
      %v1030 = vld [vmem:[#allocation2 + $0x13a] sm:$0xff]
      %v1031 = vld [vmem:[#allocation2 + $0x142] sm:$0xff]
      %v1032 = vld [vmem:[#allocation2 + $0x152] sm:$0xff]
      %v1033 = vld [vmem:[#allocation2 + $0x15a] sm:$0xff]
      %v1034 = vld [vmem:[#allocation2 + $0x16a] sm:$0xff]
      %v1035 = vld [vmem:[#allocation2 + $0x172] sm:$0xff]
      %v1036 = vld [vmem:[%s907] sm:$0xff]
      %v1037 = vld [vmem:[%s907 + $0x8] sm:$0xff]
      %v1038 = vld [vmem:[%s907 + $0x18] sm:$0xff]
      %v1039 = vld [vmem:[%s907 + $0x20] sm:$0xff]
      %v1040 = vld [vmem:[%s907 + $0x30] sm:$0xff]
      %v1041 = vld [vmem:[%s907 + $0x38] sm:$0xff]
      %v1042 = vld [vmem:[%s907 + $0x48] sm:$0xff]
      %v1043 = vld [vmem:[%s907 + $0x50] sm:$0xff]
      %v1044 = vld [vmem:[%s907 + $0x60] sm:$0xff]
      %v1045 = vld [vmem:[%s907 + $0x68] sm:$0xff]
      %v1046 = vld [vmem:[%s907 + $0x78] sm:$0xff]
      %v1047 = vld [vmem:[%s907 + $0x80] sm:$0xff]
      %v1048 = vld [vmem:[%s907 + $0x90] sm:$0xff]
      %v1049 = vld [vmem:[%s907 + $0x98] sm:$0xff]
      %v1050 = vld [vmem:[%s907 + $0xa8] sm:$0xff]
      %v1051 = vld [vmem:[%s907 + $0xb0] sm:$0xff]
      %v1052 = vld [vmem:[%s907 + $0xc0] sm:$0xff]
      %v1053 = vld [vmem:[%s907 + $0xc8] sm:$0xff]
      %v1054 = vld [vmem:[%s907 + $0xd8] sm:$0xff]
      %v1055 = vld [vmem:[%s907 + $0xe0] sm:$0xff]
      %v1056 = vld [vmem:[%s907 + $0xf0] sm:$0xff]
      %v1057 = vld [vmem:[%s907 + $0xf8] sm:$0xff]
      %v1058 = vld [vmem:[%s907 + $0x108] sm:$0xff]
      %v1059 = vld [vmem:[%s907 + $0x110] sm:$0xff]
      %v1060 = vld [vmem:[%s907 + $0x120] sm:$0xff]
      %v1061 = vld [vmem:[%s907 + $0x128] sm:$0xff]
      %v1062 = vld [vmem:[%s907 + $0x138] sm:$0xff]
      %v1063 = vld [vmem:[%s907 + $0x140] sm:$0xff]
      %v1064 = vld [vmem:[%s907 + $0x150] sm:$0xff]
      %v1065 = vld [vmem:[%s907 + $0x158] sm:$0xff]
      %v1066 = vld [vmem:[%s907 + $0x168] sm:$0xff]
      %v1067 = vld [vmem:[%s907 + $0x170] sm:$0xff]
      %v1068 = vld [vmem:[%s907 + $0x1] sm:$0xff]
      %v1069 = vld [vmem:[%s907 + $0x9] sm:$0xff]
      %v1070 = vld [vmem:[%s907 + $0x19] sm:$0xff]
      %v1071 = vld [vmem:[%s907 + $0x21] sm:$0xff]
      %v1072 = vld [vmem:[%s907 + $0x31] sm:$0xff]
      %v1073 = vld [vmem:[%s907 + $0x39] sm:$0xff]
      %v1074 = vld [vmem:[%s907 + $0x49] sm:$0xff]
      %v1075 = vld [vmem:[%s907 + $0x51] sm:$0xff]
      %v1076 = vld [vmem:[%s907 + $0x61] sm:$0xff]
      %v1077 = vld [vmem:[%s907 + $0x69] sm:$0xff]
      %v1078 = vld [vmem:[%s907 + $0x79] sm:$0xff]
      %v1079 = vld [vmem:[%s907 + $0x81] sm:$0xff]
      %v1080 = vld [vmem:[%s907 + $0x91] sm:$0xff]
      %v1081 = vld [vmem:[%s907 + $0x99] sm:$0xff]
      %v1082 = vld [vmem:[%s907 + $0xa9] sm:$0xff]
      %v1083 = vld [vmem:[%s907 + $0xb1] sm:$0xff]
      %v1084 = vld [vmem:[%s907 + $0xc1] sm:$0xff]
      %v1085 = vld [vmem:[%s907 + $0xc9] sm:$0xff]
      %v1086 = vld [vmem:[%s907 + $0xd9] sm:$0xff]
      %v1087 = vld [vmem:[%s907 + $0xe1] sm:$0xff]
      %v1088 = vld [vmem:[%s907 + $0xf1] sm:$0xff]
      %v1089 = vld [vmem:[%s907 + $0xf9] sm:$0xff]
      %v1090 = vld [vmem:[%s907 + $0x109] sm:$0xff]
      %v1091 = vld [vmem:[%s907 + $0x111] sm:$0xff]
      %v1092 = vld [vmem:[%s907 + $0x121] sm:$0xff]
      %v1093 = vld [vmem:[%s907 + $0x129] sm:$0xff]
      %v1094 = vld [vmem:[%s907 + $0x139] sm:$0xff]
      %v1095 = vld [vmem:[%s907 + $0x141] sm:$0xff]
      %v1096 = vld [vmem:[%s907 + $0x151] sm:$0xff]
      %v1097 = vld [vmem:[%s907 + $0x159] sm:$0xff]
      %v1098 = vld [vmem:[%s907 + $0x169] sm:$0xff]
      %v1099 = vld [vmem:[%s907 + $0x171] sm:$0xff]
      %v1100 = vld [vmem:[%s907 + $0x2] sm:$0xff]
      %v1101 = vld [vmem:[%s907 + $0xa] sm:$0xff]
      %v1102 = vld [vmem:[%s907 + $0x1a] sm:$0xff]
      %v1103 = vld [vmem:[%s907 + $0x22] sm:$0xff]
      %v1104 = vld [vmem:[%s907 + $0x32] sm:$0xff]
      %v1105 = vld [vmem:[%s907 + $0x3a] sm:$0xff]
      %v1106 = vld [vmem:[%s907 + $0x4a] sm:$0xff]
      %v1107 = vld [vmem:[%s907 + $0x52] sm:$0xff]
      %v1108 = vld [vmem:[%s907 + $0x62] sm:$0xff]
      %v1109 = vld [vmem:[%s907 + $0x6a] sm:$0xff]
      %v1110 = vld [vmem:[%s907 + $0x7a] sm:$0xff]
      %v1111 = vld [vmem:[%s907 + $0x82] sm:$0xff]
      %v1112 = vld [vmem:[%s907 + $0x92] sm:$0xff]
      %v1113 = vld [vmem:[%s907 + $0x9a] sm:$0xff]
      %v1114 = vld [vmem:[%s907 + $0xaa] sm:$0xff]
      %v1115 = vld [vmem:[%s907 + $0xb2] sm:$0xff]
      %v1116 = vld [vmem:[%s907 + $0xc2] sm:$0xff]
      %v1117 = vld [vmem:[%s907 + $0xca] sm:$0xff]
      %v1118 = vld [vmem:[%s907 + $0xda] sm:$0xff]
      %v1119 = vld [vmem:[%s907 + $0xe2] sm:$0xff]
      %v1120 = vld [vmem:[%s907 + $0xf2] sm:$0xff]
      %v1121 = vld [vmem:[%s907 + $0xfa] sm:$0xff]
      %v1122 = vld [vmem:[%s907 + $0x10a] sm:$0xff]
      %v1123 = vld [vmem:[%s907 + $0x112] sm:$0xff]
      %v1124 = vld [vmem:[%s907 + $0x122] sm:$0xff]
      %v1125 = vld [vmem:[%s907 + $0x12a] sm:$0xff]
      %v1126 = vld [vmem:[%s907 + $0x13a] sm:$0xff]
      %v1127 = vld [vmem:[%s907 + $0x142] sm:$0xff]
      %v1128 = vld [vmem:[%s907 + $0x152] sm:$0xff]
      %v1129 = vld [vmem:[%s907 + $0x15a] sm:$0xff]
      %v1130 = vld [vmem:[%s907 + $0x16a] sm:$0xff]
      %v1131 = vld [vmem:[%s907 + $0x172] sm:$0xff]
      %s1132 = scalar_lea.vmem [#allocation2], 48
      %v1133 = vld [vmem:[%s1132] sm:$0xff]
      %v1134 = vld [vmem:[%s1132 + $0x8] sm:$0xff]
      %v1135 = vld [vmem:[%s1132 + $0x18] sm:$0xff]
      %v1136 = vld [vmem:[%s1132 + $0x20] sm:$0xff]
      %v1137 = vld [vmem:[%s1132 + $0x30] sm:$0xff]
      %v1138 = vld [vmem:[%s1132 + $0x38] sm:$0xff]
      %v1139 = vld [vmem:[%s1132 + $0x48] sm:$0xff]
      %v1140 = vld [vmem:[%s1132 + $0x50] sm:$0xff]
      %v1141 = vld [vmem:[%s1132 + $0x60] sm:$0xff]
      %v1142 = vld [vmem:[%s1132 + $0x68] sm:$0xff]
      %v1143 = vld [vmem:[%s1132 + $0x78] sm:$0xff]
      %v1144 = vld [vmem:[%s1132 + $0x80] sm:$0xff]
      %v1145 = vld [vmem:[%s1132 + $0x90] sm:$0xff]
      %v1146 = vld [vmem:[%s1132 + $0x98] sm:$0xff]
      %v1147 = vld [vmem:[%s1132 + $0xa8] sm:$0xff]
      %v1148 = vld [vmem:[%s1132 + $0xb0] sm:$0xff]
      %v1149 = vld [vmem:[%s1132 + $0xc0] sm:$0xff]
      %v1150 = vld [vmem:[%s1132 + $0xc8] sm:$0xff]
      %v1151 = vld [vmem:[%s1132 + $0xd8] sm:$0xff]
      %v1152 = vld [vmem:[%s1132 + $0xe0] sm:$0xff]
      %v1153 = vld [vmem:[%s1132 + $0xf0] sm:$0xff]
      %v1154 = vld [vmem:[%s1132 + $0xf8] sm:$0xff]
      %v1155 = vld [vmem:[%s1132 + $0x108] sm:$0xff]
      %v1156 = vld [vmem:[%s1132 + $0x110] sm:$0xff]
      %v1157 = vld [vmem:[%s1132 + $0x120] sm:$0xff]
      %v1158 = vld [vmem:[%s1132 + $0x128] sm:$0xff]
      %v1159 = vld [vmem:[%s1132 + $0x138] sm:$0xff]
      %v1160 = vld [vmem:[%s1132 + $0x140] sm:$0xff]
      %v1161 = vld [vmem:[%s1132 + $0x150] sm:$0xff]
      %v1162 = vld [vmem:[%s1132 + $0x158] sm:$0xff]
      %v1163 = vld [vmem:[%s1132 + $0x168] sm:$0xff]
      %v1164 = vld [vmem:[%s1132 + $0x170] sm:$0xff]
      %v1165 = vld [vmem:[%s1132 + $0x1] sm:$0xff]
      %v1166 = vld [vmem:[%s1132 + $0x9] sm:$0xff]
      %v1167 = vld [vmem:[%s1132 + $0x19] sm:$0xff]
      %v1168 = vld [vmem:[%s1132 + $0x21] sm:$0xff]
      %v1169 = vld [vmem:[%s1132 + $0x31] sm:$0xff]
      %v1170 = vld [vmem:[%s1132 + $0x39] sm:$0xff]
      %v1171 = vld [vmem:[%s1132 + $0x49] sm:$0xff]
      %v1172 = vld [vmem:[%s1132 + $0x51] sm:$0xff]
      %v1173 = vld [vmem:[%s1132 + $0x61] sm:$0xff]
      %v1174 = vld [vmem:[%s1132 + $0x69] sm:$0xff]
      %v1175 = vld [vmem:[%s1132 + $0x79] sm:$0xff]
      %v1176 = vld [vmem:[%s1132 + $0x81] sm:$0xff]
      %v1177 = vld [vmem:[%s1132 + $0x91] sm:$0xff]
      %v1178 = vld [vmem:[%s1132 + $0x99] sm:$0xff]
      %v1179 = vld [vmem:[%s1132 + $0xa9] sm:$0xff]
      %v1180 = vld [vmem:[%s1132 + $0xb1] sm:$0xff]
      %v1181 = vld [vmem:[%s1132 + $0xc1] sm:$0xff]
      %v1182 = vld [vmem:[%s1132 + $0xc9] sm:$0xff]
      %v1183 = vld [vmem:[%s1132 + $0xd9] sm:$0xff]
      %v1184 = vld [vmem:[%s1132 + $0xe1] sm:$0xff]
      %v1185 = vld [vmem:[%s1132 + $0xf1] sm:$0xff]
      %v1186 = vld [vmem:[%s1132 + $0xf9] sm:$0xff]
      %v1187 = vld [vmem:[%s1132 + $0x109] sm:$0xff]
      %v1188 = vld [vmem:[%s1132 + $0x111] sm:$0xff]
      %v1189 = vld [vmem:[%s1132 + $0x121] sm:$0xff]
      %v1190 = vld [vmem:[%s1132 + $0x129] sm:$0xff]
      %v1191 = vld [vmem:[%s1132 + $0x139] sm:$0xff]
      %v1192 = vld [vmem:[%s1132 + $0x141] sm:$0xff]
      %v1193 = vld [vmem:[%s1132 + $0x151] sm:$0xff]
      %v1194 = vld [vmem:[%s1132 + $0x159] sm:$0xff]
      %v1195 = vld [vmem:[%s1132 + $0x169] sm:$0xff]
      %v1196 = vld [vmem:[%s1132 + $0x171] sm:$0xff]
      %v1197 = vld [vmem:[%s1132 + $0x2] sm:$0xff]
      %v1198 = vld [vmem:[%s1132 + $0xa] sm:$0xff]
      %v1199 = vld [vmem:[%s1132 + $0x1a] sm:$0xff]
      %v1200 = vld [vmem:[%s1132 + $0x22] sm:$0xff]
      %v1201 = vld [vmem:[%s1132 + $0x32] sm:$0xff]
      %v1202 = vld [vmem:[%s1132 + $0x3a] sm:$0xff]
      %v1203 = vld [vmem:[%s1132 + $0x4a] sm:$0xff]
      %v1204 = vld [vmem:[%s1132 + $0x52] sm:$0xff]
      %v1205 = vld [vmem:[%s1132 + $0x62] sm:$0xff]
      %v1206 = vld [vmem:[%s1132 + $0x6a] sm:$0xff]
      %v1207 = vld [vmem:[%s1132 + $0x7a] sm:$0xff]
      %v1208 = vld [vmem:[%s1132 + $0x82] sm:$0xff]
      %v1209 = vld [vmem:[%s1132 + $0x92] sm:$0xff]
      %v1210 = vld [vmem:[%s1132 + $0x9a] sm:$0xff]
      %v1211 = vld [vmem:[%s1132 + $0xaa] sm:$0xff]
      %v1212 = vld [vmem:[%s1132 + $0xb2] sm:$0xff]
      %v1213 = vld [vmem:[%s1132 + $0xc2] sm:$0xff]
      %v1214 = vld [vmem:[%s1132 + $0xca] sm:$0xff]
      %v1215 = vld [vmem:[%s1132 + $0xda] sm:$0xff]
      %v1216 = vld [vmem:[%s1132 + $0xe2] sm:$0xff]
      %v1217 = vld [vmem:[%s1132 + $0xf2] sm:$0xff]
      %v1218 = vld [vmem:[%s1132 + $0xfa] sm:$0xff]
      %v1219 = vld [vmem:[%s1132 + $0x10a] sm:$0xff]
      %v1220 = vld [vmem:[%s1132 + $0x112] sm:$0xff]
      %v1221 = vld [vmem:[%s1132 + $0x122] sm:$0xff]
      %v1222 = vld [vmem:[%s1132 + $0x12a] sm:$0xff]
      %v1223 = vld [vmem:[%s1132 + $0x13a] sm:$0xff]
      %v1224 = vld [vmem:[%s1132 + $0x142] sm:$0xff]
      %v1225 = vld [vmem:[%s1132 + $0x152] sm:$0xff]
      %v1226 = vld [vmem:[%s1132 + $0x15a] sm:$0xff]
      %v1227 = vld [vmem:[%s1132 + $0x16a] sm:$0xff]
      %v1228 = vld [vmem:[%s1132 + $0x172] sm:$0xff]
      %1261 = vrot.lane.b32.xlu0 %v972, 4
      %v1262 = vpop.permute.xlu0 %1261
      %1263 = vrot.lane.b32.xlu0 %v973, 4
      %v1264 = vpop.permute.xlu0 %1263
      %1265 = vrot.lane.b32.xlu0 %v974, 4
      %v1266 = vpop.permute.xlu0 %1265
      %1267 = vrot.lane.b32.xlu0 %v975, 4
      %v1268 = vpop.permute.xlu0 %1267
      %1269 = vrot.lane.b32.xlu0 %v976, 4
      %v1270 = vpop.permute.xlu0 %1269
      %1271 = vrot.lane.b32.xlu0 %v977, 4
      %v1272 = vpop.permute.xlu0 %1271
      %1273 = vrot.lane.b32.xlu0 %v978, 4
      %v1274 = vpop.permute.xlu0 %1273
      %1275 = vrot.lane.b32.xlu0 %v979, 4
      %v1276 = vpop.permute.xlu0 %1275
      %1277 = vrot.lane.b32.xlu0 %v980, 4
      %v1278 = vpop.permute.xlu0 %1277
      %1279 = vrot.lane.b32.xlu0 %v981, 4
      %v1280 = vpop.permute.xlu0 %1279
      %1281 = vrot.lane.b32.xlu0 %v982, 4
      %v1282 = vpop.permute.xlu0 %1281
      %1283 = vrot.lane.b32.xlu0 %v983, 4
      %v1284 = vpop.permute.xlu0 %1283
      %1285 = vrot.lane.b32.xlu0 %v984, 4
      %v1286 = vpop.permute.xlu0 %1285
      %1287 = vrot.lane.b32.xlu0 %v985, 4
      %v1288 = vpop.permute.xlu0 %1287
      %1289 = vrot.lane.b32.xlu0 %v986, 4
      %v1290 = vpop.permute.xlu0 %1289
      %1291 = vrot.lane.b32.xlu0 %v987, 4
      %v1292 = vpop.permute.xlu0 %1291
      %1293 = vrot.lane.b32.xlu0 %v988, 4
      %v1294 = vpop.permute.xlu0 %1293
      %1295 = vrot.lane.b32.xlu0 %v989, 4
      %v1296 = vpop.permute.xlu0 %1295
      %1297 = vrot.lane.b32.xlu0 %v990, 4
      %v1298 = vpop.permute.xlu0 %1297
      %1299 = vrot.lane.b32.xlu0 %v991, 4
      %v1300 = vpop.permute.xlu0 %1299
      %1301 = vrot.lane.b32.xlu0 %v992, 4
      %v1302 = vpop.permute.xlu0 %1301
      %1303 = vrot.lane.b32.xlu0 %v993, 4
      %v1304 = vpop.permute.xlu0 %1303
      %1305 = vrot.lane.b32.xlu0 %v994, 4
      %v1306 = vpop.permute.xlu0 %1305
      %1307 = vrot.lane.b32.xlu0 %v995, 4
      %v1308 = vpop.permute.xlu0 %1307
      %1309 = vrot.lane.b32.xlu0 %v996, 4
      %v1310 = vpop.permute.xlu0 %1309
      %1311 = vrot.lane.b32.xlu0 %v997, 4
      %v1312 = vpop.permute.xlu0 %1311
      %1313 = vrot.lane.b32.xlu0 %v998, 4
      %v1314 = vpop.permute.xlu0 %1313
      %1315 = vrot.lane.b32.xlu0 %v999, 4
      %v1316 = vpop.permute.xlu0 %1315
      %1317 = vrot.lane.b32.xlu0 %v1000, 4
      %v1318 = vpop.permute.xlu0 %1317
      %1319 = vrot.lane.b32.xlu0 %v1001, 4
      %v1320 = vpop.permute.xlu0 %1319
      %1321 = vrot.lane.b32.xlu0 %v1002, 4
      %v1322 = vpop.permute.xlu0 %1321
      %1323 = vrot.lane.b32.xlu0 %v1003, 4
      %v1324 = vpop.permute.xlu0 %1323
      %1389 = vrot.lane.b32.xlu0 %v1004, 8
      %v1390 = vpop.permute.xlu0 %1389
      %1391 = vrot.lane.b32.xlu0 %v1005, 8
      %v1392 = vpop.permute.xlu0 %1391
      %1393 = vrot.lane.b32.xlu0 %v1006, 8
      %v1394 = vpop.permute.xlu0 %1393
      %1395 = vrot.lane.b32.xlu0 %v1007, 8
      %v1396 = vpop.permute.xlu0 %1395
      %1397 = vrot.lane.b32.xlu0 %v1008, 8
      %v1398 = vpop.permute.xlu0 %1397
      %1399 = vrot.lane.b32.xlu0 %v1009, 8
      %v1400 = vpop.permute.xlu0 %1399
      %1401 = vrot.lane.b32.xlu0 %v1010, 8
      %v1402 = vpop.permute.xlu0 %1401
      %1403 = vrot.lane.b32.xlu0 %v1011, 8
      %v1404 = vpop.permute.xlu0 %1403
      %1405 = vrot.lane.b32.xlu0 %v1012, 8
      %v1406 = vpop.permute.xlu0 %1405
      %1407 = vrot.lane.b32.xlu0 %v1013, 8
      %v1408 = vpop.permute.xlu0 %1407
      %1409 = vrot.lane.b32.xlu0 %v1014, 8
      %v1410 = vpop.permute.xlu0 %1409
      %1411 = vrot.lane.b32.xlu0 %v1015, 8
      %v1412 = vpop.permute.xlu0 %1411
      %1413 = vrot.lane.b32.xlu0 %v1016, 8
      %v1414 = vpop.permute.xlu0 %1413
      %1415 = vrot.lane.b32.xlu0 %v1017, 8
      %v1416 = vpop.permute.xlu0 %1415
      %1417 = vrot.lane.b32.xlu0 %v1018, 8
      %v1418 = vpop.permute.xlu0 %1417
      %1419 = vrot.lane.b32.xlu0 %v1019, 8
      %v1420 = vpop.permute.xlu0 %1419
      %1421 = vrot.lane.b32.xlu0 %v1020, 8
      %v1422 = vpop.permute.xlu0 %1421
      %1423 = vrot.lane.b32.xlu0 %v1021, 8
      %v1424 = vpop.permute.xlu0 %1423
      %1425 = vrot.lane.b32.xlu0 %v1022, 8
      %v1426 = vpop.permute.xlu0 %1425
      %1427 = vrot.lane.b32.xlu0 %v1023, 8
      %v1428 = vpop.permute.xlu0 %1427
      %1429 = vrot.lane.b32.xlu0 %v1024, 8
      %v1430 = vpop.permute.xlu0 %1429
      %1431 = vrot.lane.b32.xlu0 %v1025, 8
      %v1432 = vpop.permute.xlu0 %1431
      %1433 = vrot.lane.b32.xlu0 %v1026, 8
      %v1434 = vpop.permute.xlu0 %1433
      %1435 = vrot.lane.b32.xlu0 %v1027, 8
      %v1436 = vpop.permute.xlu0 %1435
      %1437 = vrot.lane.b32.xlu0 %v1028, 8
      %v1438 = vpop.permute.xlu0 %1437
      %1439 = vrot.lane.b32.xlu0 %v1029, 8
      %v1440 = vpop.permute.xlu0 %1439
      %1441 = vrot.lane.b32.xlu0 %v1030, 8
      %v1442 = vpop.permute.xlu0 %1441
      %1443 = vrot.lane.b32.xlu0 %v1031, 8
      %v1444 = vpop.permute.xlu0 %1443
      %1445 = vrot.lane.b32.xlu0 %v1032, 8
      %v1446 = vpop.permute.xlu0 %1445
      %1447 = vrot.lane.b32.xlu0 %v1033, 8
      %v1448 = vpop.permute.xlu0 %1447
      %1449 = vrot.lane.b32.xlu0 %v1034, 8
      %v1450 = vpop.permute.xlu0 %1449
      %1451 = vrot.lane.b32.xlu0 %v1035, 8
      %v1452 = vpop.permute.xlu0 %1451
      %1517 = vrot.lane.b32.xlu0 %v1036, 12
      %v1518 = vpop.permute.xlu0 %1517
      %1519 = vrot.lane.b32.xlu0 %v1037, 12
      %v1520 = vpop.permute.xlu0 %1519
      %1521 = vrot.lane.b32.xlu0 %v1038, 12
      %v1522 = vpop.permute.xlu0 %1521
      %1523 = vrot.lane.b32.xlu0 %v1039, 12
      %v1524 = vpop.permute.xlu0 %1523
      %1525 = vrot.lane.b32.xlu0 %v1040, 12
      %v1526 = vpop.permute.xlu0 %1525
      %1527 = vrot.lane.b32.xlu0 %v1041, 12
      %v1528 = vpop.permute.xlu0 %1527
      %1529 = vrot.lane.b32.xlu0 %v1042, 12
      %v1530 = vpop.permute.xlu0 %1529
      %1531 = vrot.lane.b32.xlu0 %v1043, 12
      %v1532 = vpop.permute.xlu0 %1531
      %1533 = vrot.lane.b32.xlu0 %v1044, 12
      %v1534 = vpop.permute.xlu0 %1533
      %1535 = vrot.lane.b32.xlu0 %v1045, 12
      %v1536 = vpop.permute.xlu0 %1535
      %1537 = vrot.lane.b32.xlu0 %v1046, 12
      %v1538 = vpop.permute.xlu0 %1537
      %1539 = vrot.lane.b32.xlu0 %v1047, 12
      %v1540 = vpop.permute.xlu0 %1539
      %1541 = vrot.lane.b32.xlu0 %v1048, 12
      %v1542 = vpop.permute.xlu0 %1541
      %1543 = vrot.lane.b32.xlu0 %v1049, 12
      %v1544 = vpop.permute.xlu0 %1543
      %1545 = vrot.lane.b32.xlu0 %v1050, 12
      %v1546 = vpop.permute.xlu0 %1545
      %1547 = vrot.lane.b32.xlu0 %v1051, 12
      %v1548 = vpop.permute.xlu0 %1547
      %1549 = vrot.lane.b32.xlu0 %v1052, 12
      %v1550 = vpop.permute.xlu0 %1549
      %1551 = vrot.lane.b32.xlu0 %v1053, 12
      %v1552 = vpop.permute.xlu0 %1551
      %1553 = vrot.lane.b32.xlu0 %v1054, 12
      %v1554 = vpop.permute.xlu0 %1553
      %1555 = vrot.lane.b32.xlu0 %v1055, 12
      %v1556 = vpop.permute.xlu0 %1555
      %1557 = vrot.lane.b32.xlu0 %v1056, 12
      %v1558 = vpop.permute.xlu0 %1557
      %1559 = vrot.lane.b32.xlu0 %v1057, 12
      %v1560 = vpop.permute.xlu0 %1559
      %1561 = vrot.lane.b32.xlu0 %v1058, 12
      %v1562 = vpop.permute.xlu0 %1561
      %1563 = vrot.lane.b32.xlu0 %v1059, 12
      %v1564 = vpop.permute.xlu0 %1563
      %1565 = vrot.lane.b32.xlu0 %v1060, 12
      %v1566 = vpop.permute.xlu0 %1565
      %1567 = vrot.lane.b32.xlu0 %v1061, 12
      %v1568 = vpop.permute.xlu0 %1567
      %1569 = vrot.lane.b32.xlu0 %v1062, 12
      %v1570 = vpop.permute.xlu0 %1569
      %1571 = vrot.lane.b32.xlu0 %v1063, 12
      %v1572 = vpop.permute.xlu0 %1571
      %1573 = vrot.lane.b32.xlu0 %v1064, 12
      %v1574 = vpop.permute.xlu0 %1573
      %1575 = vrot.lane.b32.xlu0 %v1065, 12
      %v1576 = vpop.permute.xlu0 %1575
      %1577 = vrot.lane.b32.xlu0 %v1066, 12
      %v1578 = vpop.permute.xlu0 %1577
      %1579 = vrot.lane.b32.xlu0 %v1067, 12
      %v1580 = vpop.permute.xlu0 %1579
      %1645 = vrot.lane.b32.xlu0 %v1068, 16
      %v1646 = vpop.permute.xlu0 %1645
      %1647 = vrot.lane.b32.xlu0 %v1069, 16
      %v1648 = vpop.permute.xlu0 %1647
      %1649 = vrot.lane.b32.xlu0 %v1070, 16
      %v1650 = vpop.permute.xlu0 %1649
      %1651 = vrot.lane.b32.xlu0 %v1071, 16
      %v1652 = vpop.permute.xlu0 %1651
      %1653 = vrot.lane.b32.xlu0 %v1072, 16
      %v1654 = vpop.permute.xlu0 %1653
      %1655 = vrot.lane.b32.xlu0 %v1073, 16
      %v1656 = vpop.permute.xlu0 %1655
      %1657 = vrot.lane.b32.xlu0 %v1074, 16
      %v1658 = vpop.permute.xlu0 %1657
      %1659 = vrot.lane.b32.xlu0 %v1075, 16
      %v1660 = vpop.permute.xlu0 %1659
      %1661 = vrot.lane.b32.xlu0 %v1076, 16
      %v1662 = vpop.permute.xlu0 %1661
      %1663 = vrot.lane.b32.xlu0 %v1077, 16
      %v1664 = vpop.permute.xlu0 %1663
      %1665 = vrot.lane.b32.xlu0 %v1078, 16
      %v1666 = vpop.permute.xlu0 %1665
      %1667 = vrot.lane.b32.xlu0 %v1079, 16
      %v1668 = vpop.permute.xlu0 %1667
      %1669 = vrot.lane.b32.xlu0 %v1080, 16
      %v1670 = vpop.permute.xlu0 %1669
      %1671 = vrot.lane.b32.xlu0 %v1081, 16
      %v1672 = vpop.permute.xlu0 %1671
      %1673 = vrot.lane.b32.xlu0 %v1082, 16
      %v1674 = vpop.permute.xlu0 %1673
      %1675 = vrot.lane.b32.xlu0 %v1083, 16
      %v1676 = vpop.permute.xlu0 %1675
      %1677 = vrot.lane.b32.xlu0 %v1084, 16
      %v1678 = vpop.permute.xlu0 %1677
      %1679 = vrot.lane.b32.xlu0 %v1085, 16
      %v1680 = vpop.permute.xlu0 %1679
      %1681 = vrot.lane.b32.xlu0 %v1086, 16
      %v1682 = vpop.permute.xlu0 %1681
      %1683 = vrot.lane.b32.xlu0 %v1087, 16
      %v1684 = vpop.permute.xlu0 %1683
      %1685 = vrot.lane.b32.xlu0 %v1088, 16
      %v1686 = vpop.permute.xlu0 %1685
      %1687 = vrot.lane.b32.xlu0 %v1089, 16
      %v1688 = vpop.permute.xlu0 %1687
      %1689 = vrot.lane.b32.xlu0 %v1090, 16
      %v1690 = vpop.permute.xlu0 %1689
      %1691 = vrot.lane.b32.xlu0 %v1091, 16
      %v1692 = vpop.permute.xlu0 %1691
      %1693 = vrot.lane.b32.xlu0 %v1092, 16
      %v1694 = vpop.permute.xlu0 %1693
      %1695 = vrot.lane.b32.xlu0 %v1093, 16
      %v1696 = vpop.permute.xlu0 %1695
      %1697 = vrot.lane.b32.xlu0 %v1094, 16
      %v1698 = vpop.permute.xlu0 %1697
      %1699 = vrot.lane.b32.xlu0 %v1095, 16
      %v1700 = vpop.permute.xlu0 %1699
      %1701 = vrot.lane.b32.xlu0 %v1096, 16
      %v1702 = vpop.permute.xlu0 %1701
      %1703 = vrot.lane.b32.xlu0 %v1097, 16
      %v1704 = vpop.permute.xlu0 %1703
      %1705 = vrot.lane.b32.xlu0 %v1098, 16
      %v1706 = vpop.permute.xlu0 %1705
      %1707 = vrot.lane.b32.xlu0 %v1099, 16
      %v1708 = vpop.permute.xlu0 %1707
      %1773 = vrot.lane.b32.xlu0 %v1100, 20
      %v1774 = vpop.permute.xlu0 %1773
      %1775 = vrot.lane.b32.xlu0 %v1101, 20
      %v1776 = vpop.permute.xlu0 %1775
      %1777 = vrot.lane.b32.xlu0 %v1102, 20
      %v1778 = vpop.permute.xlu0 %1777
      %1779 = vrot.lane.b32.xlu0 %v1103, 20
      %v1780 = vpop.permute.xlu0 %1779
      %1781 = vrot.lane.b32.xlu0 %v1104, 20
      %v1782 = vpop.permute.xlu0 %1781
      %1783 = vrot.lane.b32.xlu0 %v1105, 20
      %v1784 = vpop.permute.xlu0 %1783
      %1785 = vrot.lane.b32.xlu0 %v1106, 20
      %v1786 = vpop.permute.xlu0 %1785
      %1787 = vrot.lane.b32.xlu0 %v1107, 20
      %v1788 = vpop.permute.xlu0 %1787
      %1789 = vrot.lane.b32.xlu0 %v1108, 20
      %v1790 = vpop.permute.xlu0 %1789
      %1791 = vrot.lane.b32.xlu0 %v1109, 20
      %v1792 = vpop.permute.xlu0 %1791
      %1793 = vrot.lane.b32.xlu0 %v1110, 20
      %v1794 = vpop.permute.xlu0 %1793
      %1795 = vrot.lane.b32.xlu0 %v1111, 20
      %v1796 = vpop.permute.xlu0 %1795
      %1797 = vrot.lane.b32.xlu0 %v1112, 20
      %v1798 = vpop.permute.xlu0 %1797
      %1799 = vrot.lane.b32.xlu0 %v1113, 20
      %v1800 = vpop.permute.xlu0 %1799
      %1801 = vrot.lane.b32.xlu0 %v1114, 20
      %v1802 = vpop.permute.xlu0 %1801
      %1803 = vrot.lane.b32.xlu0 %v1115, 20
      %v1804 = vpop.permute.xlu0 %1803
      %1805 = vrot.lane.b32.xlu0 %v1116, 20
      %v1806 = vpop.permute.xlu0 %1805
      %1807 = vrot.lane.b32.xlu0 %v1117, 20
      %v1808 = vpop.permute.xlu0 %1807
      %1809 = vrot.lane.b32.xlu0 %v1118, 20
      %v1810 = vpop.permute.xlu0 %1809
      %1811 = vrot.lane.b32.xlu0 %v1119, 20
      %v1812 = vpop.permute.xlu0 %1811
      %1813 = vrot.lane.b32.xlu0 %v1120, 20
      %v1814 = vpop.permute.xlu0 %1813
      %1815 = vrot.lane.b32.xlu0 %v1121, 20
      %v1816 = vpop.permute.xlu0 %1815
      %1817 = vrot.lane.b32.xlu0 %v1122, 20
      %v1818 = vpop.permute.xlu0 %1817
      %1819 = vrot.lane.b32.xlu0 %v1123, 20
      %v1820 = vpop.permute.xlu0 %1819
      %1821 = vrot.lane.b32.xlu0 %v1124, 20
      %v1822 = vpop.permute.xlu0 %1821
      %1823 = vrot.lane.b32.xlu0 %v1125, 20
      %v1824 = vpop.permute.xlu0 %1823
      %1825 = vrot.lane.b32.xlu0 %v1126, 20
      %v1826 = vpop.permute.xlu0 %1825
      %1827 = vrot.lane.b32.xlu0 %v1127, 20
      %v1828 = vpop.permute.xlu0 %1827
      %1829 = vrot.lane.b32.xlu0 %v1128, 20
      %v1830 = vpop.permute.xlu0 %1829
      %1831 = vrot.lane.b32.xlu0 %v1129, 20
      %v1832 = vpop.permute.xlu0 %1831
      %1833 = vrot.lane.b32.xlu0 %v1130, 20
      %v1834 = vpop.permute.xlu0 %1833
      %1835 = vrot.lane.b32.xlu0 %v1131, 20
      %v1836 = vpop.permute.xlu0 %1835
      %1901 = vrot.lane.b32.xlu0 %v1133, 24
      %v1902 = vpop.permute.xlu0 %1901
      %1903 = vrot.lane.b32.xlu0 %v1134, 24
      %v1904 = vpop.permute.xlu0 %1903
      %1905 = vrot.lane.b32.xlu0 %v1135, 24
      %v1906 = vpop.permute.xlu0 %1905
      %1907 = vrot.lane.b32.xlu0 %v1136, 24
      %v1908 = vpop.permute.xlu0 %1907
      %1909 = vrot.lane.b32.xlu0 %v1137, 24
      %v1910 = vpop.permute.xlu0 %1909
      %1911 = vrot.lane.b32.xlu0 %v1138, 24
      %v1912 = vpop.permute.xlu0 %1911
      %1913 = vrot.lane.b32.xlu0 %v1139, 24
      %v1914 = vpop.permute.xlu0 %1913
      %1915 = vrot.lane.b32.xlu0 %v1140, 24
      %v1916 = vpop.permute.xlu0 %1915
      %1917 = vrot.lane.b32.xlu0 %v1141, 24
      %v1918 = vpop.permute.xlu0 %1917
      %1919 = vrot.lane.b32.xlu0 %v1142, 24
      %v1920 = vpop.permute.xlu0 %1919
      %1921 = vrot.lane.b32.xlu0 %v1143, 24
      %v1922 = vpop.permute.xlu0 %1921
      %1923 = vrot.lane.b32.xlu0 %v1144, 24
      %v1924 = vpop.permute.xlu0 %1923
      %1925 = vrot.lane.b32.xlu0 %v1145, 24
      %v1926 = vpop.permute.xlu0 %1925
      %1927 = vrot.lane.b32.xlu0 %v1146, 24
      %v1928 = vpop.permute.xlu0 %1927
      %1929 = vrot.lane.b32.xlu0 %v1147, 24
      %v1930 = vpop.permute.xlu0 %1929
      %1931 = vrot.lane.b32.xlu0 %v1148, 24
      %v1932 = vpop.permute.xlu0 %1931
      %1933 = vrot.lane.b32.xlu0 %v1149, 24
      %v1934 = vpop.permute.xlu0 %1933
      %1935 = vrot.lane.b32.xlu0 %v1150, 24
      %v1936 = vpop.permute.xlu0 %1935
      %1937 = vrot.lane.b32.xlu0 %v1151, 24
      %v1938 = vpop.permute.xlu0 %1937
      %1939 = vrot.lane.b32.xlu0 %v1152, 24
      %v1940 = vpop.permute.xlu0 %1939
      %1941 = vrot.lane.b32.xlu0 %v1153, 24
      %v1942 = vpop.permute.xlu0 %1941
      %1943 = vrot.lane.b32.xlu0 %v1154, 24
      %v1944 = vpop.permute.xlu0 %1943
      %1945 = vrot.lane.b32.xlu0 %v1155, 24
      %v1946 = vpop.permute.xlu0 %1945
      %1947 = vrot.lane.b32.xlu0 %v1156, 24
      %v1948 = vpop.permute.xlu0 %1947
      %1949 = vrot.lane.b32.xlu0 %v1157, 24
      %v1950 = vpop.permute.xlu0 %1949
      %1951 = vrot.lane.b32.xlu0 %v1158, 24
      %v1952 = vpop.permute.xlu0 %1951
      %1953 = vrot.lane.b32.xlu0 %v1159, 24
      %v1954 = vpop.permute.xlu0 %1953
      %1955 = vrot.lane.b32.xlu0 %v1160, 24
      %v1956 = vpop.permute.xlu0 %1955
      %1957 = vrot.lane.b32.xlu0 %v1161, 24
      %v1958 = vpop.permute.xlu0 %1957
      %1959 = vrot.lane.b32.xlu0 %v1162, 24
      %v1960 = vpop.permute.xlu0 %1959
      %1961 = vrot.lane.b32.xlu0 %v1163, 24
      %v1962 = vpop.permute.xlu0 %1961
      %1963 = vrot.lane.b32.xlu0 %v1164, 24
      %v1964 = vpop.permute.xlu0 %1963
      %2029 = vrot.lane.b32.xlu0 %v1165, 28
      %v2030 = vpop.permute.xlu0 %2029
      %2031 = vrot.lane.b32.xlu0 %v1166, 28
      %v2032 = vpop.permute.xlu0 %2031
      %2033 = vrot.lane.b32.xlu0 %v1167, 28
      %v2034 = vpop.permute.xlu0 %2033
      %2035 = vrot.lane.b32.xlu0 %v1168, 28
      %v2036 = vpop.permute.xlu0 %2035
      %2037 = vrot.lane.b32.xlu0 %v1169, 28
      %v2038 = vpop.permute.xlu0 %2037
      %2039 = vrot.lane.b32.xlu0 %v1170, 28
      %v2040 = vpop.permute.xlu0 %2039
      %2041 = vrot.lane.b32.xlu0 %v1171, 28
      %v2042 = vpop.permute.xlu0 %2041
      %2043 = vrot.lane.b32.xlu0 %v1172, 28
      %v2044 = vpop.permute.xlu0 %2043
      %2045 = vrot.lane.b32.xlu0 %v1173, 28
      %v2046 = vpop.permute.xlu0 %2045
      %2047 = vrot.lane.b32.xlu0 %v1174, 28
      %v2048 = vpop.permute.xlu0 %2047
      %2049 = vrot.lane.b32.xlu0 %v1175, 28
      %v2050 = vpop.permute.xlu0 %2049
      %2051 = vrot.lane.b32.xlu0 %v1176, 28
      %v2052 = vpop.permute.xlu0 %2051
      %2053 = vrot.lane.b32.xlu0 %v1177, 28
      %v2054 = vpop.permute.xlu0 %2053
      %2055 = vrot.lane.b32.xlu0 %v1178, 28
      %v2056 = vpop.permute.xlu0 %2055
      %2057 = vrot.lane.b32.xlu0 %v1179, 28
      %v2058 = vpop.permute.xlu0 %2057
      %2059 = vrot.lane.b32.xlu0 %v1180, 28
      %v2060 = vpop.permute.xlu0 %2059
      %2061 = vrot.lane.b32.xlu0 %v1181, 28
      %v2062 = vpop.permute.xlu0 %2061
      %2063 = vrot.lane.b32.xlu0 %v1182, 28
      %v2064 = vpop.permute.xlu0 %2063
      %2065 = vrot.lane.b32.xlu0 %v1183, 28
      %v2066 = vpop.permute.xlu0 %2065
      %2067 = vrot.lane.b32.xlu0 %v1184, 28
      %v2068 = vpop.permute.xlu0 %2067
      %2069 = vrot.lane.b32.xlu0 %v1185, 28
      %v2070 = vpop.permute.xlu0 %2069
      %2071 = vrot.lane.b32.xlu0 %v1186, 28
      %v2072 = vpop.permute.xlu0 %2071
      %2073 = vrot.lane.b32.xlu0 %v1187, 28
      %v2074 = vpop.permute.xlu0 %2073
      %2075 = vrot.lane.b32.xlu0 %v1188, 28
      %v2076 = vpop.permute.xlu0 %2075
      %2077 = vrot.lane.b32.xlu0 %v1189, 28
      %v2078 = vpop.permute.xlu0 %2077
      %2079 = vrot.lane.b32.xlu0 %v1190, 28
      %v2080 = vpop.permute.xlu0 %2079
      %2081 = vrot.lane.b32.xlu0 %v1191, 28
      %v2082 = vpop.permute.xlu0 %2081
      %2083 = vrot.lane.b32.xlu0 %v1192, 28
      %v2084 = vpop.permute.xlu0 %2083
      %2085 = vrot.lane.b32.xlu0 %v1193, 28
      %v2086 = vpop.permute.xlu0 %2085
      %2087 = vrot.lane.b32.xlu0 %v1194, 28
      %v2088 = vpop.permute.xlu0 %2087
      %2089 = vrot.lane.b32.xlu0 %v1195, 28
      %v2090 = vpop.permute.xlu0 %2089
      %2091 = vrot.lane.b32.xlu0 %v1196, 28
      %v2092 = vpop.permute.xlu0 %2091
      %2157 = vrot.lane.b32.xlu0 %v1197, 32
      %v2158 = vpop.permute.xlu0 %2157
      %2159 = vrot.lane.b32.xlu0 %v1198, 32
      %v2160 = vpop.permute.xlu0 %2159
      %2161 = vrot.lane.b32.xlu0 %v1199, 32
      %v2162 = vpop.permute.xlu0 %2161
      %2163 = vrot.lane.b32.xlu0 %v1200, 32
      %v2164 = vpop.permute.xlu0 %2163
      %2165 = vrot.lane.b32.xlu0 %v1201, 32
      %v2166 = vpop.permute.xlu0 %2165
      %2167 = vrot.lane.b32.xlu0 %v1202, 32
      %v2168 = vpop.permute.xlu0 %2167
      %2169 = vrot.lane.b32.xlu0 %v1203, 32
      %v2170 = vpop.permute.xlu0 %2169
      %2171 = vrot.lane.b32.xlu0 %v1204, 32
      %v2172 = vpop.permute.xlu0 %2171
      %2173 = vrot.lane.b32.xlu0 %v1205, 32
      %v2174 = vpop.permute.xlu0 %2173
      %2175 = vrot.lane.b32.xlu0 %v1206, 32
      %v2176 = vpop.permute.xlu0 %2175
      %2177 = vrot.lane.b32.xlu0 %v1207, 32
      %v2178 = vpop.permute.xlu0 %2177
      %2179 = vrot.lane.b32.xlu0 %v1208, 32
      %v2180 = vpop.permute.xlu0 %2179
      %2181 = vrot.lane.b32.xlu0 %v1209, 32
      %v2182 = vpop.permute.xlu0 %2181
      %2183 = vrot.lane.b32.xlu0 %v1210, 32
      %v2184 = vpop.permute.xlu0 %2183
      %2185 = vrot.lane.b32.xlu0 %v1211, 32
      %v2186 = vpop.permute.xlu0 %2185
      %2187 = vrot.lane.b32.xlu0 %v1212, 32
      %v2188 = vpop.permute.xlu0 %2187
      %2189 = vrot.lane.b32.xlu0 %v1213, 32
      %v2190 = vpop.permute.xlu0 %2189
      %2191 = vrot.lane.b32.xlu0 %v1214, 32
      %v2192 = vpop.permute.xlu0 %2191
      %2193 = vrot.lane.b32.xlu0 %v1215, 32
      %v2194 = vpop.permute.xlu0 %2193
      %2195 = vrot.lane.b32.xlu0 %v1216, 32
      %v2196 = vpop.permute.xlu0 %2195
      %2197 = vrot.lane.b32.xlu0 %v1217, 32
      %v2198 = vpop.permute.xlu0 %2197
      %2199 = vrot.lane.b32.xlu0 %v1218, 32
      %v2200 = vpop.permute.xlu0 %2199
      %2201 = vrot.lane.b32.xlu0 %v1219, 32
      %v2202 = vpop.permute.xlu0 %2201
      %2203 = vrot.lane.b32.xlu0 %v1220, 32
      %v2204 = vpop.permute.xlu0 %2203
      %2205 = vrot.lane.b32.xlu0 %v1221, 32
      %v2206 = vpop.permute.xlu0 %2205
      %2207 = vrot.lane.b32.xlu0 %v1222, 32
      %v2208 = vpop.permute.xlu0 %2207
      %2209 = vrot.lane.b32.xlu0 %v1223, 32
      %v2210 = vpop.permute.xlu0 %2209
      %2211 = vrot.lane.b32.xlu0 %v1224, 32
      %v2212 = vpop.permute.xlu0 %2211
      %2213 = vrot.lane.b32.xlu0 %v1225, 32
      %v2214 = vpop.permute.xlu0 %2213
      %2215 = vrot.lane.b32.xlu0 %v1226, 32
      %v2216 = vpop.permute.xlu0 %2215
      %2217 = vrot.lane.b32.xlu0 %v1227, 32
      %v2218 = vpop.permute.xlu0 %2217
      %2219 = vrot.lane.b32.xlu0 %v1228, 32
      %v2220 = vpop.permute.xlu0 %2219
      %v2253 = vsel %vm851, %v940, %v1262
      %v2254 = vsel %vm851, %v941, %v1264
      %v2255 = vsel %vm851, %v942, %v1266
      %v2256 = vsel %vm851, %v943, %v1268
      %v2257 = vsel %vm851, %v944, %v1270
      %v2258 = vsel %vm851, %v945, %v1272
      %v2259 = vsel %vm851, %v946, %v1274
      %v2260 = vsel %vm851, %v947, %v1276
      %v2261 = vsel %vm851, %v948, %v1278
      %v2262 = vsel %vm851, %v949, %v1280
      %v2263 = vsel %vm851, %v950, %v1282
      %v2264 = vsel %vm851, %v951, %v1284
      %v2265 = vsel %vm851, %v952, %v1286
      %v2266 = vsel %vm851, %v953, %v1288
      %v2267 = vsel %vm851, %v954, %v1290
      %v2268 = vsel %vm851, %v955, %v1292
      %v2269 = vsel %vm851, %v956, %v1294
      %v2270 = vsel %vm851, %v957, %v1296
      %v2271 = vsel %vm851, %v958, %v1298
      %v2272 = vsel %vm851, %v959, %v1300
      %v2273 = vsel %vm851, %v960, %v1302
      %v2274 = vsel %vm851, %v961, %v1304
      %v2275 = vsel %vm851, %v962, %v1306
      %v2276 = vsel %vm851, %v963, %v1308
      %v2277 = vsel %vm851, %v964, %v1310
      %v2278 = vsel %vm851, %v965, %v1312
      %v2279 = vsel %vm851, %v966, %v1314
      %v2280 = vsel %vm851, %v967, %v1316
      %v2281 = vsel %vm851, %v968, %v1318
      %v2282 = vsel %vm851, %v969, %v1320
      %v2283 = vsel %vm851, %v970, %v1322
      %v2284 = vsel %vm851, %v971, %v1324
      %vm2285 = vcmask 64512
      %v2286 = vsel %vm2285, %v2253, %v1390
      %v2287 = vsel %vm2285, %v2254, %v1392
      %v2288 = vsel %vm2285, %v2255, %v1394
      %v2289 = vsel %vm2285, %v2256, %v1396
      %v2290 = vsel %vm2285, %v2257, %v1398
      %v2291 = vsel %vm2285, %v2258, %v1400
      %v2292 = vsel %vm2285, %v2259, %v1402
      %v2293 = vsel %vm2285, %v2260, %v1404
      %v2294 = vsel %vm2285, %v2261, %v1406
      %v2295 = vsel %vm2285, %v2262, %v1408
      %v2296 = vsel %vm2285, %v2263, %v1410
      %v2297 = vsel %vm2285, %v2264, %v1412
      %v2298 = vsel %vm2285, %v2265, %v1414
      %v2299 = vsel %vm2285, %v2266, %v1416
      %v2300 = vsel %vm2285, %v2267, %v1418
      %v2301 = vsel %vm2285, %v2268, %v1420
      %v2302 = vsel %vm2285, %v2269, %v1422
      %v2303 = vsel %vm2285, %v2270, %v1424
      %v2304 = vsel %vm2285, %v2271, %v1426
      %v2305 = vsel %vm2285, %v2272, %v1428
      %v2306 = vsel %vm2285, %v2273, %v1430
      %v2307 = vsel %vm2285, %v2274, %v1432
      %v2308 = vsel %vm2285, %v2275, %v1434
      %v2309 = vsel %vm2285, %v2276, %v1436
      %v2310 = vsel %vm2285, %v2277, %v1438
      %v2311 = vsel %vm2285, %v2278, %v1440
      %v2312 = vsel %vm2285, %v2279, %v1442
      %v2313 = vsel %vm2285, %v2280, %v1444
      %v2314 = vsel %vm2285, %v2281, %v1446
      %v2315 = vsel %vm2285, %v2282, %v1448
      %v2316 = vsel %vm2285, %v2283, %v1450
      %v2317 = vsel %vm2285, %v2284, %v1452
      %vm2318 = vcmask 97280
      %v2319 = vsel %vm2318, %v2286, %v1518
      %v2320 = vsel %vm2318, %v2287, %v1520
      %v2321 = vsel %vm2318, %v2288, %v1522
      %v2322 = vsel %vm2318, %v2289, %v1524
      %v2323 = vsel %vm2318, %v2290, %v1526
      %v2324 = vsel %vm2318, %v2291, %v1528
      %v2325 = vsel %vm2318, %v2292, %v1530
      %v2326 = vsel %vm2318, %v2293, %v1532
      %v2327 = vsel %vm2318, %v2294, %v1534
      %v2328 = vsel %vm2318, %v2295, %v1536
      %v2329 = vsel %vm2318, %v2296, %v1538
      %v2330 = vsel %vm2318, %v2297, %v1540
      %v2331 = vsel %vm2318, %v2298, %v1542
      %v2332 = vsel %vm2318, %v2299, %v1544
      %v2333 = vsel %vm2318, %v2300, %v1546
      %v2334 = vsel %vm2318, %v2301, %v1548
      %v2335 = vsel %vm2318, %v2302, %v1550
      %v2336 = vsel %vm2318, %v2303, %v1552
      %v2337 = vsel %vm2318, %v2304, %v1554
      %v2338 = vsel %vm2318, %v2305, %v1556
      %v2339 = vsel %vm2318, %v2306, %v1558
      %v2340 = vsel %vm2318, %v2307, %v1560
      %v2341 = vsel %vm2318, %v2308, %v1562
      %v2342 = vsel %vm2318, %v2309, %v1564
      %v2343 = vsel %vm2318, %v2310, %v1566
      %v2344 = vsel %vm2318, %v2311, %v1568
      %v2345 = vsel %vm2318, %v2312, %v1570
      %v2346 = vsel %vm2318, %v2313, %v1572
      %v2347 = vsel %vm2318, %v2314, %v1574
      %v2348 = vsel %vm2318, %v2315, %v1576
      %v2349 = vsel %vm2318, %v2316, %v1578
      %v2350 = vsel %vm2318, %v2317, %v1580
      %vm2351 = vcmask 130048
      %v2352 = vsel %vm2351, %v2319, %v1646
      %v2353 = vsel %vm2351, %v2320, %v1648
      %v2354 = vsel %vm2351, %v2321, %v1650
      %v2355 = vsel %vm2351, %v2322, %v1652
      %v2356 = vsel %vm2351, %v2323, %v1654
      %v2357 = vsel %vm2351, %v2324, %v1656
      %v2358 = vsel %vm2351, %v2325, %v1658
      %v2359 = vsel %vm2351, %v2326, %v1660
      %v2360 = vsel %vm2351, %v2327, %v1662
      %v2361 = vsel %vm2351, %v2328, %v1664
      %v2362 = vsel %vm2351, %v2329, %v1666
      %v2363 = vsel %vm2351, %v2330, %v1668
      %v2364 = vsel %vm2351, %v2331, %v1670
      %v2365 = vsel %vm2351, %v2332, %v1672
      %v2366 = vsel %vm2351, %v2333, %v1674
      %v2367 = vsel %vm2351, %v2334, %v1676
      %v2368 = vsel %vm2351, %v2335, %v1678
      %v2369 = vsel %vm2351, %v2336, %v1680
      %v2370 = vsel %vm2351, %v2337, %v1682
      %v2371 = vsel %vm2351, %v2338, %v1684
      %v2372 = vsel %vm2351, %v2339, %v1686
      %v2373 = vsel %vm2351, %v2340, %v1688
      %v2374 = vsel %vm2351, %v2341, %v1690
      %v2375 = vsel %vm2351, %v2342, %v1692
      %v2376 = vsel %vm2351, %v2343, %v1694
      %v2377 = vsel %vm2351, %v2344, %v1696
      %v2378 = vsel %vm2351, %v2345, %v1698
      %v2379 = vsel %vm2351, %v2346, %v1700
      %v2380 = vsel %vm2351, %v2347, %v1702
      %v2381 = vsel %vm2351, %v2348, %v1704
      %v2382 = vsel %vm2351, %v2349, %v1706
      %v2383 = vsel %vm2351, %v2350, %v1708
      %vm2384 = vcmask 162816
      %v2385 = vsel %vm2384, %v2352, %v1774
      %v2386 = vsel %vm2384, %v2353, %v1776
      %v2387 = vsel %vm2384, %v2354, %v1778
      %v2388 = vsel %vm2384, %v2355, %v1780
      %v2389 = vsel %vm2384, %v2356, %v1782
      %v2390 = vsel %vm2384, %v2357, %v1784
      %v2391 = vsel %vm2384, %v2358, %v1786
      %v2392 = vsel %vm2384, %v2359, %v1788
      %v2393 = vsel %vm2384, %v2360, %v1790
      %v2394 = vsel %vm2384, %v2361, %v1792
      %v2395 = vsel %vm2384, %v2362, %v1794
      %v2396 = vsel %vm2384, %v2363, %v1796
      %v2397 = vsel %vm2384, %v2364, %v1798
      %v2398 = vsel %vm2384, %v2365, %v1800
      %v2399 = vsel %vm2384, %v2366, %v1802
      %v2400 = vsel %vm2384, %v2367, %v1804
      %v2401 = vsel %vm2384, %v2368, %v1806
      %v2402 = vsel %vm2384, %v2369, %v1808
      %v2403 = vsel %vm2384, %v2370, %v1810
      %v2404 = vsel %vm2384, %v2371, %v1812
      %v2405 = vsel %vm2384, %v2372, %v1814
      %v2406 = vsel %vm2384, %v2373, %v1816
      %v2407 = vsel %vm2384, %v2374, %v1818
      %v2408 = vsel %vm2384, %v2375, %v1820
      %v2409 = vsel %vm2384, %v2376, %v1822
      %v2410 = vsel %vm2384, %v2377, %v1824
      %v2411 = vsel %vm2384, %v2378, %v1826
      %v2412 = vsel %vm2384, %v2379, %v1828
      %v2413 = vsel %vm2384, %v2380, %v1830
      %v2414 = vsel %vm2384, %v2381, %v1832
      %v2415 = vsel %vm2384, %v2382, %v1834
      %v2416 = vsel %vm2384, %v2383, %v1836
      %vm2417 = vcmask 195584
      %v2418 = vsel %vm2417, %v2385, %v1902
      %v2419 = vsel %vm2417, %v2386, %v1904
      %v2420 = vsel %vm2417, %v2387, %v1906
      %v2421 = vsel %vm2417, %v2388, %v1908
      %v2422 = vsel %vm2417, %v2389, %v1910
      %v2423 = vsel %vm2417, %v2390, %v1912
      %v2424 = vsel %vm2417, %v2391, %v1914
      %v2425 = vsel %vm2417, %v2392, %v1916
      %v2426 = vsel %vm2417, %v2393, %v1918
      %v2427 = vsel %vm2417, %v2394, %v1920
      %v2428 = vsel %vm2417, %v2395, %v1922
      %v2429 = vsel %vm2417, %v2396, %v1924
      %v2430 = vsel %vm2417, %v2397, %v1926
      %v2431 = vsel %vm2417, %v2398, %v1928
      %v2432 = vsel %vm2417, %v2399, %v1930
      %v2433 = vsel %vm2417, %v2400, %v1932
      %v2434 = vsel %vm2417, %v2401, %v1934
      %v2435 = vsel %vm2417, %v2402, %v1936
      %v2436 = vsel %vm2417, %v2403, %v1938
      %v2437 = vsel %vm2417, %v2404, %v1940
      %v2438 = vsel %vm2417, %v2405, %v1942
      %v2439 = vsel %vm2417, %v2406, %v1944
      %v2440 = vsel %vm2417, %v2407, %v1946
      %v2441 = vsel %vm2417, %v2408, %v1948
      %v2442 = vsel %vm2417, %v2409, %v1950
      %v2443 = vsel %vm2417, %v2410, %v1952
      %v2444 = vsel %vm2417, %v2411, %v1954
      %v2445 = vsel %vm2417, %v2412, %v1956
      %v2446 = vsel %vm2417, %v2413, %v1958
      %v2447 = vsel %vm2417, %v2414, %v1960
      %v2448 = vsel %vm2417, %v2415, %v1962
      %v2449 = vsel %vm2417, %v2416, %v1964
      %vm2450 = vcmask 228352
      %v2451 = vsel %vm2450, %v2418, %v2030
      %v2452 = vsel %vm2450, %v2419, %v2032
      %v2453 = vsel %vm2450, %v2420, %v2034
      %v2454 = vsel %vm2450, %v2421, %v2036
      %v2455 = vsel %vm2450, %v2422, %v2038
      %v2456 = vsel %vm2450, %v2423, %v2040
      %v2457 = vsel %vm2450, %v2424, %v2042
      %v2458 = vsel %vm2450, %v2425, %v2044
      %v2459 = vsel %vm2450, %v2426, %v2046
      %v2460 = vsel %vm2450, %v2427, %v2048
      %v2461 = vsel %vm2450, %v2428, %v2050
      %v2462 = vsel %vm2450, %v2429, %v2052
      %v2463 = vsel %vm2450, %v2430, %v2054
      %v2464 = vsel %vm2450, %v2431, %v2056
      %v2465 = vsel %vm2450, %v2432, %v2058
      %v2466 = vsel %vm2450, %v2433, %v2060
      %v2467 = vsel %vm2450, %v2434, %v2062
      %v2468 = vsel %vm2450, %v2435, %v2064
      %v2469 = vsel %vm2450, %v2436, %v2066
      %v2470 = vsel %vm2450, %v2437, %v2068
      %v2471 = vsel %vm2450, %v2438, %v2070
      %v2472 = vsel %vm2450, %v2439, %v2072
      %v2473 = vsel %vm2450, %v2440, %v2074
      %v2474 = vsel %vm2450, %v2441, %v2076
      %v2475 = vsel %vm2450, %v2442, %v2078
      %v2476 = vsel %vm2450, %v2443, %v2080
      %v2477 = vsel %vm2450, %v2444, %v2082
      %v2478 = vsel %vm2450, %v2445, %v2084
      %v2479 = vsel %vm2450, %v2446, %v2086
      %v2480 = vsel %vm2450, %v2447, %v2088
      %v2481 = vsel %vm2450, %v2448, %v2090
      %v2482 = vsel %vm2450, %v2449, %v2092
      %vm2483 = vcmask 261120
      %v2484 = vsel %vm2483, %v2451, %v2158
      %v2485 = vsel %vm2483, %v2452, %v2160
      %v2486 = vsel %vm2483, %v2453, %v2162
      %v2487 = vsel %vm2483, %v2454, %v2164
      %v2488 = vsel %vm2483, %v2455, %v2166
      %v2489 = vsel %vm2483, %v2456, %v2168
      %v2490 = vsel %vm2483, %v2457, %v2170
      %v2491 = vsel %vm2483, %v2458, %v2172
      %v2492 = vsel %vm2483, %v2459, %v2174
      %v2493 = vsel %vm2483, %v2460, %v2176
      %v2494 = vsel %vm2483, %v2461, %v2178
      %v2495 = vsel %vm2483, %v2462, %v2180
      %v2496 = vsel %vm2483, %v2463, %v2182
      %v2497 = vsel %vm2483, %v2464, %v2184
      %v2498 = vsel %vm2483, %v2465, %v2186
      %v2499 = vsel %vm2483, %v2466, %v2188
      %v2500 = vsel %vm2483, %v2467, %v2190
      %v2501 = vsel %vm2483, %v2468, %v2192
      %v2502 = vsel %vm2483, %v2469, %v2194
      %v2503 = vsel %vm2483, %v2470, %v2196
      %v2504 = vsel %vm2483, %v2471, %v2198
      %v2505 = vsel %vm2483, %v2472, %v2200
      %v2506 = vsel %vm2483, %v2473, %v2202
      %v2507 = vsel %vm2483, %v2474, %v2204
      %v2508 = vsel %vm2483, %v2475, %v2206
      %v2509 = vsel %vm2483, %v2476, %v2208
      %v2510 = vsel %vm2483, %v2477, %v2210
      %v2511 = vsel %vm2483, %v2478, %v2212
      %v2512 = vsel %vm2483, %v2479, %v2214
      %v2513 = vsel %vm2483, %v2480, %v2216
      %v2514 = vsel %vm2483, %v2481, %v2218
      %v2515 = vsel %vm2483, %v2482, %v2220
      %v2516 = vpack.c.bf16 %v2485, %v2484
      %v2517 = vpack.c.bf16 %v2487, %v2486
      %v2518 = vpack.c.bf16 %v2489, %v2488
      %v2519 = vpack.c.bf16 %v2491, %v2490
      %v2520 = vpack.c.bf16 %v2493, %v2492
      %v2521 = vpack.c.bf16 %v2495, %v2494
      %v2522 = vpack.c.bf16 %v2497, %v2496
      %v2523 = vpack.c.bf16 %v2499, %v2498
      %v2524 = vpack.c.bf16 %v2501, %v2500
      %v2525 = vpack.c.bf16 %v2503, %v2502
      %v2526 = vpack.c.bf16 %v2505, %v2504
      %v2527 = vpack.c.bf16 %v2507, %v2506
      %v2528 = vpack.c.bf16 %v2509, %v2508
      %v2529 = vpack.c.bf16 %v2511, %v2510
      %v2530 = vpack.c.bf16 %v2513, %v2512
      %v2531 = vpack.c.bf16 %v2515, %v2514
      %v2532 = vld [vmem:[%s3] sm:$0xf]
      %v2533 = vld [vmem:[%s3 + $0x4] sm:$0xf]
      %v2534 = vld [vmem:[%s3 + $0x8] sm:$0xf]
      %v2535 = vld [vmem:[%s3 + $0xc] sm:$0xf]
      %v2536 = vld [vmem:[%s3 + $0x10] sm:$0x3]
      %v2537 = vld [vmem:[%s4] sm:$0x1]
      %v2539 = vlaneseq
      %v2540 = vshrl.u32 %v2539, 7
      %v2541 = vsub.s32 0, %v2540
      %v2542 = vrot.slane %v2537, %v2541
      %v2549 = vunpack.c.l.b16 %v2532
      %v2550 = vunpack.c.l.b16 %v2533
      %v2551 = vunpack.c.l.b16 %v2534
      %v2552 = vunpack.c.l.b16 %v2535
      %v2553 = vunpack.c.l.b16 %v2536
      %v2554 = vpack.c.b16 %v2550, %v2549
      %v2555 = vpack.c.b16 %v2552, %v2551
      %v2556 = vpack.c.b16 %v2553, %v2553
      %vm2559 = vcmask 293888
      %v2561 = vsel %vm2559, %v2516, 0
      %v2564 = vsel %vm2559, %v2517, 0
      %v2567 = vsel %vm2559, %v2518, 0
      %v2570 = vsel %vm2559, %v2519, 0
      %v2573 = vsel %vm2559, %v2520, 0
      %v2576 = vsel %vm2559, %v2521, 0
      %v2579 = vsel %vm2559, %v2522, 0
      %v2582 = vsel %vm2559, %v2523, 0
      %v2585 = vsel %vm2559, %v2524, 0
      %v2588 = vsel %vm2559, %v2525, 0
      %v2591 = vsel %vm2559, %v2526, 0
      %v2594 = vsel %vm2559, %v2527, 0
      %v2597 = vsel %vm2559, %v2528, 0
      %v2600 = vsel %vm2559, %v2529, 0
      %v2603 = vsel %vm2559, %v2530, 0
      %v2606 = vsel %vm2559, %v2531, 0
      %vm2608 = vcmask 1041408
      %v2610 = vsel %vm2608, %v2556, 0
      %2612 = vmatprep.subr.bf16.mxu0 0
      %2613 = vmatpush1.bf16.msra.mxu0 %v2554
      %2614 = vmatprep.subr.bf16.mxu0 0
      %2615 = vmatpush1.bf16.msra.mxu0 %v2555
      %2616 = vmatprep.subr.bf16.mxu0 0
      %2617 = vmatpush1.bf16.msra.mxu0 %v2610
      %2618 = vmatprep.subr.bf16.mxu0 0
      %2619 = vmatpush1.bf16.msra.mxu0 0
      %2620 = vmatprep.subr.bf16.mxu0 0
      %2621 = vmatpush1.bf16.msra.mxu0 0
      %2622 = vmatprep.subr.bf16.mxu0 0
      %2623 = vmatpush1.bf16.msra.mxu0 0
      %2624 = vmatprep.subr.bf16.mxu0 0
      %2625 = vmatpush1.bf16.msra.mxu0 0
      %2626 = vmatprep.subr.bf16.mxu0 0
      %2627 = vmatpush1.bf16.msra.mxu0 0
      %2628 = vmatprep.subr.bf16.mxu0 0
      %2629 = vmatpush1.bf16.msra.mxu0 0
      %2630 = vmatprep.subr.bf16.mxu0 0
      %2631 = vmatpush1.bf16.msra.mxu0 0
      %2632 = vmatprep.subr.bf16.mxu0 0
      %2633 = vmatpush1.bf16.msra.mxu0 0
      %2634 = vmatprep.subr.bf16.mxu0 0
      %2635 = vmatpush1.bf16.msra.mxu0 0
      %2636 = vmatprep.subr.bf16.mxu0 0
      %2637 = vmatpush1.bf16.msra.mxu0 0
      %2638 = vmatprep.subr.bf16.mxu0 0
      %2639 = vmatpush1.bf16.msra.mxu0 0
      %2640 = vmatprep.subr.bf16.mxu0 0
      %2641 = vmatpush1.bf16.msra.mxu0 0
      %2642 = vmatprep.subr.bf16.mxu0 0
      %2643 = vmatpush1.bf16.msra.mxu0 0
      %2644 = vmatprep.mubr.bf16.mxu0 0
      %2645 = vmatmul.mubr.bf16.gmra.mrb[0].mxu0 %v2561
      %v2646 = vpop.f32.mrb[0].mxu0
      %v2647 = vadd.f32 %v2542, %v2646
      %v2648 = vpop.f32.mrb[0].mxu0
      %v2649 = vpop.f32.mrb[0].mxu0
      %v2650 = vadd.f32 %v2542, %v2649
      %v2651 = vpop.f32.mrb[0].mxu0
      %2652 = vmatprep.mubr.bf16.mxu0 0
      %2653 = vmatmul.mubr.bf16.gmra.mrb[0].mxu0 %v2564
      %v2654 = vpop.f32.mrb[0].mxu0
      %v2655 = vadd.f32 %v2542, %v2654
      %v2656 = vpop.f32.mrb[0].mxu0
      %v2657 = vpop.f32.mrb[0].mxu0
      %v2658 = vadd.f32 %v2542, %v2657
      %v2659 = vpop.f32.mrb[0].mxu0
      %2660 = vmatprep.mubr.bf16.mxu0 0
      %2661 = vmatmul.mubr.bf16.gmra.mrb[0].mxu0 %v2567
      %v2662 = vpop.f32.mrb[0].mxu0
      %v2663 = vadd.f32 %v2542, %v2662
      %v2664 = vpop.f32.mrb[0].mxu0
      %v2665 = vpop.f32.mrb[0].mxu0
      %v2666 = vadd.f32 %v2542, %v2665
      %v2667 = vpop.f32.mrb[0].mxu0
      %2668 = vmatprep.mubr.bf16.mxu0 0
      %2669 = vmatmul.mubr.bf16.gmra.mrb[0].mxu0 %v2570
      %v2670 = vpop.f32.mrb[0].mxu0
      %v2671 = vadd.f32 %v2542, %v2670
      %v2672 = vpop.f32.mrb[0].mxu0
      %v2673 = vpop.f32.mrb[0].mxu0
      %v2674 = vadd.f32 %v2542, %v2673
      %v2675 = vpop.f32.mrb[0].mxu0
      %2676 = vmatprep.mubr.bf16.mxu0 0
      %2677 = vmatmul.mubr.bf16.gmra.mrb[0].mxu0 %v2573
      %v2678 = vpop.f32.mrb[0].mxu0
      %v2679 = vadd.f32 %v2542, %v2678
      %v2680 = vpop.f32.mrb[0].mxu0
      %v2681 = vpop.f32.mrb[0].mxu0
      %v2682 = vadd.f32 %v2542, %v2681
      %v2683 = vpop.f32.mrb[0].mxu0
      %2684 = vmatprep.mubr.bf16.mxu0 0
      %2685 = vmatmul.mubr.bf16.gmra.mrb[0].mxu0 %v2576
      %v2686 = vpop.f32.mrb[0].mxu0
      %v2687 = vadd.f32 %v2542, %v2686
      %v2688 = vpop.f32.mrb[0].mxu0
      %v2689 = vpop.f32.mrb[0].mxu0
      %v2690 = vadd.f32 %v2542, %v2689
      %v2691 = vpop.f32.mrb[0].mxu0
      %2692 = vmatprep.mubr.bf16.mxu0 0
      %2693 = vmatmul.mubr.bf16.gmra.mrb[0].mxu0 %v2579
      %v2694 = vpop.f32.mrb[0].mxu0
      %v2695 = vadd.f32 %v2542, %v2694
      %v2696 = vpop.f32.mrb[0].mxu0
      %v2697 = vpop.f32.mrb[0].mxu0
      %v2698 = vadd.f32 %v2542, %v2697
      %v2699 = vpop.f32.mrb[0].mxu0
      %2700 = vmatprep.mubr.bf16.mxu0 0
      %2701 = vmatmul.mubr.bf16.gmra.mrb[0].mxu0 %v2582
      %v2702 = vpop.f32.mrb[0].mxu0
      %v2703 = vadd.f32 %v2542, %v2702
      %v2704 = vpop.f32.mrb[0].mxu0
      %v2705 = vpop.f32.mrb[0].mxu0
      %v2706 = vadd.f32 %v2542, %v2705
      %v2707 = vpop.f32.mrb[0].mxu0
      %2708 = vmatprep.mubr.bf16.mxu0 0
      %2709 = vmatmul.mubr.bf16.gmra.mrb[0].mxu0 %v2585
      %v2710 = vpop.f32.mrb[0].mxu0
      %v2711 = vadd.f32 %v2542, %v2710
      %v2712 = vpop.f32.mrb[0].mxu0
      %v2713 = vpop.f32.mrb[0].mxu0
      %v2714 = vadd.f32 %v2542, %v2713
      %v2715 = vpop.f32.mrb[0].mxu0
      %2716 = vmatprep.mubr.bf16.mxu0 0
      %2717 = vmatmul.mubr.bf16.gmra.mrb[0].mxu0 %v2588
      %v2718 = vpop.f32.mrb[0].mxu0
      %v2719 = vadd.f32 %v2542, %v2718
      %v2720 = vpop.f32.mrb[0].mxu0
      %v2721 = vpop.f32.mrb[0].mxu0
      %v2722 = vadd.f32 %v2542, %v2721
      %v2723 = vpop.f32.mrb[0].mxu0
      %2724 = vmatprep.mubr.bf16.mxu0 0
      %2725 = vmatmul.mubr.bf16.gmra.mrb[0].mxu0 %v2591
      %v2726 = vpop.f32.mrb[0].mxu0
      %v2727 = vadd.f32 %v2542, %v2726
      %v2728 = vpop.f32.mrb[0].mxu0
      %v2729 = vpop.f32.mrb[0].mxu0
      %v2730 = vadd.f32 %v2542, %v2729
      %v2731 = vpop.f32.mrb[0].mxu0
      %2732 = vmatprep.mubr.bf16.mxu0 0
      %2733 = vmatmul.mubr.bf16.gmra.mrb[0].mxu0 %v2594
      %v2734 = vpop.f32.mrb[0].mxu0
      %v2735 = vadd.f32 %v2542, %v2734
      %v2736 = vpop.f32.mrb[0].mxu0
      %v2737 = vpop.f32.mrb[0].mxu0
      %v2738 = vadd.f32 %v2542, %v2737
      %v2739 = vpop.f32.mrb[0].mxu0
      %2740 = vmatprep.mubr.bf16.mxu0 0
      %2741 = vmatmul.mubr.bf16.gmra.mrb[0].mxu0 %v2597
      %v2742 = vpop.f32.mrb[0].mxu0
      %v2743 = vadd.f32 %v2542, %v2742
      %v2744 = vpop.f32.mrb[0].mxu0
      %v2745 = vpop.f32.mrb[0].mxu0
      %v2746 = vadd.f32 %v2542, %v2745
      %v2747 = vpop.f32.mrb[0].mxu0
      %2748 = vmatprep.mubr.bf16.mxu0 0
      %2749 = vmatmul.mubr.bf16.gmra.mrb[0].mxu0 %v2600
      %v2750 = vpop.f32.mrb[0].mxu0
      %v2751 = vadd.f32 %v2542, %v2750
      %v2752 = vpop.f32.mrb[0].mxu0
      %v2753 = vpop.f32.mrb[0].mxu0
      %v2754 = vadd.f32 %v2542, %v2753
      %v2755 = vpop.f32.mrb[0].mxu0
      %2756 = vmatprep.mubr.bf16.mxu0 0
      %2757 = vmatmul.mubr.bf16.gmra.mrb[0].mxu0 %v2603
      %v2758 = vpop.f32.mrb[0].mxu0
      %v2759 = vadd.f32 %v2542, %v2758
      %v2760 = vpop.f32.mrb[0].mxu0
      %v2761 = vpop.f32.mrb[0].mxu0
      %v2762 = vadd.f32 %v2542, %v2761
      %v2763 = vpop.f32.mrb[0].mxu0
      %2764 = vmatprep.mubr.bf16.mxu0 0
      %2765 = vmatmul.mubr.bf16.gmra.mrb[0].mxu0 %v2606
      %v2766 = vpop.f32.mrb[0].mxu0
      %v2767 = vadd.f32 %v2542, %v2766
      %v2768 = vpop.f32.mrb[0].mxu0
      %v2769 = vpop.f32.mrb[0].mxu0
      %v2770 = vadd.f32 %v2542, %v2769
      %v2771 = vpop.f32.mrb[0].mxu0
      %2772 = vdwg.mxu0
      %v2773 = vmax.f32 %v2647, 0.0
      %v2774 = vmax.f32 %v2650, 0.0
      %v2775 = vmax.f32 %v2655, 0.0
      %v2776 = vmax.f32 %v2658, 0.0
      %v2777 = vmax.f32 %v2663, 0.0
      %v2778 = vmax.f32 %v2666, 0.0
      %v2779 = vmax.f32 %v2671, 0.0
      %v2780 = vmax.f32 %v2674, 0.0
      %v2781 = vmax.f32 %v2679, 0.0
      %v2782 = vmax.f32 %v2682, 0.0
      %v2783 = vmax.f32 %v2687, 0.0
      %v2784 = vmax.f32 %v2690, 0.0
      %v2785 = vmax.f32 %v2695, 0.0
      %v2786 = vmax.f32 %v2698, 0.0
      %v2787 = vmax.f32 %v2703, 0.0
      %v2788 = vmax.f32 %v2706, 0.0
      %v2789 = vmax.f32 %v2711, 0.0
      %v2790 = vmax.f32 %v2714, 0.0
      %v2791 = vmax.f32 %v2719, 0.0
      %v2792 = vmax.f32 %v2722, 0.0
      %v2793 = vmax.f32 %v2727, 0.0
      %v2794 = vmax.f32 %v2730, 0.0
      %v2795 = vmax.f32 %v2735, 0.0
      %v2796 = vmax.f32 %v2738, 0.0
      %v2797 = vmax.f32 %v2743, 0.0
      %v2798 = vmax.f32 %v2746, 0.0
      %v2799 = vmax.f32 %v2751, 0.0
      %v2800 = vmax.f32 %v2754, 0.0
      %v2801 = vmax.f32 %v2759, 0.0
      %v2802 = vmax.f32 %v2762, 0.0
      %v2803 = vmax.f32 %v2767, 0.0
      %v2804 = vmax.f32 %v2770, 0.0
      %2805 = vst.msk [vmem:[%s907 + $0x1] sm:$0xff] %vm851, %v2773
      %2806 = vst.msk [vmem:[%s907 + $0x9] sm:$0xff] %vm851, %v2774
      %2807 = vst.msk [vmem:[%s907 + $0x19] sm:$0xff] %vm851, %v2775
      %2808 = vst.msk [vmem:[%s907 + $0x21] sm:$0xff] %vm851, %v2776
      %2809 = vst.msk [vmem:[%s907 + $0x31] sm:$0xff] %vm851, %v2777
      %2810 = vst.msk [vmem:[%s907 + $0x39] sm:$0xff] %vm851, %v2778
      %2811 = vst.msk [vmem:[%s907 + $0x49] sm:$0xff] %vm851, %v2779
      %2812 = vst.msk [vmem:[%s907 + $0x51] sm:$0xff] %vm851, %v2780
      %2813 = vst.msk [vmem:[%s907 + $0x61] sm:$0xff] %vm851, %v2781
      %2814 = vst.msk [vmem:[%s907 + $0x69] sm:$0xff] %vm851, %v2782
      %2815 = vst.msk [vmem:[%s907 + $0x79] sm:$0xff] %vm851, %v2783
      %2816 = vst.msk [vmem:[%s907 + $0x81] sm:$0xff] %vm851, %v2784
      %2817 = vst.msk [vmem:[%s907 + $0x91] sm:$0xff] %vm851, %v2785
      %2818 = vst.msk [vmem:[%s907 + $0x99] sm:$0xff] %vm851, %v2786
      %2819 = vst.msk [vmem:[%s907 + $0xa9] sm:$0xff] %vm851, %v2787
      %2820 = vst.msk [vmem:[%s907 + $0xb1] sm:$0xff] %vm851, %v2788
      %2821 = vst.msk [vmem:[%s907 + $0xc1] sm:$0xff] %vm851, %v2789
      %2822 = vst.msk [vmem:[%s907 + $0xc9] sm:$0xff] %vm851, %v2790
      %2823 = vst.msk [vmem:[%s907 + $0xd9] sm:$0xff] %vm851, %v2791
      %2824 = vst.msk [vmem:[%s907 + $0xe1] sm:$0xff] %vm851, %v2792
      %2825 = vst.msk [vmem:[%s907 + $0xf1] sm:$0xff] %vm851, %v2793
      %2826 = vst.msk [vmem:[%s907 + $0xf9] sm:$0xff] %vm851, %v2794
      %2827 = vst.msk [vmem:[%s907 + $0x109] sm:$0xff] %vm851, %v2795
      %2828 = vst.msk [vmem:[%s907 + $0x111] sm:$0xff] %vm851, %v2796
      %2829 = vst.msk [vmem:[%s907 + $0x121] sm:$0xff] %vm851, %v2797
      %2830 = vst.msk [vmem:[%s907 + $0x129] sm:$0xff] %vm851, %v2798
      %2831 = vst.msk [vmem:[%s907 + $0x139] sm:$0xff] %vm851, %v2799
      %2832 = vst.msk [vmem:[%s907 + $0x141] sm:$0xff] %vm851, %v2800
      %2833 = vst.msk [vmem:[%s907 + $0x151] sm:$0xff] %vm851, %v2801
      %2834 = vst.msk [vmem:[%s907 + $0x159] sm:$0xff] %vm851, %v2802
      %2835 = vst.msk [vmem:[%s907 + $0x169] sm:$0xff] %vm851, %v2803
      %2836 = vst.msk [vmem:[%s907 + $0x171] sm:$0xff] %vm851, %v2804
      %v2837 = vld [vmem:[#allocation2] sm:$0xff]
      %v2838 = vld [vmem:[#allocation2 + $0x8] sm:$0xff]
      %v2839 = vld [vmem:[#allocation2 + $0x18] sm:$0xff]
      %v2840 = vld [vmem:[#allocation2 + $0x20] sm:$0xff]
      %v2841 = vld [vmem:[#allocation2 + $0x30] sm:$0xff]
      %v2842 = vld [vmem:[#allocation2 + $0x38] sm:$0xff]
      %v2843 = vld [vmem:[#allocation2 + $0x48] sm:$0xff]
      %v2844 = vld [vmem:[#allocation2 + $0x50] sm:$0xff]
      %v2845 = vld [vmem:[#allocation2 + $0x60] sm:$0xff]
      %v2846 = vld [vmem:[#allocation2 + $0x68] sm:$0xff]
      %v2847 = vld [vmem:[#allocation2 + $0x78] sm:$0xff]
      %v2848 = vld [vmem:[#allocation2 + $0x80] sm:$0xff]
      %v2849 = vld [vmem:[#allocation2 + $0x90] sm:$0xff]
      %v2850 = vld [vmem:[#allocation2 + $0x98] sm:$0xff]
      %v2851 = vld [vmem:[#allocation2 + $0xa8] sm:$0xff]
      %v2852 = vld [vmem:[#allocation2 + $0xb0] sm:$0xff]
      %v2853 = vld [vmem:[#allocation2 + $0xc0] sm:$0xff]
      %v2854 = vld [vmem:[#allocation2 + $0xc8] sm:$0xff]
      %v2855 = vld [vmem:[#allocation2 + $0xd8] sm:$0xff]
      %v2856 = vld [vmem:[#allocation2 + $0xe0] sm:$0xff]
      %v2857 = vld [vmem:[#allocation2 + $0xf0] sm:$0xff]
      %v2858 = vld [vmem:[#allocation2 + $0xf8] sm:$0xff]
      %v2859 = vld [vmem:[#allocation2 + $0x108] sm:$0xff]
      %v2860 = vld [vmem:[#allocation2 + $0x110] sm:$0xff]
      %v2861 = vld [vmem:[#allocation2 + $0x120] sm:$0xff]
      %v2862 = vld [vmem:[#allocation2 + $0x128] sm:$0xff]
      %v2863 = vld [vmem:[#allocation2 + $0x138] sm:$0xff]
      %v2864 = vld [vmem:[#allocation2 + $0x140] sm:$0xff]
      %v2865 = vld [vmem:[#allocation2 + $0x150] sm:$0xff]
      %v2866 = vld [vmem:[#allocation2 + $0x158] sm:$0xff]
      %v2867 = vld [vmem:[#allocation2 + $0x168] sm:$0xff]
      %v2868 = vld [vmem:[#allocation2 + $0x170] sm:$0xff]
      %v2869 = vld [vmem:[#allocation2 + $0x1] sm:$0xff]
      %v2870 = vld [vmem:[#allocation2 + $0x9] sm:$0xff]
      %v2871 = vld [vmem:[#allocation2 + $0x19] sm:$0xff]
      %v2872 = vld [vmem:[#allocation2 + $0x21] sm:$0xff]
      %v2873 = vld [vmem:[#allocation2 + $0x31] sm:$0xff]
      %v2874 = vld [vmem:[#allocation2 + $0x39] sm:$0xff]
      %v2875 = vld [vmem:[#allocation2 + $0x49] sm:$0xff]
      %v2876 = vld [vmem:[#allocation2 + $0x51] sm:$0xff]
      %v2877 = vld [vmem:[#allocation2 + $0x61] sm:$0xff]
      %v2878 = vld [vmem:[#allocation2 + $0x69] sm:$0xff]
      %v2879 = vld [vmem:[#allocation2 + $0x79] sm:$0xff]
      %v2880 = vld [vmem:[#allocation2 + $0x81] sm:$0xff]
      %v2881 = vld [vmem:[#allocation2 + $0x91] sm:$0xff]
      %v2882 = vld [vmem:[#allocation2 + $0x99] sm:$0xff]
      %v2883 = vld [vmem:[#allocation2 + $0xa9] sm:$0xff]
      %v2884 = vld [vmem:[#allocation2 + $0xb1] sm:$0xff]
      %v2885 = vld [vmem:[#allocation2 + $0xc1] sm:$0xff]
      %v2886 = vld [vmem:[#allocation2 + $0xc9] sm:$0xff]
      %v2887 = vld [vmem:[#allocation2 + $0xd9] sm:$0xff]
      %v2888 = vld [vmem:[#allocation2 + $0xe1] sm:$0xff]
      %v2889 = vld [vmem:[#allocation2 + $0xf1] sm:$0xff]
      %v2890 = vld [vmem:[#allocation2 + $0xf9] sm:$0xff]
      %v2891 = vld [vmem:[#allocation2 + $0x109] sm:$0xff]
      %v2892 = vld [vmem:[#allocation2 + $0x111] sm:$0xff]
      %v2893 = vld [vmem:[#allocation2 + $0x121] sm:$0xff]
      %v2894 = vld [vmem:[#allocation2 + $0x129] sm:$0xff]
      %v2895 = vld [vmem:[#allocation2 + $0x139] sm:$0xff]
      %v2896 = vld [vmem:[#allocation2 + $0x141] sm:$0xff]
      %v2897 = vld [vmem:[#allocation2 + $0x151] sm:$0xff]
      %v2898 = vld [vmem:[#allocation2 + $0x159] sm:$0xff]
      %v2899 = vld [vmem:[#allocation2 + $0x169] sm:$0xff]
      %v2900 = vld [vmem:[#allocation2 + $0x171] sm:$0xff]
      %v2901 = vld [vmem:[#allocation2 + $0x2] sm:$0xff]
      %v2902 = vld [vmem:[#allocation2 + $0xa] sm:$0xff]
      %v2903 = vld [vmem:[#allocation2 + $0x1a] sm:$0xff]
      %v2904 = vld [vmem:[#allocation2 + $0x22] sm:$0xff]
      %v2905 = vld [vmem:[#allocation2 + $0x32] sm:$0xff]
      %v2906 = vld [vmem:[#allocation2 + $0x3a] sm:$0xff]
      %v2907 = vld [vmem:[#allocation2 + $0x4a] sm:$0xff]
      %v2908 = vld [vmem:[#allocation2 + $0x52] sm:$0xff]
      %v2909 = vld [vmem:[#allocation2 + $0x62] sm:$0xff]
      %v2910 = vld [vmem:[#allocation2 + $0x6a] sm:$0xff]
      %v2911 = vld [vmem:[#allocation2 + $0x7a] sm:$0xff]
      %v2912 = vld [vmem:[#allocation2 + $0x82] sm:$0xff]
      %v2913 = vld [vmem:[#allocation2 + $0x92] sm:$0xff]
      %v2914 = vld [vmem:[#allocation2 + $0x9a] sm:$0xff]
      %v2915 = vld [vmem:[#allocation2 + $0xaa] sm:$0xff]
      %v2916 = vld [vmem:[#allocation2 + $0xb2] sm:$0xff]
      %v2917 = vld [vmem:[#allocation2 + $0xc2] sm:$0xff]
      %v2918 = vld [vmem:[#allocation2 + $0xca] sm:$0xff]
      %v2919 = vld [vmem:[#allocation2 + $0xda] sm:$0xff]
      %v2920 = vld [vmem:[#allocation2 + $0xe2] sm:$0xff]
      %v2921 = vld [vmem:[#allocation2 + $0xf2] sm:$0xff]
      %v2922 = vld [vmem:[#allocation2 + $0xfa] sm:$0xff]
      %v2923 = vld [vmem:[#allocation2 + $0x10a] sm:$0xff]
      %v2924 = vld [vmem:[#allocation2 + $0x112] sm:$0xff]
      %v2925 = vld [vmem:[#allocation2 + $0x122] sm:$0xff]
      %v2926 = vld [vmem:[#allocation2 + $0x12a] sm:$0xff]
      %v2927 = vld [vmem:[#allocation2 + $0x13a] sm:$0xff]
      %v2928 = vld [vmem:[#allocation2 + $0x142] sm:$0xff]
      %v2929 = vld [vmem:[#allocation2 + $0x152] sm:$0xff]
      %v2930 = vld [vmem:[#allocation2 + $0x15a] sm:$0xff]
      %v2931 = vld [vmem:[#allocation2 + $0x16a] sm:$0xff]
      %v2932 = vld [vmem:[#allocation2 + $0x172] sm:$0xff]
      %v2933 = vld [vmem:[%s907] sm:$0xff]
      %v2934 = vld [vmem:[%s907 + $0x8] sm:$0xff]
      %v2935 = vld [vmem:[%s907 + $0x18] sm:$0xff]
      %v2936 = vld [vmem:[%s907 + $0x20] sm:$0xff]
      %v2937 = vld [vmem:[%s907 + $0x30] sm:$0xff]
      %v2938 = vld [vmem:[%s907 + $0x38] sm:$0xff]
      %v2939 = vld [vmem:[%s907 + $0x48] sm:$0xff]
      %v2940 = vld [vmem:[%s907 + $0x50] sm:$0xff]
      %v2941 = vld [vmem:[%s907 + $0x60] sm:$0xff]
      %v2942 = vld [vmem:[%s907 + $0x68] sm:$0xff]
      %v2943 = vld [vmem:[%s907 + $0x78] sm:$0xff]
      %v2944 = vld [vmem:[%s907 + $0x80] sm:$0xff]
      %v2945 = vld [vmem:[%s907 + $0x90] sm:$0xff]
      %v2946 = vld [vmem:[%s907 + $0x98] sm:$0xff]
      %v2947 = vld [vmem:[%s907 + $0xa8] sm:$0xff]
      %v2948 = vld [vmem:[%s907 + $0xb0] sm:$0xff]
      %v2949 = vld [vmem:[%s907 + $0xc0] sm:$0xff]
      %v2950 = vld [vmem:[%s907 + $0xc8] sm:$0xff]
      %v2951 = vld [vmem:[%s907 + $0xd8] sm:$0xff]
      %v2952 = vld [vmem:[%s907 + $0xe0] sm:$0xff]
      %v2953 = vld [vmem:[%s907 + $0xf0] sm:$0xff]
      %v2954 = vld [vmem:[%s907 + $0xf8] sm:$0xff]
      %v2955 = vld [vmem:[%s907 + $0x108] sm:$0xff]
      %v2956 = vld [vmem:[%s907 + $0x110] sm:$0xff]
      %v2957 = vld [vmem:[%s907 + $0x120] sm:$0xff]
      %v2958 = vld [vmem:[%s907 + $0x128] sm:$0xff]
      %v2959 = vld [vmem:[%s907 + $0x138] sm:$0xff]
      %v2960 = vld [vmem:[%s907 + $0x140] sm:$0xff]
      %v2961 = vld [vmem:[%s907 + $0x150] sm:$0xff]
      %v2962 = vld [vmem:[%s907 + $0x158] sm:$0xff]
      %v2963 = vld [vmem:[%s907 + $0x168] sm:$0xff]
      %v2964 = vld [vmem:[%s907 + $0x170] sm:$0xff]
      %v2965 = vld [vmem:[%s907 + $0x1] sm:$0xff]
      %v2966 = vld [vmem:[%s907 + $0x9] sm:$0xff]
      %v2967 = vld [vmem:[%s907 + $0x19] sm:$0xff]
      %v2968 = vld [vmem:[%s907 + $0x21] sm:$0xff]
      %v2969 = vld [vmem:[%s907 + $0x31] sm:$0xff]
      %v2970 = vld [vmem:[%s907 + $0x39] sm:$0xff]
      %v2971 = vld [vmem:[%s907 + $0x49] sm:$0xff]
      %v2972 = vld [vmem:[%s907 + $0x51] sm:$0xff]
      %v2973 = vld [vmem:[%s907 + $0x61] sm:$0xff]
      %v2974 = vld [vmem:[%s907 + $0x69] sm:$0xff]
      %v2975 = vld [vmem:[%s907 + $0x79] sm:$0xff]
      %v2976 = vld [vmem:[%s907 + $0x81] sm:$0xff]
      %v2977 = vld [vmem:[%s907 + $0x91] sm:$0xff]
      %v2978 = vld [vmem:[%s907 + $0x99] sm:$0xff]
      %v2979 = vld [vmem:[%s907 + $0xa9] sm:$0xff]
      %v2980 = vld [vmem:[%s907 + $0xb1] sm:$0xff]
      %v2981 = vld [vmem:[%s907 + $0xc1] sm:$0xff]
      %v2982 = vld [vmem:[%s907 + $0xc9] sm:$0xff]
      %v2983 = vld [vmem:[%s907 + $0xd9] sm:$0xff]
      %v2984 = vld [vmem:[%s907 + $0xe1] sm:$0xff]
      %v2985 = vld [vmem:[%s907 + $0xf1] sm:$0xff]
      %v2986 = vld [vmem:[%s907 + $0xf9] sm:$0xff]
      %v2987 = vld [vmem:[%s907 + $0x109] sm:$0xff]
      %v2988 = vld [vmem:[%s907 + $0x111] sm:$0xff]
      %v2989 = vld [vmem:[%s907 + $0x121] sm:$0xff]
      %v2990 = vld [vmem:[%s907 + $0x129] sm:$0xff]
      %v2991 = vld [vmem:[%s907 + $0x139] sm:$0xff]
      %v2992 = vld [vmem:[%s907 + $0x141] sm:$0xff]
      %v2993 = vld [vmem:[%s907 + $0x151] sm:$0xff]
      %v2994 = vld [vmem:[%s907 + $0x159] sm:$0xff]
      %v2995 = vld [vmem:[%s907 + $0x169] sm:$0xff]
      %v2996 = vld [vmem:[%s907 + $0x171] sm:$0xff]
      %v2997 = vld [vmem:[%s907 + $0x2] sm:$0xff]
      %v2998 = vld [vmem:[%s907 + $0xa] sm:$0xff]
      %v2999 = vld [vmem:[%s907 + $0x1a] sm:$0xff]
      %v3000 = vld [vmem:[%s907 + $0x22] sm:$0xff]
      %v3001 = vld [vmem:[%s907 + $0x32] sm:$0xff]
      %v3002 = vld [vmem:[%s907 + $0x3a] sm:$0xff]
      %v3003 = vld [vmem:[%s907 + $0x4a] sm:$0xff]
      %v3004 = vld [vmem:[%s907 + $0x52] sm:$0xff]
      %v3005 = vld [vmem:[%s907 + $0x62] sm:$0xff]
      %v3006 = vld [vmem:[%s907 + $0x6a] sm:$0xff]
      %v3007 = vld [vmem:[%s907 + $0x7a] sm:$0xff]
      %v3008 = vld [vmem:[%s907 + $0x82] sm:$0xff]
      %v3009 = vld [vmem:[%s907 + $0x92] sm:$0xff]
      %v3010 = vld [vmem:[%s907 + $0x9a] sm:$0xff]
      %v3011 = vld [vmem:[%s907 + $0xaa] sm:$0xff]
      %v3012 = vld [vmem:[%s907 + $0xb2] sm:$0xff]
      %v3013 = vld [vmem:[%s907 + $0xc2] sm:$0xff]
      %v3014 = vld [vmem:[%s907 + $0xca] sm:$0xff]
      %v3015 = vld [vmem:[%s907 + $0xda] sm:$0xff]
      %v3016 = vld [vmem:[%s907 + $0xe2] sm:$0xff]
      %v3017 = vld [vmem:[%s907 + $0xf2] sm:$0xff]
      %v3018 = vld [vmem:[%s907 + $0xfa] sm:$0xff]
      %v3019 = vld [vmem:[%s907 + $0x10a] sm:$0xff]
      %v3020 = vld [vmem:[%s907 + $0x112] sm:$0xff]
      %v3021 = vld [vmem:[%s907 + $0x122] sm:$0xff]
      %v3022 = vld [vmem:[%s907 + $0x12a] sm:$0xff]
      %v3023 = vld [vmem:[%s907 + $0x13a] sm:$0xff]
      %v3024 = vld [vmem:[%s907 + $0x142] sm:$0xff]
      %v3025 = vld [vmem:[%s907 + $0x152] sm:$0xff]
      %v3026 = vld [vmem:[%s907 + $0x15a] sm:$0xff]
      %v3027 = vld [vmem:[%s907 + $0x16a] sm:$0xff]
      %v3028 = vld [vmem:[%s907 + $0x172] sm:$0xff]
      %v3029 = vld [vmem:[%s1132] sm:$0xff]
      %v3030 = vld [vmem:[%s1132 + $0x8] sm:$0xff]
      %v3031 = vld [vmem:[%s1132 + $0x18] sm:$0xff]
      %v3032 = vld [vmem:[%s1132 + $0x20] sm:$0xff]
      %v3033 = vld [vmem:[%s1132 + $0x30] sm:$0xff]
      %v3034 = vld [vmem:[%s1132 + $0x38] sm:$0xff]
      %v3035 = vld [vmem:[%s1132 + $0x48] sm:$0xff]
      %v3036 = vld [vmem:[%s1132 + $0x50] sm:$0xff]
      %v3037 = vld [vmem:[%s1132 + $0x60] sm:$0xff]
      %v3038 = vld [vmem:[%s1132 + $0x68] sm:$0xff]
      %v3039 = vld [vmem:[%s1132 + $0x78] sm:$0xff]
      %v3040 = vld [vmem:[%s1132 + $0x80] sm:$0xff]
      %v3041 = vld [vmem:[%s1132 + $0x90] sm:$0xff]
      %v3042 = vld [vmem:[%s1132 + $0x98] sm:$0xff]
      %v3043 = vld [vmem:[%s1132 + $0xa8] sm:$0xff]
      %v3044 = vld [vmem:[%s1132 + $0xb0] sm:$0xff]
      %v3045 = vld [vmem:[%s1132 + $0xc0] sm:$0xff]
      %v3046 = vld [vmem:[%s1132 + $0xc8] sm:$0xff]
      %v3047 = vld [vmem:[%s1132 + $0xd8] sm:$0xff]
      %v3048 = vld [vmem:[%s1132 + $0xe0] sm:$0xff]
      %v3049 = vld [vmem:[%s1132 + $0xf0] sm:$0xff]
      %v3050 = vld [vmem:[%s1132 + $0xf8] sm:$0xff]
      %v3051 = vld [vmem:[%s1132 + $0x108] sm:$0xff]
      %v3052 = vld [vmem:[%s1132 + $0x110] sm:$0xff]
      %v3053 = vld [vmem:[%s1132 + $0x120] sm:$0xff]
      %v3054 = vld [vmem:[%s1132 + $0x128] sm:$0xff]
      %v3055 = vld [vmem:[%s1132 + $0x138] sm:$0xff]
      %v3056 = vld [vmem:[%s1132 + $0x140] sm:$0xff]
      %v3057 = vld [vmem:[%s1132 + $0x150] sm:$0xff]
      %v3058 = vld [vmem:[%s1132 + $0x158] sm:$0xff]
      %v3059 = vld [vmem:[%s1132 + $0x168] sm:$0xff]
      %v3060 = vld [vmem:[%s1132 + $0x170] sm:$0xff]
      %v3061 = vld [vmem:[%s1132 + $0x1] sm:$0xff]
      %v3062 = vld [vmem:[%s1132 + $0x9] sm:$0xff]
      %v3063 = vld [vmem:[%s1132 + $0x19] sm:$0xff]
      %v3064 = vld [vmem:[%s1132 + $0x21] sm:$0xff]
      %v3065 = vld [vmem:[%s1132 + $0x31] sm:$0xff]
      %v3066 = vld [vmem:[%s1132 + $0x39] sm:$0xff]
      %v3067 = vld [vmem:[%s1132 + $0x49] sm:$0xff]
      %v3068 = vld [vmem:[%s1132 + $0x51] sm:$0xff]
      %v3069 = vld [vmem:[%s1132 + $0x61] sm:$0xff]
      %v3070 = vld [vmem:[%s1132 + $0x69] sm:$0xff]
      %v3071 = vld [vmem:[%s1132 + $0x79] sm:$0xff]
      %v3072 = vld [vmem:[%s1132 + $0x81] sm:$0xff]
      %v3073 = vld [vmem:[%s1132 + $0x91] sm:$0xff]
      %v3074 = vld [vmem:[%s1132 + $0x99] sm:$0xff]
      %v3075 = vld [vmem:[%s1132 + $0xa9] sm:$0xff]
      %v3076 = vld [vmem:[%s1132 + $0xb1] sm:$0xff]
      %v3077 = vld [vmem:[%s1132 + $0xc1] sm:$0xff]
      %v3078 = vld [vmem:[%s1132 + $0xc9] sm:$0xff]
      %v3079 = vld [vmem:[%s1132 + $0xd9] sm:$0xff]
      %v3080 = vld [vmem:[%s1132 + $0xe1] sm:$0xff]
      %v3081 = vld [vmem:[%s1132 + $0xf1] sm:$0xff]
      %v3082 = vld [vmem:[%s1132 + $0xf9] sm:$0xff]
      %v3083 = vld [vmem:[%s1132 + $0x109] sm:$0xff]
      %v3084 = vld [vmem:[%s1132 + $0x111] sm:$0xff]
      %v3085 = vld [vmem:[%s1132 + $0x121] sm:$0xff]
      %v3086 = vld [vmem:[%s1132 + $0x129] sm:$0xff]
      %v3087 = vld [vmem:[%s1132 + $0x139] sm:$0xff]
      %v3088 = vld [vmem:[%s1132 + $0x141] sm:$0xff]
      %v3089 = vld [vmem:[%s1132 + $0x151] sm:$0xff]
      %v3090 = vld [vmem:[%s1132 + $0x159] sm:$0xff]
      %v3091 = vld [vmem:[%s1132 + $0x169] sm:$0xff]
      %v3092 = vld [vmem:[%s1132 + $0x171] sm:$0xff]
      %v3093 = vld [vmem:[%s1132 + $0x2] sm:$0xff]
      %v3094 = vld [vmem:[%s1132 + $0xa] sm:$0xff]
      %v3095 = vld [vmem:[%s1132 + $0x1a] sm:$0xff]
      %v3096 = vld [vmem:[%s1132 + $0x22] sm:$0xff]
      %v3097 = vld [vmem:[%s1132 + $0x32] sm:$0xff]
      %v3098 = vld [vmem:[%s1132 + $0x3a] sm:$0xff]
      %v3099 = vld [vmem:[%s1132 + $0x4a] sm:$0xff]
      %v3100 = vld [vmem:[%s1132 + $0x52] sm:$0xff]
      %v3101 = vld [vmem:[%s1132 + $0x62] sm:$0xff]
      %v3102 = vld [vmem:[%s1132 + $0x6a] sm:$0xff]
      %v3103 = vld [vmem:[%s1132 + $0x7a] sm:$0xff]
      %v3104 = vld [vmem:[%s1132 + $0x82] sm:$0xff]
      %v3105 = vld [vmem:[%s1132 + $0x92] sm:$0xff]
      %v3106 = vld [vmem:[%s1132 + $0x9a] sm:$0xff]
      %v3107 = vld [vmem:[%s1132 + $0xaa] sm:$0xff]
      %v3108 = vld [vmem:[%s1132 + $0xb2] sm:$0xff]
      %v3109 = vld [vmem:[%s1132 + $0xc2] sm:$0xff]
      %v3110 = vld [vmem:[%s1132 + $0xca] sm:$0xff]
      %v3111 = vld [vmem:[%s1132 + $0xda] sm:$0xff]
      %v3112 = vld [vmem:[%s1132 + $0xe2] sm:$0xff]
      %v3113 = vld [vmem:[%s1132 + $0xf2] sm:$0xff]
      %v3114 = vld [vmem:[%s1132 + $0xfa] sm:$0xff]
      %v3115 = vld [vmem:[%s1132 + $0x10a] sm:$0xff]
      %v3116 = vld [vmem:[%s1132 + $0x112] sm:$0xff]
      %v3117 = vld [vmem:[%s1132 + $0x122] sm:$0xff]
      %v3118 = vld [vmem:[%s1132 + $0x12a] sm:$0xff]
      %v3119 = vld [vmem:[%s1132 + $0x13a] sm:$0xff]
      %v3120 = vld [vmem:[%s1132 + $0x142] sm:$0xff]
      %v3121 = vld [vmem:[%s1132 + $0x152] sm:$0xff]
      %v3122 = vld [vmem:[%s1132 + $0x15a] sm:$0xff]
      %v3123 = vld [vmem:[%s1132 + $0x16a] sm:$0xff]
      %v3124 = vld [vmem:[%s1132 + $0x172] sm:$0xff]
      %3157 = vrot.lane.b32.xlu0 %v2869, 4
      %v3158 = vpop.permute.xlu0 %3157
      %3159 = vrot.lane.b32.xlu0 %v2870, 4
      %v3160 = vpop.permute.xlu0 %3159
      %3161 = vrot.lane.b32.xlu0 %v2871, 4
      %v3162 = vpop.permute.xlu0 %3161
      %3163 = vrot.lane.b32.xlu0 %v2872, 4
      %v3164 = vpop.permute.xlu0 %3163
      %3165 = vrot.lane.b32.xlu0 %v2873, 4
      %v3166 = vpop.permute.xlu0 %3165
      %3167 = vrot.lane.b32.xlu0 %v2874, 4
      %v3168 = vpop.permute.xlu0 %3167
      %3169 = vrot.lane.b32.xlu0 %v2875, 4
      %v3170 = vpop.permute.xlu0 %3169
      %3171 = vrot.lane.b32.xlu0 %v2876, 4
      %v3172 = vpop.permute.xlu0 %3171
      %3173 = vrot.lane.b32.xlu0 %v2877, 4
      %v3174 = vpop.permute.xlu0 %3173
      %3175 = vrot.lane.b32.xlu0 %v2878, 4
      %v3176 = vpop.permute.xlu0 %3175
      %3177 = vrot.lane.b32.xlu0 %v2879, 4
      %v3178 = vpop.permute.xlu0 %3177
      %3179 = vrot.lane.b32.xlu0 %v2880, 4
      %v3180 = vpop.permute.xlu0 %3179
      %3181 = vrot.lane.b32.xlu0 %v2881, 4
      %v3182 = vpop.permute.xlu0 %3181
      %3183 = vrot.lane.b32.xlu0 %v2882, 4
      %v3184 = vpop.permute.xlu0 %3183
      %3185 = vrot.lane.b32.xlu0 %v2883, 4
      %v3186 = vpop.permute.xlu0 %3185
      %3187 = vrot.lane.b32.xlu0 %v2884, 4
      %v3188 = vpop.permute.xlu0 %3187
      %3189 = vrot.lane.b32.xlu0 %v2885, 4
      %v3190 = vpop.permute.xlu0 %3189
      %3191 = vrot.lane.b32.xlu0 %v2886, 4
      %v3192 = vpop.permute.xlu0 %3191
      %3193 = vrot.lane.b32.xlu0 %v2887, 4
      %v3194 = vpop.permute.xlu0 %3193
      %3195 = vrot.lane.b32.xlu0 %v2888, 4
      %v3196 = vpop.permute.xlu0 %3195
      %3197 = vrot.lane.b32.xlu0 %v2889, 4
      %v3198 = vpop.permute.xlu0 %3197
      %3199 = vrot.lane.b32.xlu0 %v2890, 4
      %v3200 = vpop.permute.xlu0 %3199
      %3201 = vrot.lane.b32.xlu0 %v2891, 4
      %v3202 = vpop.permute.xlu0 %3201
      %3203 = vrot.lane.b32.xlu0 %v2892, 4
      %v3204 = vpop.permute.xlu0 %3203
      %3205 = vrot.lane.b32.xlu0 %v2893, 4
      %v3206 = vpop.permute.xlu0 %3205
      %3207 = vrot.lane.b32.xlu0 %v2894, 4
      %v3208 = vpop.permute.xlu0 %3207
      %3209 = vrot.lane.b32.xlu0 %v2895, 4
      %v3210 = vpop.permute.xlu0 %3209
      %3211 = vrot.lane.b32.xlu0 %v2896, 4
      %v3212 = vpop.permute.xlu0 %3211
      %3213 = vrot.lane.b32.xlu0 %v2897, 4
      %v3214 = vpop.permute.xlu0 %3213
      %3215 = vrot.lane.b32.xlu0 %v2898, 4
      %v3216 = vpop.permute.xlu0 %3215
      %3217 = vrot.lane.b32.xlu0 %v2899, 4
      %v3218 = vpop.permute.xlu0 %3217
      %3219 = vrot.lane.b32.xlu0 %v2900, 4
      %v3220 = vpop.permute.xlu0 %3219
      %3285 = vrot.lane.b32.xlu0 %v2901, 8
      %v3286 = vpop.permute.xlu0 %3285
      %3287 = vrot.lane.b32.xlu0 %v2902, 8
      %v3288 = vpop.permute.xlu0 %3287
      %3289 = vrot.lane.b32.xlu0 %v2903, 8
      %v3290 = vpop.permute.xlu0 %3289
      %3291 = vrot.lane.b32.xlu0 %v2904, 8
      %v3292 = vpop.permute.xlu0 %3291
      %3293 = vrot.lane.b32.xlu0 %v2905, 8
      %v3294 = vpop.permute.xlu0 %3293
      %3295 = vrot.lane.b32.xlu0 %v2906, 8
      %v3296 = vpop.permute.xlu0 %3295
      %3297 = vrot.lane.b32.xlu0 %v2907, 8
      %v3298 = vpop.permute.xlu0 %3297
      %3299 = vrot.lane.b32.xlu0 %v2908, 8
      %v3300 = vpop.permute.xlu0 %3299
      %3301 = vrot.lane.b32.xlu0 %v2909, 8
      %v3302 = vpop.permute.xlu0 %3301
      %3303 = vrot.lane.b32.xlu0 %v2910, 8
      %v3304 = vpop.permute.xlu0 %3303
      %3305 = vrot.lane.b32.xlu0 %v2911, 8
      %v3306 = vpop.permute.xlu0 %3305
      %3307 = vrot.lane.b32.xlu0 %v2912, 8
      %v3308 = vpop.permute.xlu0 %3307
      %3309 = vrot.lane.b32.xlu0 %v2913, 8
      %v3310 = vpop.permute.xlu0 %3309
      %3311 = vrot.lane.b32.xlu0 %v2914, 8
      %v3312 = vpop.permute.xlu0 %3311
      %3313 = vrot.lane.b32.xlu0 %v2915, 8
      %v3314 = vpop.permute.xlu0 %3313
      %3315 = vrot.lane.b32.xlu0 %v2916, 8
      %v3316 = vpop.permute.xlu0 %3315
      %3317 = vrot.lane.b32.xlu0 %v2917, 8
      %v3318 = vpop.permute.xlu0 %3317
      %3319 = vrot.lane.b32.xlu0 %v2918, 8
      %v3320 = vpop.permute.xlu0 %3319
      %3321 = vrot.lane.b32.xlu0 %v2919, 8
      %v3322 = vpop.permute.xlu0 %3321
      %3323 = vrot.lane.b32.xlu0 %v2920, 8
      %v3324 = vpop.permute.xlu0 %3323
      %3325 = vrot.lane.b32.xlu0 %v2921, 8
      %v3326 = vpop.permute.xlu0 %3325
      %3327 = vrot.lane.b32.xlu0 %v2922, 8
      %v3328 = vpop.permute.xlu0 %3327
      %3329 = vrot.lane.b32.xlu0 %v2923, 8
      %v3330 = vpop.permute.xlu0 %3329
      %3331 = vrot.lane.b32.xlu0 %v2924, 8
      %v3332 = vpop.permute.xlu0 %3331
      %3333 = vrot.lane.b32.xlu0 %v2925, 8
      %v3334 = vpop.permute.xlu0 %3333
      %3335 = vrot.lane.b32.xlu0 %v2926, 8
      %v3336 = vpop.permute.xlu0 %3335
      %3337 = vrot.lane.b32.xlu0 %v2927, 8
      %v3338 = vpop.permute.xlu0 %3337
      %3339 = vrot.lane.b32.xlu0 %v2928, 8
      %v3340 = vpop.permute.xlu0 %3339
      %3341 = vrot.lane.b32.xlu0 %v2929, 8
      %v3342 = vpop.permute.xlu0 %3341
      %3343 = vrot.lane.b32.xlu0 %v2930, 8
      %v3344 = vpop.permute.xlu0 %3343
      %3345 = vrot.lane.b32.xlu0 %v2931, 8
      %v3346 = vpop.permute.xlu0 %3345
      %3347 = vrot.lane.b32.xlu0 %v2932, 8
      %v3348 = vpop.permute.xlu0 %3347
      %3413 = vrot.lane.b32.xlu0 %v2933, 12
      %v3414 = vpop.permute.xlu0 %3413
      %3415 = vrot.lane.b32.xlu0 %v2934, 12
      %v3416 = vpop.permute.xlu0 %3415
      %3417 = vrot.lane.b32.xlu0 %v2935, 12
      %v3418 = vpop.permute.xlu0 %3417
      %3419 = vrot.lane.b32.xlu0 %v2936, 12
      %v3420 = vpop.permute.xlu0 %3419
      %3421 = vrot.lane.b32.xlu0 %v2937, 12
      %v3422 = vpop.permute.xlu0 %3421
      %3423 = vrot.lane.b32.xlu0 %v2938, 12
      %v3424 = vpop.permute.xlu0 %3423
      %3425 = vrot.lane.b32.xlu0 %v2939, 12
      %v3426 = vpop.permute.xlu0 %3425
      %3427 = vrot.lane.b32.xlu0 %v2940, 12
      %v3428 = vpop.permute.xlu0 %3427
      %3429 = vrot.lane.b32.xlu0 %v2941, 12
      %v3430 = vpop.permute.xlu0 %3429
      %3431 = vrot.lane.b32.xlu0 %v2942, 12
      %v3432 = vpop.permute.xlu0 %3431
      %3433 = vrot.lane.b32.xlu0 %v2943, 12
      %v3434 = vpop.permute.xlu0 %3433
      %3435 = vrot.lane.b32.xlu0 %v2944, 12
      %v3436 = vpop.permute.xlu0 %3435
      %3437 = vrot.lane.b32.xlu0 %v2945, 12
      %v3438 = vpop.permute.xlu0 %3437
      %3439 = vrot.lane.b32.xlu0 %v2946, 12
      %v3440 = vpop.permute.xlu0 %3439
      %3441 = vrot.lane.b32.xlu0 %v2947, 12
      %v3442 = vpop.permute.xlu0 %3441
      %3443 = vrot.lane.b32.xlu0 %v2948, 12
      %v3444 = vpop.permute.xlu0 %3443
      %3445 = vrot.lane.b32.xlu0 %v2949, 12
      %v3446 = vpop.permute.xlu0 %3445
      %3447 = vrot.lane.b32.xlu0 %v2950, 12
      %v3448 = vpop.permute.xlu0 %3447
      %3449 = vrot.lane.b32.xlu0 %v2951, 12
      %v3450 = vpop.permute.xlu0 %3449
      %3451 = vrot.lane.b32.xlu0 %v2952, 12
      %v3452 = vpop.permute.xlu0 %3451
      %3453 = vrot.lane.b32.xlu0 %v2953, 12
      %v3454 = vpop.permute.xlu0 %3453
      %3455 = vrot.lane.b32.xlu0 %v2954, 12
      %v3456 = vpop.permute.xlu0 %3455
      %3457 = vrot.lane.b32.xlu0 %v2955, 12
      %v3458 = vpop.permute.xlu0 %3457
      %3459 = vrot.lane.b32.xlu0 %v2956, 12
      %v3460 = vpop.permute.xlu0 %3459
      %3461 = vrot.lane.b32.xlu0 %v2957, 12
      %v3462 = vpop.permute.xlu0 %3461
      %3463 = vrot.lane.b32.xlu0 %v2958, 12
      %v3464 = vpop.permute.xlu0 %3463
      %3465 = vrot.lane.b32.xlu0 %v2959, 12
      %v3466 = vpop.permute.xlu0 %3465
      %3467 = vrot.lane.b32.xlu0 %v2960, 12
      %v3468 = vpop.permute.xlu0 %3467
      %3469 = vrot.lane.b32.xlu0 %v2961, 12
      %v3470 = vpop.permute.xlu0 %3469
      %3471 = vrot.lane.b32.xlu0 %v2962, 12
      %v3472 = vpop.permute.xlu0 %3471
      %3473 = vrot.lane.b32.xlu0 %v2963, 12
      %v3474 = vpop.permute.xlu0 %3473
      %3475 = vrot.lane.b32.xlu0 %v2964, 12
      %v3476 = vpop.permute.xlu0 %3475
      %3541 = vrot.lane.b32.xlu0 %v2965, 16
      %v3542 = vpop.permute.xlu0 %3541
      %3543 = vrot.lane.b32.xlu0 %v2966, 16
      %v3544 = vpop.permute.xlu0 %3543
      %3545 = vrot.lane.b32.xlu0 %v2967, 16
      %v3546 = vpop.permute.xlu0 %3545
      %3547 = vrot.lane.b32.xlu0 %v2968, 16
      %v3548 = vpop.permute.xlu0 %3547
      %3549 = vrot.lane.b32.xlu0 %v2969, 16
      %v3550 = vpop.permute.xlu0 %3549
      %3551 = vrot.lane.b32.xlu0 %v2970, 16
      %v3552 = vpop.permute.xlu0 %3551
      %3553 = vrot.lane.b32.xlu0 %v2971, 16
      %v3554 = vpop.permute.xlu0 %3553
      %3555 = vrot.lane.b32.xlu0 %v2972, 16
      %v3556 = vpop.permute.xlu0 %3555
      %3557 = vrot.lane.b32.xlu0 %v2973, 16
      %v3558 = vpop.permute.xlu0 %3557
      %3559 = vrot.lane.b32.xlu0 %v2974, 16
      %v3560 = vpop.permute.xlu0 %3559
      %3561 = vrot.lane.b32.xlu0 %v2975, 16
      %v3562 = vpop.permute.xlu0 %3561
      %3563 = vrot.lane.b32.xlu0 %v2976, 16
      %v3564 = vpop.permute.xlu0 %3563
      %3565 = vrot.lane.b32.xlu0 %v2977, 16
      %v3566 = vpop.permute.xlu0 %3565
      %3567 = vrot.lane.b32.xlu0 %v2978, 16
      %v3568 = vpop.permute.xlu0 %3567
      %3569 = vrot.lane.b32.xlu0 %v2979, 16
      %v3570 = vpop.permute.xlu0 %3569
      %3571 = vrot.lane.b32.xlu0 %v2980, 16
      %v3572 = vpop.permute.xlu0 %3571
      %3573 = vrot.lane.b32.xlu0 %v2981, 16
      %v3574 = vpop.permute.xlu0 %3573
      %3575 = vrot.lane.b32.xlu0 %v2982, 16
      %v3576 = vpop.permute.xlu0 %3575
      %3577 = vrot.lane.b32.xlu0 %v2983, 16
      %v3578 = vpop.permute.xlu0 %3577
      %3579 = vrot.lane.b32.xlu0 %v2984, 16
      %v3580 = vpop.permute.xlu0 %3579
      %3581 = vrot.lane.b32.xlu0 %v2985, 16
      %v3582 = vpop.permute.xlu0 %3581
      %3583 = vrot.lane.b32.xlu0 %v2986, 16
      %v3584 = vpop.permute.xlu0 %3583
      %3585 = vrot.lane.b32.xlu0 %v2987, 16
      %v3586 = vpop.permute.xlu0 %3585
      %3587 = vrot.lane.b32.xlu0 %v2988, 16
      %v3588 = vpop.permute.xlu0 %3587
      %3589 = vrot.lane.b32.xlu0 %v2989, 16
      %v3590 = vpop.permute.xlu0 %3589
      %3591 = vrot.lane.b32.xlu0 %v2990, 16
      %v3592 = vpop.permute.xlu0 %3591
      %3593 = vrot.lane.b32.xlu0 %v2991, 16
      %v3594 = vpop.permute.xlu0 %3593
      %3595 = vrot.lane.b32.xlu0 %v2992, 16
      %v3596 = vpop.permute.xlu0 %3595
      %3597 = vrot.lane.b32.xlu0 %v2993, 16
      %v3598 = vpop.permute.xlu0 %3597
      %3599 = vrot.lane.b32.xlu0 %v2994, 16
      %v3600 = vpop.permute.xlu0 %3599
      %3601 = vrot.lane.b32.xlu0 %v2995, 16
      %v3602 = vpop.permute.xlu0 %3601
      %3603 = vrot.lane.b32.xlu0 %v2996, 16
      %v3604 = vpop.permute.xlu0 %3603
      %3669 = vrot.lane.b32.xlu0 %v2997, 20
      %v3670 = vpop.permute.xlu0 %3669
      %3671 = vrot.lane.b32.xlu0 %v2998, 20
      %v3672 = vpop.permute.xlu0 %3671
      %3673 = vrot.lane.b32.xlu0 %v2999, 20
      %v3674 = vpop.permute.xlu0 %3673
      %3675 = vrot.lane.b32.xlu0 %v3000, 20
      %v3676 = vpop.permute.xlu0 %3675
      %3677 = vrot.lane.b32.xlu0 %v3001, 20
      %v3678 = vpop.permute.xlu0 %3677
      %3679 = vrot.lane.b32.xlu0 %v3002, 20
      %v3680 = vpop.permute.xlu0 %3679
      %3681 = vrot.lane.b32.xlu0 %v3003, 20
      %v3682 = vpop.permute.xlu0 %3681
      %3683 = vrot.lane.b32.xlu0 %v3004, 20
      %v3684 = vpop.permute.xlu0 %3683
      %3685 = vrot.lane.b32.xlu0 %v3005, 20
      %v3686 = vpop.permute.xlu0 %3685
      %3687 = vrot.lane.b32.xlu0 %v3006, 20
      %v3688 = vpop.permute.xlu0 %3687
      %3689 = vrot.lane.b32.xlu0 %v3007, 20
      %v3690 = vpop.permute.xlu0 %3689
      %3691 = vrot.lane.b32.xlu0 %v3008, 20
      %v3692 = vpop.permute.xlu0 %3691
      %3693 = vrot.lane.b32.xlu0 %v3009, 20
      %v3694 = vpop.permute.xlu0 %3693
      %3695 = vrot.lane.b32.xlu0 %v3010, 20
      %v3696 = vpop.permute.xlu0 %3695
      %3697 = vrot.lane.b32.xlu0 %v3011, 20
      %v3698 = vpop.permute.xlu0 %3697
      %3699 = vrot.lane.b32.xlu0 %v3012, 20
      %v3700 = vpop.permute.xlu0 %3699
      %3701 = vrot.lane.b32.xlu0 %v3013, 20
      %v3702 = vpop.permute.xlu0 %3701
      %3703 = vrot.lane.b32.xlu0 %v3014, 20
      %v3704 = vpop.permute.xlu0 %3703
      %3705 = vrot.lane.b32.xlu0 %v3015, 20
      %v3706 = vpop.permute.xlu0 %3705
      %3707 = vrot.lane.b32.xlu0 %v3016, 20
      %v3708 = vpop.permute.xlu0 %3707
      %3709 = vrot.lane.b32.xlu0 %v3017, 20
      %v3710 = vpop.permute.xlu0 %3709
      %3711 = vrot.lane.b32.xlu0 %v3018, 20
      %v3712 = vpop.permute.xlu0 %3711
      %3713 = vrot.lane.b32.xlu0 %v3019, 20
      %v3714 = vpop.permute.xlu0 %3713
      %3715 = vrot.lane.b32.xlu0 %v3020, 20
      %v3716 = vpop.permute.xlu0 %3715
      %3717 = vrot.lane.b32.xlu0 %v3021, 20
      %v3718 = vpop.permute.xlu0 %3717
      %3719 = vrot.lane.b32.xlu0 %v3022, 20
      %v3720 = vpop.permute.xlu0 %3719
      %3721 = vrot.lane.b32.xlu0 %v3023, 20
      %v3722 = vpop.permute.xlu0 %3721
      %3723 = vrot.lane.b32.xlu0 %v3024, 20
      %v3724 = vpop.permute.xlu0 %3723
      %3725 = vrot.lane.b32.xlu0 %v3025, 20
      %v3726 = vpop.permute.xlu0 %3725
      %3727 = vrot.lane.b32.xlu0 %v3026, 20
      %v3728 = vpop.permute.xlu0 %3727
      %3729 = vrot.lane.b32.xlu0 %v3027, 20
      %v3730 = vpop.permute.xlu0 %3729
      %3731 = vrot.lane.b32.xlu0 %v3028, 20
      %v3732 = vpop.permute.xlu0 %3731
      %3797 = vrot.lane.b32.xlu0 %v3029, 24
      %v3798 = vpop.permute.xlu0 %3797
      %3799 = vrot.lane.b32.xlu0 %v3030, 24
      %v3800 = vpop.permute.xlu0 %3799
      %3801 = vrot.lane.b32.xlu0 %v3031, 24
      %v3802 = vpop.permute.xlu0 %3801
      %3803 = vrot.lane.b32.xlu0 %v3032, 24
      %v3804 = vpop.permute.xlu0 %3803
      %3805 = vrot.lane.b32.xlu0 %v3033, 24
      %v3806 = vpop.permute.xlu0 %3805
      %3807 = vrot.lane.b32.xlu0 %v3034, 24
      %v3808 = vpop.permute.xlu0 %3807
      %3809 = vrot.lane.b32.xlu0 %v3035, 24
      %v3810 = vpop.permute.xlu0 %3809
      %3811 = vrot.lane.b32.xlu0 %v3036, 24
      %v3812 = vpop.permute.xlu0 %3811
      %3813 = vrot.lane.b32.xlu0 %v3037, 24
      %v3814 = vpop.permute.xlu0 %3813
      %3815 = vrot.lane.b32.xlu0 %v3038, 24
      %v3816 = vpop.permute.xlu0 %3815
      %3817 = vrot.lane.b32.xlu0 %v3039, 24
      %v3818 = vpop.permute.xlu0 %3817
      %3819 = vrot.lane.b32.xlu0 %v3040, 24
      %v3820 = vpop.permute.xlu0 %3819
      %3821 = vrot.lane.b32.xlu0 %v3041, 24
      %v3822 = vpop.permute.xlu0 %3821
      %3823 = vrot.lane.b32.xlu0 %v3042, 24
      %v3824 = vpop.permute.xlu0 %3823
      %3825 = vrot.lane.b32.xlu0 %v3043, 24
      %v3826 = vpop.permute.xlu0 %3825
      %3827 = vrot.lane.b32.xlu0 %v3044, 24
      %v3828 = vpop.permute.xlu0 %3827
      %3829 = vrot.lane.b32.xlu0 %v3045, 24
      %v3830 = vpop.permute.xlu0 %3829
      %3831 = vrot.lane.b32.xlu0 %v3046, 24
      %v3832 = vpop.permute.xlu0 %3831
      %3833 = vrot.lane.b32.xlu0 %v3047, 24
      %v3834 = vpop.permute.xlu0 %3833
      %3835 = vrot.lane.b32.xlu0 %v3048, 24
      %v3836 = vpop.permute.xlu0 %3835
      %3837 = vrot.lane.b32.xlu0 %v3049, 24
      %v3838 = vpop.permute.xlu0 %3837
      %3839 = vrot.lane.b32.xlu0 %v3050, 24
      %v3840 = vpop.permute.xlu0 %3839
      %3841 = vrot.lane.b32.xlu0 %v3051, 24
      %v3842 = vpop.permute.xlu0 %3841
      %3843 = vrot.lane.b32.xlu0 %v3052, 24
      %v3844 = vpop.permute.xlu0 %3843
      %3845 = vrot.lane.b32.xlu0 %v3053, 24
      %v3846 = vpop.permute.xlu0 %3845
      %3847 = vrot.lane.b32.xlu0 %v3054, 24
      %v3848 = vpop.permute.xlu0 %3847
      %3849 = vrot.lane.b32.xlu0 %v3055, 24
      %v3850 = vpop.permute.xlu0 %3849
      %3851 = vrot.lane.b32.xlu0 %v3056, 24
      %v3852 = vpop.permute.xlu0 %3851
      %3853 = vrot.lane.b32.xlu0 %v3057, 24
      %v3854 = vpop.permute.xlu0 %3853
      %3855 = vrot.lane.b32.xlu0 %v3058, 24
      %v3856 = vpop.permute.xlu0 %3855
      %3857 = vrot.lane.b32.xlu0 %v3059, 24
      %v3858 = vpop.permute.xlu0 %3857
      %3859 = vrot.lane.b32.xlu0 %v3060, 24
      %v3860 = vpop.permute.xlu0 %3859
      %3925 = vrot.lane.b32.xlu0 %v3061, 28
      %v3926 = vpop.permute.xlu0 %3925
      %3927 = vrot.lane.b32.xlu0 %v3062, 28
      %v3928 = vpop.permute.xlu0 %3927
      %3929 = vrot.lane.b32.xlu0 %v3063, 28
      %v3930 = vpop.permute.xlu0 %3929
      %3931 = vrot.lane.b32.xlu0 %v3064, 28
      %v3932 = vpop.permute.xlu0 %3931
      %3933 = vrot.lane.b32.xlu0 %v3065, 28
      %v3934 = vpop.permute.xlu0 %3933
      %3935 = vrot.lane.b32.xlu0 %v3066, 28
      %v3936 = vpop.permute.xlu0 %3935
      %3937 = vrot.lane.b32.xlu0 %v3067, 28
      %v3938 = vpop.permute.xlu0 %3937
      %3939 = vrot.lane.b32.xlu0 %v3068, 28
      %v3940 = vpop.permute.xlu0 %3939
      %3941 = vrot.lane.b32.xlu0 %v3069, 28
      %v3942 = vpop.permute.xlu0 %3941
      %3943 = vrot.lane.b32.xlu0 %v3070, 28
      %v3944 = vpop.permute.xlu0 %3943
      %3945 = vrot.lane.b32.xlu0 %v3071, 28
      %v3946 = vpop.permute.xlu0 %3945
      %3947 = vrot.lane.b32.xlu0 %v3072, 28
      %v3948 = vpop.permute.xlu0 %3947
      %3949 = vrot.lane.b32.xlu0 %v3073, 28
      %v3950 = vpop.permute.xlu0 %3949
      %3951 = vrot.lane.b32.xlu0 %v3074, 28
      %v3952 = vpop.permute.xlu0 %3951
      %3953 = vrot.lane.b32.xlu0 %v3075, 28
      %v3954 = vpop.permute.xlu0 %3953
      %3955 = vrot.lane.b32.xlu0 %v3076, 28
      %v3956 = vpop.permute.xlu0 %3955
      %3957 = vrot.lane.b32.xlu0 %v3077, 28
      %v3958 = vpop.permute.xlu0 %3957
      %3959 = vrot.lane.b32.xlu0 %v3078, 28
      %v3960 = vpop.permute.xlu0 %3959
      %3961 = vrot.lane.b32.xlu0 %v3079, 28
      %v3962 = vpop.permute.xlu0 %3961
      %3963 = vrot.lane.b32.xlu0 %v3080, 28
      %v3964 = vpop.permute.xlu0 %3963
      %3965 = vrot.lane.b32.xlu0 %v3081, 28
      %v3966 = vpop.permute.xlu0 %3965
      %3967 = vrot.lane.b32.xlu0 %v3082, 28
      %v3968 = vpop.permute.xlu0 %3967
      %3969 = vrot.lane.b32.xlu0 %v3083, 28
      %v3970 = vpop.permute.xlu0 %3969
      %3971 = vrot.lane.b32.xlu0 %v3084, 28
      %v3972 = vpop.permute.xlu0 %3971
      %3973 = vrot.lane.b32.xlu0 %v3085, 28
      %v3974 = vpop.permute.xlu0 %3973
      %3975 = vrot.lane.b32.xlu0 %v3086, 28
      %v3976 = vpop.permute.xlu0 %3975
      %3977 = vrot.lane.b32.xlu0 %v3087, 28
      %v3978 = vpop.permute.xlu0 %3977
      %3979 = vrot.lane.b32.xlu0 %v3088, 28
      %v3980 = vpop.permute.xlu0 %3979
      %3981 = vrot.lane.b32.xlu0 %v3089, 28
      %v3982 = vpop.permute.xlu0 %3981
      %3983 = vrot.lane.b32.xlu0 %v3090, 28
      %v3984 = vpop.permute.xlu0 %3983
      %3985 = vrot.lane.b32.xlu0 %v3091, 28
      %v3986 = vpop.permute.xlu0 %3985
      %3987 = vrot.lane.b32.xlu0 %v3092, 28
      %v3988 = vpop.permute.xlu0 %3987
      %4053 = vrot.lane.b32.xlu0 %v3093, 32
      %v4054 = vpop.permute.xlu0 %4053
      %4055 = vrot.lane.b32.xlu0 %v3094, 32
      %v4056 = vpop.permute.xlu0 %4055
      %4057 = vrot.lane.b32.xlu0 %v3095, 32
      %v4058 = vpop.permute.xlu0 %4057
      %4059 = vrot.lane.b32.xlu0 %v3096, 32
      %v4060 = vpop.permute.xlu0 %4059
      %4061 = vrot.lane.b32.xlu0 %v3097, 32
      %v4062 = vpop.permute.xlu0 %4061
      %4063 = vrot.lane.b32.xlu0 %v3098, 32
      %v4064 = vpop.permute.xlu0 %4063
      %4065 = vrot.lane.b32.xlu0 %v3099, 32
      %v4066 = vpop.permute.xlu0 %4065
      %4067 = vrot.lane.b32.xlu0 %v3100, 32
      %v4068 = vpop.permute.xlu0 %4067
      %4069 = vrot.lane.b32.xlu0 %v3101, 32
      %v4070 = vpop.permute.xlu0 %4069
      %4071 = vrot.lane.b32.xlu0 %v3102, 32
      %v4072 = vpop.permute.xlu0 %4071
      %4073 = vrot.lane.b32.xlu0 %v3103, 32
      %v4074 = vpop.permute.xlu0 %4073
      %4075 = vrot.lane.b32.xlu0 %v3104, 32
      %v4076 = vpop.permute.xlu0 %4075
      %4077 = vrot.lane.b32.xlu0 %v3105, 32
      %v4078 = vpop.permute.xlu0 %4077
      %4079 = vrot.lane.b32.xlu0 %v3106, 32
      %v4080 = vpop.permute.xlu0 %4079
      %4081 = vrot.lane.b32.xlu0 %v3107, 32
      %v4082 = vpop.permute.xlu0 %4081
      %4083 = vrot.lane.b32.xlu0 %v3108, 32
      %v4084 = vpop.permute.xlu0 %4083
      %4085 = vrot.lane.b32.xlu0 %v3109, 32
      %v4086 = vpop.permute.xlu0 %4085
      %4087 = vrot.lane.b32.xlu0 %v3110, 32
      %v4088 = vpop.permute.xlu0 %4087
      %4089 = vrot.lane.b32.xlu0 %v3111, 32
      %v4090 = vpop.permute.xlu0 %4089
      %4091 = vrot.lane.b32.xlu0 %v3112, 32
      %v4092 = vpop.permute.xlu0 %4091
      %4093 = vrot.lane.b32.xlu0 %v3113, 32
      %v4094 = vpop.permute.xlu0 %4093
      %4095 = vrot.lane.b32.xlu0 %v3114, 32
      %v4096 = vpop.permute.xlu0 %4095
      %4097 = vrot.lane.b32.xlu0 %v3115, 32
      %v4098 = vpop.permute.xlu0 %4097
      %4099 = vrot.lane.b32.xlu0 %v3116, 32
      %v4100 = vpop.permute.xlu0 %4099
      %4101 = vrot.lane.b32.xlu0 %v3117, 32
      %v4102 = vpop.permute.xlu0 %4101
      %4103 = vrot.lane.b32.xlu0 %v3118, 32
      %v4104 = vpop.permute.xlu0 %4103
      %4105 = vrot.lane.b32.xlu0 %v3119, 32
      %v4106 = vpop.permute.xlu0 %4105
      %4107 = vrot.lane.b32.xlu0 %v3120, 32
      %v4108 = vpop.permute.xlu0 %4107
      %4109 = vrot.lane.b32.xlu0 %v3121, 32
      %v4110 = vpop.permute.xlu0 %4109
      %4111 = vrot.lane.b32.xlu0 %v3122, 32
      %v4112 = vpop.permute.xlu0 %4111
      %4113 = vrot.lane.b32.xlu0 %v3123, 32
      %v4114 = vpop.permute.xlu0 %4113
      %4115 = vrot.lane.b32.xlu0 %v3124, 32
      %v4116 = vpop.permute.xlu0 %4115
      %v4149 = vsel %vm851, %v2837, %v3158
      %v4150 = vsel %vm851, %v2838, %v3160
      %v4151 = vsel %vm851, %v2839, %v3162
      %v4152 = vsel %vm851, %v2840, %v3164
      %v4153 = vsel %vm851, %v2841, %v3166
      %v4154 = vsel %vm851, %v2842, %v3168
      %v4155 = vsel %vm851, %v2843, %v3170
      %v4156 = vsel %vm851, %v2844, %v3172
      %v4157 = vsel %vm851, %v2845, %v3174
      %v4158 = vsel %vm851, %v2846, %v3176
      %v4159 = vsel %vm851, %v2847, %v3178
      %v4160 = vsel %vm851, %v2848, %v3180
      %v4161 = vsel %vm851, %v2849, %v3182
      %v4162 = vsel %vm851, %v2850, %v3184
      %v4163 = vsel %vm851, %v2851, %v3186
      %v4164 = vsel %vm851, %v2852, %v3188
      %v4165 = vsel %vm851, %v2853, %v3190
      %v4166 = vsel %vm851, %v2854, %v3192
      %v4167 = vsel %vm851, %v2855, %v3194
      %v4168 = vsel %vm851, %v2856, %v3196
      %v4169 = vsel %vm851, %v2857, %v3198
      %v4170 = vsel %vm851, %v2858, %v3200
      %v4171 = vsel %vm851, %v2859, %v3202
      %v4172 = vsel %vm851, %v2860, %v3204
      %v4173 = vsel %vm851, %v2861, %v3206
      %v4174 = vsel %vm851, %v2862, %v3208
      %v4175 = vsel %vm851, %v2863, %v3210
      %v4176 = vsel %vm851, %v2864, %v3212
      %v4177 = vsel %vm851, %v2865, %v3214
      %v4178 = vsel %vm851, %v2866, %v3216
      %v4179 = vsel %vm851, %v2867, %v3218
      %v4180 = vsel %vm851, %v2868, %v3220
      %v4181 = vsel %vm2285, %v4149, %v3286
      %v4182 = vsel %vm2285, %v4150, %v3288
      %v4183 = vsel %vm2285, %v4151, %v3290
      %v4184 = vsel %vm2285, %v4152, %v3292
      %v4185 = vsel %vm2285, %v4153, %v3294
      %v4186 = vsel %vm2285, %v4154, %v3296
      %v4187 = vsel %vm2285, %v4155, %v3298
      %v4188 = vsel %vm2285, %v4156, %v3300
      %v4189 = vsel %vm2285, %v4157, %v3302
      %v4190 = vsel %vm2285, %v4158, %v3304
      %v4191 = vsel %vm2285, %v4159, %v3306
      %v4192 = vsel %vm2285, %v4160, %v3308
      %v4193 = vsel %vm2285, %v4161, %v3310
      %v4194 = vsel %vm2285, %v4162, %v3312
      %v4195 = vsel %vm2285, %v4163, %v3314
      %v4196 = vsel %vm2285, %v4164, %v3316
      %v4197 = vsel %vm2285, %v4165, %v3318
      %v4198 = vsel %vm2285, %v4166, %v3320
      %v4199 = vsel %vm2285, %v4167, %v3322
      %v4200 = vsel %vm2285, %v4168, %v3324
      %v4201 = vsel %vm2285, %v4169, %v3326
      %v4202 = vsel %vm2285, %v4170, %v3328
      %v4203 = vsel %vm2285, %v4171, %v3330
      %v4204 = vsel %vm2285, %v4172, %v3332
      %v4205 = vsel %vm2285, %v4173, %v3334
      %v4206 = vsel %vm2285, %v4174, %v3336
      %v4207 = vsel %vm2285, %v4175, %v3338
      %v4208 = vsel %vm2285, %v4176, %v3340
      %v4209 = vsel %vm2285, %v4177, %v3342
      %v4210 = vsel %vm2285, %v4178, %v3344
      %v4211 = vsel %vm2285, %v4179, %v3346
      %v4212 = vsel %vm2285, %v4180, %v3348
      %v4213 = vsel %vm2318, %v4181, %v3414
      %v4214 = vsel %vm2318, %v4182, %v3416
      %v4215 = vsel %vm2318, %v4183, %v3418
      %v4216 = vsel %vm2318, %v4184, %v3420
      %v4217 = vsel %vm2318, %v4185, %v3422
      %v4218 = vsel %vm2318, %v4186, %v3424
      %v4219 = vsel %vm2318, %v4187, %v3426
      %v4220 = vsel %vm2318, %v4188, %v3428
      %v4221 = vsel %vm2318, %v4189, %v3430
      %v4222 = vsel %vm2318, %v4190, %v3432
      %v4223 = vsel %vm2318, %v4191, %v3434
      %v4224 = vsel %vm2318, %v4192, %v3436
      %v4225 = vsel %vm2318, %v4193, %v3438
      %v4226 = vsel %vm2318, %v4194, %v3440
      %v4227 = vsel %vm2318, %v4195, %v3442
      %v4228 = vsel %vm2318, %v4196, %v3444
      %v4229 = vsel %vm2318, %v4197, %v3446
      %v4230 = vsel %vm2318, %v4198, %v3448
      %v4231 = vsel %vm2318, %v4199, %v3450
      %v4232 = vsel %vm2318, %v4200, %v3452
      %v4233 = vsel %vm2318, %v4201, %v3454
      %v4234 = vsel %vm2318, %v4202, %v3456
      %v4235 = vsel %vm2318, %v4203, %v3458
      %v4236 = vsel %vm2318, %v4204, %v3460
      %v4237 = vsel %vm2318, %v4205, %v3462
      %v4238 = vsel %vm2318, %v4206, %v3464
      %v4239 = vsel %vm2318, %v4207, %v3466
      %v4240 = vsel %vm2318, %v4208, %v3468
      %v4241 = vsel %vm2318, %v4209, %v3470
      %v4242 = vsel %vm2318, %v4210, %v3472
      %v4243 = vsel %vm2318, %v4211, %v3474
      %v4244 = vsel %vm2318, %v4212, %v3476
      %v4245 = vsel %vm2351, %v4213, %v3542
      %v4246 = vsel %vm2351, %v4214, %v3544
      %v4247 = vsel %vm2351, %v4215, %v3546
      %v4248 = vsel %vm2351, %v4216, %v3548
      %v4249 = vsel %vm2351, %v4217, %v3550
      %v4250 = vsel %vm2351, %v4218, %v3552
      %v4251 = vsel %vm2351, %v4219, %v3554
      %v4252 = vsel %vm2351, %v4220, %v3556
      %v4253 = vsel %vm2351, %v4221, %v3558
      %v4254 = vsel %vm2351, %v4222, %v3560
      %v4255 = vsel %vm2351, %v4223, %v3562
      %v4256 = vsel %vm2351, %v4224, %v3564
      %v4257 = vsel %vm2351, %v4225, %v3566
      %v4258 = vsel %vm2351, %v4226, %v3568
      %v4259 = vsel %vm2351, %v4227, %v3570
      %v4260 = vsel %vm2351, %v4228, %v3572
      %v4261 = vsel %vm2351, %v4229, %v3574
      %v4262 = vsel %vm2351, %v4230, %v3576
      %v4263 = vsel %vm2351, %v4231, %v3578
      %v4264 = vsel %vm2351, %v4232, %v3580
      %v4265 = vsel %vm2351, %v4233, %v3582
      %v4266 = vsel %vm2351, %v4234, %v3584
      %v4267 = vsel %vm2351, %v4235, %v3586
      %v4268 = vsel %vm2351, %v4236, %v3588
      %v4269 = vsel %vm2351, %v4237, %v3590
      %v4270 = vsel %vm2351, %v4238, %v3592
      %v4271 = vsel %vm2351, %v4239, %v3594
      %v4272 = vsel %vm2351, %v4240, %v3596
      %v4273 = vsel %vm2351, %v4241, %v3598
      %v4274 = vsel %vm2351, %v4242, %v3600
      %v4275 = vsel %vm2351, %v4243, %v3602
      %v4276 = vsel %vm2351, %v4244, %v3604
      %v4277 = vsel %vm2384, %v4245, %v3670
      %v4278 = vsel %vm2384, %v4246, %v3672
      %v4279 = vsel %vm2384, %v4247, %v3674
      %v4280 = vsel %vm2384, %v4248, %v3676
      %v4281 = vsel %vm2384, %v4249, %v3678
      %v4282 = vsel %vm2384, %v4250, %v3680
      %v4283 = vsel %vm2384, %v4251, %v3682
      %v4284 = vsel %vm2384, %v4252, %v3684
      %v4285 = vsel %vm2384, %v4253, %v3686
      %v4286 = vsel %vm2384, %v4254, %v3688
      %v4287 = vsel %vm2384, %v4255, %v3690
      %v4288 = vsel %vm2384, %v4256, %v3692
      %v4289 = vsel %vm2384, %v4257, %v3694
      %v4290 = vsel %vm2384, %v4258, %v3696
      %v4291 = vsel %vm2384, %v4259, %v3698
      %v4292 = vsel %vm2384, %v4260, %v3700
      %v4293 = vsel %vm2384, %v4261, %v3702
      %v4294 = vsel %vm2384, %v4262, %v3704
      %v4295 = vsel %vm2384, %v4263, %v3706
      %v4296 = vsel %vm2384, %v4264, %v3708
      %v4297 = vsel %vm2384, %v4265, %v3710
      %v4298 = vsel %vm2384, %v4266, %v3712
      %v4299 = vsel %vm2384, %v4267, %v3714
      %v4300 = vsel %vm2384, %v4268, %v3716
      %v4301 = vsel %vm2384, %v4269, %v3718
      %v4302 = vsel %vm2384, %v4270, %v3720
      %v4303 = vsel %vm2384, %v4271, %v3722
      %v4304 = vsel %vm2384, %v4272, %v3724
      %v4305 = vsel %vm2384, %v4273, %v3726
      %v4306 = vsel %vm2384, %v4274, %v3728
      %v4307 = vsel %vm2384, %v4275, %v3730
      %v4308 = vsel %vm2384, %v4276, %v3732
      %v4309 = vsel %vm2417, %v4277, %v3798
      %v4310 = vsel %vm2417, %v4278, %v3800
      %v4311 = vsel %vm2417, %v4279, %v3802
      %v4312 = vsel %vm2417, %v4280, %v3804
      %v4313 = vsel %vm2417, %v4281, %v3806
      %v4314 = vsel %vm2417, %v4282, %v3808
      %v4315 = vsel %vm2417, %v4283, %v3810
      %v4316 = vsel %vm2417, %v4284, %v3812
      %v4317 = vsel %vm2417, %v4285, %v3814
      %v4318 = vsel %vm2417, %v4286, %v3816
      %v4319 = vsel %vm2417, %v4287, %v3818
      %v4320 = vsel %vm2417, %v4288, %v3820
      %v4321 = vsel %vm2417, %v4289, %v3822
      %v4322 = vsel %vm2417, %v4290, %v3824
      %v4323 = vsel %vm2417, %v4291, %v3826
      %v4324 = vsel %vm2417, %v4292, %v3828
      %v4325 = vsel %vm2417, %v4293, %v3830
      %v4326 = vsel %vm2417, %v4294, %v3832
      %v4327 = vsel %vm2417, %v4295, %v3834
      %v4328 = vsel %vm2417, %v4296, %v3836
      %v4329 = vsel %vm2417, %v4297, %v3838
      %v4330 = vsel %vm2417, %v4298, %v3840
      %v4331 = vsel %vm2417, %v4299, %v3842
      %v4332 = vsel %vm2417, %v4300, %v3844
      %v4333 = vsel %vm2417, %v4301, %v3846
      %v4334 = vsel %vm2417, %v4302, %v3848
      %v4335 = vsel %vm2417, %v4303, %v3850
      %v4336 = vsel %vm2417, %v4304, %v3852
      %v4337 = vsel %vm2417, %v4305, %v3854
      %v4338 = vsel %vm2417, %v4306, %v3856
      %v4339 = vsel %vm2417, %v4307, %v3858
      %v4340 = vsel %vm2417, %v4308, %v3860
      %v4341 = vsel %vm2450, %v4309, %v3926
      %v4342 = vsel %vm2450, %v4310, %v3928
      %v4343 = vsel %vm2450, %v4311, %v3930
      %v4344 = vsel %vm2450, %v4312, %v3932
      %v4345 = vsel %vm2450, %v4313, %v3934
      %v4346 = vsel %vm2450, %v4314, %v3936
      %v4347 = vsel %vm2450, %v4315, %v3938
      %v4348 = vsel %vm2450, %v4316, %v3940
      %v4349 = vsel %vm2450, %v4317, %v3942
      %v4350 = vsel %vm2450, %v4318, %v3944
      %v4351 = vsel %vm2450, %v4319, %v3946
      %v4352 = vsel %vm2450, %v4320, %v3948
      %v4353 = vsel %vm2450, %v4321, %v3950
      %v4354 = vsel %vm2450, %v4322, %v3952
      %v4355 = vsel %vm2450, %v4323, %v3954
      %v4356 = vsel %vm2450, %v4324, %v3956
      %v4357 = vsel %vm2450, %v4325, %v3958
      %v4358 = vsel %vm2450, %v4326, %v3960
      %v4359 = vsel %vm2450, %v4327, %v3962
      %v4360 = vsel %vm2450, %v4328, %v3964
      %v4361 = vsel %vm2450, %v4329, %v3966
      %v4362 = vsel %vm2450, %v4330, %v3968
      %v4363 = vsel %vm2450, %v4331, %v3970
      %v4364 = vsel %vm2450, %v4332, %v3972
      %v4365 = vsel %vm2450, %v4333, %v3974
      %v4366 = vsel %vm2450, %v4334, %v3976
      %v4367 = vsel %vm2450, %v4335, %v3978
      %v4368 = vsel %vm2450, %v4336, %v3980
      %v4369 = vsel %vm2450, %v4337, %v3982
      %v4370 = vsel %vm2450, %v4338, %v3984
      %v4371 = vsel %vm2450, %v4339, %v3986
      %v4372 = vsel %vm2450, %v4340, %v3988
      %v4373 = vsel %vm2483, %v4341, %v4054
      %v4374 = vsel %vm2483, %v4342, %v4056
      %v4375 = vsel %vm2483, %v4343, %v4058
      %v4376 = vsel %vm2483, %v4344, %v4060
      %v4377 = vsel %vm2483, %v4345, %v4062
      %v4378 = vsel %vm2483, %v4346, %v4064
      %v4379 = vsel %vm2483, %v4347, %v4066
      %v4380 = vsel %vm2483, %v4348, %v4068
      %v4381 = vsel %vm2483, %v4349, %v4070
      %v4382 = vsel %vm2483, %v4350, %v4072
      %v4383 = vsel %vm2483, %v4351, %v4074
      %v4384 = vsel %vm2483, %v4352, %v4076
      %v4385 = vsel %vm2483, %v4353, %v4078
      %v4386 = vsel %vm2483, %v4354, %v4080
      %v4387 = vsel %vm2483, %v4355, %v4082
      %v4388 = vsel %vm2483, %v4356, %v4084
      %v4389 = vsel %vm2483, %v4357, %v4086
      %v4390 = vsel %vm2483, %v4358, %v4088
      %v4391 = vsel %vm2483, %v4359, %v4090
      %v4392 = vsel %vm2483, %v4360, %v4092
      %v4393 = vsel %vm2483, %v4361, %v4094
      %v4394 = vsel %vm2483, %v4362, %v4096
      %v4395 = vsel %vm2483, %v4363, %v4098
      %v4396 = vsel %vm2483, %v4364, %v4100
      %v4397 = vsel %vm2483, %v4365, %v4102
      %v4398 = vsel %vm2483, %v4366, %v4104
      %v4399 = vsel %vm2483, %v4367, %v4106
      %v4400 = vsel %vm2483, %v4368, %v4108
      %v4401 = vsel %vm2483, %v4369, %v4110
      %v4402 = vsel %vm2483, %v4370, %v4112
      %v4403 = vsel %vm2483, %v4371, %v4114
      %v4404 = vsel %vm2483, %v4372, %v4116
      %v4405 = vpack.c.bf16 %v4374, %v4373
      %v4406 = vpack.c.bf16 %v4376, %v4375
      %v4407 = vpack.c.bf16 %v4378, %v4377
      %v4408 = vpack.c.bf16 %v4380, %v4379
      %v4409 = vpack.c.bf16 %v4382, %v4381
      %v4410 = vpack.c.bf16 %v4384, %v4383
      %v4411 = vpack.c.bf16 %v4386, %v4385
      %v4412 = vpack.c.bf16 %v4388, %v4387
      %v4413 = vpack.c.bf16 %v4390, %v4389
      %v4414 = vpack.c.bf16 %v4392, %v4391
      %v4415 = vpack.c.bf16 %v4394, %v4393
      %v4416 = vpack.c.bf16 %v4396, %v4395
      %v4417 = vpack.c.bf16 %v4398, %v4397
      %v4418 = vpack.c.bf16 %v4400, %v4399
      %v4419 = vpack.c.bf16 %v4402, %v4401
      %v4420 = vpack.c.bf16 %v4404, %v4403
      %s4421 = scalar_lea.vmem %s3, 20
      %v4422 = vld [vmem:[%s4421] sm:$0xf]
      %v4423 = vld [vmem:[%s4421 + $0x4] sm:$0xf]
      %v4424 = vld [vmem:[%s4421 + $0x8] sm:$0xf]
      %v4425 = vld [vmem:[%s4421 + $0xc] sm:$0xf]
      %v4426 = vld [vmem:[%s4421 + $0x10] sm:$0x3]
      %s4427 = scalar_lea.vmem %s4, 1
      %v4428 = vld [vmem:[%s4427] sm:$0x1]
      %v4430 = vlaneseq
      %v4431 = vshrl.u32 %v4430, 7
      %v4432 = vsub.s32 0, %v4431
      %v4433 = vrot.slane %v4428, %v4432
      %v4440 = vunpack.c.l.b16 %v4422
      %v4441 = vunpack.c.l.b16 %v4423
      %v4442 = vunpack.c.l.b16 %v4424
      %v4443 = vunpack.c.l.b16 %v4425
      %v4444 = vunpack.c.l.b16 %v4426
      %v4445 = vpack.c.b16 %v4441, %v4440
      %v4446 = vpack.c.b16 %v4443, %v4442
      %v4447 = vpack.c.b16 %v4444, %v4444
      %v4451 = vsel %vm2559, %v4405, 0
      %v4454 = vsel %vm2559, %v4406, 0
      %v4457 = vsel %vm2559, %v4407, 0
      %v4460 = vsel %vm2559, %v4408, 0
      %v4463 = vsel %vm2559, %v4409, 0
      %v4466 = vsel %vm2559, %v4410, 0
      %v4469 = vsel %vm2559, %v4411, 0
      %v4472 = vsel %vm2559, %v4412, 0
      %v4475 = vsel %vm2559, %v4413, 0
      %v4478 = vsel %vm2559, %v4414, 0
      %v4481 = vsel %vm2559, %v4415, 0
      %v4484 = vsel %vm2559, %v4416, 0
      %v4487 = vsel %vm2559, %v4417, 0
      %v4490 = vsel %vm2559, %v4418, 0
      %v4493 = vsel %vm2559, %v4419, 0
      %v4496 = vsel %vm2559, %v4420, 0
      %v4499 = vsel %vm2608, %v4447, 0
      %4501 = vmatprep.subr.bf16.mxu0 0
      %4502 = vmatpush1.bf16.msra.mxu0 %v4445
      %4503 = vmatprep.subr.bf16.mxu0 0
      %4504 = vmatpush1.bf16.msra.mxu0 %v4446
      %4505 = vmatprep.subr.bf16.mxu0 0
      %4506 = vmatpush1.bf16.msra.mxu0 %v4499
      %4507 = vmatprep.subr.bf16.mxu0 0
      %4508 = vmatpush1.bf16.msra.mxu0 0
      %4509 = vmatprep.subr.bf16.mxu0 0
      %4510 = vmatpush1.bf16.msra.mxu0 0
      %4511 = vmatprep.subr.bf16.mxu0 0
      %4512 = vmatpush1.bf16.msra.mxu0 0
      %4513 = vmatprep.subr.bf16.mxu0 0
      %4514 = vmatpush1.bf16.msra.mxu0 0
      %4515 = vmatprep.subr.bf16.mxu0 0
      %4516 = vmatpush1.bf16.msra.mxu0 0
      %4517 = vmatprep.subr.bf16.mxu0 0
      %4518 = vmatpush1.bf16.msra.mxu0 0
      %4519 = vmatprep.subr.bf16.mxu0 0
      %4520 = vmatpush1.bf16.msra.mxu0 0
      %4521 = vmatprep.subr.bf16.mxu0 0
      %4522 = vmatpush1.bf16.msra.mxu0 0
      %4523 = vmatprep.subr.bf16.mxu0 0
      %4524 = vmatpush1.bf16.msra.mxu0 0
      %4525 = vmatprep.subr.bf16.mxu0 0
      %4526 = vmatpush1.bf16.msra.mxu0 0
      %4527 = vmatprep.subr.bf16.mxu0 0
      %4528 = vmatpush1.bf16.msra.mxu0 0
      %4529 = vmatprep.subr.bf16.mxu0 0
      %4530 = vmatpush1.bf16.msra.mxu0 0
      %4531 = vmatprep.subr.bf16.mxu0 0
      %4532 = vmatpush1.bf16.msra.mxu0 0
      %4533 = vmatprep.mubr.bf16.mxu0 0
      %4534 = vmatmul.mubr.bf16.gmra.mrb[0].mxu0 %v4451
      %v4535 = vpop.f32.mrb[0].mxu0
      %v4536 = vadd.f32 %v4433, %v4535
      %v4537 = vpop.f32.mrb[0].mxu0
      %v4538 = vpop.f32.mrb[0].mxu0
      %v4539 = vadd.f32 %v4433, %v4538
      %v4540 = vpop.f32.mrb[0].mxu0
      %4541 = vmatprep.mubr.bf16.mxu0 0
      %4542 = vmatmul.mubr.bf16.gmra.mrb[0].mxu0 %v4454
      %v4543 = vpop.f32.mrb[0].mxu0
      %v4544 = vadd.f32 %v4433, %v4543
      %v4545 = vpop.f32.mrb[0].mxu0
      %v4546 = vpop.f32.mrb[0].mxu0
      %v4547 = vadd.f32 %v4433, %v4546
      %v4548 = vpop.f32.mrb[0].mxu0
      %4549 = vmatprep.mubr.bf16.mxu0 0
      %4550 = vmatmul.mubr.bf16.gmra.mrb[0].mxu0 %v4457
      %v4551 = vpop.f32.mrb[0].mxu0
      %v4552 = vadd.f32 %v4433, %v4551
      %v4553 = vpop.f32.mrb[0].mxu0
      %v4554 = vpop.f32.mrb[0].mxu0
      %v4555 = vadd.f32 %v4433, %v4554
      %v4556 = vpop.f32.mrb[0].mxu0
      %4557 = vmatprep.mubr.bf16.mxu0 0
      %4558 = vmatmul.mubr.bf16.gmra.mrb[0].mxu0 %v4460
      %v4559 = vpop.f32.mrb[0].mxu0
      %v4560 = vadd.f32 %v4433, %v4559
      %v4561 = vpop.f32.mrb[0].mxu0
      %v4562 = vpop.f32.mrb[0].mxu0
      %v4563 = vadd.f32 %v4433, %v4562
      %v4564 = vpop.f32.mrb[0].mxu0
      %4565 = vmatprep.mubr.bf16.mxu0 0
      %4566 = vmatmul.mubr.bf16.gmra.mrb[0].mxu0 %v4463
      %v4567 = vpop.f32.mrb[0].mxu0
      %v4568 = vadd.f32 %v4433, %v4567
      %v4569 = vpop.f32.mrb[0].mxu0
      %v4570 = vpop.f32.mrb[0].mxu0
      %v4571 = vadd.f32 %v4433, %v4570
      %v4572 = vpop.f32.mrb[0].mxu0
      %4573 = vmatprep.mubr.bf16.mxu0 0
      %4574 = vmatmul.mubr.bf16.gmra.mrb[0].mxu0 %v4466
      %v4575 = vpop.f32.mrb[0].mxu0
      %v4576 = vadd.f32 %v4433, %v4575
      %v4577 = vpop.f32.mrb[0].mxu0
      %v4578 = vpop.f32.mrb[0].mxu0
      %v4579 = vadd.f32 %v4433, %v4578
      %v4580 = vpop.f32.mrb[0].mxu0
      %4581 = vmatprep.mubr.bf16.mxu0 0
      %4582 = vmatmul.mubr.bf16.gmra.mrb[0].mxu0 %v4469
      %v4583 = vpop.f32.mrb[0].mxu0
      %v4584 = vadd.f32 %v4433, %v4583
      %v4585 = vpop.f32.mrb[0].mxu0
      %v4586 = vpop.f32.mrb[0].mxu0
      %v4587 = vadd.f32 %v4433, %v4586
      %v4588 = vpop.f32.mrb[0].mxu0
      %4589 = vmatprep.mubr.bf16.mxu0 0
      %4590 = vmatmul.mubr.bf16.gmra.mrb[0].mxu0 %v4472
      %v4591 = vpop.f32.mrb[0].mxu0
      %v4592 = vadd.f32 %v4433, %v4591
      %v4593 = vpop.f32.mrb[0].mxu0
      %v4594 = vpop.f32.mrb[0].mxu0
      %v4595 = vadd.f32 %v4433, %v4594
      %v4596 = vpop.f32.mrb[0].mxu0
      %4597 = vmatprep.mubr.bf16.mxu0 0
      %4598 = vmatmul.mubr.bf16.gmra.mrb[0].mxu0 %v4475
      %v4599 = vpop.f32.mrb[0].mxu0
      %v4600 = vadd.f32 %v4433, %v4599
      %v4601 = vpop.f32.mrb[0].mxu0
      %v4602 = vpop.f32.mrb[0].mxu0
      %v4603 = vadd.f32 %v4433, %v4602
      %v4604 = vpop.f32.mrb[0].mxu0
      %4605 = vmatprep.mubr.bf16.mxu0 0
      %4606 = vmatmul.mubr.bf16.gmra.mrb[0].mxu0 %v4478
      %v4607 = vpop.f32.mrb[0].mxu0
      %v4608 = vadd.f32 %v4433, %v4607
      %v4609 = vpop.f32.mrb[0].mxu0
      %v4610 = vpop.f32.mrb[0].mxu0
      %v4611 = vadd.f32 %v4433, %v4610
      %v4612 = vpop.f32.mrb[0].mxu0
      %4613 = vmatprep.mubr.bf16.mxu0 0
      %4614 = vmatmul.mubr.bf16.gmra.mrb[0].mxu0 %v4481
      %v4615 = vpop.f32.mrb[0].mxu0
      %v4616 = vadd.f32 %v4433, %v4615
      %v4617 = vpop.f32.mrb[0].mxu0
      %v4618 = vpop.f32.mrb[0].mxu0
      %v4619 = vadd.f32 %v4433, %v4618
      %v4620 = vpop.f32.mrb[0].mxu0
      %4621 = vmatprep.mubr.bf16.mxu0 0
      %4622 = vmatmul.mubr.bf16.gmra.mrb[0].mxu0 %v4484
      %v4623 = vpop.f32.mrb[0].mxu0
      %v4624 = vadd.f32 %v4433, %v4623
      %v4625 = vpop.f32.mrb[0].mxu0
      %v4626 = vpop.f32.mrb[0].mxu0
      %v4627 = vadd.f32 %v4433, %v4626
      %v4628 = vpop.f32.mrb[0].mxu0
      %4629 = vmatprep.mubr.bf16.mxu0 0
      %4630 = vmatmul.mubr.bf16.gmra.mrb[0].mxu0 %v4487
      %v4631 = vpop.f32.mrb[0].mxu0
      %v4632 = vadd.f32 %v4433, %v4631
      %v4633 = vpop.f32.mrb[0].mxu0
      %v4634 = vpop.f32.mrb[0].mxu0
      %v4635 = vadd.f32 %v4433, %v4634
      %v4636 = vpop.f32.mrb[0].mxu0
      %4637 = vmatprep.mubr.bf16.mxu0 0
      %4638 = vmatmul.mubr.bf16.gmra.mrb[0].mxu0 %v4490
      %v4639 = vpop.f32.mrb[0].mxu0
      %v4640 = vadd.f32 %v4433, %v4639
      %v4641 = vpop.f32.mrb[0].mxu0
      %v4642 = vpop.f32.mrb[0].mxu0
      %v4643 = vadd.f32 %v4433, %v4642
      %v4644 = vpop.f32.mrb[0].mxu0
      %4645 = vmatprep.mubr.bf16.mxu0 0
      %4646 = vmatmul.mubr.bf16.gmra.mrb[0].mxu0 %v4493
      %v4647 = vpop.f32.mrb[0].mxu0
      %v4648 = vadd.f32 %v4433, %v4647
      %v4649 = vpop.f32.mrb[0].mxu0
      %v4650 = vpop.f32.mrb[0].mxu0
      %v4651 = vadd.f32 %v4433, %v4650
      %v4652 = vpop.f32.mrb[0].mxu0
      %4653 = vmatprep.mubr.bf16.mxu0 0
      %4654 = vmatmul.mubr.bf16.gmra.mrb[0].mxu0 %v4496
      %v4655 = vpop.f32.mrb[0].mxu0
      %v4656 = vadd.f32 %v4433, %v4655
      %v4657 = vpop.f32.mrb[0].mxu0
      %v4658 = vpop.f32.mrb[0].mxu0
      %v4659 = vadd.f32 %v4433, %v4658
      %v4660 = vpop.f32.mrb[0].mxu0
      %4661 = vdwg.mxu0
      %v4662 = vmax.f32 %v4536, 0.0
      %v4663 = vmax.f32 %v4539, 0.0
      %v4664 = vmax.f32 %v4544, 0.0
      %v4665 = vmax.f32 %v4547, 0.0
      %v4666 = vmax.f32 %v4552, 0.0
      %v4667 = vmax.f32 %v4555, 0.0
      %v4668 = vmax.f32 %v4560, 0.0
      %v4669 = vmax.f32 %v4563, 0.0
      %v4670 = vmax.f32 %v4568, 0.0
      %v4671 = vmax.f32 %v4571, 0.0
      %v4672 = vmax.f32 %v4576, 0.0
      %v4673 = vmax.f32 %v4579, 0.0
      %v4674 = vmax.f32 %v4584, 0.0
      %v4675 = vmax.f32 %v4587, 0.0
      %v4676 = vmax.f32 %v4592, 0.0
      %v4677 = vmax.f32 %v4595, 0.0
      %v4678 = vmax.f32 %v4600, 0.0
      %v4679 = vmax.f32 %v4603, 0.0
      %v4680 = vmax.f32 %v4608, 0.0
      %v4681 = vmax.f32 %v4611, 0.0
      %v4682 = vmax.f32 %v4616, 0.0
      %v4683 = vmax.f32 %v4619, 0.0
      %v4684 = vmax.f32 %v4624, 0.0
      %v4685 = vmax.f32 %v4627, 0.0
      %v4686 = vmax.f32 %v4632, 0.0
      %v4687 = vmax.f32 %v4635, 0.0
      %v4688 = vmax.f32 %v4640, 0.0
      %v4689 = vmax.f32 %v4643, 0.0
      %v4690 = vmax.f32 %v4648, 0.0
      %v4691 = vmax.f32 %v4651, 0.0
      %v4692 = vmax.f32 %v4656, 0.0
      %v4693 = vmax.f32 %v4659, 0.0
      %4694 = vst.msk [vmem:[%s907 + $0x1] sm:$0xff] %vm851, %v4662
      %4695 = vst.msk [vmem:[%s907 + $0x9] sm:$0xff] %vm851, %v4663
      %4696 = vst.msk [vmem:[%s907 + $0x19] sm:$0xff] %vm851, %v4664
      %4697 = vst.msk [vmem:[%s907 + $0x21] sm:$0xff] %vm851, %v4665
      %4698 = vst.msk [vmem:[%s907 + $0x31] sm:$0xff] %vm851, %v4666
      %4699 = vst.msk [vmem:[%s907 + $0x39] sm:$0xff] %vm851, %v4667
      %4700 = vst.msk [vmem:[%s907 + $0x49] sm:$0xff] %vm851, %v4668
      %4701 = vst.msk [vmem:[%s907 + $0x51] sm:$0xff] %vm851, %v4669
      %4702 = vst.msk [vmem:[%s907 + $0x61] sm:$0xff] %vm851, %v4670
      %4703 = vst.msk [vmem:[%s907 + $0x69] sm:$0xff] %vm851, %v4671
      %4704 = vst.msk [vmem:[%s907 + $0x79] sm:$0xff] %vm851, %v4672
      %4705 = vst.msk [vmem:[%s907 + $0x81] sm:$0xff] %vm851, %v4673
      %4706 = vst.msk [vmem:[%s907 + $0x91] sm:$0xff] %vm851, %v4674
      %4707 = vst.msk [vmem:[%s907 + $0x99] sm:$0xff] %vm851, %v4675
      %4708 = vst.msk [vmem:[%s907 + $0xa9] sm:$0xff] %vm851, %v4676
      %4709 = vst.msk [vmem:[%s907 + $0xb1] sm:$0xff] %vm851, %v4677
      %4710 = vst.msk [vmem:[%s907 + $0xc1] sm:$0xff] %vm851, %v4678
      %4711 = vst.msk [vmem:[%s907 + $0xc9] sm:$0xff] %vm851, %v4679
      %4712 = vst.msk [vmem:[%s907 + $0xd9] sm:$0xff] %vm851, %v4680
      %4713 = vst.msk [vmem:[%s907 + $0xe1] sm:$0xff] %vm851, %v4681
      %4714 = vst.msk [vmem:[%s907 + $0xf1] sm:$0xff] %vm851, %v4682
      %4715 = vst.msk [vmem:[%s907 + $0xf9] sm:$0xff] %vm851, %v4683
      %4716 = vst.msk [vmem:[%s907 + $0x109] sm:$0xff] %vm851, %v4684
      %4717 = vst.msk [vmem:[%s907 + $0x111] sm:$0xff] %vm851, %v4685
      %4718 = vst.msk [vmem:[%s907 + $0x121] sm:$0xff] %vm851, %v4686
      %4719 = vst.msk [vmem:[%s907 + $0x129] sm:$0xff] %vm851, %v4687
      %4720 = vst.msk [vmem:[%s907 + $0x139] sm:$0xff] %vm851, %v4688
      %4721 = vst.msk [vmem:[%s907 + $0x141] sm:$0xff] %vm851, %v4689
      %4722 = vst.msk [vmem:[%s907 + $0x151] sm:$0xff] %vm851, %v4690
      %4723 = vst.msk [vmem:[%s907 + $0x159] sm:$0xff] %vm851, %v4691
      %4724 = vst.msk [vmem:[%s907 + $0x169] sm:$0xff] %vm851, %v4692
      %4725 = vst.msk [vmem:[%s907 + $0x171] sm:$0xff] %vm851, %v4693
      %v4726 = vld [vmem:[#allocation2] sm:$0xff]
      %v4727 = vld [vmem:[#allocation2 + $0x8] sm:$0xff]
      %v4728 = vld [vmem:[#allocation2 + $0x18] sm:$0xff]
      %v4729 = vld [vmem:[#allocation2 + $0x20] sm:$0xff]
      %v4730 = vld [vmem:[#allocation2 + $0x30] sm:$0xff]
      %v4731 = vld [vmem:[#allocation2 + $0x38] sm:$0xff]
      %v4732 = vld [vmem:[#allocation2 + $0x48] sm:$0xff]
      %v4733 = vld [vmem:[#allocation2 + $0x50] sm:$0xff]
      %v4734 = vld [vmem:[#allocation2 + $0x60] sm:$0xff]
      %v4735 = vld [vmem:[#allocation2 + $0x68] sm:$0xff]
      %v4736 = vld [vmem:[#allocation2 + $0x78] sm:$0xff]
      %v4737 = vld [vmem:[#allocation2 + $0x80] sm:$0xff]
      %v4738 = vld [vmem:[#allocation2 + $0x90] sm:$0xff]
      %v4739 = vld [vmem:[#allocation2 + $0x98] sm:$0xff]
      %v4740 = vld [vmem:[#allocation2 + $0xa8] sm:$0xff]
      %v4741 = vld [vmem:[#allocation2 + $0xb0] sm:$0xff]
      %v4742 = vld [vmem:[#allocation2 + $0xc0] sm:$0xff]
      %v4743 = vld [vmem:[#allocation2 + $0xc8] sm:$0xff]
      %v4744 = vld [vmem:[#allocation2 + $0xd8] sm:$0xff]
      %v4745 = vld [vmem:[#allocation2 + $0xe0] sm:$0xff]
      %v4746 = vld [vmem:[#allocation2 + $0xf0] sm:$0xff]
      %v4747 = vld [vmem:[#allocation2 + $0xf8] sm:$0xff]
      %v4748 = vld [vmem:[#allocation2 + $0x108] sm:$0xff]
      %v4749 = vld [vmem:[#allocation2 + $0x110] sm:$0xff]
      %v4750 = vld [vmem:[#allocation2 + $0x120] sm:$0xff]
      %v4751 = vld [vmem:[#allocation2 + $0x128] sm:$0xff]
      %v4752 = vld [vmem:[#allocation2 + $0x138] sm:$0xff]
      %v4753 = vld [vmem:[#allocation2 + $0x140] sm:$0xff]
      %v4754 = vld [vmem:[#allocation2 + $0x150] sm:$0xff]
      %v4755 = vld [vmem:[#allocation2 + $0x158] sm:$0xff]
      %v4756 = vld [vmem:[#allocation2 + $0x168] sm:$0xff]
      %v4757 = vld [vmem:[#allocation2 + $0x170] sm:$0xff]
      %v4758 = vld [vmem:[#allocation2 + $0x1] sm:$0xff]
      %v4759 = vld [vmem:[#allocation2 + $0x9] sm:$0xff]
      %v4760 = vld [vmem:[#allocation2 + $0x19] sm:$0xff]
      %v4761 = vld [vmem:[#allocation2 + $0x21] sm:$0xff]
      %v4762 = vld [vmem:[#allocation2 + $0x31] sm:$0xff]
      %v4763 = vld [vmem:[#allocation2 + $0x39] sm:$0xff]
      %v4764 = vld [vmem:[#allocation2 + $0x49] sm:$0xff]
      %v4765 = vld [vmem:[#allocation2 + $0x51] sm:$0xff]
      %v4766 = vld [vmem:[#allocation2 + $0x61] sm:$0xff]
      %v4767 = vld [vmem:[#allocation2 + $0x69] sm:$0xff]
      %v4768 = vld [vmem:[#allocation2 + $0x79] sm:$0xff]
      %v4769 = vld [vmem:[#allocation2 + $0x81] sm:$0xff]
      %v4770 = vld [vmem:[#allocation2 + $0x91] sm:$0xff]
      %v4771 = vld [vmem:[#allocation2 + $0x99] sm:$0xff]
      %v4772 = vld [vmem:[#allocation2 + $0xa9] sm:$0xff]
      %v4773 = vld [vmem:[#allocation2 + $0xb1] sm:$0xff]
      %v4774 = vld [vmem:[#allocation2 + $0xc1] sm:$0xff]
      %v4775 = vld [vmem:[#allocation2 + $0xc9] sm:$0xff]
      %v4776 = vld [vmem:[#allocation2 + $0xd9] sm:$0xff]
      %v4777 = vld [vmem:[#allocation2 + $0xe1] sm:$0xff]
      %v4778 = vld [vmem:[#allocation2 + $0xf1] sm:$0xff]
      %v4779 = vld [vmem:[#allocation2 + $0xf9] sm:$0xff]
      %v4780 = vld [vmem:[#allocation2 + $0x109] sm:$0xff]
      %v4781 = vld [vmem:[#allocation2 + $0x111] sm:$0xff]
      %v4782 = vld [vmem:[#allocation2 + $0x121] sm:$0xff]
      %v4783 = vld [vmem:[#allocation2 + $0x129] sm:$0xff]
      %v4784 = vld [vmem:[#allocation2 + $0x139] sm:$0xff]
      %v4785 = vld [vmem:[#allocation2 + $0x141] sm:$0xff]
      %v4786 = vld [vmem:[#allocation2 + $0x151] sm:$0xff]
      %v4787 = vld [vmem:[#allocation2 + $0x159] sm:$0xff]
      %v4788 = vld [vmem:[#allocation2 + $0x169] sm:$0xff]
      %v4789 = vld [vmem:[#allocation2 + $0x171] sm:$0xff]
      %v4790 = vld [vmem:[#allocation2 + $0x2] sm:$0xff]
      %v4791 = vld [vmem:[#allocation2 + $0xa] sm:$0xff]
      %v4792 = vld [vmem:[#allocation2 + $0x1a] sm:$0xff]
      %v4793 = vld [vmem:[#allocation2 + $0x22] sm:$0xff]
      %v4794 = vld [vmem:[#allocation2 + $0x32] sm:$0xff]
      %v4795 = vld [vmem:[#allocation2 + $0x3a] sm:$0xff]
      %v4796 = vld [vmem:[#allocation2 + $0x4a] sm:$0xff]
      %v4797 = vld [vmem:[#allocation2 + $0x52] sm:$0xff]
      %v4798 = vld [vmem:[#allocation2 + $0x62] sm:$0xff]
      %v4799 = vld [vmem:[#allocation2 + $0x6a] sm:$0xff]
      %v4800 = vld [vmem:[#allocation2 + $0x7a] sm:$0xff]
      %v4801 = vld [vmem:[#allocation2 + $0x82] sm:$0xff]
      %v4802 = vld [vmem:[#allocation2 + $0x92] sm:$0xff]
      %v4803 = vld [vmem:[#allocation2 + $0x9a] sm:$0xff]
      %v4804 = vld [vmem:[#allocation2 + $0xaa] sm:$0xff]
      %v4805 = vld [vmem:[#allocation2 + $0xb2] sm:$0xff]
      %v4806 = vld [vmem:[#allocation2 + $0xc2] sm:$0xff]
      %v4807 = vld [vmem:[#allocation2 + $0xca] sm:$0xff]
      %v4808 = vld [vmem:[#allocation2 + $0xda] sm:$0xff]
      %v4809 = vld [vmem:[#allocation2 + $0xe2] sm:$0xff]
      %v4810 = vld [vmem:[#allocation2 + $0xf2] sm:$0xff]
      %v4811 = vld [vmem:[#allocation2 + $0xfa] sm:$0xff]
      %v4812 = vld [vmem:[#allocation2 + $0x10a] sm:$0xff]
      %v4813 = vld [vmem:[#allocation2 + $0x112] sm:$0xff]
      %v4814 = vld [vmem:[#allocation2 + $0x122] sm:$0xff]
      %v4815 = vld [vmem:[#allocation2 + $0x12a] sm:$0xff]
      %v4816 = vld [vmem:[#allocation2 + $0x13a] sm:$0xff]
      %v4817 = vld [vmem:[#allocation2 + $0x142] sm:$0xff]
      %v4818 = vld [vmem:[#allocation2 + $0x152] sm:$0xff]
      %v4819 = vld [vmem:[#allocation2 + $0x15a] sm:$0xff]
      %v4820 = vld [vmem:[#allocation2 + $0x16a] sm:$0xff]
      %v4821 = vld [vmem:[#allocation2 + $0x172] sm:$0xff]
      %v4822 = vld [vmem:[%s907] sm:$0xff]
      %v4823 = vld [vmem:[%s907 + $0x8] sm:$0xff]
      %v4824 = vld [vmem:[%s907 + $0x18] sm:$0xff]
      %v4825 = vld [vmem:[%s907 + $0x20] sm:$0xff]
      %v4826 = vld [vmem:[%s907 + $0x30] sm:$0xff]
      %v4827 = vld [vmem:[%s907 + $0x38] sm:$0xff]
      %v4828 = vld [vmem:[%s907 + $0x48] sm:$0xff]
      %v4829 = vld [vmem:[%s907 + $0x50] sm:$0xff]
      %v4830 = vld [vmem:[%s907 + $0x60] sm:$0xff]
      %v4831 = vld [vmem:[%s907 + $0x68] sm:$0xff]
      %v4832 = vld [vmem:[%s907 + $0x78] sm:$0xff]
      %v4833 = vld [vmem:[%s907 + $0x80] sm:$0xff]
      %v4834 = vld [vmem:[%s907 + $0x90] sm:$0xff]
      %v4835 = vld [vmem:[%s907 + $0x98] sm:$0xff]
      %v4836 = vld [vmem:[%s907 + $0xa8] sm:$0xff]
      %v4837 = vld [vmem:[%s907 + $0xb0] sm:$0xff]
      %v4838 = vld [vmem:[%s907 + $0xc0] sm:$0xff]
      %v4839 = vld [vmem:[%s907 + $0xc8] sm:$0xff]
      %v4840 = vld [vmem:[%s907 + $0xd8] sm:$0xff]
      %v4841 = vld [vmem:[%s907 + $0xe0] sm:$0xff]
      %v4842 = vld [vmem:[%s907 + $0xf0] sm:$0xff]
      %v4843 = vld [vmem:[%s907 + $0xf8] sm:$0xff]
      %v4844 = vld [vmem:[%s907 + $0x108] sm:$0xff]
      %v4845 = vld [vmem:[%s907 + $0x110] sm:$0xff]
      %v4846 = vld [vmem:[%s907 + $0x120] sm:$0xff]
      %v4847 = vld [vmem:[%s907 + $0x128] sm:$0xff]
      %v4848 = vld [vmem:[%s907 + $0x138] sm:$0xff]
      %v4849 = vld [vmem:[%s907 + $0x140] sm:$0xff]
      %v4850 = vld [vmem:[%s907 + $0x150] sm:$0xff]
      %v4851 = vld [vmem:[%s907 + $0x158] sm:$0xff]
      %v4852 = vld [vmem:[%s907 + $0x168] sm:$0xff]
      %v4853 = vld [vmem:[%s907 + $0x170] sm:$0xff]
      %v4854 = vld [vmem:[%s907 + $0x1] sm:$0xff]
      %v4855 = vld [vmem:[%s907 + $0x9] sm:$0xff]
      %v4856 = vld [vmem:[%s907 + $0x19] sm:$0xff]
      %v4857 = vld [vmem:[%s907 + $0x21] sm:$0xff]
      %v4858 = vld [vmem:[%s907 + $0x31] sm:$0xff]
      %v4859 = vld [vmem:[%s907 + $0x39] sm:$0xff]
      %v4860 = vld [vmem:[%s907 + $0x49] sm:$0xff]
      %v4861 = vld [vmem:[%s907 + $0x51] sm:$0xff]
      %v4862 = vld [vmem:[%s907 + $0x61] sm:$0xff]
      %v4863 = vld [vmem:[%s907 + $0x69] sm:$0xff]
      %v4864 = vld [vmem:[%s907 + $0x79] sm:$0xff]
      %v4865 = vld [vmem:[%s907 + $0x81] sm:$0xff]
      %v4866 = vld [vmem:[%s907 + $0x91] sm:$0xff]
      %v4867 = vld [vmem:[%s907 + $0x99] sm:$0xff]
      %v4868 = vld [vmem:[%s907 + $0xa9] sm:$0xff]
      %v4869 = vld [vmem:[%s907 + $0xb1] sm:$0xff]
      %v4870 = vld [vmem:[%s907 + $0xc1] sm:$0xff]
      %v4871 = vld [vmem:[%s907 + $0xc9] sm:$0xff]
      %v4872 = vld [vmem:[%s907 + $0xd9] sm:$0xff]
      %v4873 = vld [vmem:[%s907 + $0xe1] sm:$0xff]
      %v4874 = vld [vmem:[%s907 + $0xf1] sm:$0xff]
      %v4875 = vld [vmem:[%s907 + $0xf9] sm:$0xff]
      %v4876 = vld [vmem:[%s907 + $0x109] sm:$0xff]
      %v4877 = vld [vmem:[%s907 + $0x111] sm:$0xff]
      %v4878 = vld [vmem:[%s907 + $0x121] sm:$0xff]
      %v4879 = vld [vmem:[%s907 + $0x129] sm:$0xff]
      %v4880 = vld [vmem:[%s907 + $0x139] sm:$0xff]
      %v4881 = vld [vmem:[%s907 + $0x141] sm:$0xff]
      %v4882 = vld [vmem:[%s907 + $0x151] sm:$0xff]
      %v4883 = vld [vmem:[%s907 + $0x159] sm:$0xff]
      %v4884 = vld [vmem:[%s907 + $0x169] sm:$0xff]
      %v4885 = vld [vmem:[%s907 + $0x171] sm:$0xff]
      %v4886 = vld [vmem:[%s907 + $0x2] sm:$0xff]
      %v4887 = vld [vmem:[%s907 + $0xa] sm:$0xff]
      %v4888 = vld [vmem:[%s907 + $0x1a] sm:$0xff]
      %v4889 = vld [vmem:[%s907 + $0x22] sm:$0xff]
      %v4890 = vld [vmem:[%s907 + $0x32] sm:$0xff]
      %v4891 = vld [vmem:[%s907 + $0x3a] sm:$0xff]
      %v4892 = vld [vmem:[%s907 + $0x4a] sm:$0xff]
      %v4893 = vld [vmem:[%s907 + $0x52] sm:$0xff]
      %v4894 = vld [vmem:[%s907 + $0x62] sm:$0xff]
      %v4895 = vld [vmem:[%s907 + $0x6a] sm:$0xff]
      %v4896 = vld [vmem:[%s907 + $0x7a] sm:$0xff]
      %v4897 = vld [vmem:[%s907 + $0x82] sm:$0xff]
      %v4898 = vld [vmem:[%s907 + $0x92] sm:$0xff]
      %v4899 = vld [vmem:[%s907 + $0x9a] sm:$0xff]
      %v4900 = vld [vmem:[%s907 + $0xaa] sm:$0xff]
      %v4901 = vld [vmem:[%s907 + $0xb2] sm:$0xff]
      %v4902 = vld [vmem:[%s907 + $0xc2] sm:$0xff]
      %v4903 = vld [vmem:[%s907 + $0xca] sm:$0xff]
      %v4904 = vld [vmem:[%s907 + $0xda] sm:$0xff]
      %v4905 = vld [vmem:[%s907 + $0xe2] sm:$0xff]
      %v4906 = vld [vmem:[%s907 + $0xf2] sm:$0xff]
      %v4907 = vld [vmem:[%s907 + $0xfa] sm:$0xff]
      %v4908 = vld [vmem:[%s907 + $0x10a] sm:$0xff]
      %v4909 = vld [vmem:[%s907 + $0x112] sm:$0xff]
      %v4910 = vld [vmem:[%s907 + $0x122] sm:$0xff]
      %v4911 = vld [vmem:[%s907 + $0x12a] sm:$0xff]
      %v4912 = vld [vmem:[%s907 + $0x13a] sm:$0xff]
      %v4913 = vld [vmem:[%s907 + $0x142] sm:$0xff]
      %v4914 = vld [vmem:[%s907 + $0x152] sm:$0xff]
      %v4915 = vld [vmem:[%s907 + $0x15a] sm:$0xff]
      %v4916 = vld [vmem:[%s907 + $0x16a] sm:$0xff]
      %v4917 = vld [vmem:[%s907 + $0x172] sm:$0xff]
      %v4918 = vld [vmem:[%s1132] sm:$0xff]
      %v4919 = vld [vmem:[%s1132 + $0x8] sm:$0xff]
      %v4920 = vld [vmem:[%s1132 + $0x18] sm:$0xff]
      %v4921 = vld [vmem:[%s1132 + $0x20] sm:$0xff]
      %v4922 = vld [vmem:[%s1132 + $0x30] sm:$0xff]
      %v4923 = vld [vmem:[%s1132 + $0x38] sm:$0xff]
      %v4924 = vld [vmem:[%s1132 + $0x48] sm:$0xff]
      %v4925 = vld [vmem:[%s1132 + $0x50] sm:$0xff]
      %v4926 = vld [vmem:[%s1132 + $0x60] sm:$0xff]
      %v4927 = vld [vmem:[%s1132 + $0x68] sm:$0xff]
      %v4928 = vld [vmem:[%s1132 + $0x78] sm:$0xff]
      %v4929 = vld [vmem:[%s1132 + $0x80] sm:$0xff]
      %v4930 = vld [vmem:[%s1132 + $0x90] sm:$0xff]
      %v4931 = vld [vmem:[%s1132 + $0x98] sm:$0xff]
      %v4932 = vld [vmem:[%s1132 + $0xa8] sm:$0xff]
      %v4933 = vld [vmem:[%s1132 + $0xb0] sm:$0xff]
      %v4934 = vld [vmem:[%s1132 + $0xc0] sm:$0xff]
      %v4935 = vld [vmem:[%s1132 + $0xc8] sm:$0xff]
      %v4936 = vld [vmem:[%s1132 + $0xd8] sm:$0xff]
      %v4937 = vld [vmem:[%s1132 + $0xe0] sm:$0xff]
      %v4938 = vld [vmem:[%s1132 + $0xf0] sm:$0xff]
      %v4939 = vld [vmem:[%s1132 + $0xf8] sm:$0xff]
      %v4940 = vld [vmem:[%s1132 + $0x108] sm:$0xff]
      %v4941 = vld [vmem:[%s1132 + $0x110] sm:$0xff]
      %v4942 = vld [vmem:[%s1132 + $0x120] sm:$0xff]
      %v4943 = vld [vmem:[%s1132 + $0x128] sm:$0xff]
      %v4944 = vld [vmem:[%s1132 + $0x138] sm:$0xff]
      %v4945 = vld [vmem:[%s1132 + $0x140] sm:$0xff]
      %v4946 = vld [vmem:[%s1132 + $0x150] sm:$0xff]
      %v4947 = vld [vmem:[%s1132 + $0x158] sm:$0xff]
      %v4948 = vld [vmem:[%s1132 + $0x168] sm:$0xff]
      %v4949 = vld [vmem:[%s1132 + $0x170] sm:$0xff]
      %v4950 = vld [vmem:[%s1132 + $0x1] sm:$0xff]
      %v4951 = vld [vmem:[%s1132 + $0x9] sm:$0xff]
      %v4952 = vld [vmem:[%s1132 + $0x19] sm:$0xff]
      %v4953 = vld [vmem:[%s1132 + $0x21] sm:$0xff]
      %v4954 = vld [vmem:[%s1132 + $0x31] sm:$0xff]
      %v4955 = vld [vmem:[%s1132 + $0x39] sm:$0xff]
      %v4956 = vld [vmem:[%s1132 + $0x49] sm:$0xff]
      %v4957 = vld [vmem:[%s1132 + $0x51] sm:$0xff]
      %v4958 = vld [vmem:[%s1132 + $0x61] sm:$0xff]
      %v4959 = vld [vmem:[%s1132 + $0x69] sm:$0xff]
      %v4960 = vld [vmem:[%s1132 + $0x79] sm:$0xff]
      %v4961 = vld [vmem:[%s1132 + $0x81] sm:$0xff]
      %v4962 = vld [vmem:[%s1132 + $0x91] sm:$0xff]
      %v4963 = vld [vmem:[%s1132 + $0x99] sm:$0xff]
      %v4964 = vld [vmem:[%s1132 + $0xa9] sm:$0xff]
      %v4965 = vld [vmem:[%s1132 + $0xb1] sm:$0xff]
      %v4966 = vld [vmem:[%s1132 + $0xc1] sm:$0xff]
      %v4967 = vld [vmem:[%s1132 + $0xc9] sm:$0xff]
      %v4968 = vld [vmem:[%s1132 + $0xd9] sm:$0xff]
      %v4969 = vld [vmem:[%s1132 + $0xe1] sm:$0xff]
      %v4970 = vld [vmem:[%s1132 + $0xf1] sm:$0xff]
      %v4971 = vld [vmem:[%s1132 + $0xf9] sm:$0xff]
      %v4972 = vld [vmem:[%s1132 + $0x109] sm:$0xff]
      %v4973 = vld [vmem:[%s1132 + $0x111] sm:$0xff]
      %v4974 = vld [vmem:[%s1132 + $0x121] sm:$0xff]
      %v4975 = vld [vmem:[%s1132 + $0x129] sm:$0xff]
      %v4976 = vld [vmem:[%s1132 + $0x139] sm:$0xff]
      %v4977 = vld [vmem:[%s1132 + $0x141] sm:$0xff]
      %v4978 = vld [vmem:[%s1132 + $0x151] sm:$0xff]
      %v4979 = vld [vmem:[%s1132 + $0x159] sm:$0xff]
      %v4980 = vld [vmem:[%s1132 + $0x169] sm:$0xff]
      %v4981 = vld [vmem:[%s1132 + $0x171] sm:$0xff]
      %v4982 = vld [vmem:[%s1132 + $0x2] sm:$0xff]
      %v4983 = vld [vmem:[%s1132 + $0xa] sm:$0xff]
      %v4984 = vld [vmem:[%s1132 + $0x1a] sm:$0xff]
      %v4985 = vld [vmem:[%s1132 + $0x22] sm:$0xff]
      %v4986 = vld [vmem:[%s1132 + $0x32] sm:$0xff]
      %v4987 = vld [vmem:[%s1132 + $0x3a] sm:$0xff]
      %v4988 = vld [vmem:[%s1132 + $0x4a] sm:$0xff]
      %v4989 = vld [vmem:[%s1132 + $0x52] sm:$0xff]
      %v4990 = vld [vmem:[%s1132 + $0x62] sm:$0xff]
      %v4991 = vld [vmem:[%s1132 + $0x6a] sm:$0xff]
      %v4992 = vld [vmem:[%s1132 + $0x7a] sm:$0xff]
      %v4993 = vld [vmem:[%s1132 + $0x82] sm:$0xff]
      %v4994 = vld [vmem:[%s1132 + $0x92] sm:$0xff]
      %v4995 = vld [vmem:[%s1132 + $0x9a] sm:$0xff]
      %v4996 = vld [vmem:[%s1132 + $0xaa] sm:$0xff]
      %v4997 = vld [vmem:[%s1132 + $0xb2] sm:$0xff]
      %v4998 = vld [vmem:[%s1132 + $0xc2] sm:$0xff]
      %v4999 = vld [vmem:[%s1132 + $0xca] sm:$0xff]
      %v5000 = vld [vmem:[%s1132 + $0xda] sm:$0xff]
      %v5001 = vld [vmem:[%s1132 + $0xe2] sm:$0xff]
      %v5002 = vld [vmem:[%s1132 + $0xf2] sm:$0xff]
      %v5003 = vld [vmem:[%s1132 + $0xfa] sm:$0xff]
      %v5004 = vld [vmem:[%s1132 + $0x10a] sm:$0xff]
      %v5005 = vld [vmem:[%s1132 + $0x112] sm:$0xff]
      %v5006 = vld [vmem:[%s1132 + $0x122] sm:$0xff]
      %v5007 = vld [vmem:[%s1132 + $0x12a] sm:$0xff]
      %v5008 = vld [vmem:[%s1132 + $0x13a] sm:$0xff]
      %v5009 = vld [vmem:[%s1132 + $0x142] sm:$0xff]
      %v5010 = vld [vmem:[%s1132 + $0x152] sm:$0xff]
      %v5011 = vld [vmem:[%s1132 + $0x15a] sm:$0xff]
      %v5012 = vld [vmem:[%s1132 + $0x16a] sm:$0xff]
      %v5013 = vld [vmem:[%s1132 + $0x172] sm:$0xff]
      %5046 = vrot.lane.b32.xlu0 %v4758, 4
      %v5047 = vpop.permute.xlu0 %5046
      %5048 = vrot.lane.b32.xlu0 %v4759, 4
      %v5049 = vpop.permute.xlu0 %5048
      %5050 = vrot.lane.b32.xlu0 %v4760, 4
      %v5051 = vpop.permute.xlu0 %5050
      %5052 = vrot.lane.b32.xlu0 %v4761, 4
      %v5053 = vpop.permute.xlu0 %5052
      %5054 = vrot.lane.b32.xlu0 %v4762, 4
      %v5055 = vpop.permute.xlu0 %5054
      %5056 = vrot.lane.b32.xlu0 %v4763, 4
      %v5057 = vpop.permute.xlu0 %5056
      %5058 = vrot.lane.b32.xlu0 %v4764, 4
      %v5059 = vpop.permute.xlu0 %5058
      %5060 = vrot.lane.b32.xlu0 %v4765, 4
      %v5061 = vpop.permute.xlu0 %5060
      %5062 = vrot.lane.b32.xlu0 %v4766, 4
      %v5063 = vpop.permute.xlu0 %5062
      %5064 = vrot.lane.b32.xlu0 %v4767, 4
      %v5065 = vpop.permute.xlu0 %5064
      %5066 = vrot.lane.b32.xlu0 %v4768, 4
      %v5067 = vpop.permute.xlu0 %5066
      %5068 = vrot.lane.b32.xlu0 %v4769, 4
      %v5069 = vpop.permute.xlu0 %5068
      %5070 = vrot.lane.b32.xlu0 %v4770, 4
      %v5071 = vpop.permute.xlu0 %5070
      %5072 = vrot.lane.b32.xlu0 %v4771, 4
      %v5073 = vpop.permute.xlu0 %5072
      %5074 = vrot.lane.b32.xlu0 %v4772, 4
      %v5075 = vpop.permute.xlu0 %5074
      %5076 = vrot.lane.b32.xlu0 %v4773, 4
      %v5077 = vpop.permute.xlu0 %5076
      %5078 = vrot.lane.b32.xlu0 %v4774, 4
      %v5079 = vpop.permute.xlu0 %5078
      %5080 = vrot.lane.b32.xlu0 %v4775, 4
      %v5081 = vpop.permute.xlu0 %5080
      %5082 = vrot.lane.b32.xlu0 %v4776, 4
      %v5083 = vpop.permute.xlu0 %5082
      %5084 = vrot.lane.b32.xlu0 %v4777, 4
      %v5085 = vpop.permute.xlu0 %5084
      %5086 = vrot.lane.b32.xlu0 %v4778, 4
      %v5087 = vpop.permute.xlu0 %5086
      %5088 = vrot.lane.b32.xlu0 %v4779, 4
      %v5089 = vpop.permute.xlu0 %5088
      %5090 = vrot.lane.b32.xlu0 %v4780, 4
      %v5091 = vpop.permute.xlu0 %5090
      %5092 = vrot.lane.b32.xlu0 %v4781, 4
      %v5093 = vpop.permute.xlu0 %5092
      %5094 = vrot.lane.b32.xlu0 %v4782, 4
      %v5095 = vpop.permute.xlu0 %5094
      %5096 = vrot.lane.b32.xlu0 %v4783, 4
      %v5097 = vpop.permute.xlu0 %5096
      %5098 = vrot.lane.b32.xlu0 %v4784, 4
      %v5099 = vpop.permute.xlu0 %5098
      %5100 = vrot.lane.b32.xlu0 %v4785, 4
      %v5101 = vpop.permute.xlu0 %5100
      %5102 = vrot.lane.b32.xlu0 %v4786, 4
      %v5103 = vpop.permute.xlu0 %5102
      %5104 = vrot.lane.b32.xlu0 %v4787, 4
      %v5105 = vpop.permute.xlu0 %5104
      %5106 = vrot.lane.b32.xlu0 %v4788, 4
      %v5107 = vpop.permute.xlu0 %5106
      %5108 = vrot.lane.b32.xlu0 %v4789, 4
      %v5109 = vpop.permute.xlu0 %5108
      %5174 = vrot.lane.b32.xlu0 %v4790, 8
      %v5175 = vpop.permute.xlu0 %5174
      %5176 = vrot.lane.b32.xlu0 %v4791, 8
      %v5177 = vpop.permute.xlu0 %5176
      %5178 = vrot.lane.b32.xlu0 %v4792, 8
      %v5179 = vpop.permute.xlu0 %5178
      %5180 = vrot.lane.b32.xlu0 %v4793, 8
      %v5181 = vpop.permute.xlu0 %5180
      %5182 = vrot.lane.b32.xlu0 %v4794, 8
      %v5183 = vpop.permute.xlu0 %5182
      %5184 = vrot.lane.b32.xlu0 %v4795, 8
      %v5185 = vpop.permute.xlu0 %5184
      %5186 = vrot.lane.b32.xlu0 %v4796, 8
      %v5187 = vpop.permute.xlu0 %5186
      %5188 = vrot.lane.b32.xlu0 %v4797, 8
      %v5189 = vpop.permute.xlu0 %5188
      %5190 = vrot.lane.b32.xlu0 %v4798, 8
      %v5191 = vpop.permute.xlu0 %5190
      %5192 = vrot.lane.b32.xlu0 %v4799, 8
      %v5193 = vpop.permute.xlu0 %5192
      %5194 = vrot.lane.b32.xlu0 %v4800, 8
      %v5195 = vpop.permute.xlu0 %5194
      %5196 = vrot.lane.b32.xlu0 %v4801, 8
      %v5197 = vpop.permute.xlu0 %5196
      %5198 = vrot.lane.b32.xlu0 %v4802, 8
      %v5199 = vpop.permute.xlu0 %5198
      %5200 = vrot.lane.b32.xlu0 %v4803, 8
      %v5201 = vpop.permute.xlu0 %5200
      %5202 = vrot.lane.b32.xlu0 %v4804, 8
      %v5203 = vpop.permute.xlu0 %5202
      %5204 = vrot.lane.b32.xlu0 %v4805, 8
      %v5205 = vpop.permute.xlu0 %5204
      %5206 = vrot.lane.b32.xlu0 %v4806, 8
      %v5207 = vpop.permute.xlu0 %5206
      %5208 = vrot.lane.b32.xlu0 %v4807, 8
      %v5209 = vpop.permute.xlu0 %5208
      %5210 = vrot.lane.b32.xlu0 %v4808, 8
      %v5211 = vpop.permute.xlu0 %5210
      %5212 = vrot.lane.b32.xlu0 %v4809, 8
      %v5213 = vpop.permute.xlu0 %5212
      %5214 = vrot.lane.b32.xlu0 %v4810, 8
      %v5215 = vpop.permute.xlu0 %5214
      %5216 = vrot.lane.b32.xlu0 %v4811, 8
      %v5217 = vpop.permute.xlu0 %5216
      %5218 = vrot.lane.b32.xlu0 %v4812, 8
      %v5219 = vpop.permute.xlu0 %5218
      %5220 = vrot.lane.b32.xlu0 %v4813, 8
      %v5221 = vpop.permute.xlu0 %5220
      %5222 = vrot.lane.b32.xlu0 %v4814, 8
      %v5223 = vpop.permute.xlu0 %5222
      %5224 = vrot.lane.b32.xlu0 %v4815, 8
      %v5225 = vpop.permute.xlu0 %5224
      %5226 = vrot.lane.b32.xlu0 %v4816, 8
      %v5227 = vpop.permute.xlu0 %5226
      %5228 = vrot.lane.b32.xlu0 %v4817, 8
      %v5229 = vpop.permute.xlu0 %5228
      %5230 = vrot.lane.b32.xlu0 %v4818, 8
      %v5231 = vpop.permute.xlu0 %5230
      %5232 = vrot.lane.b32.xlu0 %v4819, 8
      %v5233 = vpop.permute.xlu0 %5232
      %5234 = vrot.lane.b32.xlu0 %v4820, 8
      %v5235 = vpop.permute.xlu0 %5234
      %5236 = vrot.lane.b32.xlu0 %v4821, 8
      %v5237 = vpop.permute.xlu0 %5236
      %5302 = vrot.lane.b32.xlu0 %v4822, 12
      %v5303 = vpop.permute.xlu0 %5302
      %5304 = vrot.lane.b32.xlu0 %v4823, 12
      %v5305 = vpop.permute.xlu0 %5304
      %5306 = vrot.lane.b32.xlu0 %v4824, 12
      %v5307 = vpop.permute.xlu0 %5306
      %5308 = vrot.lane.b32.xlu0 %v4825, 12
      %v5309 = vpop.permute.xlu0 %5308
      %5310 = vrot.lane.b32.xlu0 %v4826, 12
      %v5311 = vpop.permute.xlu0 %5310
      %5312 = vrot.lane.b32.xlu0 %v4827, 12
      %v5313 = vpop.permute.xlu0 %5312
      %5314 = vrot.lane.b32.xlu0 %v4828, 12
      %v5315 = vpop.permute.xlu0 %5314
      %5316 = vrot.lane.b32.xlu0 %v4829, 12
      %v5317 = vpop.permute.xlu0 %5316
      %5318 = vrot.lane.b32.xlu0 %v4830, 12
      %v5319 = vpop.permute.xlu0 %5318
      %5320 = vrot.lane.b32.xlu0 %v4831, 12
      %v5321 = vpop.permute.xlu0 %5320
      %5322 = vrot.lane.b32.xlu0 %v4832, 12
      %v5323 = vpop.permute.xlu0 %5322
      %5324 = vrot.lane.b32.xlu0 %v4833, 12
      %v5325 = vpop.permute.xlu0 %5324
      %5326 = vrot.lane.b32.xlu0 %v4834, 12
      %v5327 = vpop.permute.xlu0 %5326
      %5328 = vrot.lane.b32.xlu0 %v4835, 12
      %v5329 = vpop.permute.xlu0 %5328
      %5330 = vrot.lane.b32.xlu0 %v4836, 12
      %v5331 = vpop.permute.xlu0 %5330
      %5332 = vrot.lane.b32.xlu0 %v4837, 12
      %v5333 = vpop.permute.xlu0 %5332
      %5334 = vrot.lane.b32.xlu0 %v4838, 12
      %v5335 = vpop.permute.xlu0 %5334
      %5336 = vrot.lane.b32.xlu0 %v4839, 12
      %v5337 = vpop.permute.xlu0 %5336
      %5338 = vrot.lane.b32.xlu0 %v4840, 12
      %v5339 = vpop.permute.xlu0 %5338
      %5340 = vrot.lane.b32.xlu0 %v4841, 12
      %v5341 = vpop.permute.xlu0 %5340
      %5342 = vrot.lane.b32.xlu0 %v4842, 12
      %v5343 = vpop.permute.xlu0 %5342
      %5344 = vrot.lane.b32.xlu0 %v4843, 12
      %v5345 = vpop.permute.xlu0 %5344
      %5346 = vrot.lane.b32.xlu0 %v4844, 12
      %v5347 = vpop.permute.xlu0 %5346
      %5348 = vrot.lane.b32.xlu0 %v4845, 12
      %v5349 = vpop.permute.xlu0 %5348
      %5350 = vrot.lane.b32.xlu0 %v4846, 12
      %v5351 = vpop.permute.xlu0 %5350
      %5352 = vrot.lane.b32.xlu0 %v4847, 12
      %v5353 = vpop.permute.xlu0 %5352
      %5354 = vrot.lane.b32.xlu0 %v4848, 12
      %v5355 = vpop.permute.xlu0 %5354
      %5356 = vrot.lane.b32.xlu0 %v4849, 12
      %v5357 = vpop.permute.xlu0 %5356
      %5358 = vrot.lane.b32.xlu0 %v4850, 12
      %v5359 = vpop.permute.xlu0 %5358
      %5360 = vrot.lane.b32.xlu0 %v4851, 12
      %v5361 = vpop.permute.xlu0 %5360
      %5362 = vrot.lane.b32.xlu0 %v4852, 12
      %v5363 = vpop.permute.xlu0 %5362
      %5364 = vrot.lane.b32.xlu0 %v4853, 12
      %v5365 = vpop.permute.xlu0 %5364
      %5430 = vrot.lane.b32.xlu0 %v4854, 16
      %v5431 = vpop.permute.xlu0 %5430
      %5432 = vrot.lane.b32.xlu0 %v4855, 16
      %v5433 = vpop.permute.xlu0 %5432
      %5434 = vrot.lane.b32.xlu0 %v4856, 16
      %v5435 = vpop.permute.xlu0 %5434
      %5436 = vrot.lane.b32.xlu0 %v4857, 16
      %v5437 = vpop.permute.xlu0 %5436
      %5438 = vrot.lane.b32.xlu0 %v4858, 16
      %v5439 = vpop.permute.xlu0 %5438
      %5440 = vrot.lane.b32.xlu0 %v4859, 16
      %v5441 = vpop.permute.xlu0 %5440
      %5442 = vrot.lane.b32.xlu0 %v4860, 16
      %v5443 = vpop.permute.xlu0 %5442
      %5444 = vrot.lane.b32.xlu0 %v4861, 16
      %v5445 = vpop.permute.xlu0 %5444
      %5446 = vrot.lane.b32.xlu0 %v4862, 16
      %v5447 = vpop.permute.xlu0 %5446
      %5448 = vrot.lane.b32.xlu0 %v4863, 16
      %v5449 = vpop.permute.xlu0 %5448
      %5450 = vrot.lane.b32.xlu0 %v4864, 16
      %v5451 = vpop.permute.xlu0 %5450
      %5452 = vrot.lane.b32.xlu0 %v4865, 16
      %v5453 = vpop.permute.xlu0 %5452
      %5454 = vrot.lane.b32.xlu0 %v4866, 16
      %v5455 = vpop.permute.xlu0 %5454
      %5456 = vrot.lane.b32.xlu0 %v4867, 16
      %v5457 = vpop.permute.xlu0 %5456
      %5458 = vrot.lane.b32.xlu0 %v4868, 16
      %v5459 = vpop.permute.xlu0 %5458
      %5460 = vrot.lane.b32.xlu0 %v4869, 16
      %v5461 = vpop.permute.xlu0 %5460
      %5462 = vrot.lane.b32.xlu0 %v4870, 16
      %v5463 = vpop.permute.xlu0 %5462
      %5464 = vrot.lane.b32.xlu0 %v4871, 16
      %v5465 = vpop.permute.xlu0 %5464
      %5466 = vrot.lane.b32.xlu0 %v4872, 16
      %v5467 = vpop.permute.xlu0 %5466
      %5468 = vrot.lane.b32.xlu0 %v4873, 16
      %v5469 = vpop.permute.xlu0 %5468
      %5470 = vrot.lane.b32.xlu0 %v4874, 16
      %v5471 = vpop.permute.xlu0 %5470
      %5472 = vrot.lane.b32.xlu0 %v4875, 16
      %v5473 = vpop.permute.xlu0 %5472
      %5474 = vrot.lane.b32.xlu0 %v4876, 16
      %v5475 = vpop.permute.xlu0 %5474
      %5476 = vrot.lane.b32.xlu0 %v4877, 16
      %v5477 = vpop.permute.xlu0 %5476
      %5478 = vrot.lane.b32.xlu0 %v4878, 16
      %v5479 = vpop.permute.xlu0 %5478
      %5480 = vrot.lane.b32.xlu0 %v4879, 16
      %v5481 = vpop.permute.xlu0 %5480
      %5482 = vrot.lane.b32.xlu0 %v4880, 16
      %v5483 = vpop.permute.xlu0 %5482
      %5484 = vrot.lane.b32.xlu0 %v4881, 16
      %v5485 = vpop.permute.xlu0 %5484
      %5486 = vrot.lane.b32.xlu0 %v4882, 16
      %v5487 = vpop.permute.xlu0 %5486
      %5488 = vrot.lane.b32.xlu0 %v4883, 16
      %v5489 = vpop.permute.xlu0 %5488
      %5490 = vrot.lane.b32.xlu0 %v4884, 16
      %v5491 = vpop.permute.xlu0 %5490
      %5492 = vrot.lane.b32.xlu0 %v4885, 16
      %v5493 = vpop.permute.xlu0 %5492
      %5558 = vrot.lane.b32.xlu0 %v4886, 20
      %v5559 = vpop.permute.xlu0 %5558
      %5560 = vrot.lane.b32.xlu0 %v4887, 20
      %v5561 = vpop.permute.xlu0 %5560
      %5562 = vrot.lane.b32.xlu0 %v4888, 20
      %v5563 = vpop.permute.xlu0 %5562
      %5564 = vrot.lane.b32.xlu0 %v4889, 20
      %v5565 = vpop.permute.xlu0 %5564
      %5566 = vrot.lane.b32.xlu0 %v4890, 20
      %v5567 = vpop.permute.xlu0 %5566
      %5568 = vrot.lane.b32.xlu0 %v4891, 20
      %v5569 = vpop.permute.xlu0 %5568
      %5570 = vrot.lane.b32.xlu0 %v4892, 20
      %v5571 = vpop.permute.xlu0 %5570
      %5572 = vrot.lane.b32.xlu0 %v4893, 20
      %v5573 = vpop.permute.xlu0 %5572
      %5574 = vrot.lane.b32.xlu0 %v4894, 20
      %v5575 = vpop.permute.xlu0 %5574
      %5576 = vrot.lane.b32.xlu0 %v4895, 20
      %v5577 = vpop.permute.xlu0 %5576
      %5578 = vrot.lane.b32.xlu0 %v4896, 20
      %v5579 = vpop.permute.xlu0 %5578
      %5580 = vrot.lane.b32.xlu0 %v4897, 20
      %v5581 = vpop.permute.xlu0 %5580
      %5582 = vrot.lane.b32.xlu0 %v4898, 20
      %v5583 = vpop.permute.xlu0 %5582
      %5584 = vrot.lane.b32.xlu0 %v4899, 20
      %v5585 = vpop.permute.xlu0 %5584
      %5586 = vrot.lane.b32.xlu0 %v4900, 20
      %v5587 = vpop.permute.xlu0 %5586
      %5588 = vrot.lane.b32.xlu0 %v4901, 20
      %v5589 = vpop.permute.xlu0 %5588
      %5590 = vrot.lane.b32.xlu0 %v4902, 20
      %v5591 = vpop.permute.xlu0 %5590
      %5592 = vrot.lane.b32.xlu0 %v4903, 20
      %v5593 = vpop.permute.xlu0 %5592
      %5594 = vrot.lane.b32.xlu0 %v4904, 20
      %v5595 = vpop.permute.xlu0 %5594
      %5596 = vrot.lane.b32.xlu0 %v4905, 20
      %v5597 = vpop.permute.xlu0 %5596
      %5598 = vrot.lane.b32.xlu0 %v4906, 20
      %v5599 = vpop.permute.xlu0 %5598
      %5600 = vrot.lane.b32.xlu0 %v4907, 20
      %v5601 = vpop.permute.xlu0 %5600
      %5602 = vrot.lane.b32.xlu0 %v4908, 20
      %v5603 = vpop.permute.xlu0 %5602
      %5604 = vrot.lane.b32.xlu0 %v4909, 20
      %v5605 = vpop.permute.xlu0 %5604
      %5606 = vrot.lane.b32.xlu0 %v4910, 20
      %v5607 = vpop.permute.xlu0 %5606
      %5608 = vrot.lane.b32.xlu0 %v4911, 20
      %v5609 = vpop.permute.xlu0 %5608
      %5610 = vrot.lane.b32.xlu0 %v4912, 20
      %v5611 = vpop.permute.xlu0 %5610
      %5612 = vrot.lane.b32.xlu0 %v4913, 20
      %v5613 = vpop.permute.xlu0 %5612
      %5614 = vrot.lane.b32.xlu0 %v4914, 20
      %v5615 = vpop.permute.xlu0 %5614
      %5616 = vrot.lane.b32.xlu0 %v4915, 20
      %v5617 = vpop.permute.xlu0 %5616
      %5618 = vrot.lane.b32.xlu0 %v4916, 20
      %v5619 = vpop.permute.xlu0 %5618
      %5620 = vrot.lane.b32.xlu0 %v4917, 20
      %v5621 = vpop.permute.xlu0 %5620
      %5686 = vrot.lane.b32.xlu0 %v4918, 24
      %v5687 = vpop.permute.xlu0 %5686
      %5688 = vrot.lane.b32.xlu0 %v4919, 24
      %v5689 = vpop.permute.xlu0 %5688
      %5690 = vrot.lane.b32.xlu0 %v4920, 24
      %v5691 = vpop.permute.xlu0 %5690
      %5692 = vrot.lane.b32.xlu0 %v4921, 24
      %v5693 = vpop.permute.xlu0 %5692
      %5694 = vrot.lane.b32.xlu0 %v4922, 24
      %v5695 = vpop.permute.xlu0 %5694
      %5696 = vrot.lane.b32.xlu0 %v4923, 24
      %v5697 = vpop.permute.xlu0 %5696
      %5698 = vrot.lane.b32.xlu0 %v4924, 24
      %v5699 = vpop.permute.xlu0 %5698
      %5700 = vrot.lane.b32.xlu0 %v4925, 24
      %v5701 = vpop.permute.xlu0 %5700
      %5702 = vrot.lane.b32.xlu0 %v4926, 24
      %v5703 = vpop.permute.xlu0 %5702
      %5704 = vrot.lane.b32.xlu0 %v4927, 24
      %v5705 = vpop.permute.xlu0 %5704
      %5706 = vrot.lane.b32.xlu0 %v4928, 24
      %v5707 = vpop.permute.xlu0 %5706
      %5708 = vrot.lane.b32.xlu0 %v4929, 24
      %v5709 = vpop.permute.xlu0 %5708
      %5710 = vrot.lane.b32.xlu0 %v4930, 24
      %v5711 = vpop.permute.xlu0 %5710
      %5712 = vrot.lane.b32.xlu0 %v4931, 24
      %v5713 = vpop.permute.xlu0 %5712
      %5714 = vrot.lane.b32.xlu0 %v4932, 24
      %v5715 = vpop.permute.xlu0 %5714
      %5716 = vrot.lane.b32.xlu0 %v4933, 24
      %v5717 = vpop.permute.xlu0 %5716
      %5718 = vrot.lane.b32.xlu0 %v4934, 24
      %v5719 = vpop.permute.xlu0 %5718
      %5720 = vrot.lane.b32.xlu0 %v4935, 24
      %v5721 = vpop.permute.xlu0 %5720
      %5722 = vrot.lane.b32.xlu0 %v4936, 24
      %v5723 = vpop.permute.xlu0 %5722
      %5724 = vrot.lane.b32.xlu0 %v4937, 24
      %v5725 = vpop.permute.xlu0 %5724
      %5726 = vrot.lane.b32.xlu0 %v4938, 24
      %v5727 = vpop.permute.xlu0 %5726
      %5728 = vrot.lane.b32.xlu0 %v4939, 24
      %v5729 = vpop.permute.xlu0 %5728
      %5730 = vrot.lane.b32.xlu0 %v4940, 24
      %v5731 = vpop.permute.xlu0 %5730
      %5732 = vrot.lane.b32.xlu0 %v4941, 24
      %v5733 = vpop.permute.xlu0 %5732
      %5734 = vrot.lane.b32.xlu0 %v4942, 24
      %v5735 = vpop.permute.xlu0 %5734
      %5736 = vrot.lane.b32.xlu0 %v4943, 24
      %v5737 = vpop.permute.xlu0 %5736
      %5738 = vrot.lane.b32.xlu0 %v4944, 24
      %v5739 = vpop.permute.xlu0 %5738
      %5740 = vrot.lane.b32.xlu0 %v4945, 24
      %v5741 = vpop.permute.xlu0 %5740
      %5742 = vrot.lane.b32.xlu0 %v4946, 24
      %v5743 = vpop.permute.xlu0 %5742
      %5744 = vrot.lane.b32.xlu0 %v4947, 24
      %v5745 = vpop.permute.xlu0 %5744
      %5746 = vrot.lane.b32.xlu0 %v4948, 24
      %v5747 = vpop.permute.xlu0 %5746
      %5748 = vrot.lane.b32.xlu0 %v4949, 24
      %v5749 = vpop.permute.xlu0 %5748
      %5814 = vrot.lane.b32.xlu0 %v4950, 28
      %v5815 = vpop.permute.xlu0 %5814
      %5816 = vrot.lane.b32.xlu0 %v4951, 28
      %v5817 = vpop.permute.xlu0 %5816
      %5818 = vrot.lane.b32.xlu0 %v4952, 28
      %v5819 = vpop.permute.xlu0 %5818
      %5820 = vrot.lane.b32.xlu0 %v4953, 28
      %v5821 = vpop.permute.xlu0 %5820
      %5822 = vrot.lane.b32.xlu0 %v4954, 28
      %v5823 = vpop.permute.xlu0 %5822
      %5824 = vrot.lane.b32.xlu0 %v4955, 28
      %v5825 = vpop.permute.xlu0 %5824
      %5826 = vrot.lane.b32.xlu0 %v4956, 28
      %v5827 = vpop.permute.xlu0 %5826
      %5828 = vrot.lane.b32.xlu0 %v4957, 28
      %v5829 = vpop.permute.xlu0 %5828
      %5830 = vrot.lane.b32.xlu0 %v4958, 28
      %v5831 = vpop.permute.xlu0 %5830
      %5832 = vrot.lane.b32.xlu0 %v4959, 28
      %v5833 = vpop.permute.xlu0 %5832
      %5834 = vrot.lane.b32.xlu0 %v4960, 28
      %v5835 = vpop.permute.xlu0 %5834
      %5836 = vrot.lane.b32.xlu0 %v4961, 28
      %v5837 = vpop.permute.xlu0 %5836
      %5838 = vrot.lane.b32.xlu0 %v4962, 28
      %v5839 = vpop.permute.xlu0 %5838
      %5840 = vrot.lane.b32.xlu0 %v4963, 28
      %v5841 = vpop.permute.xlu0 %5840
      %5842 = vrot.lane.b32.xlu0 %v4964, 28
      %v5843 = vpop.permute.xlu0 %5842
      %5844 = vrot.lane.b32.xlu0 %v4965, 28
      %v5845 = vpop.permute.xlu0 %5844
      %5846 = vrot.lane.b32.xlu0 %v4966, 28
      %v5847 = vpop.permute.xlu0 %5846
      %5848 = vrot.lane.b32.xlu0 %v4967, 28
      %v5849 = vpop.permute.xlu0 %5848
      %5850 = vrot.lane.b32.xlu0 %v4968, 28
      %v5851 = vpop.permute.xlu0 %5850
      %5852 = vrot.lane.b32.xlu0 %v4969, 28
      %v5853 = vpop.permute.xlu0 %5852
      %5854 = vrot.lane.b32.xlu0 %v4970, 28
      %v5855 = vpop.permute.xlu0 %5854
      %5856 = vrot.lane.b32.xlu0 %v4971, 28
      %v5857 = vpop.permute.xlu0 %5856
      %5858 = vrot.lane.b32.xlu0 %v4972, 28
      %v5859 = vpop.permute.xlu0 %5858
      %5860 = vrot.lane.b32.xlu0 %v4973, 28
      %v5861 = vpop.permute.xlu0 %5860
      %5862 = vrot.lane.b32.xlu0 %v4974, 28
      %v5863 = vpop.permute.xlu0 %5862
      %5864 = vrot.lane.b32.xlu0 %v4975, 28
      %v5865 = vpop.permute.xlu0 %5864
      %5866 = vrot.lane.b32.xlu0 %v4976, 28
      %v5867 = vpop.permute.xlu0 %5866
      %5868 = vrot.lane.b32.xlu0 %v4977, 28
      %v5869 = vpop.permute.xlu0 %5868
      %5870 = vrot.lane.b32.xlu0 %v4978, 28
      %v5871 = vpop.permute.xlu0 %5870
      %5872 = vrot.lane.b32.xlu0 %v4979, 28
      %v5873 = vpop.permute.xlu0 %5872
      %5874 = vrot.lane.b32.xlu0 %v4980, 28
      %v5875 = vpop.permute.xlu0 %5874
      %5876 = vrot.lane.b32.xlu0 %v4981, 28
      %v5877 = vpop.permute.xlu0 %5876
      %5942 = vrot.lane.b32.xlu0 %v4982, 32
      %v5943 = vpop.permute.xlu0 %5942
      %5944 = vrot.lane.b32.xlu0 %v4983, 32
      %v5945 = vpop.permute.xlu0 %5944
      %5946 = vrot.lane.b32.xlu0 %v4984, 32
      %v5947 = vpop.permute.xlu0 %5946
      %5948 = vrot.lane.b32.xlu0 %v4985, 32
      %v5949 = vpop.permute.xlu0 %5948
      %5950 = vrot.lane.b32.xlu0 %v4986, 32
      %v5951 = vpop.permute.xlu0 %5950
      %5952 = vrot.lane.b32.xlu0 %v4987, 32
      %v5953 = vpop.permute.xlu0 %5952
      %5954 = vrot.lane.b32.xlu0 %v4988, 32
      %v5955 = vpop.permute.xlu0 %5954
      %5956 = vrot.lane.b32.xlu0 %v4989, 32
      %v5957 = vpop.permute.xlu0 %5956
      %5958 = vrot.lane.b32.xlu0 %v4990, 32
      %v5959 = vpop.permute.xlu0 %5958
      %5960 = vrot.lane.b32.xlu0 %v4991, 32
      %v5961 = vpop.permute.xlu0 %5960
      %5962 = vrot.lane.b32.xlu0 %v4992, 32
      %v5963 = vpop.permute.xlu0 %5962
      %5964 = vrot.lane.b32.xlu0 %v4993, 32
      %v5965 = vpop.permute.xlu0 %5964
      %5966 = vrot.lane.b32.xlu0 %v4994, 32
      %v5967 = vpop.permute.xlu0 %5966
      %5968 = vrot.lane.b32.xlu0 %v4995, 32
      %v5969 = vpop.permute.xlu0 %5968
      %5970 = vrot.lane.b32.xlu0 %v4996, 32
      %v5971 = vpop.permute.xlu0 %5970
      %5972 = vrot.lane.b32.xlu0 %v4997, 32
      %v5973 = vpop.permute.xlu0 %5972
      %5974 = vrot.lane.b32.xlu0 %v4998, 32
      %v5975 = vpop.permute.xlu0 %5974
      %5976 = vrot.lane.b32.xlu0 %v4999, 32
      %v5977 = vpop.permute.xlu0 %5976
      %5978 = vrot.lane.b32.xlu0 %v5000, 32
      %v5979 = vpop.permute.xlu0 %5978
      %5980 = vrot.lane.b32.xlu0 %v5001, 32
      %v5981 = vpop.permute.xlu0 %5980
      %5982 = vrot.lane.b32.xlu0 %v5002, 32
      %v5983 = vpop.permute.xlu0 %5982
      %5984 = vrot.lane.b32.xlu0 %v5003, 32
      %v5985 = vpop.permute.xlu0 %5984
      %5986 = vrot.lane.b32.xlu0 %v5004, 32
      %v5987 = vpop.permute.xlu0 %5986
      %5988 = vrot.lane.b32.xlu0 %v5005, 32
      %v5989 = vpop.permute.xlu0 %5988
      %5990 = vrot.lane.b32.xlu0 %v5006, 32
      %v5991 = vpop.permute.xlu0 %5990
      %5992 = vrot.lane.b32.xlu0 %v5007, 32
      %v5993 = vpop.permute.xlu0 %5992
      %5994 = vrot.lane.b32.xlu0 %v5008, 32
      %v5995 = vpop.permute.xlu0 %5994
      %5996 = vrot.lane.b32.xlu0 %v5009, 32
      %v5997 = vpop.permute.xlu0 %5996
      %5998 = vrot.lane.b32.xlu0 %v5010, 32
      %v5999 = vpop.permute.xlu0 %5998
      %6000 = vrot.lane.b32.xlu0 %v5011, 32
      %v6001 = vpop.permute.xlu0 %6000
      %6002 = vrot.lane.b32.xlu0 %v5012, 32
      %v6003 = vpop.permute.xlu0 %6002
      %6004 = vrot.lane.b32.xlu0 %v5013, 32
      %v6005 = vpop.permute.xlu0 %6004
      %v6038 = vsel %vm851, %v4726, %v5047
      %v6039 = vsel %vm851, %v4727, %v5049
      %v6040 = vsel %vm851, %v4728, %v5051
      %v6041 = vsel %vm851, %v4729, %v5053
      %v6042 = vsel %vm851, %v4730, %v5055
      %v6043 = vsel %vm851, %v4731, %v5057
      %v6044 = vsel %vm851, %v4732, %v5059
      %v6045 = vsel %vm851, %v4733, %v5061
      %v6046 = vsel %vm851, %v4734, %v5063
      %v6047 = vsel %vm851, %v4735, %v5065
      %v6048 = vsel %vm851, %v4736, %v5067
      %v6049 = vsel %vm851, %v4737, %v5069
      %v6050 = vsel %vm851, %v4738, %v5071
      %v6051 = vsel %vm851, %v4739, %v5073
      %v6052 = vsel %vm851, %v4740, %v5075
      %v6053 = vsel %vm851, %v4741, %v5077
      %v6054 = vsel %vm851, %v4742, %v5079
      %v6055 = vsel %vm851, %v4743, %v5081
      %v6056 = vsel %vm851, %v4744, %v5083
      %v6057 = vsel %vm851, %v4745, %v5085
      %v6058 = vsel %vm851, %v4746, %v5087
      %v6059 = vsel %vm851, %v4747, %v5089
      %v6060 = vsel %vm851, %v4748, %v5091
      %v6061 = vsel %vm851, %v4749, %v5093
      %v6062 = vsel %vm851, %v4750, %v5095
      %v6063 = vsel %vm851, %v4751, %v5097
      %v6064 = vsel %vm851, %v4752, %v5099
      %v6065 = vsel %vm851, %v4753, %v5101
      %v6066 = vsel %vm851, %v4754, %v5103
      %v6067 = vsel %vm851, %v4755, %v5105
      %v6068 = vsel %vm851, %v4756, %v5107
      %v6069 = vsel %vm851, %v4757, %v5109
      %v6070 = vsel %vm2285, %v6038, %v5175
      %v6071 = vsel %vm2285, %v6039, %v5177
      %v6072 = vsel %vm2285, %v6040, %v5179
      %v6073 = vsel %vm2285, %v6041, %v5181
      %v6074 = vsel %vm2285, %v6042, %v5183
      %v6075 = vsel %vm2285, %v6043, %v5185
      %v6076 = vsel %vm2285, %v6044, %v5187
      %v6077 = vsel %vm2285, %v6045, %v5189
      %v6078 = vsel %vm2285, %v6046, %v5191
      %v6079 = vsel %vm2285, %v6047, %v5193
      %v6080 = vsel %vm2285, %v6048, %v5195
      %v6081 = vsel %vm2285, %v6049, %v5197
      %v6082 = vsel %vm2285, %v6050, %v5199
      %v6083 = vsel %vm2285, %v6051, %v5201
      %v6084 = vsel %vm2285, %v6052, %v5203
      %v6085 = vsel %vm2285, %v6053, %v5205
      %v6086 = vsel %vm2285, %v6054, %v5207
      %v6087 = vsel %vm2285, %v6055, %v5209
      %v6088 = vsel %vm2285, %v6056, %v5211
      %v6089 = vsel %vm2285, %v6057, %v5213
      %v6090 = vsel %vm2285, %v6058, %v5215
      %v6091 = vsel %vm2285, %v6059, %v5217
      %v6092 = vsel %vm2285, %v6060, %v5219
      %v6093 = vsel %vm2285, %v6061, %v5221
      %v6094 = vsel %vm2285, %v6062, %v5223
      %v6095 = vsel %vm2285, %v6063, %v5225
      %v6096 = vsel %vm2285, %v6064, %v5227
      %v6097 = vsel %vm2285, %v6065, %v5229
      %v6098 = vsel %vm2285, %v6066, %v5231
      %v6099 = vsel %vm2285, %v6067, %v5233
      %v6100 = vsel %vm2285, %v6068, %v5235
      %v6101 = vsel %vm2285, %v6069, %v5237
      %v6102 = vsel %vm2318, %v6070, %v5303
      %v6103 = vsel %vm2318, %v6071, %v5305
      %v6104 = vsel %vm2318, %v6072, %v5307
      %v6105 = vsel %vm2318, %v6073, %v5309
      %v6106 = vsel %vm2318, %v6074, %v5311
      %v6107 = vsel %vm2318, %v6075, %v5313
      %v6108 = vsel %vm2318, %v6076, %v5315
      %v6109 = vsel %vm2318, %v6077, %v5317
      %v6110 = vsel %vm2318, %v6078, %v5319
      %v6111 = vsel %vm2318, %v6079, %v5321
      %v6112 = vsel %vm2318, %v6080, %v5323
      %v6113 = vsel %vm2318, %v6081, %v5325
      %v6114 = vsel %vm2318, %v6082, %v5327
      %v6115 = vsel %vm2318, %v6083, %v5329
      %v6116 = vsel %vm2318, %v6084, %v5331
      %v6117 = vsel %vm2318, %v6085, %v5333
      %v6118 = vsel %vm2318, %v6086, %v5335
      %v6119 = vsel %vm2318, %v6087, %v5337
      %v6120 = vsel %vm2318, %v6088, %v5339
      %v6121 = vsel %vm2318, %v6089, %v5341
      %v6122 = vsel %vm2318, %v6090, %v5343
      %v6123 = vsel %vm2318, %v6091, %v5345
      %v6124 = vsel %vm2318, %v6092, %v5347
      %v6125 = vsel %vm2318, %v6093, %v5349
      %v6126 = vsel %vm2318, %v6094, %v5351
      %v6127 = vsel %vm2318, %v6095, %v5353
      %v6128 = vsel %vm2318, %v6096, %v5355
      %v6129 = vsel %vm2318, %v6097, %v5357
      %v6130 = vsel %vm2318, %v6098, %v5359
      %v6131 = vsel %vm2318, %v6099, %v5361
      %v6132 = vsel %vm2318, %v6100, %v5363
      %v6133 = vsel %vm2318, %v6101, %v5365
      %v6134 = vsel %vm2351, %v6102, %v5431
      %v6135 = vsel %vm2351, %v6103, %v5433
      %v6136 = vsel %vm2351, %v6104, %v5435
      %v6137 = vsel %vm2351, %v6105, %v5437
      %v6138 = vsel %vm2351, %v6106, %v5439
      %v6139 = vsel %vm2351, %v6107, %v5441
      %v6140 = vsel %vm2351, %v6108, %v5443
      %v6141 = vsel %vm2351, %v6109, %v5445
      %v6142 = vsel %vm2351, %v6110, %v5447
      %v6143 = vsel %vm2351, %v6111, %v5449
      %v6144 = vsel %vm2351, %v6112, %v5451
      %v6145 = vsel %vm2351, %v6113, %v5453
      %v6146 = vsel %vm2351, %v6114, %v5455
      %v6147 = vsel %vm2351, %v6115, %v5457
      %v6148 = vsel %vm2351, %v6116, %v5459
      %v6149 = vsel %vm2351, %v6117, %v5461
      %v6150 = vsel %vm2351, %v6118, %v5463
      %v6151 = vsel %vm2351, %v6119, %v5465
      %v6152 = vsel %vm2351, %v6120, %v5467
      %v6153 = vsel %vm2351, %v6121, %v5469
      %v6154 = vsel %vm2351, %v6122, %v5471
      %v6155 = vsel %vm2351, %v6123, %v5473
      %v6156 = vsel %vm2351, %v6124, %v5475
      %v6157 = vsel %vm2351, %v6125, %v5477
      %v6158 = vsel %vm2351, %v6126, %v5479
      %v6159 = vsel %vm2351, %v6127, %v5481
      %v6160 = vsel %vm2351, %v6128, %v5483
      %v6161 = vsel %vm2351, %v6129, %v5485
      %v6162 = vsel %vm2351, %v6130, %v5487
      %v6163 = vsel %vm2351, %v6131, %v5489
      %v6164 = vsel %vm2351, %v6132, %v5491
      %v6165 = vsel %vm2351, %v6133, %v5493
      %v6166 = vsel %vm2384, %v6134, %v5559
      %v6167 = vsel %vm2384, %v6135, %v5561
      %v6168 = vsel %vm2384, %v6136, %v5563
      %v6169 = vsel %vm2384, %v6137, %v5565
      %v6170 = vsel %vm2384, %v6138, %v5567
      %v6171 = vsel %vm2384, %v6139, %v5569
      %v6172 = vsel %vm2384, %v6140, %v5571
      %v6173 = vsel %vm2384, %v6141, %v5573
      %v6174 = vsel %vm2384, %v6142, %v5575
      %v6175 = vsel %vm2384, %v6143, %v5577
      %v6176 = vsel %vm2384, %v6144, %v5579
      %v6177 = vsel %vm2384, %v6145, %v5581
      %v6178 = vsel %vm2384, %v6146, %v5583
      %v6179 = vsel %vm2384, %v6147, %v5585
      %v6180 = vsel %vm2384, %v6148, %v5587
      %v6181 = vsel %vm2384, %v6149, %v5589
      %v6182 = vsel %vm2384, %v6150, %v5591
      %v6183 = vsel %vm2384, %v6151, %v5593
      %v6184 = vsel %vm2384, %v6152, %v5595
      %v6185 = vsel %vm2384, %v6153, %v5597
      %v6186 = vsel %vm2384, %v6154, %v5599
      %v6187 = vsel %vm2384, %v6155, %v5601
      %v6188 = vsel %vm2384, %v6156, %v5603
      %v6189 = vsel %vm2384, %v6157, %v5605
      %v6190 = vsel %vm2384, %v6158, %v5607
      %v6191 = vsel %vm2384, %v6159, %v5609
      %v6192 = vsel %vm2384, %v6160, %v5611
      %v6193 = vsel %vm2384, %v6161, %v5613
      %v6194 = vsel %vm2384, %v6162, %v5615
      %v6195 = vsel %vm2384, %v6163, %v5617
      %v6196 = vsel %vm2384, %v6164, %v5619
      %v6197 = vsel %vm2384, %v6165, %v5621
      %v6198 = vsel %vm2417, %v6166, %v5687
      %v6199 = vsel %vm2417, %v6167, %v5689
      %v6200 = vsel %vm2417, %v6168, %v5691
      %v6201 = vsel %vm2417, %v6169, %v5693
      %v6202 = vsel %vm2417, %v6170, %v5695
      %v6203 = vsel %vm2417, %v6171, %v5697
      %v6204 = vsel %vm2417, %v6172, %v5699
      %v6205 = vsel %vm2417, %v6173, %v5701
      %v6206 = vsel %vm2417, %v6174, %v5703
      %v6207 = vsel %vm2417, %v6175, %v5705
      %v6208 = vsel %vm2417, %v6176, %v5707
      %v6209 = vsel %vm2417, %v6177, %v5709
      %v6210 = vsel %vm2417, %v6178, %v5711
      %v6211 = vsel %vm2417, %v6179, %v5713
      %v6212 = vsel %vm2417, %v6180, %v5715
      %v6213 = vsel %vm2417, %v6181, %v5717
      %v6214 = vsel %vm2417, %v6182, %v5719
      %v6215 = vsel %vm2417, %v6183, %v5721
      %v6216 = vsel %vm2417, %v6184, %v5723
      %v6217 = vsel %vm2417, %v6185, %v5725
      %v6218 = vsel %vm2417, %v6186, %v5727
      %v6219 = vsel %vm2417, %v6187, %v5729
      %v6220 = vsel %vm2417, %v6188, %v5731
      %v6221 = vsel %vm2417, %v6189, %v5733
      %v6222 = vsel %vm2417, %v6190, %v5735
      %v6223 = vsel %vm2417, %v6191, %v5737
      %v6224 = vsel %vm2417, %v6192, %v5739
      %v6225 = vsel %vm2417, %v6193, %v5741
      %v6226 = vsel %vm2417, %v6194, %v5743
      %v6227 = vsel %vm2417, %v6195, %v5745
      %v6228 = vsel %vm2417, %v6196, %v5747
      %v6229 = vsel %vm2417, %v6197, %v5749
      %v6230 = vsel %vm2450, %v6198, %v5815
      %v6231 = vsel %vm2450, %v6199, %v5817
      %v6232 = vsel %vm2450, %v6200, %v5819
      %v6233 = vsel %vm2450, %v6201, %v5821
      %v6234 = vsel %vm2450, %v6202, %v5823
      %v6235 = vsel %vm2450, %v6203, %v5825
      %v6236 = vsel %vm2450, %v6204, %v5827
      %v6237 = vsel %vm2450, %v6205, %v5829
      %v6238 = vsel %vm2450, %v6206, %v5831
      %v6239 = vsel %vm2450, %v6207, %v5833
      %v6240 = vsel %vm2450, %v6208, %v5835
      %v6241 = vsel %vm2450, %v6209, %v5837
      %v6242 = vsel %vm2450, %v6210, %v5839
      %v6243 = vsel %vm2450, %v6211, %v5841
      %v6244 = vsel %vm2450, %v6212, %v5843
      %v6245 = vsel %vm2450, %v6213, %v5845
      %v6246 = vsel %vm2450, %v6214, %v5847
      %v6247 = vsel %vm2450, %v6215, %v5849
      %v6248 = vsel %vm2450, %v6216, %v5851
      %v6249 = vsel %vm2450, %v6217, %v5853
      %v6250 = vsel %vm2450, %v6218, %v5855
      %v6251 = vsel %vm2450, %v6219, %v5857
      %v6252 = vsel %vm2450, %v6220, %v5859
      %v6253 = vsel %vm2450, %v6221, %v5861
      %v6254 = vsel %vm2450, %v6222, %v5863
      %v6255 = vsel %vm2450, %v6223, %v5865
      %v6256 = vsel %vm2450, %v6224, %v5867
      %v6257 = vsel %vm2450, %v6225, %v5869
      %v6258 = vsel %vm2450, %v6226, %v5871
      %v6259 = vsel %vm2450, %v6227, %v5873
      %v6260 = vsel %vm2450, %v6228, %v5875
      %v6261 = vsel %vm2450, %v6229, %v5877
      %v6262 = vsel %vm2483, %v6230, %v5943
      %v6263 = vsel %vm2483, %v6231, %v5945
      %v6264 = vsel %vm2483, %v6232, %v5947
      %v6265 = vsel %vm2483, %v6233, %v5949
      %v6266 = vsel %vm2483, %v6234, %v5951
      %v6267 = vsel %vm2483, %v6235, %v5953
      %v6268 = vsel %vm2483, %v6236, %v5955
      %v6269 = vsel %vm2483, %v6237, %v5957
      %v6270 = vsel %vm2483, %v6238, %v5959
      %v6271 = vsel %vm2483, %v6239, %v5961
      %v6272 = vsel %vm2483, %v6240, %v5963
      %v6273 = vsel %vm2483, %v6241, %v5965
      %v6274 = vsel %vm2483, %v6242, %v5967
      %v6275 = vsel %vm2483, %v6243, %v5969
      %v6276 = vsel %vm2483, %v6244, %v5971
      %v6277 = vsel %vm2483, %v6245, %v5973
      %v6278 = vsel %vm2483, %v6246, %v5975
      %v6279 = vsel %vm2483, %v6247, %v5977
      %v6280 = vsel %vm2483, %v6248, %v5979
      %v6281 = vsel %vm2483, %v6249, %v5981
      %v6282 = vsel %vm2483, %v6250, %v5983
      %v6283 = vsel %vm2483, %v6251, %v5985
      %v6284 = vsel %vm2483, %v6252, %v5987
      %v6285 = vsel %vm2483, %v6253, %v5989
      %v6286 = vsel %vm2483, %v6254, %v5991
      %v6287 = vsel %vm2483, %v6255, %v5993
      %v6288 = vsel %vm2483, %v6256, %v5995
      %v6289 = vsel %vm2483, %v6257, %v5997
      %v6290 = vsel %vm2483, %v6258, %v5999
      %v6291 = vsel %vm2483, %v6259, %v6001
      %v6292 = vsel %vm2483, %v6260, %v6003
      %v6293 = vsel %vm2483, %v6261, %v6005
      %v6294 = vpack.c.bf16 %v6263, %v6262
      %v6295 = vpack.c.bf16 %v6265, %v6264
      %v6296 = vpack.c.bf16 %v6267, %v6266
      %v6297 = vpack.c.bf16 %v6269, %v6268
      %v6298 = vpack.c.bf16 %v6271, %v6270
      %v6299 = vpack.c.bf16 %v6273, %v6272
      %v6300 = vpack.c.bf16 %v6275, %v6274
      %v6301 = vpack.c.bf16 %v6277, %v6276
      %v6302 = vpack.c.bf16 %v6279, %v6278
      %v6303 = vpack.c.bf16 %v6281, %v6280
      %v6304 = vpack.c.bf16 %v6283, %v6282
      %v6305 = vpack.c.bf16 %v6285, %v6284
      %v6306 = vpack.c.bf16 %v6287, %v6286
      %v6307 = vpack.c.bf16 %v6289, %v6288
      %v6308 = vpack.c.bf16 %v6291, %v6290
      %v6309 = vpack.c.bf16 %v6293, %v6292
      %s6310 = scalar_lea.vmem %s3, 40
      %v6311 = vld [vmem:[%s6310] sm:$0xf]
      %v6312 = vld [vmem:[%s6310 + $0x4] sm:$0xf]
      %v6313 = vld [vmem:[%s6310 + $0x8] sm:$0xf]
      %v6314 = vld [vmem:[%s6310 + $0xc] sm:$0xf]
      %v6315 = vld [vmem:[%s6310 + $0x10] sm:$0x3]
      %s6316 = scalar_lea.vmem %s4, 2
      %v6317 = vld [vmem:[%s6316] sm:$0x1]
      %v6319 = vlaneseq
      %v6320 = vshrl.u32 %v6319, 7
      %v6321 = vsub.s32 0, %v6320
      %v6322 = vrot.slane %v6317, %v6321
      %v6329 = vunpack.c.l.b16 %v6311
      %v6330 = vunpack.c.l.b16 %v6312
      %v6331 = vunpack.c.l.b16 %v6313
      %v6332 = vunpack.c.l.b16 %v6314
      %v6333 = vunpack.c.l.b16 %v6315
      %v6334 = vpack.c.b16 %v6330, %v6329
      %v6335 = vpack.c.b16 %v6332, %v6331
      %v6336 = vpack.c.b16 %v6333, %v6333
      %v6340 = vsel %vm2559, %v6294, 0
      %v6343 = vsel %vm2559, %v6295, 0
      %v6346 = vsel %vm2559, %v6296, 0
      %v6349 = vsel %vm2559, %v6297, 0
      %v6352 = vsel %vm2559, %v6298, 0
      %v6355 = vsel %vm2559, %v6299, 0
      %v6358 = vsel %vm2559, %v6300, 0
      %v6361 = vsel %vm2559, %v6301, 0
      %v6364 = vsel %vm2559, %v6302, 0
      %v6367 = vsel %vm2559, %v6303, 0
      %v6370 = vsel %vm2559, %v6304, 0
      %v6373 = vsel %vm2559, %v6305, 0
      %v6376 = vsel %vm2559, %v6306, 0
      %v6379 = vsel %vm2559, %v6307, 0
      %v6382 = vsel %vm2559, %v6308, 0
      %v6385 = vsel %vm2559, %v6309, 0
      %v6388 = vsel %vm2608, %v6336, 0
      %6390 = vmatprep.subr.bf16.mxu0 0
      %6391 = vmatpush1.bf16.msra.mxu0 %v6334
      %6392 = vmatprep.subr.bf16.mxu0 0
      %6393 = vmatpush1.bf16.msra.mxu0 %v6335
      %6394 = vmatprep.subr.bf16.mxu0 0
      %6395 = vmatpush1.bf16.msra.mxu0 %v6388
      %6396 = vmatprep.subr.bf16.mxu0 0
      %6397 = vmatpush1.bf16.msra.mxu0 0
      %6398 = vmatprep.subr.bf16.mxu0 0
      %6399 = vmatpush1.bf16.msra.mxu0 0
      %6400 = vmatprep.subr.bf16.mxu0 0
      %6401 = vmatpush1.bf16.msra.mxu0 0
      %6402 = vmatprep.subr.bf16.mxu0 0
      %6403 = vmatpush1.bf16.msra.mxu0 0
      %6404 = vmatprep.subr.bf16.mxu0 0
      %6405 = vmatpush1.bf16.msra.mxu0 0
      %6406 = vmatprep.subr.bf16.mxu0 0
      %6407 = vmatpush1.bf16.msra.mxu0 0
      %6408 = vmatprep.subr.bf16.mxu0 0
      %6409 = vmatpush1.bf16.msra.mxu0 0
      %6410 = vmatprep.subr.bf16.mxu0 0
      %6411 = vmatpush1.bf16.msra.mxu0 0
      %6412 = vmatprep.subr.bf16.mxu0 0
      %6413 = vmatpush1.bf16.msra.mxu0 0
      %6414 = vmatprep.subr.bf16.mxu0 0
      %6415 = vmatpush1.bf16.msra.mxu0 0
      %6416 = vmatprep.subr.bf16.mxu0 0
      %6417 = vmatpush1.bf16.msra.mxu0 0
      %6418 = vmatprep.subr.bf16.mxu0 0
      %6419 = vmatpush1.bf16.msra.mxu0 0
      %6420 = vmatprep.subr.bf16.mxu0 0
      %6421 = vmatpush1.bf16.msra.mxu0 0
      %6422 = vmatprep.mubr.bf16.mxu0 0
      %6423 = vmatmul.mubr.bf16.gmra.mrb[0].mxu0 %v6340
      %v6424 = vpop.f32.mrb[0].mxu0
      %v6425 = vadd.f32 %v6322, %v6424
      %v6426 = vpop.f32.mrb[0].mxu0
      %v6427 = vpop.f32.mrb[0].mxu0
      %v6428 = vadd.f32 %v6322, %v6427
      %v6429 = vpop.f32.mrb[0].mxu0
      %6430 = vmatprep.mubr.bf16.mxu0 0
      %6431 = vmatmul.mubr.bf16.gmra.mrb[0].mxu0 %v6343
      %v6432 = vpop.f32.mrb[0].mxu0
      %v6433 = vadd.f32 %v6322, %v6432
      %v6434 = vpop.f32.mrb[0].mxu0
      %v6435 = vpop.f32.mrb[0].mxu0
      %v6436 = vadd.f32 %v6322, %v6435
      %v6437 = vpop.f32.mrb[0].mxu0
      %6438 = vmatprep.mubr.bf16.mxu0 0
      %6439 = vmatmul.mubr.bf16.gmra.mrb[0].mxu0 %v6346
      %v6440 = vpop.f32.mrb[0].mxu0
      %v6441 = vadd.f32 %v6322, %v6440
      %v6442 = vpop.f32.mrb[0].mxu0
      %v6443 = vpop.f32.mrb[0].mxu0
      %v6444 = vadd.f32 %v6322, %v6443
      %v6445 = vpop.f32.mrb[0].mxu0
      %6446 = vmatprep.mubr.bf16.mxu0 0
      %6447 = vmatmul.mubr.bf16.gmra.mrb[0].mxu0 %v6349
      %v6448 = vpop.f32.mrb[0].mxu0
      %v6449 = vadd.f32 %v6322, %v6448
      %v6450 = vpop.f32.mrb[0].mxu0
      %v6451 = vpop.f32.mrb[0].mxu0
      %v6452 = vadd.f32 %v6322, %v6451
      %v6453 = vpop.f32.mrb[0].mxu0
      %6454 = vmatprep.mubr.bf16.mxu0 0
      %6455 = vmatmul.mubr.bf16.gmra.mrb[0].mxu0 %v6352
      %v6456 = vpop.f32.mrb[0].mxu0
      %v6457 = vadd.f32 %v6322, %v6456
      %v6458 = vpop.f32.mrb[0].mxu0
      %v6459 = vpop.f32.mrb[0].mxu0
      %v6460 = vadd.f32 %v6322, %v6459
      %v6461 = vpop.f32.mrb[0].mxu0
      %6462 = vmatprep.mubr.bf16.mxu0 0
      %6463 = vmatmul.mubr.bf16.gmra.mrb[0].mxu0 %v6355
      %v6464 = vpop.f32.mrb[0].mxu0
      %v6465 = vadd.f32 %v6322, %v6464
      %v6466 = vpop.f32.mrb[0].mxu0
      %v6467 = vpop.f32.mrb[0].mxu0
      %v6468 = vadd.f32 %v6322, %v6467
      %v6469 = vpop.f32.mrb[0].mxu0
      %6470 = vmatprep.mubr.bf16.mxu0 0
      %6471 = vmatmul.mubr.bf16.gmra.mrb[0].mxu0 %v6358
      %v6472 = vpop.f32.mrb[0].mxu0
      %v6473 = vadd.f32 %v6322, %v6472
      %v6474 = vpop.f32.mrb[0].mxu0
      %v6475 = vpop.f32.mrb[0].mxu0
      %v6476 = vadd.f32 %v6322, %v6475
      %v6477 = vpop.f32.mrb[0].mxu0
      %6478 = vmatprep.mubr.bf16.mxu0 0
      %6479 = vmatmul.mubr.bf16.gmra.mrb[0].mxu0 %v6361
      %v6480 = vpop.f32.mrb[0].mxu0
      %v6481 = vadd.f32 %v6322, %v6480
      %v6482 = vpop.f32.mrb[0].mxu0
      %v6483 = vpop.f32.mrb[0].mxu0
      %v6484 = vadd.f32 %v6322, %v6483
      %v6485 = vpop.f32.mrb[0].mxu0
      %6486 = vmatprep.mubr.bf16.mxu0 0
      %6487 = vmatmul.mubr.bf16.gmra.mrb[0].mxu0 %v6364
      %v6488 = vpop.f32.mrb[0].mxu0
      %v6489 = vadd.f32 %v6322, %v6488
      %v6490 = vpop.f32.mrb[0].mxu0
      %v6491 = vpop.f32.mrb[0].mxu0
      %v6492 = vadd.f32 %v6322, %v6491
      %v6493 = vpop.f32.mrb[0].mxu0
      %6494 = vmatprep.mubr.bf16.mxu0 0
      %6495 = vmatmul.mubr.bf16.gmra.mrb[0].mxu0 %v6367
      %v6496 = vpop.f32.mrb[0].mxu0
      %v6497 = vadd.f32 %v6322, %v6496
      %v6498 = vpop.f32.mrb[0].mxu0
      %v6499 = vpop.f32.mrb[0].mxu0
      %v6500 = vadd.f32 %v6322, %v6499
      %v6501 = vpop.f32.mrb[0].mxu0
      %6502 = vmatprep.mubr.bf16.mxu0 0
      %6503 = vmatmul.mubr.bf16.gmra.mrb[0].mxu0 %v6370
      %v6504 = vpop.f32.mrb[0].mxu0
      %v6505 = vadd.f32 %v6322, %v6504
      %v6506 = vpop.f32.mrb[0].mxu0
      %v6507 = vpop.f32.mrb[0].mxu0
      %v6508 = vadd.f32 %v6322, %v6507
      %v6509 = vpop.f32.mrb[0].mxu0
      %6510 = vmatprep.mubr.bf16.mxu0 0
      %6511 = vmatmul.mubr.bf16.gmra.mrb[0].mxu0 %v6373
      %v6512 = vpop.f32.mrb[0].mxu0
      %v6513 = vadd.f32 %v6322, %v6512
      %v6514 = vpop.f32.mrb[0].mxu0
      %v6515 = vpop.f32.mrb[0].mxu0
      %v6516 = vadd.f32 %v6322, %v6515
      %v6517 = vpop.f32.mrb[0].mxu0
      %6518 = vmatprep.mubr.bf16.mxu0 0
      %6519 = vmatmul.mubr.bf16.gmra.mrb[0].mxu0 %v6376
      %v6520 = vpop.f32.mrb[0].mxu0
      %v6521 = vadd.f32 %v6322, %v6520
      %v6522 = vpop.f32.mrb[0].mxu0
      %v6523 = vpop.f32.mrb[0].mxu0
      %v6524 = vadd.f32 %v6322, %v6523
      %v6525 = vpop.f32.mrb[0].mxu0
      %6526 = vmatprep.mubr.bf16.mxu0 0
      %6527 = vmatmul.mubr.bf16.gmra.mrb[0].mxu0 %v6379
      %v6528 = vpop.f32.mrb[0].mxu0
      %v6529 = vadd.f32 %v6322, %v6528
      %v6530 = vpop.f32.mrb[0].mxu0
      %v6531 = vpop.f32.mrb[0].mxu0
      %v6532 = vadd.f32 %v6322, %v6531
      %v6533 = vpop.f32.mrb[0].mxu0
      %6534 = vmatprep.mubr.bf16.mxu0 0
      %6535 = vmatmul.mubr.bf16.gmra.mrb[0].mxu0 %v6382
      %v6536 = vpop.f32.mrb[0].mxu0
      %v6537 = vadd.f32 %v6322, %v6536
      %v6538 = vpop.f32.mrb[0].mxu0
      %v6539 = vpop.f32.mrb[0].mxu0
      %v6540 = vadd.f32 %v6322, %v6539
      %v6541 = vpop.f32.mrb[0].mxu0
      %6542 = vmatprep.mubr.bf16.mxu0 0
      %6543 = vmatmul.mubr.bf16.gmra.mrb[0].mxu0 %v6385
      %v6544 = vpop.f32.mrb[0].mxu0
      %v6545 = vadd.f32 %v6322, %v6544
      %v6546 = vpop.f32.mrb[0].mxu0
      %v6547 = vpop.f32.mrb[0].mxu0
      %v6548 = vadd.f32 %v6322, %v6547
      %v6549 = vpop.f32.mrb[0].mxu0
      %6550 = vdwg.mxu0
      %v6551 = vmax.f32 %v6425, 0.0
      %v6552 = vmax.f32 %v6428, 0.0
      %v6553 = vmax.f32 %v6433, 0.0
      %v6554 = vmax.f32 %v6436, 0.0
      %v6555 = vmax.f32 %v6441, 0.0
      %v6556 = vmax.f32 %v6444, 0.0
      %v6557 = vmax.f32 %v6449, 0.0
      %v6558 = vmax.f32 %v6452, 0.0
      %v6559 = vmax.f32 %v6457, 0.0
      %v6560 = vmax.f32 %v6460, 0.0
      %v6561 = vmax.f32 %v6465, 0.0
      %v6562 = vmax.f32 %v6468, 0.0
      %v6563 = vmax.f32 %v6473, 0.0
      %v6564 = vmax.f32 %v6476, 0.0
      %v6565 = vmax.f32 %v6481, 0.0
      %v6566 = vmax.f32 %v6484, 0.0
      %v6567 = vmax.f32 %v6489, 0.0
      %v6568 = vmax.f32 %v6492, 0.0
      %v6569 = vmax.f32 %v6497, 0.0
      %v6570 = vmax.f32 %v6500, 0.0
      %v6571 = vmax.f32 %v6505, 0.0
      %v6572 = vmax.f32 %v6508, 0.0
      %v6573 = vmax.f32 %v6513, 0.0
      %v6574 = vmax.f32 %v6516, 0.0
      %v6575 = vmax.f32 %v6521, 0.0
      %v6576 = vmax.f32 %v6524, 0.0
      %v6577 = vmax.f32 %v6529, 0.0
      %v6578 = vmax.f32 %v6532, 0.0
      %v6579 = vmax.f32 %v6537, 0.0
      %v6580 = vmax.f32 %v6540, 0.0
      %v6581 = vmax.f32 %v6545, 0.0
      %v6582 = vmax.f32 %v6548, 0.0
      %v6583 = vld [vmem:[#allocation6] sm:$0x1]
      %v6585 = vlaneseq
      %v6586 = vshrl.u32 %v6585, 7
      %v6587 = vsub.s32 0, %v6586
      %v6588 = vrot.slane %v6583, %v6587
      %6589 = vset.pattern.permute.xlu0 0
      %6590 = vperm.xlu0 %6589, %v6588
      %v6591 = vpop.permute.xlu0 %6590
      %v6593 = vmul.f32 %v6591, %v725
      %v6594 = vmul.f32 %v6591, %v728
      %v6595 = vmul.f32 %v6591, %v733
      %v6596 = vmul.f32 %v6591, %v736
      %v6597 = vmul.f32 %v6591, %v741
      %v6598 = vmul.f32 %v6591, %v744
      %v6599 = vmul.f32 %v6591, %v749
      %v6600 = vmul.f32 %v6591, %v752
      %v6601 = vmul.f32 %v6591, %v757
      %v6602 = vmul.f32 %v6591, %v760
      %v6603 = vmul.f32 %v6591, %v765
      %v6604 = vmul.f32 %v6591, %v768
      %v6605 = vmul.f32 %v6591, %v773
      %v6606 = vmul.f32 %v6591, %v776
      %v6607 = vmul.f32 %v6591, %v781
      %v6608 = vmul.f32 %v6591, %v784
      %v6609 = vmul.f32 %v6591, %v789
      %v6610 = vmul.f32 %v6591, %v792
      %v6611 = vmul.f32 %v6591, %v797
      %v6612 = vmul.f32 %v6591, %v800
      %v6613 = vmul.f32 %v6591, %v805
      %v6614 = vmul.f32 %v6591, %v808
      %v6615 = vmul.f32 %v6591, %v813
      %v6616 = vmul.f32 %v6591, %v816
      %v6617 = vmul.f32 %v6591, %v821
      %v6618 = vmul.f32 %v6591, %v824
      %v6619 = vmul.f32 %v6591, %v829
      %v6620 = vmul.f32 %v6591, %v832
      %v6621 = vmul.f32 %v6591, %v837
      %v6622 = vmul.f32 %v6591, %v840
      %v6623 = vmul.f32 %v6591, %v845
      %v6624 = vmul.f32 %v6591, %v848
      %v6625 = vadd.f32 %v6551, %v6593
      %v6626 = vadd.f32 %v6552, %v6594
      %v6627 = vadd.f32 %v6553, %v6595
      %v6628 = vadd.f32 %v6554, %v6596
      %v6629 = vadd.f32 %v6555, %v6597
      %v6630 = vadd.f32 %v6556, %v6598
      %v6631 = vadd.f32 %v6557, %v6599
      %v6632 = vadd.f32 %v6558, %v6600
      %v6633 = vadd.f32 %v6559, %v6601
      %v6634 = vadd.f32 %v6560, %v6602
      %v6635 = vadd.f32 %v6561, %v6603
      %v6636 = vadd.f32 %v6562, %v6604
      %v6637 = vadd.f32 %v6563, %v6605
      %v6638 = vadd.f32 %v6564, %v6606
      %v6639 = vadd.f32 %v6565, %v6607
      %v6640 = vadd.f32 %v6566, %v6608
      %v6641 = vadd.f32 %v6567, %v6609
      %v6642 = vadd.f32 %v6568, %v6610
      %v6643 = vadd.f32 %v6569, %v6611
      %v6644 = vadd.f32 %v6570, %v6612
      %v6645 = vadd.f32 %v6571, %v6613
      %v6646 = vadd.f32 %v6572, %v6614
      %v6647 = vadd.f32 %v6573, %v6615
      %v6648 = vadd.f32 %v6574, %v6616
      %v6649 = vadd.f32 %v6575, %v6617
      %v6650 = vadd.f32 %v6576, %v6618
      %v6651 = vadd.f32 %v6577, %v6619
      %v6652 = vadd.f32 %v6578, %v6620
      %v6653 = vadd.f32 %v6579, %v6621
      %v6654 = vadd.f32 %v6580, %v6622
      %v6655 = vadd.f32 %v6581, %v6623
      %v6656 = vadd.f32 %v6582, %v6624
      %v6689 = vcombine.high %v6625, %v6625
      %v6691 = vunpack.c.l.s4 1983009808
      %v6692 = vunpack.c.0.s8 %v6691
      %v6693 = vlaneseq
      %v6694 = vshrl.u32 %v6693, 7
      %v6695 = vsub.s32 %v6692, %v6694
      %v6696 = vrot.slane %v6625, %v6695
      %v6698 = vunpack.c.l.s4 1983009808
      %v6699 = vunpack.c.0.s8 %v6698
      %v6700 = vlaneseq
      %v6701 = vshrl.u32 %v6700, 7
      %v6702 = vsub.s32 %v6699, %v6701
      %v6703 = vrot.slane %v6689, %v6702
      %v6704 = vcombine.high %v6696, %v6696
      %v6705 = vcombine.high %v6703, %v6703
      %v6706 = vcombine.high %v6626, %v6626
      %v6708 = vunpack.c.l.s4 1983009808
      %v6709 = vunpack.c.0.s8 %v6708
      %v6710 = vlaneseq
      %v6711 = vshrl.u32 %v6710, 7
      %v6712 = vsub.s32 %v6709, %v6711
      %v6713 = vrot.slane %v6626, %v6712
      %v6715 = vunpack.c.l.s4 1983009808
      %v6716 = vunpack.c.0.s8 %v6715
      %v6717 = vlaneseq
      %v6718 = vshrl.u32 %v6717, 7
      %v6719 = vsub.s32 %v6716, %v6718
      %v6720 = vrot.slane %v6706, %v6719
      %v6721 = vcombine.high %v6713, %v6713
      %v6722 = vcombine.high %v6720, %v6720
      %v6723 = vcombine.high %v6627, %v6627
      %v6725 = vunpack.c.l.s4 1983009808
      %v6726 = vunpack.c.0.s8 %v6725
      %v6727 = vlaneseq
      %v6728 = vshrl.u32 %v6727, 7
      %v6729 = vsub.s32 %v6726, %v6728
      %v6730 = vrot.slane %v6627, %v6729
      %v6732 = vunpack.c.l.s4 1983009808
      %v6733 = vunpack.c.0.s8 %v6732
      %v6734 = vlaneseq
      %v6735 = vshrl.u32 %v6734, 7
      %v6736 = vsub.s32 %v6733, %v6735
      %v6737 = vrot.slane %v6723, %v6736
      %v6738 = vcombine.high %v6730, %v6730
      %v6739 = vcombine.high %v6737, %v6737
      %v6740 = vcombine.high %v6628, %v6628
      %v6742 = vunpack.c.l.s4 1983009808
      %v6743 = vunpack.c.0.s8 %v6742
      %v6744 = vlaneseq
      %v6745 = vshrl.u32 %v6744, 7
      %v6746 = vsub.s32 %v6743, %v6745
      %v6747 = vrot.slane %v6628, %v6746
      %v6749 = vunpack.c.l.s4 1983009808
      %v6750 = vunpack.c.0.s8 %v6749
      %v6751 = vlaneseq
      %v6752 = vshrl.u32 %v6751, 7
      %v6753 = vsub.s32 %v6750, %v6752
      %v6754 = vrot.slane %v6740, %v6753
      %v6755 = vcombine.high %v6747, %v6747
      %v6756 = vcombine.high %v6754, %v6754
      %v6757 = vcombine.high %v6629, %v6629
      %v6759 = vunpack.c.l.s4 1983009808
      %v6760 = vunpack.c.0.s8 %v6759
      %v6761 = vlaneseq
      %v6762 = vshrl.u32 %v6761, 7
      %v6763 = vsub.s32 %v6760, %v6762
      %v6764 = vrot.slane %v6629, %v6763
      %v6766 = vunpack.c.l.s4 1983009808
      %v6767 = vunpack.c.0.s8 %v6766
      %v6768 = vlaneseq
      %v6769 = vshrl.u32 %v6768, 7
      %v6770 = vsub.s32 %v6767, %v6769
      %v6771 = vrot.slane %v6757, %v6770
      %v6772 = vcombine.high %v6764, %v6764
      %v6773 = vcombine.high %v6771, %v6771
      %v6774 = vcombine.high %v6630, %v6630
      %v6776 = vunpack.c.l.s4 1983009808
      %v6777 = vunpack.c.0.s8 %v6776
      %v6778 = vlaneseq
      %v6779 = vshrl.u32 %v6778, 7
      %v6780 = vsub.s32 %v6777, %v6779
      %v6781 = vrot.slane %v6630, %v6780
      %v6783 = vunpack.c.l.s4 1983009808
      %v6784 = vunpack.c.0.s8 %v6783
      %v6785 = vlaneseq
      %v6786 = vshrl.u32 %v6785, 7
      %v6787 = vsub.s32 %v6784, %v6786
      %v6788 = vrot.slane %v6774, %v6787
      %v6789 = vcombine.high %v6781, %v6781
      %v6790 = vcombine.high %v6788, %v6788
      %v6791 = vcombine.high %v6631, %v6631
      %v6793 = vunpack.c.l.s4 1983009808
      %v6794 = vunpack.c.0.s8 %v6793
      %v6795 = vlaneseq
      %v6796 = vshrl.u32 %v6795, 7
      %v6797 = vsub.s32 %v6794, %v6796
      %v6798 = vrot.slane %v6631, %v6797
      %v6800 = vunpack.c.l.s4 1983009808
      %v6801 = vunpack.c.0.s8 %v6800
      %v6802 = vlaneseq
      %v6803 = vshrl.u32 %v6802, 7
      %v6804 = vsub.s32 %v6801, %v6803
      %v6805 = vrot.slane %v6791, %v6804
      %v6806 = vcombine.high %v6798, %v6798
      %v6807 = vcombine.high %v6805, %v6805
      %v6808 = vcombine.high %v6632, %v6632
      %v6810 = vunpack.c.l.s4 1983009808
      %v6811 = vunpack.c.0.s8 %v6810
      %v6812 = vlaneseq
      %v6813 = vshrl.u32 %v6812, 7
      %v6814 = vsub.s32 %v6811, %v6813
      %v6815 = vrot.slane %v6632, %v6814
      %v6817 = vunpack.c.l.s4 1983009808
      %v6818 = vunpack.c.0.s8 %v6817
      %v6819 = vlaneseq
      %v6820 = vshrl.u32 %v6819, 7
      %v6821 = vsub.s32 %v6818, %v6820
      %v6822 = vrot.slane %v6808, %v6821
      %v6823 = vcombine.high %v6815, %v6815
      %v6824 = vcombine.high %v6822, %v6822
      %v6825 = vcombine.high %v6633, %v6633
      %v6827 = vunpack.c.l.s4 1983009808
      %v6828 = vunpack.c.0.s8 %v6827
      %v6829 = vlaneseq
      %v6830 = vshrl.u32 %v6829, 7
      %v6831 = vsub.s32 %v6828, %v6830
      %v6832 = vrot.slane %v6633, %v6831
      %v6834 = vunpack.c.l.s4 1983009808
      %v6835 = vunpack.c.0.s8 %v6834
      %v6836 = vlaneseq
      %v6837 = vshrl.u32 %v6836, 7
      %v6838 = vsub.s32 %v6835, %v6837
      %v6839 = vrot.slane %v6825, %v6838
      %v6840 = vcombine.high %v6832, %v6832
      %v6841 = vcombine.high %v6839, %v6839
      %v6842 = vcombine.high %v6634, %v6634
      %v6844 = vunpack.c.l.s4 1983009808
      %v6845 = vunpack.c.0.s8 %v6844
      %v6846 = vlaneseq
      %v6847 = vshrl.u32 %v6846, 7
      %v6848 = vsub.s32 %v6845, %v6847
      %v6849 = vrot.slane %v6634, %v6848
      %v6851 = vunpack.c.l.s4 1983009808
      %v6852 = vunpack.c.0.s8 %v6851
      %v6853 = vlaneseq
      %v6854 = vshrl.u32 %v6853, 7
      %v6855 = vsub.s32 %v6852, %v6854
      %v6856 = vrot.slane %v6842, %v6855
      %v6857 = vcombine.high %v6849, %v6849
      %v6858 = vcombine.high %v6856, %v6856
      %v6859 = vcombine.high %v6635, %v6635
      %v6861 = vunpack.c.l.s4 1983009808
      %v6862 = vunpack.c.0.s8 %v6861
      %v6863 = vlaneseq
      %v6864 = vshrl.u32 %v6863, 7
      %v6865 = vsub.s32 %v6862, %v6864
      %v6866 = vrot.slane %v6635, %v6865
      %v6868 = vunpack.c.l.s4 1983009808
      %v6869 = vunpack.c.0.s8 %v6868
      %v6870 = vlaneseq
      %v6871 = vshrl.u32 %v6870, 7
      %v6872 = vsub.s32 %v6869, %v6871
      %v6873 = vrot.slane %v6859, %v6872
      %v6874 = vcombine.high %v6866, %v6866
      %v6875 = vcombine.high %v6873, %v6873
      %v6876 = vcombine.high %v6636, %v6636
      %v6878 = vunpack.c.l.s4 1983009808
      %v6879 = vunpack.c.0.s8 %v6878
      %v6880 = vlaneseq
      %v6881 = vshrl.u32 %v6880, 7
      %v6882 = vsub.s32 %v6879, %v6881
      %v6883 = vrot.slane %v6636, %v6882
      %v6885 = vunpack.c.l.s4 1983009808
      %v6886 = vunpack.c.0.s8 %v6885
      %v6887 = vlaneseq
      %v6888 = vshrl.u32 %v6887, 7
      %v6889 = vsub.s32 %v6886, %v6888
      %v6890 = vrot.slane %v6876, %v6889
      %v6891 = vcombine.high %v6883, %v6883
      %v6892 = vcombine.high %v6890, %v6890
      %v6893 = vcombine.high %v6637, %v6637
      %v6895 = vunpack.c.l.s4 1983009808
      %v6896 = vunpack.c.0.s8 %v6895
      %v6897 = vlaneseq
      %v6898 = vshrl.u32 %v6897, 7
      %v6899 = vsub.s32 %v6896, %v6898
      %v6900 = vrot.slane %v6637, %v6899
      %v6902 = vunpack.c.l.s4 1983009808
      %v6903 = vunpack.c.0.s8 %v6902
      %v6904 = vlaneseq
      %v6905 = vshrl.u32 %v6904, 7
      %v6906 = vsub.s32 %v6903, %v6905
      %v6907 = vrot.slane %v6893, %v6906
      %v6908 = vcombine.high %v6900, %v6900
      %v6909 = vcombine.high %v6907, %v6907
      %v6910 = vcombine.high %v6638, %v6638
      %v6912 = vunpack.c.l.s4 1983009808
      %v6913 = vunpack.c.0.s8 %v6912
      %v6914 = vlaneseq
      %v6915 = vshrl.u32 %v6914, 7
      %v6916 = vsub.s32 %v6913, %v6915
      %v6917 = vrot.slane %v6638, %v6916
      %v6919 = vunpack.c.l.s4 1983009808
      %v6920 = vunpack.c.0.s8 %v6919
      %v6921 = vlaneseq
      %v6922 = vshrl.u32 %v6921, 7
      %v6923 = vsub.s32 %v6920, %v6922
      %v6924 = vrot.slane %v6910, %v6923
      %v6925 = vcombine.high %v6917, %v6917
      %v6926 = vcombine.high %v6924, %v6924
      %v6927 = vcombine.high %v6639, %v6639
      %v6929 = vunpack.c.l.s4 1983009808
      %v6930 = vunpack.c.0.s8 %v6929
      %v6931 = vlaneseq
      %v6932 = vshrl.u32 %v6931, 7
      %v6933 = vsub.s32 %v6930, %v6932
      %v6934 = vrot.slane %v6639, %v6933
      %v6936 = vunpack.c.l.s4 1983009808
      %v6937 = vunpack.c.0.s8 %v6936
      %v6938 = vlaneseq
      %v6939 = vshrl.u32 %v6938, 7
      %v6940 = vsub.s32 %v6937, %v6939
      %v6941 = vrot.slane %v6927, %v6940
      %v6942 = vcombine.high %v6934, %v6934
      %v6943 = vcombine.high %v6941, %v6941
      %v6944 = vcombine.high %v6640, %v6640
      %v6946 = vunpack.c.l.s4 1983009808
      %v6947 = vunpack.c.0.s8 %v6946
      %v6948 = vlaneseq
      %v6949 = vshrl.u32 %v6948, 7
      %v6950 = vsub.s32 %v6947, %v6949
      %v6951 = vrot.slane %v6640, %v6950
      %v6953 = vunpack.c.l.s4 1983009808
      %v6954 = vunpack.c.0.s8 %v6953
      %v6955 = vlaneseq
      %v6956 = vshrl.u32 %v6955, 7
      %v6957 = vsub.s32 %v6954, %v6956
      %v6958 = vrot.slane %v6944, %v6957
      %v6959 = vcombine.high %v6951, %v6951
      %v6960 = vcombine.high %v6958, %v6958
      %v6961 = vcombine.high %v6641, %v6641
      %v6963 = vunpack.c.l.s4 1983009808
      %v6964 = vunpack.c.0.s8 %v6963
      %v6965 = vlaneseq
      %v6966 = vshrl.u32 %v6965, 7
      %v6967 = vsub.s32 %v6964, %v6966
      %v6968 = vrot.slane %v6641, %v6967
      %v6970 = vunpack.c.l.s4 1983009808
      %v6971 = vunpack.c.0.s8 %v6970
      %v6972 = vlaneseq
      %v6973 = vshrl.u32 %v6972, 7
      %v6974 = vsub.s32 %v6971, %v6973
      %v6975 = vrot.slane %v6961, %v6974
      %v6976 = vcombine.high %v6968, %v6968
      %v6977 = vcombine.high %v6975, %v6975
      %v6978 = vcombine.high %v6642, %v6642
      %v6980 = vunpack.c.l.s4 1983009808
      %v6981 = vunpack.c.0.s8 %v6980
      %v6982 = vlaneseq
      %v6983 = vshrl.u32 %v6982, 7
      %v6984 = vsub.s32 %v6981, %v6983
      %v6985 = vrot.slane %v6642, %v6984
      %v6987 = vunpack.c.l.s4 1983009808
      %v6988 = vunpack.c.0.s8 %v6987
      %v6989 = vlaneseq
      %v6990 = vshrl.u32 %v6989, 7
      %v6991 = vsub.s32 %v6988, %v6990
      %v6992 = vrot.slane %v6978, %v6991
      %v6993 = vcombine.high %v6985, %v6985
      %v6994 = vcombine.high %v6992, %v6992
      %v6995 = vcombine.high %v6643, %v6643
      %v6997 = vunpack.c.l.s4 1983009808
      %v6998 = vunpack.c.0.s8 %v6997
      %v6999 = vlaneseq
      %v7000 = vshrl.u32 %v6999, 7
      %v7001 = vsub.s32 %v6998, %v7000
      %v7002 = vrot.slane %v6643, %v7001
      %v7004 = vunpack.c.l.s4 1983009808
      %v7005 = vunpack.c.0.s8 %v7004
      %v7006 = vlaneseq
      %v7007 = vshrl.u32 %v7006, 7
      %v7008 = vsub.s32 %v7005, %v7007
      %v7009 = vrot.slane %v6995, %v7008
      %v7010 = vcombine.high %v7002, %v7002
      %v7011 = vcombine.high %v7009, %v7009
      %v7012 = vcombine.high %v6644, %v6644
      %v7014 = vunpack.c.l.s4 1983009808
      %v7015 = vunpack.c.0.s8 %v7014
      %v7016 = vlaneseq
      %v7017 = vshrl.u32 %v7016, 7
      %v7018 = vsub.s32 %v7015, %v7017
      %v7019 = vrot.slane %v6644, %v7018
      %v7021 = vunpack.c.l.s4 1983009808
      %v7022 = vunpack.c.0.s8 %v7021
      %v7023 = vlaneseq
      %v7024 = vshrl.u32 %v7023, 7
      %v7025 = vsub.s32 %v7022, %v7024
      %v7026 = vrot.slane %v7012, %v7025
      %v7027 = vcombine.high %v7019, %v7019
      %v7028 = vcombine.high %v7026, %v7026
      %v7029 = vcombine.high %v6645, %v6645
      %v7031 = vunpack.c.l.s4 1983009808
      %v7032 = vunpack.c.0.s8 %v7031
      %v7033 = vlaneseq
      %v7034 = vshrl.u32 %v7033, 7
      %v7035 = vsub.s32 %v7032, %v7034
      %v7036 = vrot.slane %v6645, %v7035
      %v7038 = vunpack.c.l.s4 1983009808
      %v7039 = vunpack.c.0.s8 %v7038
      %v7040 = vlaneseq
      %v7041 = vshrl.u32 %v7040, 7
      %v7042 = vsub.s32 %v7039, %v7041
      %v7043 = vrot.slane %v7029, %v7042
      %v7044 = vcombine.high %v7036, %v7036
      %v7045 = vcombine.high %v7043, %v7043
      %v7046 = vcombine.high %v6646, %v6646
      %v7048 = vunpack.c.l.s4 1983009808
      %v7049 = vunpack.c.0.s8 %v7048
      %v7050 = vlaneseq
      %v7051 = vshrl.u32 %v7050, 7
      %v7052 = vsub.s32 %v7049, %v7051
      %v7053 = vrot.slane %v6646, %v7052
      %v7055 = vunpack.c.l.s4 1983009808
      %v7056 = vunpack.c.0.s8 %v7055
      %v7057 = vlaneseq
      %v7058 = vshrl.u32 %v7057, 7
      %v7059 = vsub.s32 %v7056, %v7058
      %v7060 = vrot.slane %v7046, %v7059
      %v7061 = vcombine.high %v7053, %v7053
      %v7062 = vcombine.high %v7060, %v7060
      %v7063 = vcombine.high %v6647, %v6647
      %v7065 = vunpack.c.l.s4 1983009808
      %v7066 = vunpack.c.0.s8 %v7065
      %v7067 = vlaneseq
      %v7068 = vshrl.u32 %v7067, 7
      %v7069 = vsub.s32 %v7066, %v7068
      %v7070 = vrot.slane %v6647, %v7069
      %v7072 = vunpack.c.l.s4 1983009808
      %v7073 = vunpack.c.0.s8 %v7072
      %v7074 = vlaneseq
      %v7075 = vshrl.u32 %v7074, 7
      %v7076 = vsub.s32 %v7073, %v7075
      %v7077 = vrot.slane %v7063, %v7076
      %v7078 = vcombine.high %v7070, %v7070
      %v7079 = vcombine.high %v7077, %v7077
      %v7080 = vcombine.high %v6648, %v6648
      %v7082 = vunpack.c.l.s4 1983009808
      %v7083 = vunpack.c.0.s8 %v7082
      %v7084 = vlaneseq
      %v7085 = vshrl.u32 %v7084, 7
      %v7086 = vsub.s32 %v7083, %v7085
      %v7087 = vrot.slane %v6648, %v7086
      %v7089 = vunpack.c.l.s4 1983009808
      %v7090 = vunpack.c.0.s8 %v7089
      %v7091 = vlaneseq
      %v7092 = vshrl.u32 %v7091, 7
      %v7093 = vsub.s32 %v7090, %v7092
      %v7094 = vrot.slane %v7080, %v7093
      %v7095 = vcombine.high %v7087, %v7087
      %v7096 = vcombine.high %v7094, %v7094
      %v7097 = vcombine.high %v6649, %v6649
      %v7099 = vunpack.c.l.s4 1983009808
      %v7100 = vunpack.c.0.s8 %v7099
      %v7101 = vlaneseq
      %v7102 = vshrl.u32 %v7101, 7
      %v7103 = vsub.s32 %v7100, %v7102
      %v7104 = vrot.slane %v6649, %v7103
      %v7106 = vunpack.c.l.s4 1983009808
      %v7107 = vunpack.c.0.s8 %v7106
      %v7108 = vlaneseq
      %v7109 = vshrl.u32 %v7108, 7
      %v7110 = vsub.s32 %v7107, %v7109
      %v7111 = vrot.slane %v7097, %v7110
      %v7112 = vcombine.high %v7104, %v7104
      %v7113 = vcombine.high %v7111, %v7111
      %v7114 = vcombine.high %v6650, %v6650
      %v7116 = vunpack.c.l.s4 1983009808
      %v7117 = vunpack.c.0.s8 %v7116
      %v7118 = vlaneseq
      %v7119 = vshrl.u32 %v7118, 7
      %v7120 = vsub.s32 %v7117, %v7119
      %v7121 = vrot.slane %v6650, %v7120
      %v7123 = vunpack.c.l.s4 1983009808
      %v7124 = vunpack.c.0.s8 %v7123
      %v7125 = vlaneseq
      %v7126 = vshrl.u32 %v7125, 7
      %v7127 = vsub.s32 %v7124, %v7126
      %v7128 = vrot.slane %v7114, %v7127
      %v7129 = vcombine.high %v7121, %v7121
      %v7130 = vcombine.high %v7128, %v7128
      %v7131 = vcombine.high %v6651, %v6651
      %v7133 = vunpack.c.l.s4 1983009808
      %v7134 = vunpack.c.0.s8 %v7133
      %v7135 = vlaneseq
      %v7136 = vshrl.u32 %v7135, 7
      %v7137 = vsub.s32 %v7134, %v7136
      %v7138 = vrot.slane %v6651, %v7137
      %v7140 = vunpack.c.l.s4 1983009808
      %v7141 = vunpack.c.0.s8 %v7140
      %v7142 = vlaneseq
      %v7143 = vshrl.u32 %v7142, 7
      %v7144 = vsub.s32 %v7141, %v7143
      %v7145 = vrot.slane %v7131, %v7144
      %v7146 = vcombine.high %v7138, %v7138
      %v7147 = vcombine.high %v7145, %v7145
      %v7148 = vcombine.high %v6652, %v6652
      %v7150 = vunpack.c.l.s4 1983009808
      %v7151 = vunpack.c.0.s8 %v7150
      %v7152 = vlaneseq
      %v7153 = vshrl.u32 %v7152, 7
      %v7154 = vsub.s32 %v7151, %v7153
      %v7155 = vrot.slane %v6652, %v7154
      %v7157 = vunpack.c.l.s4 1983009808
      %v7158 = vunpack.c.0.s8 %v7157
      %v7159 = vlaneseq
      %v7160 = vshrl.u32 %v7159, 7
      %v7161 = vsub.s32 %v7158, %v7160
      %v7162 = vrot.slane %v7148, %v7161
      %v7163 = vcombine.high %v7155, %v7155
      %v7164 = vcombine.high %v7162, %v7162
      %v7165 = vcombine.high %v6653, %v6653
      %v7167 = vunpack.c.l.s4 1983009808
      %v7168 = vunpack.c.0.s8 %v7167
      %v7169 = vlaneseq
      %v7170 = vshrl.u32 %v7169, 7
      %v7171 = vsub.s32 %v7168, %v7170
      %v7172 = vrot.slane %v6653, %v7171
      %v7174 = vunpack.c.l.s4 1983009808
      %v7175 = vunpack.c.0.s8 %v7174
      %v7176 = vlaneseq
      %v7177 = vshrl.u32 %v7176, 7
      %v7178 = vsub.s32 %v7175, %v7177
      %v7179 = vrot.slane %v7165, %v7178
      %v7180 = vcombine.high %v7172, %v7172
      %v7181 = vcombine.high %v7179, %v7179
      %v7182 = vcombine.high %v6654, %v6654
      %v7184 = vunpack.c.l.s4 1983009808
      %v7185 = vunpack.c.0.s8 %v7184
      %v7186 = vlaneseq
      %v7187 = vshrl.u32 %v7186, 7
      %v7188 = vsub.s32 %v7185, %v7187
      %v7189 = vrot.slane %v6654, %v7188
      %v7191 = vunpack.c.l.s4 1983009808
      %v7192 = vunpack.c.0.s8 %v7191
      %v7193 = vlaneseq
      %v7194 = vshrl.u32 %v7193, 7
      %v7195 = vsub.s32 %v7192, %v7194
      %v7196 = vrot.slane %v7182, %v7195
      %v7197 = vcombine.high %v7189, %v7189
      %v7198 = vcombine.high %v7196, %v7196
      %v7199 = vcombine.high %v6655, %v6655
      %v7201 = vunpack.c.l.s4 1983009808
      %v7202 = vunpack.c.0.s8 %v7201
      %v7203 = vlaneseq
      %v7204 = vshrl.u32 %v7203, 7
      %v7205 = vsub.s32 %v7202, %v7204
      %v7206 = vrot.slane %v6655, %v7205
      %v7208 = vunpack.c.l.s4 1983009808
      %v7209 = vunpack.c.0.s8 %v7208
      %v7210 = vlaneseq
      %v7211 = vshrl.u32 %v7210, 7
      %v7212 = vsub.s32 %v7209, %v7211
      %v7213 = vrot.slane %v7199, %v7212
      %v7214 = vcombine.high %v7206, %v7206
      %v7215 = vcombine.high %v7213, %v7213
      %v7216 = vcombine.high %v6656, %v6656
      %v7218 = vunpack.c.l.s4 1983009808
      %v7219 = vunpack.c.0.s8 %v7218
      %v7220 = vlaneseq
      %v7221 = vshrl.u32 %v7220, 7
      %v7222 = vsub.s32 %v7219, %v7221
      %v7223 = vrot.slane %v6656, %v7222
      %v7225 = vunpack.c.l.s4 1983009808
      %v7226 = vunpack.c.0.s8 %v7225
      %v7227 = vlaneseq
      %v7228 = vshrl.u32 %v7227, 7
      %v7229 = vsub.s32 %v7226, %v7228
      %v7230 = vrot.slane %v7216, %v7229
      %v7231 = vcombine.high %v7223, %v7223
      %v7232 = vcombine.high %v7230, %v7230
      %v7361 = vsel %vm854, %v6696, -inf
      %v7362 = vrot.slane %v7361, 4
      %v7363 = vmax.f32 %v7361, %v7362
      %v7364 = vrot.slane %v7363, 2
      %v7365 = vmax.f32 %v7363, %v7364
      %v7366 = vrot.slane %v7365, 1
      %v7367 = vmax.f32 %v7365, %v7366
      %v7368 = vsel %vm854, %v6704, -inf
      %v7369 = vrot.slane %v7368, 4
      %v7370 = vmax.f32 %v7368, %v7369
      %v7371 = vrot.slane %v7370, 2
      %v7372 = vmax.f32 %v7370, %v7371
      %v7373 = vrot.slane %v7372, 1
      %v7374 = vmax.f32 %v7372, %v7373
      %v7375 = vsel %vm854, %v6703, -inf
      %v7376 = vrot.slane %v7375, 4
      %v7377 = vmax.f32 %v7375, %v7376
      %v7378 = vrot.slane %v7377, 2
      %v7379 = vmax.f32 %v7377, %v7378
      %v7380 = vrot.slane %v7379, 1
      %v7381 = vmax.f32 %v7379, %v7380
      %v7382 = vsel %vm854, %v6705, -inf
      %v7383 = vrot.slane %v7382, 4
      %v7384 = vmax.f32 %v7382, %v7383
      %v7385 = vrot.slane %v7384, 2
      %v7386 = vmax.f32 %v7384, %v7385
      %v7387 = vrot.slane %v7386, 1
      %v7388 = vmax.f32 %v7386, %v7387
      %v7389 = vsel %vm854, %v6713, -inf
      %v7390 = vrot.slane %v7389, 4
      %v7391 = vmax.f32 %v7389, %v7390
      %v7392 = vrot.slane %v7391, 2
      %v7393 = vmax.f32 %v7391, %v7392
      %v7394 = vrot.slane %v7393, 1
      %v7395 = vmax.f32 %v7393, %v7394
      %v7396 = vsel %vm854, %v6721, -inf
      %v7397 = vrot.slane %v7396, 4
      %v7398 = vmax.f32 %v7396, %v7397
      %v7399 = vrot.slane %v7398, 2
      %v7400 = vmax.f32 %v7398, %v7399
      %v7401 = vrot.slane %v7400, 1
      %v7402 = vmax.f32 %v7400, %v7401
      %v7403 = vsel %vm854, %v6720, -inf
      %v7404 = vrot.slane %v7403, 4
      %v7405 = vmax.f32 %v7403, %v7404
      %v7406 = vrot.slane %v7405, 2
      %v7407 = vmax.f32 %v7405, %v7406
      %v7408 = vrot.slane %v7407, 1
      %v7409 = vmax.f32 %v7407, %v7408
      %v7410 = vsel %vm854, %v6722, -inf
      %v7411 = vrot.slane %v7410, 4
      %v7412 = vmax.f32 %v7410, %v7411
      %v7413 = vrot.slane %v7412, 2
      %v7414 = vmax.f32 %v7412, %v7413
      %v7415 = vrot.slane %v7414, 1
      %v7416 = vmax.f32 %v7414, %v7415
      %v7417 = vsel %vm854, %v6730, -inf
      %v7418 = vrot.slane %v7417, 4
      %v7419 = vmax.f32 %v7417, %v7418
      %v7420 = vrot.slane %v7419, 2
      %v7421 = vmax.f32 %v7419, %v7420
      %v7422 = vrot.slane %v7421, 1
      %v7423 = vmax.f32 %v7421, %v7422
      %v7424 = vsel %vm854, %v6738, -inf
      %v7425 = vrot.slane %v7424, 4
      %v7426 = vmax.f32 %v7424, %v7425
      %v7427 = vrot.slane %v7426, 2
      %v7428 = vmax.f32 %v7426, %v7427
      %v7429 = vrot.slane %v7428, 1
      %v7430 = vmax.f32 %v7428, %v7429
      %v7431 = vsel %vm854, %v6737, -inf
      %v7432 = vrot.slane %v7431, 4
      %v7433 = vmax.f32 %v7431, %v7432
      %v7434 = vrot.slane %v7433, 2
      %v7435 = vmax.f32 %v7433, %v7434
      %v7436 = vrot.slane %v7435, 1
      %v7437 = vmax.f32 %v7435, %v7436
      %v7438 = vsel %vm854, %v6739, -inf
      %v7439 = vrot.slane %v7438, 4
      %v7440 = vmax.f32 %v7438, %v7439
      %v7441 = vrot.slane %v7440, 2
      %v7442 = vmax.f32 %v7440, %v7441
      %v7443 = vrot.slane %v7442, 1
      %v7444 = vmax.f32 %v7442, %v7443
      %v7445 = vsel %vm854, %v6747, -inf
      %v7446 = vrot.slane %v7445, 4
      %v7447 = vmax.f32 %v7445, %v7446
      %v7448 = vrot.slane %v7447, 2
      %v7449 = vmax.f32 %v7447, %v7448
      %v7450 = vrot.slane %v7449, 1
      %v7451 = vmax.f32 %v7449, %v7450
      %v7452 = vsel %vm854, %v6755, -inf
      %v7453 = vrot.slane %v7452, 4
      %v7454 = vmax.f32 %v7452, %v7453
      %v7455 = vrot.slane %v7454, 2
      %v7456 = vmax.f32 %v7454, %v7455
      %v7457 = vrot.slane %v7456, 1
      %v7458 = vmax.f32 %v7456, %v7457
      %v7459 = vsel %vm854, %v6754, -inf
      %v7460 = vrot.slane %v7459, 4
      %v7461 = vmax.f32 %v7459, %v7460
      %v7462 = vrot.slane %v7461, 2
      %v7463 = vmax.f32 %v7461, %v7462
      %v7464 = vrot.slane %v7463, 1
      %v7465 = vmax.f32 %v7463, %v7464
      %v7466 = vsel %vm854, %v6756, -inf
      %v7467 = vrot.slane %v7466, 4
      %v7468 = vmax.f32 %v7466, %v7467
      %v7469 = vrot.slane %v7468, 2
      %v7470 = vmax.f32 %v7468, %v7469
      %v7471 = vrot.slane %v7470, 1
      %v7472 = vmax.f32 %v7470, %v7471
      %v7473 = vsel %vm854, %v6764, -inf
      %v7474 = vrot.slane %v7473, 4
      %v7475 = vmax.f32 %v7473, %v7474
      %v7476 = vrot.slane %v7475, 2
      %v7477 = vmax.f32 %v7475, %v7476
      %v7478 = vrot.slane %v7477, 1
      %v7479 = vmax.f32 %v7477, %v7478
      %v7480 = vsel %vm854, %v6772, -inf
      %v7481 = vrot.slane %v7480, 4
      %v7482 = vmax.f32 %v7480, %v7481
      %v7483 = vrot.slane %v7482, 2
      %v7484 = vmax.f32 %v7482, %v7483
      %v7485 = vrot.slane %v7484, 1
      %v7486 = vmax.f32 %v7484, %v7485
      %v7487 = vsel %vm854, %v6771, -inf
      %v7488 = vrot.slane %v7487, 4
      %v7489 = vmax.f32 %v7487, %v7488
      %v7490 = vrot.slane %v7489, 2
      %v7491 = vmax.f32 %v7489, %v7490
      %v7492 = vrot.slane %v7491, 1
      %v7493 = vmax.f32 %v7491, %v7492
      %v7494 = vsel %vm854, %v6773, -inf
      %v7495 = vrot.slane %v7494, 4
      %v7496 = vmax.f32 %v7494, %v7495
      %v7497 = vrot.slane %v7496, 2
      %v7498 = vmax.f32 %v7496, %v7497
      %v7499 = vrot.slane %v7498, 1
      %v7500 = vmax.f32 %v7498, %v7499
      %v7501 = vsel %vm854, %v6781, -inf
      %v7502 = vrot.slane %v7501, 4
      %v7503 = vmax.f32 %v7501, %v7502
      %v7504 = vrot.slane %v7503, 2
      %v7505 = vmax.f32 %v7503, %v7504
      %v7506 = vrot.slane %v7505, 1
      %v7507 = vmax.f32 %v7505, %v7506
      %v7508 = vsel %vm854, %v6789, -inf
      %v7509 = vrot.slane %v7508, 4
      %v7510 = vmax.f32 %v7508, %v7509
      %v7511 = vrot.slane %v7510, 2
      %v7512 = vmax.f32 %v7510, %v7511
      %v7513 = vrot.slane %v7512, 1
      %v7514 = vmax.f32 %v7512, %v7513
      %v7515 = vsel %vm854, %v6788, -inf
      %v7516 = vrot.slane %v7515, 4
      %v7517 = vmax.f32 %v7515, %v7516
      %v7518 = vrot.slane %v7517, 2
      %v7519 = vmax.f32 %v7517, %v7518
      %v7520 = vrot.slane %v7519, 1
      %v7521 = vmax.f32 %v7519, %v7520
      %v7522 = vsel %vm854, %v6790, -inf
      %v7523 = vrot.slane %v7522, 4
      %v7524 = vmax.f32 %v7522, %v7523
      %v7525 = vrot.slane %v7524, 2
      %v7526 = vmax.f32 %v7524, %v7525
      %v7527 = vrot.slane %v7526, 1
      %v7528 = vmax.f32 %v7526, %v7527
      %v7529 = vsel %vm854, %v6798, -inf
      %v7530 = vrot.slane %v7529, 4
      %v7531 = vmax.f32 %v7529, %v7530
      %v7532 = vrot.slane %v7531, 2
      %v7533 = vmax.f32 %v7531, %v7532
      %v7534 = vrot.slane %v7533, 1
      %v7535 = vmax.f32 %v7533, %v7534
      %v7536 = vsel %vm854, %v6806, -inf
      %v7537 = vrot.slane %v7536, 4
      %v7538 = vmax.f32 %v7536, %v7537
      %v7539 = vrot.slane %v7538, 2
      %v7540 = vmax.f32 %v7538, %v7539
      %v7541 = vrot.slane %v7540, 1
      %v7542 = vmax.f32 %v7540, %v7541
      %v7543 = vsel %vm854, %v6805, -inf
      %v7544 = vrot.slane %v7543, 4
      %v7545 = vmax.f32 %v7543, %v7544
      %v7546 = vrot.slane %v7545, 2
      %v7547 = vmax.f32 %v7545, %v7546
      %v7548 = vrot.slane %v7547, 1
      %v7549 = vmax.f32 %v7547, %v7548
      %v7550 = vsel %vm854, %v6807, -inf
      %v7551 = vrot.slane %v7550, 4
      %v7552 = vmax.f32 %v7550, %v7551
      %v7553 = vrot.slane %v7552, 2
      %v7554 = vmax.f32 %v7552, %v7553
      %v7555 = vrot.slane %v7554, 1
      %v7556 = vmax.f32 %v7554, %v7555
      %v7557 = vsel %vm854, %v6815, -inf
      %v7558 = vrot.slane %v7557, 4
      %v7559 = vmax.f32 %v7557, %v7558
      %v7560 = vrot.slane %v7559, 2
      %v7561 = vmax.f32 %v7559, %v7560
      %v7562 = vrot.slane %v7561, 1
      %v7563 = vmax.f32 %v7561, %v7562
      %v7564 = vsel %vm854, %v6823, -inf
      %v7565 = vrot.slane %v7564, 4
      %v7566 = vmax.f32 %v7564, %v7565
      %v7567 = vrot.slane %v7566, 2
      %v7568 = vmax.f32 %v7566, %v7567
      %v7569 = vrot.slane %v7568, 1
      %v7570 = vmax.f32 %v7568, %v7569
      %v7571 = vsel %vm854, %v6822, -inf
      %v7572 = vrot.slane %v7571, 4
      %v7573 = vmax.f32 %v7571, %v7572
      %v7574 = vrot.slane %v7573, 2
      %v7575 = vmax.f32 %v7573, %v7574
      %v7576 = vrot.slane %v7575, 1
      %v7577 = vmax.f32 %v7575, %v7576
      %v7578 = vsel %vm854, %v6824, -inf
      %v7579 = vrot.slane %v7578, 4
      %v7580 = vmax.f32 %v7578, %v7579
      %v7581 = vrot.slane %v7580, 2
      %v7582 = vmax.f32 %v7580, %v7581
      %v7583 = vrot.slane %v7582, 1
      %v7584 = vmax.f32 %v7582, %v7583
      %v7585 = vsel %vm854, %v6832, -inf
      %v7586 = vrot.slane %v7585, 4
      %v7587 = vmax.f32 %v7585, %v7586
      %v7588 = vrot.slane %v7587, 2
      %v7589 = vmax.f32 %v7587, %v7588
      %v7590 = vrot.slane %v7589, 1
      %v7591 = vmax.f32 %v7589, %v7590
      %v7592 = vsel %vm854, %v6840, -inf
      %v7593 = vrot.slane %v7592, 4
      %v7594 = vmax.f32 %v7592, %v7593
      %v7595 = vrot.slane %v7594, 2
      %v7596 = vmax.f32 %v7594, %v7595
      %v7597 = vrot.slane %v7596, 1
      %v7598 = vmax.f32 %v7596, %v7597
      %v7599 = vsel %vm854, %v6839, -inf
      %v7600 = vrot.slane %v7599, 4
      %v7601 = vmax.f32 %v7599, %v7600
      %v7602 = vrot.slane %v7601, 2
      %v7603 = vmax.f32 %v7601, %v7602
      %v7604 = vrot.slane %v7603, 1
      %v7605 = vmax.f32 %v7603, %v7604
      %v7606 = vsel %vm854, %v6841, -inf
      %v7607 = vrot.slane %v7606, 4
      %v7608 = vmax.f32 %v7606, %v7607
      %v7609 = vrot.slane %v7608, 2
      %v7610 = vmax.f32 %v7608, %v7609
      %v7611 = vrot.slane %v7610, 1
      %v7612 = vmax.f32 %v7610, %v7611
      %v7613 = vsel %vm854, %v6849, -inf
      %v7614 = vrot.slane %v7613, 4
      %v7615 = vmax.f32 %v7613, %v7614
      %v7616 = vrot.slane %v7615, 2
      %v7617 = vmax.f32 %v7615, %v7616
      %v7618 = vrot.slane %v7617, 1
      %v7619 = vmax.f32 %v7617, %v7618
      %v7620 = vsel %vm854, %v6857, -inf
      %v7621 = vrot.slane %v7620, 4
      %v7622 = vmax.f32 %v7620, %v7621
      %v7623 = vrot.slane %v7622, 2
      %v7624 = vmax.f32 %v7622, %v7623
      %v7625 = vrot.slane %v7624, 1
      %v7626 = vmax.f32 %v7624, %v7625
      %v7627 = vsel %vm854, %v6856, -inf
      %v7628 = vrot.slane %v7627, 4
      %v7629 = vmax.f32 %v7627, %v7628
      %v7630 = vrot.slane %v7629, 2
      %v7631 = vmax.f32 %v7629, %v7630
      %v7632 = vrot.slane %v7631, 1
      %v7633 = vmax.f32 %v7631, %v7632
      %v7634 = vsel %vm854, %v6858, -inf
      %v7635 = vrot.slane %v7634, 4
      %v7636 = vmax.f32 %v7634, %v7635
      %v7637 = vrot.slane %v7636, 2
      %v7638 = vmax.f32 %v7636, %v7637
      %v7639 = vrot.slane %v7638, 1
      %v7640 = vmax.f32 %v7638, %v7639
      %v7641 = vsel %vm854, %v6866, -inf
      %v7642 = vrot.slane %v7641, 4
      %v7643 = vmax.f32 %v7641, %v7642
      %v7644 = vrot.slane %v7643, 2
      %v7645 = vmax.f32 %v7643, %v7644
      %v7646 = vrot.slane %v7645, 1
      %v7647 = vmax.f32 %v7645, %v7646
      %v7648 = vsel %vm854, %v6874, -inf
      %v7649 = vrot.slane %v7648, 4
      %v7650 = vmax.f32 %v7648, %v7649
      %v7651 = vrot.slane %v7650, 2
      %v7652 = vmax.f32 %v7650, %v7651
      %v7653 = vrot.slane %v7652, 1
      %v7654 = vmax.f32 %v7652, %v7653
      %v7655 = vsel %vm854, %v6873, -inf
      %v7656 = vrot.slane %v7655, 4
      %v7657 = vmax.f32 %v7655, %v7656
      %v7658 = vrot.slane %v7657, 2
      %v7659 = vmax.f32 %v7657, %v7658
      %v7660 = vrot.slane %v7659, 1
      %v7661 = vmax.f32 %v7659, %v7660
      %v7662 = vsel %vm854, %v6875, -inf
      %v7663 = vrot.slane %v7662, 4
      %v7664 = vmax.f32 %v7662, %v7663
      %v7665 = vrot.slane %v7664, 2
      %v7666 = vmax.f32 %v7664, %v7665
      %v7667 = vrot.slane %v7666, 1
      %v7668 = vmax.f32 %v7666, %v7667
      %v7669 = vsel %vm854, %v6883, -inf
      %v7670 = vrot.slane %v7669, 4
      %v7671 = vmax.f32 %v7669, %v7670
      %v7672 = vrot.slane %v7671, 2
      %v7673 = vmax.f32 %v7671, %v7672
      %v7674 = vrot.slane %v7673, 1
      %v7675 = vmax.f32 %v7673, %v7674
      %v7676 = vsel %vm854, %v6891, -inf
      %v7677 = vrot.slane %v7676, 4
      %v7678 = vmax.f32 %v7676, %v7677
      %v7679 = vrot.slane %v7678, 2
      %v7680 = vmax.f32 %v7678, %v7679
      %v7681 = vrot.slane %v7680, 1
      %v7682 = vmax.f32 %v7680, %v7681
      %v7683 = vsel %vm854, %v6890, -inf
      %v7684 = vrot.slane %v7683, 4
      %v7685 = vmax.f32 %v7683, %v7684
      %v7686 = vrot.slane %v7685, 2
      %v7687 = vmax.f32 %v7685, %v7686
      %v7688 = vrot.slane %v7687, 1
      %v7689 = vmax.f32 %v7687, %v7688
      %v7690 = vsel %vm854, %v6892, -inf
      %v7691 = vrot.slane %v7690, 4
      %v7692 = vmax.f32 %v7690, %v7691
      %v7693 = vrot.slane %v7692, 2
      %v7694 = vmax.f32 %v7692, %v7693
      %v7695 = vrot.slane %v7694, 1
      %v7696 = vmax.f32 %v7694, %v7695
      %v7697 = vsel %vm854, %v6900, -inf
      %v7698 = vrot.slane %v7697, 4
      %v7699 = vmax.f32 %v7697, %v7698
      %v7700 = vrot.slane %v7699, 2
      %v7701 = vmax.f32 %v7699, %v7700
      %v7702 = vrot.slane %v7701, 1
      %v7703 = vmax.f32 %v7701, %v7702
      %v7704 = vsel %vm854, %v6908, -inf
      %v7705 = vrot.slane %v7704, 4
      %v7706 = vmax.f32 %v7704, %v7705
      %v7707 = vrot.slane %v7706, 2
      %v7708 = vmax.f32 %v7706, %v7707
      %v7709 = vrot.slane %v7708, 1
      %v7710 = vmax.f32 %v7708, %v7709
      %v7711 = vsel %vm854, %v6907, -inf
      %v7712 = vrot.slane %v7711, 4
      %v7713 = vmax.f32 %v7711, %v7712
      %v7714 = vrot.slane %v7713, 2
      %v7715 = vmax.f32 %v7713, %v7714
      %v7716 = vrot.slane %v7715, 1
      %v7717 = vmax.f32 %v7715, %v7716
      %v7718 = vsel %vm854, %v6909, -inf
      %v7719 = vrot.slane %v7718, 4
      %v7720 = vmax.f32 %v7718, %v7719
      %v7721 = vrot.slane %v7720, 2
      %v7722 = vmax.f32 %v7720, %v7721
      %v7723 = vrot.slane %v7722, 1
      %v7724 = vmax.f32 %v7722, %v7723
      %v7725 = vsel %vm854, %v6917, -inf
      %v7726 = vrot.slane %v7725, 4
      %v7727 = vmax.f32 %v7725, %v7726
      %v7728 = vrot.slane %v7727, 2
      %v7729 = vmax.f32 %v7727, %v7728
      %v7730 = vrot.slane %v7729, 1
      %v7731 = vmax.f32 %v7729, %v7730
      %v7732 = vsel %vm854, %v6925, -inf
      %v7733 = vrot.slane %v7732, 4
      %v7734 = vmax.f32 %v7732, %v7733
      %v7735 = vrot.slane %v7734, 2
      %v7736 = vmax.f32 %v7734, %v7735
      %v7737 = vrot.slane %v7736, 1
      %v7738 = vmax.f32 %v7736, %v7737
      %v7739 = vsel %vm854, %v6924, -inf
      %v7740 = vrot.slane %v7739, 4
      %v7741 = vmax.f32 %v7739, %v7740
      %v7742 = vrot.slane %v7741, 2
      %v7743 = vmax.f32 %v7741, %v7742
      %v7744 = vrot.slane %v7743, 1
      %v7745 = vmax.f32 %v7743, %v7744
      %v7746 = vsel %vm854, %v6926, -inf
      %v7747 = vrot.slane %v7746, 4
      %v7748 = vmax.f32 %v7746, %v7747
      %v7749 = vrot.slane %v7748, 2
      %v7750 = vmax.f32 %v7748, %v7749
      %v7751 = vrot.slane %v7750, 1
      %v7752 = vmax.f32 %v7750, %v7751
      %v7753 = vsel %vm854, %v6934, -inf
      %v7754 = vrot.slane %v7753, 4
      %v7755 = vmax.f32 %v7753, %v7754
      %v7756 = vrot.slane %v7755, 2
      %v7757 = vmax.f32 %v7755, %v7756
      %v7758 = vrot.slane %v7757, 1
      %v7759 = vmax.f32 %v7757, %v7758
      %v7760 = vsel %vm854, %v6942, -inf
      %v7761 = vrot.slane %v7760, 4
      %v7762 = vmax.f32 %v7760, %v7761
      %v7763 = vrot.slane %v7762, 2
      %v7764 = vmax.f32 %v7762, %v7763
      %v7765 = vrot.slane %v7764, 1
      %v7766 = vmax.f32 %v7764, %v7765
      %v7767 = vsel %vm854, %v6941, -inf
      %v7768 = vrot.slane %v7767, 4
      %v7769 = vmax.f32 %v7767, %v7768
      %v7770 = vrot.slane %v7769, 2
      %v7771 = vmax.f32 %v7769, %v7770
      %v7772 = vrot.slane %v7771, 1
      %v7773 = vmax.f32 %v7771, %v7772
      %v7774 = vsel %vm854, %v6943, -inf
      %v7775 = vrot.slane %v7774, 4
      %v7776 = vmax.f32 %v7774, %v7775
      %v7777 = vrot.slane %v7776, 2
      %v7778 = vmax.f32 %v7776, %v7777
      %v7779 = vrot.slane %v7778, 1
      %v7780 = vmax.f32 %v7778, %v7779
      %v7781 = vsel %vm854, %v6951, -inf
      %v7782 = vrot.slane %v7781, 4
      %v7783 = vmax.f32 %v7781, %v7782
      %v7784 = vrot.slane %v7783, 2
      %v7785 = vmax.f32 %v7783, %v7784
      %v7786 = vrot.slane %v7785, 1
      %v7787 = vmax.f32 %v7785, %v7786
      %v7788 = vsel %vm854, %v6959, -inf
      %v7789 = vrot.slane %v7788, 4
      %v7790 = vmax.f32 %v7788, %v7789
      %v7791 = vrot.slane %v7790, 2
      %v7792 = vmax.f32 %v7790, %v7791
      %v7793 = vrot.slane %v7792, 1
      %v7794 = vmax.f32 %v7792, %v7793
      %v7795 = vsel %vm854, %v6958, -inf
      %v7796 = vrot.slane %v7795, 4
      %v7797 = vmax.f32 %v7795, %v7796
      %v7798 = vrot.slane %v7797, 2
      %v7799 = vmax.f32 %v7797, %v7798
      %v7800 = vrot.slane %v7799, 1
      %v7801 = vmax.f32 %v7799, %v7800
      %v7802 = vsel %vm854, %v6960, -inf
      %v7803 = vrot.slane %v7802, 4
      %v7804 = vmax.f32 %v7802, %v7803
      %v7805 = vrot.slane %v7804, 2
      %v7806 = vmax.f32 %v7804, %v7805
      %v7807 = vrot.slane %v7806, 1
      %v7808 = vmax.f32 %v7806, %v7807
      %v7809 = vsel %vm854, %v6968, -inf
      %v7810 = vrot.slane %v7809, 4
      %v7811 = vmax.f32 %v7809, %v7810
      %v7812 = vrot.slane %v7811, 2
      %v7813 = vmax.f32 %v7811, %v7812
      %v7814 = vrot.slane %v7813, 1
      %v7815 = vmax.f32 %v7813, %v7814
      %v7816 = vsel %vm854, %v6976, -inf
      %v7817 = vrot.slane %v7816, 4
      %v7818 = vmax.f32 %v7816, %v7817
      %v7819 = vrot.slane %v7818, 2
      %v7820 = vmax.f32 %v7818, %v7819
      %v7821 = vrot.slane %v7820, 1
      %v7822 = vmax.f32 %v7820, %v7821
      %v7823 = vsel %vm854, %v6975, -inf
      %v7824 = vrot.slane %v7823, 4
      %v7825 = vmax.f32 %v7823, %v7824
      %v7826 = vrot.slane %v7825, 2
      %v7827 = vmax.f32 %v7825, %v7826
      %v7828 = vrot.slane %v7827, 1
      %v7829 = vmax.f32 %v7827, %v7828
      %v7830 = vsel %vm854, %v6977, -inf
      %v7831 = vrot.slane %v7830, 4
      %v7832 = vmax.f32 %v7830, %v7831
      %v7833 = vrot.slane %v7832, 2
      %v7834 = vmax.f32 %v7832, %v7833
      %v7835 = vrot.slane %v7834, 1
      %v7836 = vmax.f32 %v7834, %v7835
      %v7837 = vsel %vm854, %v6985, -inf
      %v7838 = vrot.slane %v7837, 4
      %v7839 = vmax.f32 %v7837, %v7838
      %v7840 = vrot.slane %v7839, 2
      %v7841 = vmax.f32 %v7839, %v7840
      %v7842 = vrot.slane %v7841, 1
      %v7843 = vmax.f32 %v7841, %v7842
      %v7844 = vsel %vm854, %v6993, -inf
      %v7845 = vrot.slane %v7844, 4
      %v7846 = vmax.f32 %v7844, %v7845
      %v7847 = vrot.slane %v7846, 2
      %v7848 = vmax.f32 %v7846, %v7847
      %v7849 = vrot.slane %v7848, 1
      %v7850 = vmax.f32 %v7848, %v7849
      %v7851 = vsel %vm854, %v6992, -inf
      %v7852 = vrot.slane %v7851, 4
      %v7853 = vmax.f32 %v7851, %v7852
      %v7854 = vrot.slane %v7853, 2
      %v7855 = vmax.f32 %v7853, %v7854
      %v7856 = vrot.slane %v7855, 1
      %v7857 = vmax.f32 %v7855, %v7856
      %v7858 = vsel %vm854, %v6994, -inf
      %v7859 = vrot.slane %v7858, 4
      %v7860 = vmax.f32 %v7858, %v7859
      %v7861 = vrot.slane %v7860, 2
      %v7862 = vmax.f32 %v7860, %v7861
      %v7863 = vrot.slane %v7862, 1
      %v7864 = vmax.f32 %v7862, %v7863
      %v7865 = vsel %vm854, %v7002, -inf
      %v7866 = vrot.slane %v7865, 4
      %v7867 = vmax.f32 %v7865, %v7866
      %v7868 = vrot.slane %v7867, 2
      %v7869 = vmax.f32 %v7867, %v7868
      %v7870 = vrot.slane %v7869, 1
      %v7871 = vmax.f32 %v7869, %v7870
      %v7872 = vsel %vm854, %v7010, -inf
      %v7873 = vrot.slane %v7872, 4
      %v7874 = vmax.f32 %v7872, %v7873
      %v7875 = vrot.slane %v7874, 2
      %v7876 = vmax.f32 %v7874, %v7875
      %v7877 = vrot.slane %v7876, 1
      %v7878 = vmax.f32 %v7876, %v7877
      %v7879 = vsel %vm854, %v7009, -inf
      %v7880 = vrot.slane %v7879, 4
      %v7881 = vmax.f32 %v7879, %v7880
      %v7882 = vrot.slane %v7881, 2
      %v7883 = vmax.f32 %v7881, %v7882
      %v7884 = vrot.slane %v7883, 1
      %v7885 = vmax.f32 %v7883, %v7884
      %v7886 = vsel %vm854, %v7011, -inf
      %v7887 = vrot.slane %v7886, 4
      %v7888 = vmax.f32 %v7886, %v7887
      %v7889 = vrot.slane %v7888, 2
      %v7890 = vmax.f32 %v7888, %v7889
      %v7891 = vrot.slane %v7890, 1
      %v7892 = vmax.f32 %v7890, %v7891
      %v7893 = vsel %vm854, %v7019, -inf
      %v7894 = vrot.slane %v7893, 4
      %v7895 = vmax.f32 %v7893, %v7894
      %v7896 = vrot.slane %v7895, 2
      %v7897 = vmax.f32 %v7895, %v7896
      %v7898 = vrot.slane %v7897, 1
      %v7899 = vmax.f32 %v7897, %v7898
      %v7900 = vsel %vm854, %v7027, -inf
      %v7901 = vrot.slane %v7900, 4
      %v7902 = vmax.f32 %v7900, %v7901
      %v7903 = vrot.slane %v7902, 2
      %v7904 = vmax.f32 %v7902, %v7903
      %v7905 = vrot.slane %v7904, 1
      %v7906 = vmax.f32 %v7904, %v7905
      %v7907 = vsel %vm854, %v7026, -inf
      %v7908 = vrot.slane %v7907, 4
      %v7909 = vmax.f32 %v7907, %v7908
      %v7910 = vrot.slane %v7909, 2
      %v7911 = vmax.f32 %v7909, %v7910
      %v7912 = vrot.slane %v7911, 1
      %v7913 = vmax.f32 %v7911, %v7912
      %v7914 = vsel %vm854, %v7028, -inf
      %v7915 = vrot.slane %v7914, 4
      %v7916 = vmax.f32 %v7914, %v7915
      %v7917 = vrot.slane %v7916, 2
      %v7918 = vmax.f32 %v7916, %v7917
      %v7919 = vrot.slane %v7918, 1
      %v7920 = vmax.f32 %v7918, %v7919
      %v7921 = vsel %vm854, %v7036, -inf
      %v7922 = vrot.slane %v7921, 4
      %v7923 = vmax.f32 %v7921, %v7922
      %v7924 = vrot.slane %v7923, 2
      %v7925 = vmax.f32 %v7923, %v7924
      %v7926 = vrot.slane %v7925, 1
      %v7927 = vmax.f32 %v7925, %v7926
      %v7928 = vsel %vm854, %v7044, -inf
      %v7929 = vrot.slane %v7928, 4
      %v7930 = vmax.f32 %v7928, %v7929
      %v7931 = vrot.slane %v7930, 2
      %v7932 = vmax.f32 %v7930, %v7931
      %v7933 = vrot.slane %v7932, 1
      %v7934 = vmax.f32 %v7932, %v7933
      %v7935 = vsel %vm854, %v7043, -inf
      %v7936 = vrot.slane %v7935, 4
      %v7937 = vmax.f32 %v7935, %v7936
      %v7938 = vrot.slane %v7937, 2
      %v7939 = vmax.f32 %v7937, %v7938
      %v7940 = vrot.slane %v7939, 1
      %v7941 = vmax.f32 %v7939, %v7940
      %v7942 = vsel %vm854, %v7045, -inf
      %v7943 = vrot.slane %v7942, 4
      %v7944 = vmax.f32 %v7942, %v7943
      %v7945 = vrot.slane %v7944, 2
      %v7946 = vmax.f32 %v7944, %v7945
      %v7947 = vrot.slane %v7946, 1
      %v7948 = vmax.f32 %v7946, %v7947
      %v7949 = vsel %vm854, %v7053, -inf
      %v7950 = vrot.slane %v7949, 4
      %v7951 = vmax.f32 %v7949, %v7950
      %v7952 = vrot.slane %v7951, 2
      %v7953 = vmax.f32 %v7951, %v7952
      %v7954 = vrot.slane %v7953, 1
      %v7955 = vmax.f32 %v7953, %v7954
      %v7956 = vsel %vm854, %v7061, -inf
      %v7957 = vrot.slane %v7956, 4
      %v7958 = vmax.f32 %v7956, %v7957
      %v7959 = vrot.slane %v7958, 2
      %v7960 = vmax.f32 %v7958, %v7959
      %v7961 = vrot.slane %v7960, 1
      %v7962 = vmax.f32 %v7960, %v7961
      %v7963 = vsel %vm854, %v7060, -inf
      %v7964 = vrot.slane %v7963, 4
      %v7965 = vmax.f32 %v7963, %v7964
      %v7966 = vrot.slane %v7965, 2
      %v7967 = vmax.f32 %v7965, %v7966
      %v7968 = vrot.slane %v7967, 1
      %v7969 = vmax.f32 %v7967, %v7968
      %v7970 = vsel %vm854, %v7062, -inf
      %v7971 = vrot.slane %v7970, 4
      %v7972 = vmax.f32 %v7970, %v7971
      %v7973 = vrot.slane %v7972, 2
      %v7974 = vmax.f32 %v7972, %v7973
      %v7975 = vrot.slane %v7974, 1
      %v7976 = vmax.f32 %v7974, %v7975
      %v7977 = vsel %vm854, %v7070, -inf
      %v7978 = vrot.slane %v7977, 4
      %v7979 = vmax.f32 %v7977, %v7978
      %v7980 = vrot.slane %v7979, 2
      %v7981 = vmax.f32 %v7979, %v7980
      %v7982 = vrot.slane %v7981, 1
      %v7983 = vmax.f32 %v7981, %v7982
      %v7984 = vsel %vm854, %v7078, -inf
      %v7985 = vrot.slane %v7984, 4
      %v7986 = vmax.f32 %v7984, %v7985
      %v7987 = vrot.slane %v7986, 2
      %v7988 = vmax.f32 %v7986, %v7987
      %v7989 = vrot.slane %v7988, 1
      %v7990 = vmax.f32 %v7988, %v7989
      %v7991 = vsel %vm854, %v7077, -inf
      %v7992 = vrot.slane %v7991, 4
      %v7993 = vmax.f32 %v7991, %v7992
      %v7994 = vrot.slane %v7993, 2
      %v7995 = vmax.f32 %v7993, %v7994
      %v7996 = vrot.slane %v7995, 1
      %v7997 = vmax.f32 %v7995, %v7996
      %v7998 = vsel %vm854, %v7079, -inf
      %v7999 = vrot.slane %v7998, 4
      %v8000 = vmax.f32 %v7998, %v7999
      %v8001 = vrot.slane %v8000, 2
      %v8002 = vmax.f32 %v8000, %v8001
      %v8003 = vrot.slane %v8002, 1
      %v8004 = vmax.f32 %v8002, %v8003
      %v8005 = vsel %vm854, %v7087, -inf
      %v8006 = vrot.slane %v8005, 4
      %v8007 = vmax.f32 %v8005, %v8006
      %v8008 = vrot.slane %v8007, 2
      %v8009 = vmax.f32 %v8007, %v8008
      %v8010 = vrot.slane %v8009, 1
      %v8011 = vmax.f32 %v8009, %v8010
      %v8012 = vsel %vm854, %v7095, -inf
      %v8013 = vrot.slane %v8012, 4
      %v8014 = vmax.f32 %v8012, %v8013
      %v8015 = vrot.slane %v8014, 2
      %v8016 = vmax.f32 %v8014, %v8015
      %v8017 = vrot.slane %v8016, 1
      %v8018 = vmax.f32 %v8016, %v8017
      %v8019 = vsel %vm854, %v7094, -inf
      %v8020 = vrot.slane %v8019, 4
      %v8021 = vmax.f32 %v8019, %v8020
      %v8022 = vrot.slane %v8021, 2
      %v8023 = vmax.f32 %v8021, %v8022
      %v8024 = vrot.slane %v8023, 1
      %v8025 = vmax.f32 %v8023, %v8024
      %v8026 = vsel %vm854, %v7096, -inf
      %v8027 = vrot.slane %v8026, 4
      %v8028 = vmax.f32 %v8026, %v8027
      %v8029 = vrot.slane %v8028, 2
      %v8030 = vmax.f32 %v8028, %v8029
      %v8031 = vrot.slane %v8030, 1
      %v8032 = vmax.f32 %v8030, %v8031
      %v8033 = vsel %vm854, %v7104, -inf
      %v8034 = vrot.slane %v8033, 4
      %v8035 = vmax.f32 %v8033, %v8034
      %v8036 = vrot.slane %v8035, 2
      %v8037 = vmax.f32 %v8035, %v8036
      %v8038 = vrot.slane %v8037, 1
      %v8039 = vmax.f32 %v8037, %v8038
      %v8040 = vsel %vm854, %v7112, -inf
      %v8041 = vrot.slane %v8040, 4
      %v8042 = vmax.f32 %v8040, %v8041
      %v8043 = vrot.slane %v8042, 2
      %v8044 = vmax.f32 %v8042, %v8043
      %v8045 = vrot.slane %v8044, 1
      %v8046 = vmax.f32 %v8044, %v8045
      %v8047 = vsel %vm854, %v7111, -inf
      %v8048 = vrot.slane %v8047, 4
      %v8049 = vmax.f32 %v8047, %v8048
      %v8050 = vrot.slane %v8049, 2
      %v8051 = vmax.f32 %v8049, %v8050
      %v8052 = vrot.slane %v8051, 1
      %v8053 = vmax.f32 %v8051, %v8052
      %v8054 = vsel %vm854, %v7113, -inf
      %v8055 = vrot.slane %v8054, 4
      %v8056 = vmax.f32 %v8054, %v8055
      %v8057 = vrot.slane %v8056, 2
      %v8058 = vmax.f32 %v8056, %v8057
      %v8059 = vrot.slane %v8058, 1
      %v8060 = vmax.f32 %v8058, %v8059
      %v8061 = vsel %vm854, %v7121, -inf
      %v8062 = vrot.slane %v8061, 4
      %v8063 = vmax.f32 %v8061, %v8062
      %v8064 = vrot.slane %v8063, 2
      %v8065 = vmax.f32 %v8063, %v8064
      %v8066 = vrot.slane %v8065, 1
      %v8067 = vmax.f32 %v8065, %v8066
      %v8068 = vsel %vm854, %v7129, -inf
      %v8069 = vrot.slane %v8068, 4
      %v8070 = vmax.f32 %v8068, %v8069
      %v8071 = vrot.slane %v8070, 2
      %v8072 = vmax.f32 %v8070, %v8071
      %v8073 = vrot.slane %v8072, 1
      %v8074 = vmax.f32 %v8072, %v8073
      %v8075 = vsel %vm854, %v7128, -inf
      %v8076 = vrot.slane %v8075, 4
      %v8077 = vmax.f32 %v8075, %v8076
      %v8078 = vrot.slane %v8077, 2
      %v8079 = vmax.f32 %v8077, %v8078
      %v8080 = vrot.slane %v8079, 1
      %v8081 = vmax.f32 %v8079, %v8080
      %v8082 = vsel %vm854, %v7130, -inf
      %v8083 = vrot.slane %v8082, 4
      %v8084 = vmax.f32 %v8082, %v8083
      %v8085 = vrot.slane %v8084, 2
      %v8086 = vmax.f32 %v8084, %v8085
      %v8087 = vrot.slane %v8086, 1
      %v8088 = vmax.f32 %v8086, %v8087
      %v8089 = vsel %vm854, %v7138, -inf
      %v8090 = vrot.slane %v8089, 4
      %v8091 = vmax.f32 %v8089, %v8090
      %v8092 = vrot.slane %v8091, 2
      %v8093 = vmax.f32 %v8091, %v8092
      %v8094 = vrot.slane %v8093, 1
      %v8095 = vmax.f32 %v8093, %v8094
      %v8096 = vsel %vm854, %v7146, -inf
      %v8097 = vrot.slane %v8096, 4
      %v8098 = vmax.f32 %v8096, %v8097
      %v8099 = vrot.slane %v8098, 2
      %v8100 = vmax.f32 %v8098, %v8099
      %v8101 = vrot.slane %v8100, 1
      %v8102 = vmax.f32 %v8100, %v8101
      %v8103 = vsel %vm854, %v7145, -inf
      %v8104 = vrot.slane %v8103, 4
      %v8105 = vmax.f32 %v8103, %v8104
      %v8106 = vrot.slane %v8105, 2
      %v8107 = vmax.f32 %v8105, %v8106
      %v8108 = vrot.slane %v8107, 1
      %v8109 = vmax.f32 %v8107, %v8108
      %v8110 = vsel %vm854, %v7147, -inf
      %v8111 = vrot.slane %v8110, 4
      %v8112 = vmax.f32 %v8110, %v8111
      %v8113 = vrot.slane %v8112, 2
      %v8114 = vmax.f32 %v8112, %v8113
      %v8115 = vrot.slane %v8114, 1
      %v8116 = vmax.f32 %v8114, %v8115
      %v8117 = vsel %vm854, %v7155, -inf
      %v8118 = vrot.slane %v8117, 4
      %v8119 = vmax.f32 %v8117, %v8118
      %v8120 = vrot.slane %v8119, 2
      %v8121 = vmax.f32 %v8119, %v8120
      %v8122 = vrot.slane %v8121, 1
      %v8123 = vmax.f32 %v8121, %v8122
      %v8124 = vsel %vm854, %v7163, -inf
      %v8125 = vrot.slane %v8124, 4
      %v8126 = vmax.f32 %v8124, %v8125
      %v8127 = vrot.slane %v8126, 2
      %v8128 = vmax.f32 %v8126, %v8127
      %v8129 = vrot.slane %v8128, 1
      %v8130 = vmax.f32 %v8128, %v8129
      %v8131 = vsel %vm854, %v7162, -inf
      %v8132 = vrot.slane %v8131, 4
      %v8133 = vmax.f32 %v8131, %v8132
      %v8134 = vrot.slane %v8133, 2
      %v8135 = vmax.f32 %v8133, %v8134
      %v8136 = vrot.slane %v8135, 1
      %v8137 = vmax.f32 %v8135, %v8136
      %v8138 = vsel %vm854, %v7164, -inf
      %v8139 = vrot.slane %v8138, 4
      %v8140 = vmax.f32 %v8138, %v8139
      %v8141 = vrot.slane %v8140, 2
      %v8142 = vmax.f32 %v8140, %v8141
      %v8143 = vrot.slane %v8142, 1
      %v8144 = vmax.f32 %v8142, %v8143
      %v8145 = vsel %vm854, %v7172, -inf
      %v8146 = vrot.slane %v8145, 4
      %v8147 = vmax.f32 %v8145, %v8146
      %v8148 = vrot.slane %v8147, 2
      %v8149 = vmax.f32 %v8147, %v8148
      %v8150 = vrot.slane %v8149, 1
      %v8151 = vmax.f32 %v8149, %v8150
      %v8152 = vsel %vm854, %v7180, -inf
      %v8153 = vrot.slane %v8152, 4
      %v8154 = vmax.f32 %v8152, %v8153
      %v8155 = vrot.slane %v8154, 2
      %v8156 = vmax.f32 %v8154, %v8155
      %v8157 = vrot.slane %v8156, 1
      %v8158 = vmax.f32 %v8156, %v8157
      %v8159 = vsel %vm854, %v7179, -inf
      %v8160 = vrot.slane %v8159, 4
      %v8161 = vmax.f32 %v8159, %v8160
      %v8162 = vrot.slane %v8161, 2
      %v8163 = vmax.f32 %v8161, %v8162
      %v8164 = vrot.slane %v8163, 1
      %v8165 = vmax.f32 %v8163, %v8164
      %v8166 = vsel %vm854, %v7181, -inf
      %v8167 = vrot.slane %v8166, 4
      %v8168 = vmax.f32 %v8166, %v8167
      %v8169 = vrot.slane %v8168, 2
      %v8170 = vmax.f32 %v8168, %v8169
      %v8171 = vrot.slane %v8170, 1
      %v8172 = vmax.f32 %v8170, %v8171
      %v8173 = vsel %vm854, %v7189, -inf
      %v8174 = vrot.slane %v8173, 4
      %v8175 = vmax.f32 %v8173, %v8174
      %v8176 = vrot.slane %v8175, 2
      %v8177 = vmax.f32 %v8175, %v8176
      %v8178 = vrot.slane %v8177, 1
      %v8179 = vmax.f32 %v8177, %v8178
      %v8180 = vsel %vm854, %v7197, -inf
      %v8181 = vrot.slane %v8180, 4
      %v8182 = vmax.f32 %v8180, %v8181
      %v8183 = vrot.slane %v8182, 2
      %v8184 = vmax.f32 %v8182, %v8183
      %v8185 = vrot.slane %v8184, 1
      %v8186 = vmax.f32 %v8184, %v8185
      %v8187 = vsel %vm854, %v7196, -inf
      %v8188 = vrot.slane %v8187, 4
      %v8189 = vmax.f32 %v8187, %v8188
      %v8190 = vrot.slane %v8189, 2
      %v8191 = vmax.f32 %v8189, %v8190
      %v8192 = vrot.slane %v8191, 1
      %v8193 = vmax.f32 %v8191, %v8192
      %v8194 = vsel %vm854, %v7198, -inf
      %v8195 = vrot.slane %v8194, 4
      %v8196 = vmax.f32 %v8194, %v8195
      %v8197 = vrot.slane %v8196, 2
      %v8198 = vmax.f32 %v8196, %v8197
      %v8199 = vrot.slane %v8198, 1
      %v8200 = vmax.f32 %v8198, %v8199
      %v8201 = vsel %vm854, %v7206, -inf
      %v8202 = vrot.slane %v8201, 4
      %v8203 = vmax.f32 %v8201, %v8202
      %v8204 = vrot.slane %v8203, 2
      %v8205 = vmax.f32 %v8203, %v8204
      %v8206 = vrot.slane %v8205, 1
      %v8207 = vmax.f32 %v8205, %v8206
      %v8208 = vsel %vm854, %v7214, -inf
      %v8209 = vrot.slane %v8208, 4
      %v8210 = vmax.f32 %v8208, %v8209
      %v8211 = vrot.slane %v8210, 2
      %v8212 = vmax.f32 %v8210, %v8211
      %v8213 = vrot.slane %v8212, 1
      %v8214 = vmax.f32 %v8212, %v8213
      %v8215 = vsel %vm854, %v7213, -inf
      %v8216 = vrot.slane %v8215, 4
      %v8217 = vmax.f32 %v8215, %v8216
      %v8218 = vrot.slane %v8217, 2
      %v8219 = vmax.f32 %v8217, %v8218
      %v8220 = vrot.slane %v8219, 1
      %v8221 = vmax.f32 %v8219, %v8220
      %v8222 = vsel %vm854, %v7215, -inf
      %v8223 = vrot.slane %v8222, 4
      %v8224 = vmax.f32 %v8222, %v8223
      %v8225 = vrot.slane %v8224, 2
      %v8226 = vmax.f32 %v8224, %v8225
      %v8227 = vrot.slane %v8226, 1
      %v8228 = vmax.f32 %v8226, %v8227
      %v8229 = vsel %vm854, %v7223, -inf
      %v8230 = vrot.slane %v8229, 4
      %v8231 = vmax.f32 %v8229, %v8230
      %v8232 = vrot.slane %v8231, 2
      %v8233 = vmax.f32 %v8231, %v8232
      %v8234 = vrot.slane %v8233, 1
      %v8235 = vmax.f32 %v8233, %v8234
      %v8236 = vsel %vm854, %v7231, -inf
      %v8237 = vrot.slane %v8236, 4
      %v8238 = vmax.f32 %v8236, %v8237
      %v8239 = vrot.slane %v8238, 2
      %v8240 = vmax.f32 %v8238, %v8239
      %v8241 = vrot.slane %v8240, 1
      %v8242 = vmax.f32 %v8240, %v8241
      %v8243 = vsel %vm854, %v7230, -inf
      %v8244 = vrot.slane %v8243, 4
      %v8245 = vmax.f32 %v8243, %v8244
      %v8246 = vrot.slane %v8245, 2
      %v8247 = vmax.f32 %v8245, %v8246
      %v8248 = vrot.slane %v8247, 1
      %v8249 = vmax.f32 %v8247, %v8248
      %v8250 = vsel %vm854, %v7232, -inf
      %v8251 = vrot.slane %v8250, 4
      %v8252 = vmax.f32 %v8250, %v8251
      %v8253 = vrot.slane %v8252, 2
      %v8254 = vmax.f32 %v8252, %v8253
      %v8255 = vrot.slane %v8254, 1
      %v8256 = vmax.f32 %v8254, %v8255
      %v8257 = vsel %vm851, %v7367, -inf
      %v8258 = vsel %vm851, %v7423, -inf
      %v8259 = vmax.f32 %v8257, %v8258
      %v8260 = vsel %vm851, %v7374, -inf
      %v8261 = vsel %vm851, %v7430, -inf
      %v8262 = vmax.f32 %v8260, %v8261
      %v8263 = vsel %vm851, %v7381, -inf
      %v8264 = vsel %vm851, %v7437, -inf
      %v8265 = vmax.f32 %v8263, %v8264
      %v8266 = vsel %vm851, %v7388, -inf
      %v8267 = vsel %vm851, %v7444, -inf
      %v8268 = vmax.f32 %v8266, %v8267
      %v8269 = vsel %vm851, %v7395, -inf
      %v8270 = vsel %vm851, %v7451, -inf
      %v8271 = vmax.f32 %v8269, %v8270
      %v8272 = vsel %vm851, %v7402, -inf
      %v8273 = vsel %vm851, %v7458, -inf
      %v8274 = vmax.f32 %v8272, %v8273
      %v8275 = vsel %vm851, %v7409, -inf
      %v8276 = vsel %vm851, %v7465, -inf
      %v8277 = vmax.f32 %v8275, %v8276
      %v8278 = vsel %vm851, %v7416, -inf
      %v8279 = vsel %vm851, %v7472, -inf
      %v8280 = vmax.f32 %v8278, %v8279
      %v8281 = vsel %vm851, %v7479, -inf
      %v8282 = vsel %vm851, %v7535, -inf
      %v8283 = vmax.f32 %v8281, %v8282
      %v8284 = vsel %vm851, %v7486, -inf
      %v8285 = vsel %vm851, %v7542, -inf
      %v8286 = vmax.f32 %v8284, %v8285
      %v8287 = vsel %vm851, %v7493, -inf
      %v8288 = vsel %vm851, %v7549, -inf
      %v8289 = vmax.f32 %v8287, %v8288
      %v8290 = vsel %vm851, %v7500, -inf
      %v8291 = vsel %vm851, %v7556, -inf
      %v8292 = vmax.f32 %v8290, %v8291
      %v8293 = vsel %vm851, %v7507, -inf
      %v8294 = vsel %vm851, %v7563, -inf
      %v8295 = vmax.f32 %v8293, %v8294
      %v8296 = vsel %vm851, %v7514, -inf
      %v8297 = vsel %vm851, %v7570, -inf
      %v8298 = vmax.f32 %v8296, %v8297
      %v8299 = vsel %vm851, %v7521, -inf
      %v8300 = vsel %vm851, %v7577, -inf
      %v8301 = vmax.f32 %v8299, %v8300
      %v8302 = vsel %vm851, %v7528, -inf
      %v8303 = vsel %vm851, %v7584, -inf
      %v8304 = vmax.f32 %v8302, %v8303
      %v8305 = vsel %vm851, %v7591, -inf
      %v8306 = vsel %vm851, %v7647, -inf
      %v8307 = vmax.f32 %v8305, %v8306
      %v8308 = vsel %vm851, %v7598, -inf
      %v8309 = vsel %vm851, %v7654, -inf
      %v8310 = vmax.f32 %v8308, %v8309
      %v8311 = vsel %vm851, %v7605, -inf
      %v8312 = vsel %vm851, %v7661, -inf
      %v8313 = vmax.f32 %v8311, %v8312
      %v8314 = vsel %vm851, %v7612, -inf
      %v8315 = vsel %vm851, %v7668, -inf
      %v8316 = vmax.f32 %v8314, %v8315
      %v8317 = vsel %vm851, %v7619, -inf
      %v8318 = vsel %vm851, %v7675, -inf
      %v8319 = vmax.f32 %v8317, %v8318
      %v8320 = vsel %vm851, %v7626, -inf
      %v8321 = vsel %vm851, %v7682, -inf
      %v8322 = vmax.f32 %v8320, %v8321
      %v8323 = vsel %vm851, %v7633, -inf
      %v8324 = vsel %vm851, %v7689, -inf
      %v8325 = vmax.f32 %v8323, %v8324
      %v8326 = vsel %vm851, %v7640, -inf
      %v8327 = vsel %vm851, %v7696, -inf
      %v8328 = vmax.f32 %v8326, %v8327
      %v8329 = vsel %vm851, %v7703, -inf
      %v8330 = vsel %vm851, %v7759, -inf
      %v8331 = vmax.f32 %v8329, %v8330
      %v8332 = vsel %vm851, %v7710, -inf
      %v8333 = vsel %vm851, %v7766, -inf
      %v8334 = vmax.f32 %v8332, %v8333
      %v8335 = vsel %vm851, %v7717, -inf
      %v8336 = vsel %vm851, %v7773, -inf
      %v8337 = vmax.f32 %v8335, %v8336
      %v8338 = vsel %vm851, %v7724, -inf
      %v8339 = vsel %vm851, %v7780, -inf
      %v8340 = vmax.f32 %v8338, %v8339
      %v8341 = vsel %vm851, %v7731, -inf
      %v8342 = vsel %vm851, %v7787, -inf
      %v8343 = vmax.f32 %v8341, %v8342
      %v8344 = vsel %vm851, %v7738, -inf
      %v8345 = vsel %vm851, %v7794, -inf
      %v8346 = vmax.f32 %v8344, %v8345
      %v8347 = vsel %vm851, %v7745, -inf
      %v8348 = vsel %vm851, %v7801, -inf
      %v8349 = vmax.f32 %v8347, %v8348
      %v8350 = vsel %vm851, %v7752, -inf
      %v8351 = vsel %vm851, %v7808, -inf
      %v8352 = vmax.f32 %v8350, %v8351
      %v8353 = vsel %vm851, %v7815, -inf
      %v8354 = vsel %vm851, %v7871, -inf
      %v8355 = vmax.f32 %v8353, %v8354
      %v8356 = vsel %vm851, %v7822, -inf
      %v8357 = vsel %vm851, %v7878, -inf
      %v8358 = vmax.f32 %v8356, %v8357
      %v8359 = vsel %vm851, %v7829, -inf
      %v8360 = vsel %vm851, %v7885, -inf
      %v8361 = vmax.f32 %v8359, %v8360
      %v8362 = vsel %vm851, %v7836, -inf
      %v8363 = vsel %vm851, %v7892, -inf
      %v8364 = vmax.f32 %v8362, %v8363
      %v8365 = vsel %vm851, %v7843, -inf
      %v8366 = vsel %vm851, %v7899, -inf
      %v8367 = vmax.f32 %v8365, %v8366
      %v8368 = vsel %vm851, %v7850, -inf
      %v8369 = vsel %vm851, %v7906, -inf
      %v8370 = vmax.f32 %v8368, %v8369
      %v8371 = vsel %vm851, %v7857, -inf
      %v8372 = vsel %vm851, %v7913, -inf
      %v8373 = vmax.f32 %v8371, %v8372
      %v8374 = vsel %vm851, %v7864, -inf
      %v8375 = vsel %vm851, %v7920, -inf
      %v8376 = vmax.f32 %v8374, %v8375
      %v8377 = vsel %vm851, %v7927, -inf
      %v8378 = vsel %vm851, %v7983, -inf
      %v8379 = vmax.f32 %v8377, %v8378
      %v8380 = vsel %vm851, %v7934, -inf
      %v8381 = vsel %vm851, %v7990, -inf
      %v8382 = vmax.f32 %v8380, %v8381
      %v8383 = vsel %vm851, %v7941, -inf
      %v8384 = vsel %vm851, %v7997, -inf
      %v8385 = vmax.f32 %v8383, %v8384
      %v8386 = vsel %vm851, %v7948, -inf
      %v8387 = vsel %vm851, %v8004, -inf
      %v8388 = vmax.f32 %v8386, %v8387
      %v8389 = vsel %vm851, %v7955, -inf
      %v8390 = vsel %vm851, %v8011, -inf
      %v8391 = vmax.f32 %v8389, %v8390
      %v8392 = vsel %vm851, %v7962, -inf
      %v8393 = vsel %vm851, %v8018, -inf
      %v8394 = vmax.f32 %v8392, %v8393
      %v8395 = vsel %vm851, %v7969, -inf
      %v8396 = vsel %vm851, %v8025, -inf
      %v8397 = vmax.f32 %v8395, %v8396
      %v8398 = vsel %vm851, %v7976, -inf
      %v8399 = vsel %vm851, %v8032, -inf
      %v8400 = vmax.f32 %v8398, %v8399
      %v8401 = vsel %vm851, %v8039, -inf
      %v8402 = vsel %vm851, %v8095, -inf
      %v8403 = vmax.f32 %v8401, %v8402
      %v8404 = vsel %vm851, %v8046, -inf
      %v8405 = vsel %vm851, %v8102, -inf
      %v8406 = vmax.f32 %v8404, %v8405
      %v8407 = vsel %vm851, %v8053, -inf
      %v8408 = vsel %vm851, %v8109, -inf
      %v8409 = vmax.f32 %v8407, %v8408
      %v8410 = vsel %vm851, %v8060, -inf
      %v8411 = vsel %vm851, %v8116, -inf
      %v8412 = vmax.f32 %v8410, %v8411
      %v8413 = vsel %vm851, %v8067, -inf
      %v8414 = vsel %vm851, %v8123, -inf
      %v8415 = vmax.f32 %v8413, %v8414
      %v8416 = vsel %vm851, %v8074, -inf
      %v8417 = vsel %vm851, %v8130, -inf
      %v8418 = vmax.f32 %v8416, %v8417
      %v8419 = vsel %vm851, %v8081, -inf
      %v8420 = vsel %vm851, %v8137, -inf
      %v8421 = vmax.f32 %v8419, %v8420
      %v8422 = vsel %vm851, %v8088, -inf
      %v8423 = vsel %vm851, %v8144, -inf
      %v8424 = vmax.f32 %v8422, %v8423
      %v8425 = vsel %vm851, %v8151, -inf
      %v8426 = vsel %vm851, %v8207, -inf
      %v8427 = vmax.f32 %v8425, %v8426
      %v8428 = vsel %vm851, %v8158, -inf
      %v8429 = vsel %vm851, %v8214, -inf
      %v8430 = vmax.f32 %v8428, %v8429
      %v8431 = vsel %vm851, %v8165, -inf
      %v8432 = vsel %vm851, %v8221, -inf
      %v8433 = vmax.f32 %v8431, %v8432
      %v8434 = vsel %vm851, %v8172, -inf
      %v8435 = vsel %vm851, %v8228, -inf
      %v8436 = vmax.f32 %v8434, %v8435
      %v8437 = vsel %vm851, %v8179, -inf
      %v8438 = vsel %vm851, %v8235, -inf
      %v8439 = vmax.f32 %v8437, %v8438
      %v8440 = vsel %vm851, %v8186, -inf
      %v8441 = vsel %vm851, %v8242, -inf
      %v8442 = vmax.f32 %v8440, %v8441
      %v8443 = vsel %vm851, %v8193, -inf
      %v8444 = vsel %vm851, %v8249, -inf
      %v8445 = vmax.f32 %v8443, %v8444
      %v8446 = vsel %vm851, %v8200, -inf
      %v8447 = vsel %vm851, %v8256, -inf
      %v8448 = vmax.f32 %v8446, %v8447
      %v8449 = vpack.c.bf16 %v8259, %v8259
      %v8450 = vpack.c.bf16 %v8262, %v8262
      %v8451 = vpack.c.bf16 %v8265, %v8265
      %v8452 = vpack.c.bf16 %v8268, %v8268
      %v8453 = vpack.c.bf16 %v8271, %v8271
      %v8454 = vpack.c.bf16 %v8274, %v8274
      %v8455 = vpack.c.bf16 %v8277, %v8277
      %v8456 = vpack.c.bf16 %v8280, %v8280
      %v8457 = vpack.c.bf16 %v8283, %v8283
      %v8458 = vpack.c.bf16 %v8286, %v8286
      %v8459 = vpack.c.bf16 %v8289, %v8289
      %v8460 = vpack.c.bf16 %v8292, %v8292
      %v8461 = vpack.c.bf16 %v8295, %v8295
      %v8462 = vpack.c.bf16 %v8298, %v8298
      %v8463 = vpack.c.bf16 %v8301, %v8301
      %v8464 = vpack.c.bf16 %v8304, %v8304
      %v8465 = vpack.c.bf16 %v8307, %v8307
      %v8466 = vpack.c.bf16 %v8310, %v8310
      %v8467 = vpack.c.bf16 %v8313, %v8313
      %v8468 = vpack.c.bf16 %v8316, %v8316
      %v8469 = vpack.c.bf16 %v8319, %v8319
      %v8470 = vpack.c.bf16 %v8322, %v8322
      %v8471 = vpack.c.bf16 %v8325, %v8325
      %v8472 = vpack.c.bf16 %v8328, %v8328
      %v8473 = vpack.c.bf16 %v8331, %v8331
      %v8474 = vpack.c.bf16 %v8334, %v8334
      %v8475 = vpack.c.bf16 %v8337, %v8337
      %v8476 = vpack.c.bf16 %v8340, %v8340
      %v8477 = vpack.c.bf16 %v8343, %v8343
      %v8478 = vpack.c.bf16 %v8346, %v8346
      %v8479 = vpack.c.bf16 %v8349, %v8349
      %v8480 = vpack.c.bf16 %v8352, %v8352
      %v8481 = vpack.c.bf16 %v8355, %v8355
      %v8482 = vpack.c.bf16 %v8358, %v8358
      %v8483 = vpack.c.bf16 %v8361, %v8361
      %v8484 = vpack.c.bf16 %v8364, %v8364
      %v8485 = vpack.c.bf16 %v8367, %v8367
      %v8486 = vpack.c.bf16 %v8370, %v8370
      %v8487 = vpack.c.bf16 %v8373, %v8373
      %v8488 = vpack.c.bf16 %v8376, %v8376
      %v8489 = vpack.c.bf16 %v8379, %v8379
      %v8490 = vpack.c.bf16 %v8382, %v8382
      %v8491 = vpack.c.bf16 %v8385, %v8385
      %v8492 = vpack.c.bf16 %v8388, %v8388
      %v8493 = vpack.c.bf16 %v8391, %v8391
      %v8494 = vpack.c.bf16 %v8394, %v8394
      %v8495 = vpack.c.bf16 %v8397, %v8397
      %v8496 = vpack.c.bf16 %v8400, %v8400
      %v8497 = vpack.c.bf16 %v8403, %v8403
      %v8498 = vpack.c.bf16 %v8406, %v8406
      %v8499 = vpack.c.bf16 %v8409, %v8409
      %v8500 = vpack.c.bf16 %v8412, %v8412
      %v8501 = vpack.c.bf16 %v8415, %v8415
      %v8502 = vpack.c.bf16 %v8418, %v8418
      %v8503 = vpack.c.bf16 %v8421, %v8421
      %v8504 = vpack.c.bf16 %v8424, %v8424
      %v8505 = vpack.c.bf16 %v8427, %v8427
      %v8506 = vpack.c.bf16 %v8430, %v8430
      %v8507 = vpack.c.bf16 %v8433, %v8433
      %v8508 = vpack.c.bf16 %v8436, %v8436
      %v8509 = vpack.c.bf16 %v8439, %v8439
      %v8510 = vpack.c.bf16 %v8442, %v8442
      %v8511 = vpack.c.bf16 %v8445, %v8445
      %v8512 = vpack.c.bf16 %v8448, %v8448
      %v8513 = vld [vmem:[%s6] sm:$0x3]
      %v8514 = vld [vmem:[%s7] sm:$0x1]
      %v8516 = vlaneseq
      %v8517 = vshrl.u32 %v8516, 7
      %v8518 = vsub.s32 0, %v8517
      %v8519 = vrot.slane %v8514, %v8518
      %v8585 = vunpack.c.l.b16 %v8449
      %v8586 = vunpack.c.l.b16 %v8450
      %v8587 = vunpack.c.l.b16 %v8451
      %v8588 = vunpack.c.l.b16 %v8452
      %v8589 = vunpack.c.l.b16 %v8453
      %v8590 = vunpack.c.l.b16 %v8454
      %v8591 = vunpack.c.l.b16 %v8455
      %v8592 = vunpack.c.l.b16 %v8456
      %v8593 = vunpack.c.l.b16 %v8457
      %v8594 = vunpack.c.l.b16 %v8458
      %v8595 = vunpack.c.l.b16 %v8459
      %v8596 = vunpack.c.l.b16 %v8460
      %v8597 = vunpack.c.l.b16 %v8461
      %v8598 = vunpack.c.l.b16 %v8462
      %v8599 = vunpack.c.l.b16 %v8463
      %v8600 = vunpack.c.l.b16 %v8464
      %v8601 = vunpack.c.l.b16 %v8465
      %v8602 = vunpack.c.l.b16 %v8466
      %v8603 = vunpack.c.l.b16 %v8467
      %v8604 = vunpack.c.l.b16 %v8468
      %v8605 = vunpack.c.l.b16 %v8469
      %v8606 = vunpack.c.l.b16 %v8470
      %v8607 = vunpack.c.l.b16 %v8471
      %v8608 = vunpack.c.l.b16 %v8472
      %v8609 = vunpack.c.l.b16 %v8473
      %v8610 = vunpack.c.l.b16 %v8474
      %v8611 = vunpack.c.l.b16 %v8475
      %v8612 = vunpack.c.l.b16 %v8476
      %v8613 = vunpack.c.l.b16 %v8477
      %v8614 = vunpack.c.l.b16 %v8478
      %v8615 = vunpack.c.l.b16 %v8479
      %v8616 = vunpack.c.l.b16 %v8480
      %v8617 = vunpack.c.l.b16 %v8481
      %v8618 = vunpack.c.l.b16 %v8482
      %v8619 = vunpack.c.l.b16 %v8483
      %v8620 = vunpack.c.l.b16 %v8484
      %v8621 = vunpack.c.l.b16 %v8485
      %v8622 = vunpack.c.l.b16 %v8486
      %v8623 = vunpack.c.l.b16 %v8487
      %v8624 = vunpack.c.l.b16 %v8488
      %v8625 = vunpack.c.l.b16 %v8489
      %v8626 = vunpack.c.l.b16 %v8490
      %v8627 = vunpack.c.l.b16 %v8491
      %v8628 = vunpack.c.l.b16 %v8492
      %v8629 = vunpack.c.l.b16 %v8493
      %v8630 = vunpack.c.l.b16 %v8494
      %v8631 = vunpack.c.l.b16 %v8495
      %v8632 = vunpack.c.l.b16 %v8496
      %v8633 = vunpack.c.l.b16 %v8497
      %v8634 = vunpack.c.l.b16 %v8498
      %v8635 = vunpack.c.l.b16 %v8499
      %v8636 = vunpack.c.l.b16 %v8500
      %v8637 = vunpack.c.l.b16 %v8501
      %v8638 = vunpack.c.l.b16 %v8502
      %v8639 = vunpack.c.l.b16 %v8503
      %v8640 = vunpack.c.l.b16 %v8504
      %v8641 = vunpack.c.l.b16 %v8505
      %v8642 = vunpack.c.l.b16 %v8506
      %v8643 = vunpack.c.l.b16 %v8507
      %v8644 = vunpack.c.l.b16 %v8508
      %v8645 = vunpack.c.l.b16 %v8509
      %v8646 = vunpack.c.l.b16 %v8510
      %v8647 = vunpack.c.l.b16 %v8511
      %v8648 = vunpack.c.l.b16 %v8512
      %vm8649 = vcmask 1041409
      %v8650 = vsel %vm8649, %v8586, %v8585
      %vm8651 = vcmask 1042434
      %v8652 = vsel %vm8651, %v8587, %v8650
      %vm8653 = vcmask 1043459
      %v8654 = vsel %vm8653, %v8588, %v8652
      %vm8655 = vcmask 1044484
      %v8656 = vsel %vm8655, %v8589, %v8654
      %vm8657 = vcmask 1045509
      %v8658 = vsel %vm8657, %v8590, %v8656
      %vm8659 = vcmask 1046534
      %v8660 = vsel %vm8659, %v8591, %v8658
      %vm8661 = vcmask 1047559
      %v8662 = vsel %vm8661, %v8592, %v8660
      %v8663 = vsel %vm8649, %v8594, %v8593
      %v8664 = vsel %vm8651, %v8595, %v8663
      %v8665 = vsel %vm8653, %v8596, %v8664
      %v8666 = vsel %vm8655, %v8597, %v8665
      %v8667 = vsel %vm8657, %v8598, %v8666
      %v8668 = vsel %vm8659, %v8599, %v8667
      %v8669 = vsel %vm8661, %v8600, %v8668
      %v8670 = vsel %vm8649, %v8602, %v8601
      %v8671 = vsel %vm8651, %v8603, %v8670
      %v8672 = vsel %vm8653, %v8604, %v8671
      %v8673 = vsel %vm8655, %v8605, %v8672
      %v8674 = vsel %vm8657, %v8606, %v8673
      %v8675 = vsel %vm8659, %v8607, %v8674
      %v8676 = vsel %vm8661, %v8608, %v8675
      %v8677 = vsel %vm8649, %v8610, %v8609
      %v8678 = vsel %vm8651, %v8611, %v8677
      %v8679 = vsel %vm8653, %v8612, %v8678
      %v8680 = vsel %vm8655, %v8613, %v8679
      %v8681 = vsel %vm8657, %v8614, %v8680
      %v8682 = vsel %vm8659, %v8615, %v8681
      %v8683 = vsel %vm8661, %v8616, %v8682
      %v8684 = vsel %vm8649, %v8618, %v8617
      %v8685 = vsel %vm8651, %v8619, %v8684
      %v8686 = vsel %vm8653, %v8620, %v8685
      %v8687 = vsel %vm8655, %v8621, %v8686
      %v8688 = vsel %vm8657, %v8622, %v8687
      %v8689 = vsel %vm8659, %v8623, %v8688
      %v8690 = vsel %vm8661, %v8624, %v8689
      %v8691 = vsel %vm8649, %v8626, %v8625
      %v8692 = vsel %vm8651, %v8627, %v8691
      %v8693 = vsel %vm8653, %v8628, %v8692
      %v8694 = vsel %vm8655, %v8629, %v8693
      %v8695 = vsel %vm8657, %v8630, %v8694
      %v8696 = vsel %vm8659, %v8631, %v8695
      %v8697 = vsel %vm8661, %v8632, %v8696
      %v8698 = vsel %vm8649, %v8634, %v8633
      %v8699 = vsel %vm8651, %v8635, %v8698
      %v8700 = vsel %vm8653, %v8636, %v8699
      %v8701 = vsel %vm8655, %v8637, %v8700
      %v8702 = vsel %vm8657, %v8638, %v8701
      %v8703 = vsel %vm8659, %v8639, %v8702
      %v8704 = vsel %vm8661, %v8640, %v8703
      %v8705 = vsel %vm8649, %v8642, %v8641
      %v8706 = vsel %vm8651, %v8643, %v8705
      %v8707 = vsel %vm8653, %v8644, %v8706
      %v8708 = vsel %vm8655, %v8645, %v8707
      %v8709 = vsel %vm8657, %v8646, %v8708
      %v8710 = vsel %vm8659, %v8647, %v8709
      %v8711 = vsel %vm8661, %v8648, %v8710
      %v8712 = vpack.c.b16 %v8669, %v8662
      %v8713 = vpack.c.b16 %v8683, %v8676
      %v8714 = vpack.c.b16 %v8697, %v8690
      %v8715 = vpack.c.b16 %v8711, %v8704
      %v8717 = vsel %vm851, %v8712, 0
      %v8720 = vsel %vm851, %v8713, 0
      %v8723 = vsel %vm851, %v8714, 0
      %v8726 = vsel %vm851, %v8715, 0
      %v8729 = vsel %vm2608, %v8513, 0
      %8731 = vmatprep.subr.bf16.mxu0 0
      %8732 = vmatpush1.bf16.msra.mxu0 %v8729
      %8733 = vmatprep.subr.bf16.mxu0 0
      %8734 = vmatpush1.bf16.msra.mxu0 0
      %8735 = vmatprep.subr.bf16.mxu0 0
      %8736 = vmatpush1.bf16.msra.mxu0 0
      %8737 = vmatprep.subr.bf16.mxu0 0
      %8738 = vmatpush1.bf16.msra.mxu0 0
      %8739 = vmatprep.subr.bf16.mxu0 0
      %8740 = vmatpush1.bf16.msra.mxu0 0
      %8741 = vmatprep.subr.bf16.mxu0 0
      %8742 = vmatpush1.bf16.msra.mxu0 0
      %8743 = vmatprep.subr.bf16.mxu0 0
      %8744 = vmatpush1.bf16.msra.mxu0 0
      %8745 = vmatprep.subr.bf16.mxu0 0
      %8746 = vmatpush1.bf16.msra.mxu0 0
      %8747 = vmatprep.subr.bf16.mxu0 0
      %8748 = vmatpush1.bf16.msra.mxu0 0
      %8749 = vmatprep.subr.bf16.mxu0 0
      %8750 = vmatpush1.bf16.msra.mxu0 0
      %8751 = vmatprep.subr.bf16.mxu0 0
      %8752 = vmatpush1.bf16.msra.mxu0 0
      %8753 = vmatprep.subr.bf16.mxu0 0
      %8754 = vmatpush1.bf16.msra.mxu0 0
      %8755 = vmatprep.subr.bf16.mxu0 0
      %8756 = vmatpush1.bf16.msra.mxu0 0
      %8757 = vmatprep.subr.bf16.mxu0 0
      %8758 = vmatpush1.bf16.msra.mxu0 0
      %8759 = vmatprep.subr.bf16.mxu0 0
      %8760 = vmatpush1.bf16.msra.mxu0 0
      %8761 = vmatprep.subr.bf16.mxu0 0
      %8762 = vmatpush1.bf16.msra.mxu0 0
      %8763 = vmatprep.mubr.bf16.mxu0 0
      %8764 = vmatmul.mubr.bf16.gmra.mrb[0].mxu0 %v8717
      %v8765 = vpop.f32.mrb[0].mxu0
      %v8766 = vadd.f32 %v8519, %v8765
      %v8767 = vpop.f32.mrb[0].mxu0
      %v8768 = vpop.f32.mrb[0].mxu0
      %v8769 = vadd.f32 %v8519, %v8768
      %v8770 = vpop.f32.mrb[0].mxu0
      %8771 = vmatprep.mubr.bf16.mxu0 0
      %8772 = vmatmul.mubr.bf16.gmra.mrb[0].mxu0 %v8720
      %v8773 = vpop.f32.mrb[0].mxu0
      %v8774 = vadd.f32 %v8519, %v8773
      %v8775 = vpop.f32.mrb[0].mxu0
      %v8776 = vpop.f32.mrb[0].mxu0
      %v8777 = vadd.f32 %v8519, %v8776
      %v8778 = vpop.f32.mrb[0].mxu0
      %8779 = vmatprep.mubr.bf16.mxu0 0
      %8780 = vmatmul.mubr.bf16.gmra.mrb[0].mxu0 %v8723
      %v8781 = vpop.f32.mrb[0].mxu0
      %v8782 = vadd.f32 %v8519, %v8781
      %v8783 = vpop.f32.mrb[0].mxu0
      %v8784 = vpop.f32.mrb[0].mxu0
      %v8785 = vadd.f32 %v8519, %v8784
      %v8786 = vpop.f32.mrb[0].mxu0
      %8787 = vmatprep.mubr.bf16.mxu0 0
      %8788 = vmatmul.mubr.bf16.gmra.mrb[0].mxu0 %v8726
      %v8789 = vpop.f32.mrb[0].mxu0
      %v8790 = vadd.f32 %v8519, %v8789
      %v8791 = vpop.f32.mrb[0].mxu0
      %v8792 = vpop.f32.mrb[0].mxu0
      %v8793 = vadd.f32 %v8519, %v8792
      %v8794 = vpop.f32.mrb[0].mxu0
      %8795 = vdwg.mxu0
      %8796 = vst.msk [vmem:[#allocation3] sm:$0xff] %vm2285, 0.0
      %vm8797 = vcmask 58368
      %8798 = vst.msk [vmem:[#allocation3 + $0x8] sm:$0x3] %vm8797, 0.0
      %8799 = vst.msk [vmem:[#allocation3 + $0x10] sm:$0xff] %vm2285, 0.0
      %8800 = vst.msk [vmem:[#allocation3 + $0x18] sm:$0x3] %vm8797, 0.0
      %8801 = vst.msk [vmem:[#allocation3 + $0x20] sm:$0xff] %vm2285, 0.0
      %8802 = vst.msk [vmem:[#allocation3 + $0x28] sm:$0x3] %vm8797, 0.0
      %8803 = vst.msk [vmem:[#allocation3 + $0x30] sm:$0xff] %vm2285, 0.0
      %8804 = vst.msk [vmem:[#allocation3 + $0x38] sm:$0x3] %vm8797, 0.0
      %8805 = vst.msk [vmem:[#allocation3 + $0x40] sm:$0xff] %vm2285, 0.0
      %8806 = vst.msk [vmem:[#allocation3 + $0x48] sm:$0x3] %vm8797, 0.0
      %8807 = vst.msk [vmem:[#allocation3 + $0x50] sm:$0xff] %vm2285, 0.0
      %8808 = vst.msk [vmem:[#allocation3 + $0x58] sm:$0x3] %vm8797, 0.0
      %8809 = vst.msk [vmem:[#allocation3 + $0x60] sm:$0xff] %vm2285, 0.0
      %8810 = vst.msk [vmem:[#allocation3 + $0x68] sm:$0x3] %vm8797, 0.0
      %8811 = vst.msk [vmem:[#allocation3 + $0x70] sm:$0xff] %vm2285, 0.0
      %8812 = vst.msk [vmem:[#allocation3 + $0x78] sm:$0x3] %vm8797, 0.0
      %8813 = vst.msk [vmem:[#allocation3 + $0x80] sm:$0xff] %vm2285, 0.0
      %8814 = vst.msk [vmem:[#allocation3 + $0x88] sm:$0x3] %vm8797, 0.0
      %8815 = vst.msk [vmem:[#allocation3 + $0x90] sm:$0xff] %vm2285, 0.0
      %8816 = vst.msk [vmem:[#allocation3 + $0x98] sm:$0x3] %vm8797, 0.0
      %s8817 = scalar_lea.vmem [#allocation3], 16
      %8818 = vst.msk [vmem:[%s8817 + $0x1] sm:$0xff] %vm2285, %v8766
      %8819 = vst.msk [vmem:[%s8817 + $0x11] sm:$0xff] %vm2285, %v8769
      %8820 = vst.msk [vmem:[%s8817 + $0x21] sm:$0xff] %vm2285, %v8774
      %8821 = vst.msk [vmem:[%s8817 + $0x31] sm:$0xff] %vm2285, %v8777
      %8822 = vst.msk [vmem:[%s8817 + $0x41] sm:$0xff] %vm2285, %v8782
      %8823 = vst.msk [vmem:[%s8817 + $0x51] sm:$0xff] %vm2285, %v8785
      %8824 = vst.msk [vmem:[%s8817 + $0x61] sm:$0xff] %vm2285, %v8790
      %8825 = vst.msk [vmem:[%s8817 + $0x71] sm:$0xff] %vm2285, %v8793
      %v8826 = vld [vmem:[#allocation3] sm:$0xff]
      %v8827 = vld [vmem:[#allocation3 + $0x10] sm:$0xff]
      %v8828 = vld [vmem:[#allocation3 + $0x20] sm:$0xff]
      %v8829 = vld [vmem:[#allocation3 + $0x30] sm:$0xff]
      %v8830 = vld [vmem:[#allocation3 + $0x40] sm:$0xff]
      %v8831 = vld [vmem:[#allocation3 + $0x50] sm:$0xff]
      %v8832 = vld [vmem:[#allocation3 + $0x60] sm:$0xff]
      %v8833 = vld [vmem:[#allocation3 + $0x70] sm:$0xff]
      %v8834 = vld [vmem:[#allocation3 + $0x1] sm:$0xff]
      %v8835 = vld [vmem:[#allocation3 + $0x11] sm:$0xff]
      %v8836 = vld [vmem:[#allocation3 + $0x21] sm:$0xff]
      %v8837 = vld [vmem:[#allocation3 + $0x31] sm:$0xff]
      %v8838 = vld [vmem:[#allocation3 + $0x41] sm:$0xff]
      %v8839 = vld [vmem:[#allocation3 + $0x51] sm:$0xff]
      %v8840 = vld [vmem:[#allocation3 + $0x61] sm:$0xff]
      %v8841 = vld [vmem:[#allocation3 + $0x71] sm:$0xff]
      %v8842 = vld [vmem:[#allocation3 + $0x2] sm:$0xff]
      %v8843 = vld [vmem:[#allocation3 + $0x12] sm:$0xff]
      %v8844 = vld [vmem:[#allocation3 + $0x22] sm:$0xff]
      %v8845 = vld [vmem:[#allocation3 + $0x32] sm:$0xff]
      %v8846 = vld [vmem:[#allocation3 + $0x42] sm:$0xff]
      %v8847 = vld [vmem:[#allocation3 + $0x52] sm:$0xff]
      %v8848 = vld [vmem:[#allocation3 + $0x62] sm:$0xff]
      %v8849 = vld [vmem:[#allocation3 + $0x72] sm:$0xff]
      %v8850 = vld [vmem:[%s8817] sm:$0xff]
      %v8851 = vld [vmem:[%s8817 + $0x10] sm:$0xff]
      %v8852 = vld [vmem:[%s8817 + $0x20] sm:$0xff]
      %v8853 = vld [vmem:[%s8817 + $0x30] sm:$0xff]
      %v8854 = vld [vmem:[%s8817 + $0x40] sm:$0xff]
      %v8855 = vld [vmem:[%s8817 + $0x50] sm:$0xff]
      %v8856 = vld [vmem:[%s8817 + $0x60] sm:$0xff]
      %v8857 = vld [vmem:[%s8817 + $0x70] sm:$0xff]
      %v8858 = vld [vmem:[%s8817 + $0x1] sm:$0xff]
      %v8859 = vld [vmem:[%s8817 + $0x11] sm:$0xff]
      %v8860 = vld [vmem:[%s8817 + $0x21] sm:$0xff]
      %v8861 = vld [vmem:[%s8817 + $0x31] sm:$0xff]
      %v8862 = vld [vmem:[%s8817 + $0x41] sm:$0xff]
      %v8863 = vld [vmem:[%s8817 + $0x51] sm:$0xff]
      %v8864 = vld [vmem:[%s8817 + $0x61] sm:$0xff]
      %v8865 = vld [vmem:[%s8817 + $0x71] sm:$0xff]
      %v8866 = vld [vmem:[%s8817 + $0x2] sm:$0xff]
      %v8867 = vld [vmem:[%s8817 + $0x12] sm:$0xff]
      %v8868 = vld [vmem:[%s8817 + $0x22] sm:$0xff]
      %v8869 = vld [vmem:[%s8817 + $0x32] sm:$0xff]
      %v8870 = vld [vmem:[%s8817 + $0x42] sm:$0xff]
      %v8871 = vld [vmem:[%s8817 + $0x52] sm:$0xff]
      %v8872 = vld [vmem:[%s8817 + $0x62] sm:$0xff]
      %v8873 = vld [vmem:[%s8817 + $0x72] sm:$0xff]
      %s8874 = scalar_lea.vmem [#allocation3], 32
      %v8875 = vld [vmem:[%s8874] sm:$0xff]
      %v8876 = vld [vmem:[%s8874 + $0x10] sm:$0xff]
      %v8877 = vld [vmem:[%s8874 + $0x20] sm:$0xff]
      %v8878 = vld [vmem:[%s8874 + $0x30] sm:$0xff]
      %v8879 = vld [vmem:[%s8874 + $0x40] sm:$0xff]
      %v8880 = vld [vmem:[%s8874 + $0x50] sm:$0xff]
      %v8881 = vld [vmem:[%s8874 + $0x60] sm:$0xff]
      %v8882 = vld [vmem:[%s8874 + $0x70] sm:$0xff]
      %v8883 = vld [vmem:[%s8874 + $0x1] sm:$0xff]
      %v8884 = vld [vmem:[%s8874 + $0x11] sm:$0xff]
      %v8885 = vld [vmem:[%s8874 + $0x21] sm:$0xff]
      %v8886 = vld [vmem:[%s8874 + $0x31] sm:$0xff]
      %v8887 = vld [vmem:[%s8874 + $0x41] sm:$0xff]
      %v8888 = vld [vmem:[%s8874 + $0x51] sm:$0xff]
      %v8889 = vld [vmem:[%s8874 + $0x61] sm:$0xff]
      %v8890 = vld [vmem:[%s8874 + $0x71] sm:$0xff]
      %v8891 = vld [vmem:[%s8874 + $0x2] sm:$0xff]
      %v8892 = vld [vmem:[%s8874 + $0x12] sm:$0xff]
      %v8893 = vld [vmem:[%s8874 + $0x22] sm:$0xff]
      %v8894 = vld [vmem:[%s8874 + $0x32] sm:$0xff]
      %v8895 = vld [vmem:[%s8874 + $0x42] sm:$0xff]
      %v8896 = vld [vmem:[%s8874 + $0x52] sm:$0xff]
      %v8897 = vld [vmem:[%s8874 + $0x62] sm:$0xff]
      %v8898 = vld [vmem:[%s8874 + $0x72] sm:$0xff]
      %8907 = vrot.lane.b32.xlu0 %v8834, 8
      %v8908 = vpop.permute.xlu0 %8907
      %8909 = vrot.lane.b32.xlu0 %v8835, 8
      %v8910 = vpop.permute.xlu0 %8909
      %8911 = vrot.lane.b32.xlu0 %v8836, 8
      %v8912 = vpop.permute.xlu0 %8911
      %8913 = vrot.lane.b32.xlu0 %v8837, 8
      %v8914 = vpop.permute.xlu0 %8913
      %8915 = vrot.lane.b32.xlu0 %v8838, 8
      %v8916 = vpop.permute.xlu0 %8915
      %8917 = vrot.lane.b32.xlu0 %v8839, 8
      %v8918 = vpop.permute.xlu0 %8917
      %8919 = vrot.lane.b32.xlu0 %v8840, 8
      %v8920 = vpop.permute.xlu0 %8919
      %8921 = vrot.lane.b32.xlu0 %v8841, 8
      %v8922 = vpop.permute.xlu0 %8921
      %8939 = vrot.lane.b32.xlu0 %v8842, 16
      %v8940 = vpop.permute.xlu0 %8939
      %8941 = vrot.lane.b32.xlu0 %v8843, 16
      %v8942 = vpop.permute.xlu0 %8941
      %8943 = vrot.lane.b32.xlu0 %v8844, 16
      %v8944 = vpop.permute.xlu0 %8943
      %8945 = vrot.lane.b32.xlu0 %v8845, 16
      %v8946 = vpop.permute.xlu0 %8945
      %8947 = vrot.lane.b32.xlu0 %v8846, 16
      %v8948 = vpop.permute.xlu0 %8947
      %8949 = vrot.lane.b32.xlu0 %v8847, 16
      %v8950 = vpop.permute.xlu0 %8949
      %8951 = vrot.lane.b32.xlu0 %v8848, 16
      %v8952 = vpop.permute.xlu0 %8951
      %8953 = vrot.lane.b32.xlu0 %v8849, 16
      %v8954 = vpop.permute.xlu0 %8953
      %8971 = vrot.lane.b32.xlu0 %v8850, 24
      %v8972 = vpop.permute.xlu0 %8971
      %8973 = vrot.lane.b32.xlu0 %v8851, 24
      %v8974 = vpop.permute.xlu0 %8973
      %8975 = vrot.lane.b32.xlu0 %v8852, 24
      %v8976 = vpop.permute.xlu0 %8975
      %8977 = vrot.lane.b32.xlu0 %v8853, 24
      %v8978 = vpop.permute.xlu0 %8977
      %8979 = vrot.lane.b32.xlu0 %v8854, 24
      %v8980 = vpop.permute.xlu0 %8979
      %8981 = vrot.lane.b32.xlu0 %v8855, 24
      %v8982 = vpop.permute.xlu0 %8981
      %8983 = vrot.lane.b32.xlu0 %v8856, 24
      %v8984 = vpop.permute.xlu0 %8983
      %8985 = vrot.lane.b32.xlu0 %v8857, 24
      %v8986 = vpop.permute.xlu0 %8985
      %9003 = vrot.lane.b32.xlu0 %v8858, 32
      %v9004 = vpop.permute.xlu0 %9003
      %9005 = vrot.lane.b32.xlu0 %v8859, 32
      %v9006 = vpop.permute.xlu0 %9005
      %9007 = vrot.lane.b32.xlu0 %v8860, 32
      %v9008 = vpop.permute.xlu0 %9007
      %9009 = vrot.lane.b32.xlu0 %v8861, 32
      %v9010 = vpop.permute.xlu0 %9009
      %9011 = vrot.lane.b32.xlu0 %v8862, 32
      %v9012 = vpop.permute.xlu0 %9011
      %9013 = vrot.lane.b32.xlu0 %v8863, 32
      %v9014 = vpop.permute.xlu0 %9013
      %9015 = vrot.lane.b32.xlu0 %v8864, 32
      %v9016 = vpop.permute.xlu0 %9015
      %9017 = vrot.lane.b32.xlu0 %v8865, 32
      %v9018 = vpop.permute.xlu0 %9017
      %9035 = vrot.lane.b32.xlu0 %v8866, 40
      %v9036 = vpop.permute.xlu0 %9035
      %9037 = vrot.lane.b32.xlu0 %v8867, 40
      %v9038 = vpop.permute.xlu0 %9037
      %9039 = vrot.lane.b32.xlu0 %v8868, 40
      %v9040 = vpop.permute.xlu0 %9039
      %9041 = vrot.lane.b32.xlu0 %v8869, 40
      %v9042 = vpop.permute.xlu0 %9041
      %9043 = vrot.lane.b32.xlu0 %v8870, 40
      %v9044 = vpop.permute.xlu0 %9043
      %9045 = vrot.lane.b32.xlu0 %v8871, 40
      %v9046 = vpop.permute.xlu0 %9045
      %9047 = vrot.lane.b32.xlu0 %v8872, 40
      %v9048 = vpop.permute.xlu0 %9047
      %9049 = vrot.lane.b32.xlu0 %v8873, 40
      %v9050 = vpop.permute.xlu0 %9049
      %9067 = vrot.lane.b32.xlu0 %v8875, 48
      %v9068 = vpop.permute.xlu0 %9067
      %9069 = vrot.lane.b32.xlu0 %v8876, 48
      %v9070 = vpop.permute.xlu0 %9069
      %9071 = vrot.lane.b32.xlu0 %v8877, 48
      %v9072 = vpop.permute.xlu0 %9071
      %9073 = vrot.lane.b32.xlu0 %v8878, 48
      %v9074 = vpop.permute.xlu0 %9073
      %9075 = vrot.lane.b32.xlu0 %v8879, 48
      %v9076 = vpop.permute.xlu0 %9075
      %9077 = vrot.lane.b32.xlu0 %v8880, 48
      %v9078 = vpop.permute.xlu0 %9077
      %9079 = vrot.lane.b32.xlu0 %v8881, 48
      %v9080 = vpop.permute.xlu0 %9079
      %9081 = vrot.lane.b32.xlu0 %v8882, 48
      %v9082 = vpop.permute.xlu0 %9081
      %9099 = vrot.lane.b32.xlu0 %v8883, 56
      %v9100 = vpop.permute.xlu0 %9099
      %9101 = vrot.lane.b32.xlu0 %v8884, 56
      %v9102 = vpop.permute.xlu0 %9101
      %9103 = vrot.lane.b32.xlu0 %v8885, 56
      %v9104 = vpop.permute.xlu0 %9103
      %9105 = vrot.lane.b32.xlu0 %v8886, 56
      %v9106 = vpop.permute.xlu0 %9105
      %9107 = vrot.lane.b32.xlu0 %v8887, 56
      %v9108 = vpop.permute.xlu0 %9107
      %9109 = vrot.lane.b32.xlu0 %v8888, 56
      %v9110 = vpop.permute.xlu0 %9109
      %9111 = vrot.lane.b32.xlu0 %v8889, 56
      %v9112 = vpop.permute.xlu0 %9111
      %9113 = vrot.lane.b32.xlu0 %v8890, 56
      %v9114 = vpop.permute.xlu0 %9113
      %9131 = vrot.lane.b32.xlu0 %v8891, 64
      %v9132 = vpop.permute.xlu0 %9131
      %9133 = vrot.lane.b32.xlu0 %v8892, 64
      %v9134 = vpop.permute.xlu0 %9133
      %9135 = vrot.lane.b32.xlu0 %v8893, 64
      %v9136 = vpop.permute.xlu0 %9135
      %9137 = vrot.lane.b32.xlu0 %v8894, 64
      %v9138 = vpop.permute.xlu0 %9137
      %9139 = vrot.lane.b32.xlu0 %v8895, 64
      %v9140 = vpop.permute.xlu0 %9139
      %9141 = vrot.lane.b32.xlu0 %v8896, 64
      %v9142 = vpop.permute.xlu0 %9141
      %9143 = vrot.lane.b32.xlu0 %v8897, 64
      %v9144 = vpop.permute.xlu0 %9143
      %9145 = vrot.lane.b32.xlu0 %v8898, 64
      %v9146 = vpop.permute.xlu0 %9145
      %v9155 = vsel %vm2285, %v8826, %v8908
      %v9156 = vsel %vm2285, %v8827, %v8910
      %v9157 = vsel %vm2285, %v8828, %v8912
      %v9158 = vsel %vm2285, %v8829, %v8914
      %v9159 = vsel %vm2285, %v8830, %v8916
      %v9160 = vsel %vm2285, %v8831, %v8918
      %v9161 = vsel %vm2285, %v8832, %v8920
      %v9162 = vsel %vm2285, %v8833, %v8922
      %v9163 = vsel %vm2351, %v9155, %v8940
      %v9164 = vsel %vm2351, %v9156, %v8942
      %v9165 = vsel %vm2351, %v9157, %v8944
      %v9166 = vsel %vm2351, %v9158, %v8946
      %v9167 = vsel %vm2351, %v9159, %v8948
      %v9168 = vsel %vm2351, %v9160, %v8950
      %v9169 = vsel %vm2351, %v9161, %v8952
      %v9170 = vsel %vm2351, %v9162, %v8954
      %v9171 = vsel %vm2417, %v9163, %v8972
      %v9172 = vsel %vm2417, %v9164, %v8974
      %v9173 = vsel %vm2417, %v9165, %v8976
      %v9174 = vsel %vm2417, %v9166, %v8978
      %v9175 = vsel %vm2417, %v9167, %v8980
      %v9176 = vsel %vm2417, %v9168, %v8982
      %v9177 = vsel %vm2417, %v9169, %v8984
      %v9178 = vsel %vm2417, %v9170, %v8986
      %v9179 = vsel %vm2483, %v9171, %v9004
      %v9180 = vsel %vm2483, %v9172, %v9006
      %v9181 = vsel %vm2483, %v9173, %v9008
      %v9182 = vsel %vm2483, %v9174, %v9010
      %v9183 = vsel %vm2483, %v9175, %v9012
      %v9184 = vsel %vm2483, %v9176, %v9014
      %v9185 = vsel %vm2483, %v9177, %v9016
      %v9186 = vsel %vm2483, %v9178, %v9018
      %vm9187 = vcmask 326656
      %v9188 = vsel %vm9187, %v9179, %v9036
      %v9189 = vsel %vm9187, %v9180, %v9038
      %v9190 = vsel %vm9187, %v9181, %v9040
      %v9191 = vsel %vm9187, %v9182, %v9042
      %v9192 = vsel %vm9187, %v9183, %v9044
      %v9193 = vsel %vm9187, %v9184, %v9046
      %v9194 = vsel %vm9187, %v9185, %v9048
      %v9195 = vsel %vm9187, %v9186, %v9050
      %vm9196 = vcmask 392192
      %v9197 = vsel %vm9196, %v9188, %v9068
      %v9198 = vsel %vm9196, %v9189, %v9070
      %v9199 = vsel %vm9196, %v9190, %v9072
      %v9200 = vsel %vm9196, %v9191, %v9074
      %v9201 = vsel %vm9196, %v9192, %v9076
      %v9202 = vsel %vm9196, %v9193, %v9078
      %v9203 = vsel %vm9196, %v9194, %v9080
      %v9204 = vsel %vm9196, %v9195, %v9082
      %vm9205 = vcmask 457728
      %v9206 = vsel %vm9205, %v9197, %v9100
      %v9207 = vsel %vm9205, %v9198, %v9102
      %v9208 = vsel %vm9205, %v9199, %v9104
      %v9209 = vsel %vm9205, %v9200, %v9106
      %v9210 = vsel %vm9205, %v9201, %v9108
      %v9211 = vsel %vm9205, %v9202, %v9110
      %v9212 = vsel %vm9205, %v9203, %v9112
      %v9213 = vsel %vm9205, %v9204, %v9114
      %vm9214 = vcmask 523264
      %v9215 = vsel %vm9214, %v9206, %v9132
      %v9216 = vsel %vm9214, %v9207, %v9134
      %v9217 = vsel %vm9214, %v9208, %v9136
      %v9218 = vsel %vm9214, %v9209, %v9138
      %v9219 = vsel %vm9214, %v9210, %v9140
      %v9220 = vsel %vm9214, %v9211, %v9142
      %v9221 = vsel %vm9214, %v9212, %v9144
      %v9222 = vsel %vm9214, %v9213, %v9146
      %v9223 = vpack.c.bf16 %v9216, %v9215
      %v9224 = vpack.c.bf16 %v9218, %v9217
      %v9225 = vpack.c.bf16 %v9220, %v9219
      %v9226 = vpack.c.bf16 %v9222, %v9221
      %v9227 = vld [vmem:[%s8] sm:$0xf]
      %v9228 = vld [vmem:[%s8 + $0x4] sm:$0xf]
      %v9229 = vld [vmem:[%s8 + $0x8] sm:$0xf]
      %v9230 = vld [vmem:[%s8 + $0xc] sm:$0xf]
      %v9231 = vld [vmem:[%s8 + $0x10] sm:$0xf]
      %v9232 = vld [vmem:[%s8 + $0x14] sm:$0xf]
      %v9233 = vld [vmem:[%s8 + $0x18] sm:$0xf]
      %v9234 = vld [vmem:[%s8 + $0x1c] sm:$0xf]
      %v9235 = vld [vmem:[%s8 + $0x20] sm:$0xf]
      %v9236 = vld [vmem:[%s9] sm:$0x1]
      %v9238 = vlaneseq
      %v9239 = vshrl.u32 %v9238, 7
      %v9240 = vsub.s32 0, %v9239
      %v9241 = vrot.slane %v9236, %v9240
      %v9252 = vunpack.c.l.b16 %v9227
      %v9253 = vunpack.c.l.b16 %v9228
      %v9254 = vunpack.c.l.b16 %v9229
      %v9255 = vunpack.c.l.b16 %v9230
      %v9256 = vunpack.c.l.b16 %v9231
      %v9257 = vunpack.c.l.b16 %v9232
      %v9258 = vunpack.c.l.b16 %v9233
      %v9259 = vunpack.c.l.b16 %v9234
      %v9260 = vunpack.c.l.b16 %v9235
      %v9261 = vpack.c.b16 %v9253, %v9252
      %v9262 = vpack.c.b16 %v9255, %v9254
      %v9263 = vpack.c.b16 %v9257, %v9256
      %v9264 = vpack.c.b16 %v9259, %v9258
      %v9265 = vpack.c.b16 %v9260, %v9260
      %vm9270 = vcmask 588800
      %v9272 = vsel %vm9270, %v9223, 0
      %v9275 = vsel %vm9270, %v9224, 0
      %v9278 = vsel %vm9270, %v9225, 0
      %v9281 = vsel %vm9270, %v9226, 0
      %vm9283 = vcmask 1043456
      %v9285 = vsel %vm9283, %v9265, 0
      %9287 = vmatprep.subr.bf16.mxu0 0
      %9288 = vmatpush1.bf16.msra.mxu0 %v9261
      %9289 = vmatprep.subr.bf16.mxu0 0
      %9290 = vmatpush1.bf16.msra.mxu0 %v9262
      %9291 = vmatprep.subr.bf16.mxu0 0
      %9292 = vmatpush1.bf16.msra.mxu0 %v9263
      %9293 = vmatprep.subr.bf16.mxu0 0
      %9294 = vmatpush1.bf16.msra.mxu0 %v9264
      %9295 = vmatprep.subr.bf16.mxu0 0
      %9296 = vmatpush1.bf16.msra.mxu0 %v9285
      %9297 = vmatprep.subr.bf16.mxu0 0
      %9298 = vmatpush1.bf16.msra.mxu0 0
      %9299 = vmatprep.subr.bf16.mxu0 0
      %9300 = vmatpush1.bf16.msra.mxu0 0
      %9301 = vmatprep.subr.bf16.mxu0 0
      %9302 = vmatpush1.bf16.msra.mxu0 0
      %9303 = vmatprep.subr.bf16.mxu0 0
      %9304 = vmatpush1.bf16.msra.mxu0 0
      %9305 = vmatprep.subr.bf16.mxu0 0
      %9306 = vmatpush1.bf16.msra.mxu0 0
      %9307 = vmatprep.subr.bf16.mxu0 0
      %9308 = vmatpush1.bf16.msra.mxu0 0
      %9309 = vmatprep.subr.bf16.mxu0 0
      %9310 = vmatpush1.bf16.msra.mxu0 0
      %9311 = vmatprep.subr.bf16.mxu0 0
      %9312 = vmatpush1.bf16.msra.mxu0 0
      %9313 = vmatprep.subr.bf16.mxu0 0
      %9314 = vmatpush1.bf16.msra.mxu0 0
      %9315 = vmatprep.subr.bf16.mxu0 0
      %9316 = vmatpush1.bf16.msra.mxu0 0
      %9317 = vmatprep.subr.bf16.mxu0 0
      %9318 = vmatpush1.bf16.msra.mxu0 0
      %9319 = vmatprep.mubr.bf16.mxu0 0
      %9320 = vmatmul.mubr.bf16.gmra.mrb[0].mxu0 %v9272
      %v9321 = vpop.f32.mrb[0].mxu0
      %v9322 = vadd.f32 %v9241, %v9321
      %v9323 = vpop.f32.mrb[0].mxu0
      %v9324 = vpop.f32.mrb[0].mxu0
      %v9325 = vadd.f32 %v9241, %v9324
      %v9326 = vpop.f32.mrb[0].mxu0
      %9327 = vmatprep.mubr.bf16.mxu0 0
      %9328 = vmatmul.mubr.bf16.gmra.mrb[0].mxu0 %v9275
      %v9329 = vpop.f32.mrb[0].mxu0
      %v9330 = vadd.f32 %v9241, %v9329
      %v9331 = vpop.f32.mrb[0].mxu0
      %v9332 = vpop.f32.mrb[0].mxu0
      %v9333 = vadd.f32 %v9241, %v9332
      %v9334 = vpop.f32.mrb[0].mxu0
      %9335 = vmatprep.mubr.bf16.mxu0 0
      %9336 = vmatmul.mubr.bf16.gmra.mrb[0].mxu0 %v9278
      %v9337 = vpop.f32.mrb[0].mxu0
      %v9338 = vadd.f32 %v9241, %v9337
      %v9339 = vpop.f32.mrb[0].mxu0
      %v9340 = vpop.f32.mrb[0].mxu0
      %v9341 = vadd.f32 %v9241, %v9340
      %v9342 = vpop.f32.mrb[0].mxu0
      %9343 = vmatprep.mubr.bf16.mxu0 0
      %9344 = vmatmul.mubr.bf16.gmra.mrb[0].mxu0 %v9281
      %v9345 = vpop.f32.mrb[0].mxu0
      %v9346 = vadd.f32 %v9241, %v9345
      %v9347 = vpop.f32.mrb[0].mxu0
      %v9348 = vpop.f32.mrb[0].mxu0
      %v9349 = vadd.f32 %v9241, %v9348
      %v9350 = vpop.f32.mrb[0].mxu0
      %9351 = vdwg.mxu0
      %v9352 = vmax.f32 %v9322, 0.0
      %v9353 = vmax.f32 %v9325, 0.0
      %v9354 = vmax.f32 %v9330, 0.0
      %v9355 = vmax.f32 %v9333, 0.0
      %v9356 = vmax.f32 %v9338, 0.0
      %v9357 = vmax.f32 %v9341, 0.0
      %v9358 = vmax.f32 %v9346, 0.0
      %v9359 = vmax.f32 %v9349, 0.0
      %9360 = vst.msk [vmem:[%s8817 + $0x1] sm:$0xff] %vm2285, %v9352
      %9361 = vst.msk [vmem:[%s8817 + $0x11] sm:$0xff] %vm2285, %v9353
      %9362 = vst.msk [vmem:[%s8817 + $0x21] sm:$0xff] %vm2285, %v9354
      %9363 = vst.msk [vmem:[%s8817 + $0x31] sm:$0xff] %vm2285, %v9355
      %9364 = vst.msk [vmem:[%s8817 + $0x41] sm:$0xff] %vm2285, %v9356
      %9365 = vst.msk [vmem:[%s8817 + $0x51] sm:$0xff] %vm2285, %v9357
      %9366 = vst.msk [vmem:[%s8817 + $0x61] sm:$0xff] %vm2285, %v9358
      %9367 = vst.msk [vmem:[%s8817 + $0x71] sm:$0xff] %vm2285, %v9359
      %v9368 = vld [vmem:[#allocation3] sm:$0xff]
      %v9369 = vld [vmem:[#allocation3 + $0x10] sm:$0xff]
      %v9370 = vld [vmem:[#allocation3 + $0x20] sm:$0xff]
      %v9371 = vld [vmem:[#allocation3 + $0x30] sm:$0xff]
      %v9372 = vld [vmem:[#allocation3 + $0x40] sm:$0xff]
      %v9373 = vld [vmem:[#allocation3 + $0x50] sm:$0xff]
      %v9374 = vld [vmem:[#allocation3 + $0x60] sm:$0xff]
      %v9375 = vld [vmem:[#allocation3 + $0x70] sm:$0xff]
      %v9376 = vld [vmem:[#allocation3 + $0x1] sm:$0xff]
      %v9377 = vld [vmem:[#allocation3 + $0x11] sm:$0xff]
      %v9378 = vld [vmem:[#allocation3 + $0x21] sm:$0xff]
      %v9379 = vld [vmem:[#allocation3 + $0x31] sm:$0xff]
      %v9380 = vld [vmem:[#allocation3 + $0x41] sm:$0xff]
      %v9381 = vld [vmem:[#allocation3 + $0x51] sm:$0xff]
      %v9382 = vld [vmem:[#allocation3 + $0x61] sm:$0xff]
      %v9383 = vld [vmem:[#allocation3 + $0x71] sm:$0xff]
      %v9384 = vld [vmem:[#allocation3 + $0x2] sm:$0xff]
      %v9385 = vld [vmem:[#allocation3 + $0x12] sm:$0xff]
      %v9386 = vld [vmem:[#allocation3 + $0x22] sm:$0xff]
      %v9387 = vld [vmem:[#allocation3 + $0x32] sm:$0xff]
      %v9388 = vld [vmem:[#allocation3 + $0x42] sm:$0xff]
      %v9389 = vld [vmem:[#allocation3 + $0x52] sm:$0xff]
      %v9390 = vld [vmem:[#allocation3 + $0x62] sm:$0xff]
      %v9391 = vld [vmem:[#allocation3 + $0x72] sm:$0xff]
      %v9392 = vld [vmem:[%s8817] sm:$0xff]
      %v9393 = vld [vmem:[%s8817 + $0x10] sm:$0xff]
      %v9394 = vld [vmem:[%s8817 + $0x20] sm:$0xff]
      %v9395 = vld [vmem:[%s8817 + $0x30] sm:$0xff]
      %v9396 = vld [vmem:[%s8817 + $0x40] sm:$0xff]
      %v9397 = vld [vmem:[%s8817 + $0x50] sm:$0xff]
      %v9398 = vld [vmem:[%s8817 + $0x60] sm:$0xff]
      %v9399 = vld [vmem:[%s8817 + $0x70] sm:$0xff]
      %v9400 = vld [vmem:[%s8817 + $0x1] sm:$0xff]
      %v9401 = vld [vmem:[%s8817 + $0x11] sm:$0xff]
      %v9402 = vld [vmem:[%s8817 + $0x21] sm:$0xff]
      %v9403 = vld [vmem:[%s8817 + $0x31] sm:$0xff]
      %v9404 = vld [vmem:[%s8817 + $0x41] sm:$0xff]
      %v9405 = vld [vmem:[%s8817 + $0x51] sm:$0xff]
      %v9406 = vld [vmem:[%s8817 + $0x61] sm:$0xff]
      %v9407 = vld [vmem:[%s8817 + $0x71] sm:$0xff]
      %v9408 = vld [vmem:[%s8817 + $0x2] sm:$0xff]
      %v9409 = vld [vmem:[%s8817 + $0x12] sm:$0xff]
      %v9410 = vld [vmem:[%s8817 + $0x22] sm:$0xff]
      %v9411 = vld [vmem:[%s8817 + $0x32] sm:$0xff]
      %v9412 = vld [vmem:[%s8817 + $0x42] sm:$0xff]
      %v9413 = vld [vmem:[%s8817 + $0x52] sm:$0xff]
      %v9414 = vld [vmem:[%s8817 + $0x62] sm:$0xff]
      %v9415 = vld [vmem:[%s8817 + $0x72] sm:$0xff]
      %v9416 = vld [vmem:[%s8874] sm:$0xff]
      %v9417 = vld [vmem:[%s8874 + $0x10] sm:$0xff]
      %v9418 = vld [vmem:[%s8874 + $0x20] sm:$0xff]
      %v9419 = vld [vmem:[%s8874 + $0x30] sm:$0xff]
      %v9420 = vld [vmem:[%s8874 + $0x40] sm:$0xff]
      %v9421 = vld [vmem:[%s8874 + $0x50] sm:$0xff]
      %v9422 = vld [vmem:[%s8874 + $0x60] sm:$0xff]
      %v9423 = vld [vmem:[%s8874 + $0x70] sm:$0xff]
      %v9424 = vld [vmem:[%s8874 + $0x1] sm:$0xff]
      %v9425 = vld [vmem:[%s8874 + $0x11] sm:$0xff]
      %v9426 = vld [vmem:[%s8874 + $0x21] sm:$0xff]
      %v9427 = vld [vmem:[%s8874 + $0x31] sm:$0xff]
      %v9428 = vld [vmem:[%s8874 + $0x41] sm:$0xff]
      %v9429 = vld [vmem:[%s8874 + $0x51] sm:$0xff]
      %v9430 = vld [vmem:[%s8874 + $0x61] sm:$0xff]
      %v9431 = vld [vmem:[%s8874 + $0x71] sm:$0xff]
      %v9432 = vld [vmem:[%s8874 + $0x2] sm:$0xff]
      %v9433 = vld [vmem:[%s8874 + $0x12] sm:$0xff]
      %v9434 = vld [vmem:[%s8874 + $0x22] sm:$0xff]
      %v9435 = vld [vmem:[%s8874 + $0x32] sm:$0xff]
      %v9436 = vld [vmem:[%s8874 + $0x42] sm:$0xff]
      %v9437 = vld [vmem:[%s8874 + $0x52] sm:$0xff]
      %v9438 = vld [vmem:[%s8874 + $0x62] sm:$0xff]
      %v9439 = vld [vmem:[%s8874 + $0x72] sm:$0xff]
      %9448 = vrot.lane.b32.xlu0 %v9376, 8
      %v9449 = vpop.permute.xlu0 %9448
      %9450 = vrot.lane.b32.xlu0 %v9377, 8
      %v9451 = vpop.permute.xlu0 %9450
      %9452 = vrot.lane.b32.xlu0 %v9378, 8
      %v9453 = vpop.permute.xlu0 %9452
      %9454 = vrot.lane.b32.xlu0 %v9379, 8
      %v9455 = vpop.permute.xlu0 %9454
      %9456 = vrot.lane.b32.xlu0 %v9380, 8
      %v9457 = vpop.permute.xlu0 %9456
      %9458 = vrot.lane.b32.xlu0 %v9381, 8
      %v9459 = vpop.permute.xlu0 %9458
      %9460 = vrot.lane.b32.xlu0 %v9382, 8
      %v9461 = vpop.permute.xlu0 %9460
      %9462 = vrot.lane.b32.xlu0 %v9383, 8
      %v9463 = vpop.permute.xlu0 %9462
      %9480 = vrot.lane.b32.xlu0 %v9384, 16
      %v9481 = vpop.permute.xlu0 %9480
      %9482 = vrot.lane.b32.xlu0 %v9385, 16
      %v9483 = vpop.permute.xlu0 %9482
      %9484 = vrot.lane.b32.xlu0 %v9386, 16
      %v9485 = vpop.permute.xlu0 %9484
      %9486 = vrot.lane.b32.xlu0 %v9387, 16
      %v9487 = vpop.permute.xlu0 %9486
      %9488 = vrot.lane.b32.xlu0 %v9388, 16
      %v9489 = vpop.permute.xlu0 %9488
      %9490 = vrot.lane.b32.xlu0 %v9389, 16
      %v9491 = vpop.permute.xlu0 %9490
      %9492 = vrot.lane.b32.xlu0 %v9390, 16
      %v9493 = vpop.permute.xlu0 %9492
      %9494 = vrot.lane.b32.xlu0 %v9391, 16
      %v9495 = vpop.permute.xlu0 %9494
      %9512 = vrot.lane.b32.xlu0 %v9392, 24
      %v9513 = vpop.permute.xlu0 %9512
      %9514 = vrot.lane.b32.xlu0 %v9393, 24
      %v9515 = vpop.permute.xlu0 %9514
      %9516 = vrot.lane.b32.xlu0 %v9394, 24
      %v9517 = vpop.permute.xlu0 %9516
      %9518 = vrot.lane.b32.xlu0 %v9395, 24
      %v9519 = vpop.permute.xlu0 %9518
      %9520 = vrot.lane.b32.xlu0 %v9396, 24
      %v9521 = vpop.permute.xlu0 %9520
      %9522 = vrot.lane.b32.xlu0 %v9397, 24
      %v9523 = vpop.permute.xlu0 %9522
      %9524 = vrot.lane.b32.xlu0 %v9398, 24
      %v9525 = vpop.permute.xlu0 %9524
      %9526 = vrot.lane.b32.xlu0 %v9399, 24
      %v9527 = vpop.permute.xlu0 %9526
      %9544 = vrot.lane.b32.xlu0 %v9400, 32
      %v9545 = vpop.permute.xlu0 %9544
      %9546 = vrot.lane.b32.xlu0 %v9401, 32
      %v9547 = vpop.permute.xlu0 %9546
      %9548 = vrot.lane.b32.xlu0 %v9402, 32
      %v9549 = vpop.permute.xlu0 %9548
      %9550 = vrot.lane.b32.xlu0 %v9403, 32
      %v9551 = vpop.permute.xlu0 %9550
      %9552 = vrot.lane.b32.xlu0 %v9404, 32
      %v9553 = vpop.permute.xlu0 %9552
      %9554 = vrot.lane.b32.xlu0 %v9405, 32
      %v9555 = vpop.permute.xlu0 %9554
      %9556 = vrot.lane.b32.xlu0 %v9406, 32
      %v9557 = vpop.permute.xlu0 %9556
      %9558 = vrot.lane.b32.xlu0 %v9407, 32
      %v9559 = vpop.permute.xlu0 %9558
      %9576 = vrot.lane.b32.xlu0 %v9408, 40
      %v9577 = vpop.permute.xlu0 %9576
      %9578 = vrot.lane.b32.xlu0 %v9409, 40
      %v9579 = vpop.permute.xlu0 %9578
      %9580 = vrot.lane.b32.xlu0 %v9410, 40
      %v9581 = vpop.permute.xlu0 %9580
      %9582 = vrot.lane.b32.xlu0 %v9411, 40
      %v9583 = vpop.permute.xlu0 %9582
      %9584 = vrot.lane.b32.xlu0 %v9412, 40
      %v9585 = vpop.permute.xlu0 %9584
      %9586 = vrot.lane.b32.xlu0 %v9413, 40
      %v9587 = vpop.permute.xlu0 %9586
      %9588 = vrot.lane.b32.xlu0 %v9414, 40
      %v9589 = vpop.permute.xlu0 %9588
      %9590 = vrot.lane.b32.xlu0 %v9415, 40
      %v9591 = vpop.permute.xlu0 %9590
      %9608 = vrot.lane.b32.xlu0 %v9416, 48
      %v9609 = vpop.permute.xlu0 %9608
      %9610 = vrot.lane.b32.xlu0 %v9417, 48
      %v9611 = vpop.permute.xlu0 %9610
      %9612 = vrot.lane.b32.xlu0 %v9418, 48
      %v9613 = vpop.permute.xlu0 %9612
      %9614 = vrot.lane.b32.xlu0 %v9419, 48
      %v9615 = vpop.permute.xlu0 %9614
      %9616 = vrot.lane.b32.xlu0 %v9420, 48
      %v9617 = vpop.permute.xlu0 %9616
      %9618 = vrot.lane.b32.xlu0 %v9421, 48
      %v9619 = vpop.permute.xlu0 %9618
      %9620 = vrot.lane.b32.xlu0 %v9422, 48
      %v9621 = vpop.permute.xlu0 %9620
      %9622 = vrot.lane.b32.xlu0 %v9423, 48
      %v9623 = vpop.permute.xlu0 %9622
      %9640 = vrot.lane.b32.xlu0 %v9424, 56
      %v9641 = vpop.permute.xlu0 %9640
      %9642 = vrot.lane.b32.xlu0 %v9425, 56
      %v9643 = vpop.permute.xlu0 %9642
      %9644 = vrot.lane.b32.xlu0 %v9426, 56
      %v9645 = vpop.permute.xlu0 %9644
      %9646 = vrot.lane.b32.xlu0 %v9427, 56
      %v9647 = vpop.permute.xlu0 %9646
      %9648 = vrot.lane.b32.xlu0 %v9428, 56
      %v9649 = vpop.permute.xlu0 %9648
      %9650 = vrot.lane.b32.xlu0 %v9429, 56
      %v9651 = vpop.permute.xlu0 %9650
      %9652 = vrot.lane.b32.xlu0 %v9430, 56
      %v9653 = vpop.permute.xlu0 %9652
      %9654 = vrot.lane.b32.xlu0 %v9431, 56
      %v9655 = vpop.permute.xlu0 %9654
      %9672 = vrot.lane.b32.xlu0 %v9432, 64
      %v9673 = vpop.permute.xlu0 %9672
      %9674 = vrot.lane.b32.xlu0 %v9433, 64
      %v9675 = vpop.permute.xlu0 %9674
      %9676 = vrot.lane.b32.xlu0 %v9434, 64
      %v9677 = vpop.permute.xlu0 %9676
      %9678 = vrot.lane.b32.xlu0 %v9435, 64
      %v9679 = vpop.permute.xlu0 %9678
      %9680 = vrot.lane.b32.xlu0 %v9436, 64
      %v9681 = vpop.permute.xlu0 %9680
      %9682 = vrot.lane.b32.xlu0 %v9437, 64
      %v9683 = vpop.permute.xlu0 %9682
      %9684 = vrot.lane.b32.xlu0 %v9438, 64
      %v9685 = vpop.permute.xlu0 %9684
      %9686 = vrot.lane.b32.xlu0 %v9439, 64
      %v9687 = vpop.permute.xlu0 %9686
      %v9696 = vsel %vm2285, %v9368, %v9449
      %v9697 = vsel %vm2285, %v9369, %v9451
      %v9698 = vsel %vm2285, %v9370, %v9453
      %v9699 = vsel %vm2285, %v9371, %v9455
      %v9700 = vsel %vm2285, %v9372, %v9457
      %v9701 = vsel %vm2285, %v9373, %v9459
      %v9702 = vsel %vm2285, %v9374, %v9461
      %v9703 = vsel %vm2285, %v9375, %v9463
      %v9704 = vsel %vm2351, %v9696, %v9481
      %v9705 = vsel %vm2351, %v9697, %v9483
      %v9706 = vsel %vm2351, %v9698, %v9485
      %v9707 = vsel %vm2351, %v9699, %v9487
      %v9708 = vsel %vm2351, %v9700, %v9489
      %v9709 = vsel %vm2351, %v9701, %v9491
      %v9710 = vsel %vm2351, %v9702, %v9493
      %v9711 = vsel %vm2351, %v9703, %v9495
      %v9712 = vsel %vm2417, %v9704, %v9513
      %v9713 = vsel %vm2417, %v9705, %v9515
      %v9714 = vsel %vm2417, %v9706, %v9517
      %v9715 = vsel %vm2417, %v9707, %v9519
      %v9716 = vsel %vm2417, %v9708, %v9521
      %v9717 = vsel %vm2417, %v9709, %v9523
      %v9718 = vsel %vm2417, %v9710, %v9525
      %v9719 = vsel %vm2417, %v9711, %v9527
      %v9720 = vsel %vm2483, %v9712, %v9545
      %v9721 = vsel %vm2483, %v9713, %v9547
      %v9722 = vsel %vm2483, %v9714, %v9549
      %v9723 = vsel %vm2483, %v9715, %v9551
      %v9724 = vsel %vm2483, %v9716, %v9553
      %v9725 = vsel %vm2483, %v9717, %v9555
      %v9726 = vsel %vm2483, %v9718, %v9557
      %v9727 = vsel %vm2483, %v9719, %v9559
      %v9728 = vsel %vm9187, %v9720, %v9577
      %v9729 = vsel %vm9187, %v9721, %v9579
      %v9730 = vsel %vm9187, %v9722, %v9581
      %v9731 = vsel %vm9187, %v9723, %v9583
      %v9732 = vsel %vm9187, %v9724, %v9585
      %v9733 = vsel %vm9187, %v9725, %v9587
      %v9734 = vsel %vm9187, %v9726, %v9589
      %v9735 = vsel %vm9187, %v9727, %v9591
      %v9736 = vsel %vm9196, %v9728, %v9609
      %v9737 = vsel %vm9196, %v9729, %v9611
      %v9738 = vsel %vm9196, %v9730, %v9613
      %v9739 = vsel %vm9196, %v9731, %v9615
      %v9740 = vsel %vm9196, %v9732, %v9617
      %v9741 = vsel %vm9196, %v9733, %v9619
      %v9742 = vsel %vm9196, %v9734, %v9621
      %v9743 = vsel %vm9196, %v9735, %v9623
      %v9744 = vsel %vm9205, %v9736, %v9641
      %v9745 = vsel %vm9205, %v9737, %v9643
      %v9746 = vsel %vm9205, %v9738, %v9645
      %v9747 = vsel %vm9205, %v9739, %v9647
      %v9748 = vsel %vm9205, %v9740, %v9649
      %v9749 = vsel %vm9205, %v9741, %v9651
      %v9750 = vsel %vm9205, %v9742, %v9653
      %v9751 = vsel %vm9205, %v9743, %v9655
      %v9752 = vsel %vm9214, %v9744, %v9673
      %v9753 = vsel %vm9214, %v9745, %v9675
      %v9754 = vsel %vm9214, %v9746, %v9677
      %v9755 = vsel %vm9214, %v9747, %v9679
      %v9756 = vsel %vm9214, %v9748, %v9681
      %v9757 = vsel %vm9214, %v9749, %v9683
      %v9758 = vsel %vm9214, %v9750, %v9685
      %v9759 = vsel %vm9214, %v9751, %v9687
      %v9760 = vpack.c.bf16 %v9753, %v9752
      %v9761 = vpack.c.bf16 %v9755, %v9754
      %v9762 = vpack.c.bf16 %v9757, %v9756
      %v9763 = vpack.c.bf16 %v9759, %v9758
      %s9764 = scalar_lea.vmem %s8, 36
      %v9765 = vld [vmem:[%s9764] sm:$0xf]
      %v9766 = vld [vmem:[%s9764 + $0x4] sm:$0xf]
      %v9767 = vld [vmem:[%s9764 + $0x8] sm:$0xf]
      %v9768 = vld [vmem:[%s9764 + $0xc] sm:$0xf]
      %v9769 = vld [vmem:[%s9764 + $0x10] sm:$0xf]
      %v9770 = vld [vmem:[%s9764 + $0x14] sm:$0xf]
      %v9771 = vld [vmem:[%s9764 + $0x18] sm:$0xf]
      %v9772 = vld [vmem:[%s9764 + $0x1c] sm:$0xf]
      %v9773 = vld [vmem:[%s9764 + $0x20] sm:$0xf]
      %s9774 = scalar_lea.vmem %s9, 1
      %v9775 = vld [vmem:[%s9774] sm:$0x1]
      %v9777 = vlaneseq
      %v9778 = vshrl.u32 %v9777, 7
      %v9779 = vsub.s32 0, %v9778
      %v9780 = vrot.slane %v9775, %v9779
      %v9791 = vunpack.c.l.b16 %v9765
      %v9792 = vunpack.c.l.b16 %v9766
      %v9793 = vunpack.c.l.b16 %v9767
      %v9794 = vunpack.c.l.b16 %v9768
      %v9795 = vunpack.c.l.b16 %v9769
      %v9796 = vunpack.c.l.b16 %v9770
      %v9797 = vunpack.c.l.b16 %v9771
      %v9798 = vunpack.c.l.b16 %v9772
      %v9799 = vunpack.c.l.b16 %v9773
      %v9800 = vpack.c.b16 %v9792, %v9791
      %v9801 = vpack.c.b16 %v9794, %v9793
      %v9802 = vpack.c.b16 %v9796, %v9795
      %v9803 = vpack.c.b16 %v9798, %v9797
      %v9804 = vpack.c.b16 %v9799, %v9799
      %v9810 = vsel %vm9270, %v9760, 0
      %v9813 = vsel %vm9270, %v9761, 0
      %v9816 = vsel %vm9270, %v9762, 0
      %v9819 = vsel %vm9270, %v9763, 0
      %v9822 = vsel %vm9283, %v9804, 0
      %9824 = vmatprep.subr.bf16.mxu0 0
      %9825 = vmatpush1.bf16.msra.mxu0 %v9800
      %9826 = vmatprep.subr.bf16.mxu0 0
      %9827 = vmatpush1.bf16.msra.mxu0 %v9801
      %9828 = vmatprep.subr.bf16.mxu0 0
      %9829 = vmatpush1.bf16.msra.mxu0 %v9802
      %9830 = vmatprep.subr.bf16.mxu0 0
      %9831 = vmatpush1.bf16.msra.mxu0 %v9803
      %9832 = vmatprep.subr.bf16.mxu0 0
      %9833 = vmatpush1.bf16.msra.mxu0 %v9822
      %9834 = vmatprep.subr.bf16.mxu0 0
      %9835 = vmatpush1.bf16.msra.mxu0 0
      %9836 = vmatprep.subr.bf16.mxu0 0
      %9837 = vmatpush1.bf16.msra.mxu0 0
      %9838 = vmatprep.subr.bf16.mxu0 0
      %9839 = vmatpush1.bf16.msra.mxu0 0
      %9840 = vmatprep.subr.bf16.mxu0 0
      %9841 = vmatpush1.bf16.msra.mxu0 0
      %9842 = vmatprep.subr.bf16.mxu0 0
      %9843 = vmatpush1.bf16.msra.mxu0 0
      %9844 = vmatprep.subr.bf16.mxu0 0
      %9845 = vmatpush1.bf16.msra.mxu0 0
      %9846 = vmatprep.subr.bf16.mxu0 0
      %9847 = vmatpush1.bf16.msra.mxu0 0
      %9848 = vmatprep.subr.bf16.mxu0 0
      %9849 = vmatpush1.bf16.msra.mxu0 0
      %9850 = vmatprep.subr.bf16.mxu0 0
      %9851 = vmatpush1.bf16.msra.mxu0 0
      %9852 = vmatprep.subr.bf16.mxu0 0
      %9853 = vmatpush1.bf16.msra.mxu0 0
      %9854 = vmatprep.subr.bf16.mxu0 0
      %9855 = vmatpush1.bf16.msra.mxu0 0
      %9856 = vmatprep.mubr.bf16.mxu0 0
      %9857 = vmatmul.mubr.bf16.gmra.mrb[0].mxu0 %v9810
      %v9858 = vpop.f32.mrb[0].mxu0
      %v9859 = vadd.f32 %v9780, %v9858
      %v9860 = vpop.f32.mrb[0].mxu0
      %v9861 = vpop.f32.mrb[0].mxu0
      %v9862 = vadd.f32 %v9780, %v9861
      %v9863 = vpop.f32.mrb[0].mxu0
      %9864 = vmatprep.mubr.bf16.mxu0 0
      %9865 = vmatmul.mubr.bf16.gmra.mrb[0].mxu0 %v9813
      %v9866 = vpop.f32.mrb[0].mxu0
      %v9867 = vadd.f32 %v9780, %v9866
      %v9868 = vpop.f32.mrb[0].mxu0
      %v9869 = vpop.f32.mrb[0].mxu0
      %v9870 = vadd.f32 %v9780, %v9869
      %v9871 = vpop.f32.mrb[0].mxu0
      %9872 = vmatprep.mubr.bf16.mxu0 0
      %9873 = vmatmul.mubr.bf16.gmra.mrb[0].mxu0 %v9816
      %v9874 = vpop.f32.mrb[0].mxu0
      %v9875 = vadd.f32 %v9780, %v9874
      %v9876 = vpop.f32.mrb[0].mxu0
      %v9877 = vpop.f32.mrb[0].mxu0
      %v9878 = vadd.f32 %v9780, %v9877
      %v9879 = vpop.f32.mrb[0].mxu0
      %9880 = vmatprep.mubr.bf16.mxu0 0
      %9881 = vmatmul.mubr.bf16.gmra.mrb[0].mxu0 %v9819
      %v9882 = vpop.f32.mrb[0].mxu0
      %v9883 = vadd.f32 %v9780, %v9882
      %v9884 = vpop.f32.mrb[0].mxu0
      %v9885 = vpop.f32.mrb[0].mxu0
      %v9886 = vadd.f32 %v9780, %v9885
      %v9887 = vpop.f32.mrb[0].mxu0
      %9888 = vdwg.mxu0
      %v9889 = vmax.f32 %v9859, 0.0
      %v9890 = vmax.f32 %v9862, 0.0
      %v9891 = vmax.f32 %v9867, 0.0
      %v9892 = vmax.f32 %v9870, 0.0
      %v9893 = vmax.f32 %v9875, 0.0
      %v9894 = vmax.f32 %v9878, 0.0
      %v9895 = vmax.f32 %v9883, 0.0
      %v9896 = vmax.f32 %v9886, 0.0
      %9897 = vst.msk [vmem:[%s8817 + $0x1] sm:$0xff] %vm2285, %v9889
      %9898 = vst.msk [vmem:[%s8817 + $0x11] sm:$0xff] %vm2285, %v9890
      %9899 = vst.msk [vmem:[%s8817 + $0x21] sm:$0xff] %vm2285, %v9891
      %9900 = vst.msk [vmem:[%s8817 + $0x31] sm:$0xff] %vm2285, %v9892
      %9901 = vst.msk [vmem:[%s8817 + $0x41] sm:$0xff] %vm2285, %v9893
      %9902 = vst.msk [vmem:[%s8817 + $0x51] sm:$0xff] %vm2285, %v9894
      %9903 = vst.msk [vmem:[%s8817 + $0x61] sm:$0xff] %vm2285, %v9895
      %9904 = vst.msk [vmem:[%s8817 + $0x71] sm:$0xff] %vm2285, %v9896
      %v9905 = vld [vmem:[#allocation3] sm:$0xff]
      %v9906 = vld [vmem:[#allocation3 + $0x10] sm:$0xff]
      %v9907 = vld [vmem:[#allocation3 + $0x20] sm:$0xff]
      %v9908 = vld [vmem:[#allocation3 + $0x30] sm:$0xff]
      %v9909 = vld [vmem:[#allocation3 + $0x40] sm:$0xff]
      %v9910 = vld [vmem:[#allocation3 + $0x50] sm:$0xff]
      %v9911 = vld [vmem:[#allocation3 + $0x60] sm:$0xff]
      %v9912 = vld [vmem:[#allocation3 + $0x70] sm:$0xff]
      %v9913 = vld [vmem:[#allocation3 + $0x1] sm:$0xff]
      %v9914 = vld [vmem:[#allocation3 + $0x11] sm:$0xff]
      %v9915 = vld [vmem:[#allocation3 + $0x21] sm:$0xff]
      %v9916 = vld [vmem:[#allocation3 + $0x31] sm:$0xff]
      %v9917 = vld [vmem:[#allocation3 + $0x41] sm:$0xff]
      %v9918 = vld [vmem:[#allocation3 + $0x51] sm:$0xff]
      %v9919 = vld [vmem:[#allocation3 + $0x61] sm:$0xff]
      %v9920 = vld [vmem:[#allocation3 + $0x71] sm:$0xff]
      %v9921 = vld [vmem:[#allocation3 + $0x2] sm:$0xff]
      %v9922 = vld [vmem:[#allocation3 + $0x12] sm:$0xff]
      %v9923 = vld [vmem:[#allocation3 + $0x22] sm:$0xff]
      %v9924 = vld [vmem:[#allocation3 + $0x32] sm:$0xff]
      %v9925 = vld [vmem:[#allocation3 + $0x42] sm:$0xff]
      %v9926 = vld [vmem:[#allocation3 + $0x52] sm:$0xff]
      %v9927 = vld [vmem:[#allocation3 + $0x62] sm:$0xff]
      %v9928 = vld [vmem:[#allocation3 + $0x72] sm:$0xff]
      %v9929 = vld [vmem:[%s8817] sm:$0xff]
      %v9930 = vld [vmem:[%s8817 + $0x10] sm:$0xff]
      %v9931 = vld [vmem:[%s8817 + $0x20] sm:$0xff]
      %v9932 = vld [vmem:[%s8817 + $0x30] sm:$0xff]
      %v9933 = vld [vmem:[%s8817 + $0x40] sm:$0xff]
      %v9934 = vld [vmem:[%s8817 + $0x50] sm:$0xff]
      %v9935 = vld [vmem:[%s8817 + $0x60] sm:$0xff]
      %v9936 = vld [vmem:[%s8817 + $0x70] sm:$0xff]
      %v9937 = vld [vmem:[%s8817 + $0x1] sm:$0xff]
      %v9938 = vld [vmem:[%s8817 + $0x11] sm:$0xff]
      %v9939 = vld [vmem:[%s8817 + $0x21] sm:$0xff]
      %v9940 = vld [vmem:[%s8817 + $0x31] sm:$0xff]
      %v9941 = vld [vmem:[%s8817 + $0x41] sm:$0xff]
      %v9942 = vld [vmem:[%s8817 + $0x51] sm:$0xff]
      %v9943 = vld [vmem:[%s8817 + $0x61] sm:$0xff]
      %v9944 = vld [vmem:[%s8817 + $0x71] sm:$0xff]
      %v9945 = vld [vmem:[%s8817 + $0x2] sm:$0xff]
      %v9946 = vld [vmem:[%s8817 + $0x12] sm:$0xff]
      %v9947 = vld [vmem:[%s8817 + $0x22] sm:$0xff]
      %v9948 = vld [vmem:[%s8817 + $0x32] sm:$0xff]
      %v9949 = vld [vmem:[%s8817 + $0x42] sm:$0xff]
      %v9950 = vld [vmem:[%s8817 + $0x52] sm:$0xff]
      %v9951 = vld [vmem:[%s8817 + $0x62] sm:$0xff]
      %v9952 = vld [vmem:[%s8817 + $0x72] sm:$0xff]
      %v9953 = vld [vmem:[%s8874] sm:$0xff]
      %v9954 = vld [vmem:[%s8874 + $0x10] sm:$0xff]
      %v9955 = vld [vmem:[%s8874 + $0x20] sm:$0xff]
      %v9956 = vld [vmem:[%s8874 + $0x30] sm:$0xff]
      %v9957 = vld [vmem:[%s8874 + $0x40] sm:$0xff]
      %v9958 = vld [vmem:[%s8874 + $0x50] sm:$0xff]
      %v9959 = vld [vmem:[%s8874 + $0x60] sm:$0xff]
      %v9960 = vld [vmem:[%s8874 + $0x70] sm:$0xff]
      %v9961 = vld [vmem:[%s8874 + $0x1] sm:$0xff]
      %v9962 = vld [vmem:[%s8874 + $0x11] sm:$0xff]
      %v9963 = vld [vmem:[%s8874 + $0x21] sm:$0xff]
      %v9964 = vld [vmem:[%s8874 + $0x31] sm:$0xff]
      %v9965 = vld [vmem:[%s8874 + $0x41] sm:$0xff]
      %v9966 = vld [vmem:[%s8874 + $0x51] sm:$0xff]
      %v9967 = vld [vmem:[%s8874 + $0x61] sm:$0xff]
      %v9968 = vld [vmem:[%s8874 + $0x71] sm:$0xff]
      %v9969 = vld [vmem:[%s8874 + $0x2] sm:$0xff]
      %v9970 = vld [vmem:[%s8874 + $0x12] sm:$0xff]
      %v9971 = vld [vmem:[%s8874 + $0x22] sm:$0xff]
      %v9972 = vld [vmem:[%s8874 + $0x32] sm:$0xff]
      %v9973 = vld [vmem:[%s8874 + $0x42] sm:$0xff]
      %v9974 = vld [vmem:[%s8874 + $0x52] sm:$0xff]
      %v9975 = vld [vmem:[%s8874 + $0x62] sm:$0xff]
      %v9976 = vld [vmem:[%s8874 + $0x72] sm:$0xff]
      %9985 = vrot.lane.b32.xlu0 %v9913, 8
      %v9986 = vpop.permute.xlu0 %9985
      %9987 = vrot.lane.b32.xlu0 %v9914, 8
      %v9988 = vpop.permute.xlu0 %9987
      %9989 = vrot.lane.b32.xlu0 %v9915, 8
      %v9990 = vpop.permute.xlu0 %9989
      %9991 = vrot.lane.b32.xlu0 %v9916, 8
      %v9992 = vpop.permute.xlu0 %9991
      %9993 = vrot.lane.b32.xlu0 %v9917, 8
      %v9994 = vpop.permute.xlu0 %9993
      %9995 = vrot.lane.b32.xlu0 %v9918, 8
      %v9996 = vpop.permute.xlu0 %9995
      %9997 = vrot.lane.b32.xlu0 %v9919, 8
      %v9998 = vpop.permute.xlu0 %9997
      %9999 = vrot.lane.b32.xlu0 %v9920, 8
      %v10000 = vpop.permute.xlu0 %9999
      %10017 = vrot.lane.b32.xlu0 %v9921, 16
      %v10018 = vpop.permute.xlu0 %10017
      %10019 = vrot.lane.b32.xlu0 %v9922, 16
      %v10020 = vpop.permute.xlu0 %10019
      %10021 = vrot.lane.b32.xlu0 %v9923, 16
      %v10022 = vpop.permute.xlu0 %10021
      %10023 = vrot.lane.b32.xlu0 %v9924, 16
      %v10024 = vpop.permute.xlu0 %10023
      %10025 = vrot.lane.b32.xlu0 %v9925, 16
      %v10026 = vpop.permute.xlu0 %10025
      %10027 = vrot.lane.b32.xlu0 %v9926, 16
      %v10028 = vpop.permute.xlu0 %10027
      %10029 = vrot.lane.b32.xlu0 %v9927, 16
      %v10030 = vpop.permute.xlu0 %10029
      %10031 = vrot.lane.b32.xlu0 %v9928, 16
      %v10032 = vpop.permute.xlu0 %10031
      %10049 = vrot.lane.b32.xlu0 %v9929, 24
      %v10050 = vpop.permute.xlu0 %10049
      %10051 = vrot.lane.b32.xlu0 %v9930, 24
      %v10052 = vpop.permute.xlu0 %10051
      %10053 = vrot.lane.b32.xlu0 %v9931, 24
      %v10054 = vpop.permute.xlu0 %10053
      %10055 = vrot.lane.b32.xlu0 %v9932, 24
      %v10056 = vpop.permute.xlu0 %10055
      %10057 = vrot.lane.b32.xlu0 %v9933, 24
      %v10058 = vpop.permute.xlu0 %10057
      %10059 = vrot.lane.b32.xlu0 %v9934, 24
      %v10060 = vpop.permute.xlu0 %10059
      %10061 = vrot.lane.b32.xlu0 %v9935, 24
      %v10062 = vpop.permute.xlu0 %10061
      %10063 = vrot.lane.b32.xlu0 %v9936, 24
      %v10064 = vpop.permute.xlu0 %10063
      %10081 = vrot.lane.b32.xlu0 %v9937, 32
      %v10082 = vpop.permute.xlu0 %10081
      %10083 = vrot.lane.b32.xlu0 %v9938, 32
      %v10084 = vpop.permute.xlu0 %10083
      %10085 = vrot.lane.b32.xlu0 %v9939, 32
      %v10086 = vpop.permute.xlu0 %10085
      %10087 = vrot.lane.b32.xlu0 %v9940, 32
      %v10088 = vpop.permute.xlu0 %10087
      %10089 = vrot.lane.b32.xlu0 %v9941, 32
      %v10090 = vpop.permute.xlu0 %10089
      %10091 = vrot.lane.b32.xlu0 %v9942, 32
      %v10092 = vpop.permute.xlu0 %10091
      %10093 = vrot.lane.b32.xlu0 %v9943, 32
      %v10094 = vpop.permute.xlu0 %10093
      %10095 = vrot.lane.b32.xlu0 %v9944, 32
      %v10096 = vpop.permute.xlu0 %10095
      %10113 = vrot.lane.b32.xlu0 %v9945, 40
      %v10114 = vpop.permute.xlu0 %10113
      %10115 = vrot.lane.b32.xlu0 %v9946, 40
      %v10116 = vpop.permute.xlu0 %10115
      %10117 = vrot.lane.b32.xlu0 %v9947, 40
      %v10118 = vpop.permute.xlu0 %10117
      %10119 = vrot.lane.b32.xlu0 %v9948, 40
      %v10120 = vpop.permute.xlu0 %10119
      %10121 = vrot.lane.b32.xlu0 %v9949, 40
      %v10122 = vpop.permute.xlu0 %10121
      %10123 = vrot.lane.b32.xlu0 %v9950, 40
      %v10124 = vpop.permute.xlu0 %10123
      %10125 = vrot.lane.b32.xlu0 %v9951, 40
      %v10126 = vpop.permute.xlu0 %10125
      %10127 = vrot.lane.b32.xlu0 %v9952, 40
      %v10128 = vpop.permute.xlu0 %10127
      %10145 = vrot.lane.b32.xlu0 %v9953, 48
      %v10146 = vpop.permute.xlu0 %10145
      %10147 = vrot.lane.b32.xlu0 %v9954, 48
      %v10148 = vpop.permute.xlu0 %10147
      %10149 = vrot.lane.b32.xlu0 %v9955, 48
      %v10150 = vpop.permute.xlu0 %10149
      %10151 = vrot.lane.b32.xlu0 %v9956, 48
      %v10152 = vpop.permute.xlu0 %10151
      %10153 = vrot.lane.b32.xlu0 %v9957, 48
      %v10154 = vpop.permute.xlu0 %10153
      %10155 = vrot.lane.b32.xlu0 %v9958, 48
      %v10156 = vpop.permute.xlu0 %10155
      %10157 = vrot.lane.b32.xlu0 %v9959, 48
      %v10158 = vpop.permute.xlu0 %10157
      %10159 = vrot.lane.b32.xlu0 %v9960, 48
      %v10160 = vpop.permute.xlu0 %10159
      %10177 = vrot.lane.b32.xlu0 %v9961, 56
      %v10178 = vpop.permute.xlu0 %10177
      %10179 = vrot.lane.b32.xlu0 %v9962, 56
      %v10180 = vpop.permute.xlu0 %10179
      %10181 = vrot.lane.b32.xlu0 %v9963, 56
      %v10182 = vpop.permute.xlu0 %10181
      %10183 = vrot.lane.b32.xlu0 %v9964, 56
      %v10184 = vpop.permute.xlu0 %10183
      %10185 = vrot.lane.b32.xlu0 %v9965, 56
      %v10186 = vpop.permute.xlu0 %10185
      %10187 = vrot.lane.b32.xlu0 %v9966, 56
      %v10188 = vpop.permute.xlu0 %10187
      %10189 = vrot.lane.b32.xlu0 %v9967, 56
      %v10190 = vpop.permute.xlu0 %10189
      %10191 = vrot.lane.b32.xlu0 %v9968, 56
      %v10192 = vpop.permute.xlu0 %10191
      %10209 = vrot.lane.b32.xlu0 %v9969, 64
      %v10210 = vpop.permute.xlu0 %10209
      %10211 = vrot.lane.b32.xlu0 %v9970, 64
      %v10212 = vpop.permute.xlu0 %10211
      %10213 = vrot.lane.b32.xlu0 %v9971, 64
      %v10214 = vpop.permute.xlu0 %10213
      %10215 = vrot.lane.b32.xlu0 %v9972, 64
      %v10216 = vpop.permute.xlu0 %10215
      %10217 = vrot.lane.b32.xlu0 %v9973, 64
      %v10218 = vpop.permute.xlu0 %10217
      %10219 = vrot.lane.b32.xlu0 %v9974, 64
      %v10220 = vpop.permute.xlu0 %10219
      %10221 = vrot.lane.b32.xlu0 %v9975, 64
      %v10222 = vpop.permute.xlu0 %10221
      %10223 = vrot.lane.b32.xlu0 %v9976, 64
      %v10224 = vpop.permute.xlu0 %10223
      %v10233 = vsel %vm2285, %v9905, %v9986
      %v10234 = vsel %vm2285, %v9906, %v9988
      %v10235 = vsel %vm2285, %v9907, %v9990
      %v10236 = vsel %vm2285, %v9908, %v9992
      %v10237 = vsel %vm2285, %v9909, %v9994
      %v10238 = vsel %vm2285, %v9910, %v9996
      %v10239 = vsel %vm2285, %v9911, %v9998
      %v10240 = vsel %vm2285, %v9912, %v10000
      %v10241 = vsel %vm2351, %v10233, %v10018
      %v10242 = vsel %vm2351, %v10234, %v10020
      %v10243 = vsel %vm2351, %v10235, %v10022
      %v10244 = vsel %vm2351, %v10236, %v10024
      %v10245 = vsel %vm2351, %v10237, %v10026
      %v10246 = vsel %vm2351, %v10238, %v10028
      %v10247 = vsel %vm2351, %v10239, %v10030
      %v10248 = vsel %vm2351, %v10240, %v10032
      %v10249 = vsel %vm2417, %v10241, %v10050
      %v10250 = vsel %vm2417, %v10242, %v10052
      %v10251 = vsel %vm2417, %v10243, %v10054
      %v10252 = vsel %vm2417, %v10244, %v10056
      %v10253 = vsel %vm2417, %v10245, %v10058
      %v10254 = vsel %vm2417, %v10246, %v10060
      %v10255 = vsel %vm2417, %v10247, %v10062
      %v10256 = vsel %vm2417, %v10248, %v10064
      %v10257 = vsel %vm2483, %v10249, %v10082
      %v10258 = vsel %vm2483, %v10250, %v10084
      %v10259 = vsel %vm2483, %v10251, %v10086
      %v10260 = vsel %vm2483, %v10252, %v10088
      %v10261 = vsel %vm2483, %v10253, %v10090
      %v10262 = vsel %vm2483, %v10254, %v10092
      %v10263 = vsel %vm2483, %v10255, %v10094
      %v10264 = vsel %vm2483, %v10256, %v10096
      %v10265 = vsel %vm9187, %v10257, %v10114
      %v10266 = vsel %vm9187, %v10258, %v10116
      %v10267 = vsel %vm9187, %v10259, %v10118
      %v10268 = vsel %vm9187, %v10260, %v10120
      %v10269 = vsel %vm9187, %v10261, %v10122
      %v10270 = vsel %vm9187, %v10262, %v10124
      %v10271 = vsel %vm9187, %v10263, %v10126
      %v10272 = vsel %vm9187, %v10264, %v10128
      %v10273 = vsel %vm9196, %v10265, %v10146
      %v10274 = vsel %vm9196, %v10266, %v10148
      %v10275 = vsel %vm9196, %v10267, %v10150
      %v10276 = vsel %vm9196, %v10268, %v10152
      %v10277 = vsel %vm9196, %v10269, %v10154
      %v10278 = vsel %vm9196, %v10270, %v10156
      %v10279 = vsel %vm9196, %v10271, %v10158
      %v10280 = vsel %vm9196, %v10272, %v10160
      %v10281 = vsel %vm9205, %v10273, %v10178
      %v10282 = vsel %vm9205, %v10274, %v10180
      %v10283 = vsel %vm9205, %v10275, %v10182
      %v10284 = vsel %vm9205, %v10276, %v10184
      %v10285 = vsel %vm9205, %v10277, %v10186
      %v10286 = vsel %vm9205, %v10278, %v10188
      %v10287 = vsel %vm9205, %v10279, %v10190
      %v10288 = vsel %vm9205, %v10280, %v10192
      %v10289 = vsel %vm9214, %v10281, %v10210
      %v10290 = vsel %vm9214, %v10282, %v10212
      %v10291 = vsel %vm9214, %v10283, %v10214
      %v10292 = vsel %vm9214, %v10284, %v10216
      %v10293 = vsel %vm9214, %v10285, %v10218
      %v10294 = vsel %vm9214, %v10286, %v10220
      %v10295 = vsel %vm9214, %v10287, %v10222
      %v10296 = vsel %vm9214, %v10288, %v10224
      %v10297 = vpack.c.bf16 %v10290, %v10289
      %v10298 = vpack.c.bf16 %v10292, %v10291
      %v10299 = vpack.c.bf16 %v10294, %v10293
      %v10300 = vpack.c.bf16 %v10296, %v10295
      %s10301 = scalar_lea.vmem %s8, 72
      %v10302 = vld [vmem:[%s10301] sm:$0xf]
      %v10303 = vld [vmem:[%s10301 + $0x4] sm:$0xf]
      %v10304 = vld [vmem:[%s10301 + $0x8] sm:$0xf]
      %v10305 = vld [vmem:[%s10301 + $0xc] sm:$0xf]
      %v10306 = vld [vmem:[%s10301 + $0x10] sm:$0xf]
      %v10307 = vld [vmem:[%s10301 + $0x14] sm:$0xf]
      %v10308 = vld [vmem:[%s10301 + $0x18] sm:$0xf]
      %v10309 = vld [vmem:[%s10301 + $0x1c] sm:$0xf]
      %v10310 = vld [vmem:[%s10301 + $0x20] sm:$0xf]
      %s10311 = scalar_lea.vmem %s9, 2
      %v10312 = vld [vmem:[%s10311] sm:$0x1]
      %v10314 = vlaneseq
      %v10315 = vshrl.u32 %v10314, 7
      %v10316 = vsub.s32 0, %v10315
      %v10317 = vrot.slane %v10312, %v10316
      %v10328 = vunpack.c.l.b16 %v10302
      %v10329 = vunpack.c.l.b16 %v10303
      %v10330 = vunpack.c.l.b16 %v10304
      %v10331 = vunpack.c.l.b16 %v10305
      %v10332 = vunpack.c.l.b16 %v10306
      %v10333 = vunpack.c.l.b16 %v10307
      %v10334 = vunpack.c.l.b16 %v10308
      %v10335 = vunpack.c.l.b16 %v10309
      %v10336 = vunpack.c.l.b16 %v10310
      %v10337 = vpack.c.b16 %v10329, %v10328
      %v10338 = vpack.c.b16 %v10331, %v10330
      %v10339 = vpack.c.b16 %v10333, %v10332
      %v10340 = vpack.c.b16 %v10335, %v10334
      %v10341 = vpack.c.b16 %v10336, %v10336
      %v10347 = vsel %vm9270, %v10297, 0
      %v10350 = vsel %vm9270, %v10298, 0
      %v10353 = vsel %vm9270, %v10299, 0
      %v10356 = vsel %vm9270, %v10300, 0
      %v10359 = vsel %vm9283, %v10341, 0
      %10361 = vmatprep.subr.bf16.mxu0 0
      %10362 = vmatpush1.bf16.msra.mxu0 %v10337
      %10363 = vmatprep.subr.bf16.mxu0 0
      %10364 = vmatpush1.bf16.msra.mxu0 %v10338
      %10365 = vmatprep.subr.bf16.mxu0 0
      %10366 = vmatpush1.bf16.msra.mxu0 %v10339
      %10367 = vmatprep.subr.bf16.mxu0 0
      %10368 = vmatpush1.bf16.msra.mxu0 %v10340
      %10369 = vmatprep.subr.bf16.mxu0 0
      %10370 = vmatpush1.bf16.msra.mxu0 %v10359
      %10371 = vmatprep.subr.bf16.mxu0 0
      %10372 = vmatpush1.bf16.msra.mxu0 0
      %10373 = vmatprep.subr.bf16.mxu0 0
      %10374 = vmatpush1.bf16.msra.mxu0 0
      %10375 = vmatprep.subr.bf16.mxu0 0
      %10376 = vmatpush1.bf16.msra.mxu0 0
      %10377 = vmatprep.subr.bf16.mxu0 0
      %10378 = vmatpush1.bf16.msra.mxu0 0
      %10379 = vmatprep.subr.bf16.mxu0 0
      %10380 = vmatpush1.bf16.msra.mxu0 0
      %10381 = vmatprep.subr.bf16.mxu0 0
      %10382 = vmatpush1.bf16.msra.mxu0 0
      %10383 = vmatprep.subr.bf16.mxu0 0
      %10384 = vmatpush1.bf16.msra.mxu0 0
      %10385 = vmatprep.subr.bf16.mxu0 0
      %10386 = vmatpush1.bf16.msra.mxu0 0
      %10387 = vmatprep.subr.bf16.mxu0 0
      %10388 = vmatpush1.bf16.msra.mxu0 0
      %10389 = vmatprep.subr.bf16.mxu0 0
      %10390 = vmatpush1.bf16.msra.mxu0 0
      %10391 = vmatprep.subr.bf16.mxu0 0
      %10392 = vmatpush1.bf16.msra.mxu0 0
      %10393 = vmatprep.mubr.bf16.mxu0 0
      %10394 = vmatmul.mubr.bf16.gmra.mrb[0].mxu0 %v10347
      %v10395 = vpop.f32.mrb[0].mxu0
      %v10396 = vadd.f32 %v10317, %v10395
      %v10397 = vpop.f32.mrb[0].mxu0
      %v10398 = vpop.f32.mrb[0].mxu0
      %v10399 = vadd.f32 %v10317, %v10398
      %v10400 = vpop.f32.mrb[0].mxu0
      %10401 = vmatprep.mubr.bf16.mxu0 0
      %10402 = vmatmul.mubr.bf16.gmra.mrb[0].mxu0 %v10350
      %v10403 = vpop.f32.mrb[0].mxu0
      %v10404 = vadd.f32 %v10317, %v10403
      %v10405 = vpop.f32.mrb[0].mxu0
      %v10406 = vpop.f32.mrb[0].mxu0
      %v10407 = vadd.f32 %v10317, %v10406
      %v10408 = vpop.f32.mrb[0].mxu0
      %10409 = vmatprep.mubr.bf16.mxu0 0
      %10410 = vmatmul.mubr.bf16.gmra.mrb[0].mxu0 %v10353
      %v10411 = vpop.f32.mrb[0].mxu0
      %v10412 = vadd.f32 %v10317, %v10411
      %v10413 = vpop.f32.mrb[0].mxu0
      %v10414 = vpop.f32.mrb[0].mxu0
      %v10415 = vadd.f32 %v10317, %v10414
      %v10416 = vpop.f32.mrb[0].mxu0
      %10417 = vmatprep.mubr.bf16.mxu0 0
      %10418 = vmatmul.mubr.bf16.gmra.mrb[0].mxu0 %v10356
      %v10419 = vpop.f32.mrb[0].mxu0
      %v10420 = vadd.f32 %v10317, %v10419
      %v10421 = vpop.f32.mrb[0].mxu0
      %v10422 = vpop.f32.mrb[0].mxu0
      %v10423 = vadd.f32 %v10317, %v10422
      %v10424 = vpop.f32.mrb[0].mxu0
      %10425 = vdwg.mxu0
      %v10426 = vmax.f32 %v10396, 0.0
      %v10427 = vmax.f32 %v10399, 0.0
      %v10428 = vmax.f32 %v10404, 0.0
      %v10429 = vmax.f32 %v10407, 0.0
      %v10430 = vmax.f32 %v10412, 0.0
      %v10431 = vmax.f32 %v10415, 0.0
      %v10432 = vmax.f32 %v10420, 0.0
      %v10433 = vmax.f32 %v10423, 0.0
      %v10434 = vld [vmem:[#allocation7] sm:$0x1]
      %v10436 = vlaneseq
      %v10437 = vshrl.u32 %v10436, 7
      %v10438 = vsub.s32 0, %v10437
      %v10439 = vrot.slane %v10434, %v10438
      %10440 = vset.pattern.permute.xlu0 0
      %10441 = vperm.xlu0 %10440, %v10439
      %v10442 = vpop.permute.xlu0 %10441
      %v10444 = vmul.f32 %v10442, %v8766
      %v10445 = vmul.f32 %v10442, %v8769
      %v10446 = vmul.f32 %v10442, %v8774
      %v10447 = vmul.f32 %v10442, %v8777
      %v10448 = vmul.f32 %v10442, %v8782
      %v10449 = vmul.f32 %v10442, %v8785
      %v10450 = vmul.f32 %v10442, %v8790
      %v10451 = vmul.f32 %v10442, %v8793
      %v10452 = vadd.f32 %v10426, %v10444
      %v10453 = vadd.f32 %v10427, %v10445
      %v10454 = vadd.f32 %v10428, %v10446
      %v10455 = vadd.f32 %v10429, %v10447
      %v10456 = vadd.f32 %v10430, %v10448
      %v10457 = vadd.f32 %v10431, %v10449
      %v10458 = vadd.f32 %v10432, %v10450
      %v10459 = vadd.f32 %v10433, %v10451
      %v10468 = vcombine.high %v10452, %v10452
      %v10470 = vunpack.c.l.s4 1983009808
      %v10471 = vunpack.c.0.s8 %v10470
      %v10472 = vlaneseq
      %v10473 = vshrl.u32 %v10472, 7
      %v10474 = vsub.s32 %v10471, %v10473
      %v10475 = vrot.slane %v10452, %v10474
      %v10477 = vunpack.c.l.s4 1983009808
      %v10478 = vunpack.c.0.s8 %v10477
      %v10479 = vlaneseq
      %v10480 = vshrl.u32 %v10479, 7
      %v10481 = vsub.s32 %v10478, %v10480
      %v10482 = vrot.slane %v10468, %v10481
      %v10483 = vcombine.high %v10475, %v10475
      %v10484 = vcombine.high %v10482, %v10482
      %v10485 = vcombine.high %v10453, %v10453
      %v10487 = vunpack.c.l.s4 1983009808
      %v10488 = vunpack.c.0.s8 %v10487
      %v10489 = vlaneseq
      %v10490 = vshrl.u32 %v10489, 7
      %v10491 = vsub.s32 %v10488, %v10490
      %v10492 = vrot.slane %v10453, %v10491
      %v10494 = vunpack.c.l.s4 1983009808
      %v10495 = vunpack.c.0.s8 %v10494
      %v10496 = vlaneseq
      %v10497 = vshrl.u32 %v10496, 7
      %v10498 = vsub.s32 %v10495, %v10497
      %v10499 = vrot.slane %v10485, %v10498
      %v10500 = vcombine.high %v10492, %v10492
      %v10501 = vcombine.high %v10499, %v10499
      %v10502 = vcombine.high %v10454, %v10454
      %v10504 = vunpack.c.l.s4 1983009808
      %v10505 = vunpack.c.0.s8 %v10504
      %v10506 = vlaneseq
      %v10507 = vshrl.u32 %v10506, 7
      %v10508 = vsub.s32 %v10505, %v10507
      %v10509 = vrot.slane %v10454, %v10508
      %v10511 = vunpack.c.l.s4 1983009808
      %v10512 = vunpack.c.0.s8 %v10511
      %v10513 = vlaneseq
      %v10514 = vshrl.u32 %v10513, 7
      %v10515 = vsub.s32 %v10512, %v10514
      %v10516 = vrot.slane %v10502, %v10515
      %v10517 = vcombine.high %v10509, %v10509
      %v10518 = vcombine.high %v10516, %v10516
      %v10519 = vcombine.high %v10455, %v10455
      %v10521 = vunpack.c.l.s4 1983009808
      %v10522 = vunpack.c.0.s8 %v10521
      %v10523 = vlaneseq
      %v10524 = vshrl.u32 %v10523, 7
      %v10525 = vsub.s32 %v10522, %v10524
      %v10526 = vrot.slane %v10455, %v10525
      %v10528 = vunpack.c.l.s4 1983009808
      %v10529 = vunpack.c.0.s8 %v10528
      %v10530 = vlaneseq
      %v10531 = vshrl.u32 %v10530, 7
      %v10532 = vsub.s32 %v10529, %v10531
      %v10533 = vrot.slane %v10519, %v10532
      %v10534 = vcombine.high %v10526, %v10526
      %v10535 = vcombine.high %v10533, %v10533
      %v10536 = vcombine.high %v10456, %v10456
      %v10538 = vunpack.c.l.s4 1983009808
      %v10539 = vunpack.c.0.s8 %v10538
      %v10540 = vlaneseq
      %v10541 = vshrl.u32 %v10540, 7
      %v10542 = vsub.s32 %v10539, %v10541
      %v10543 = vrot.slane %v10456, %v10542
      %v10545 = vunpack.c.l.s4 1983009808
      %v10546 = vunpack.c.0.s8 %v10545
      %v10547 = vlaneseq
      %v10548 = vshrl.u32 %v10547, 7
      %v10549 = vsub.s32 %v10546, %v10548
      %v10550 = vrot.slane %v10536, %v10549
      %v10551 = vcombine.high %v10543, %v10543
      %v10552 = vcombine.high %v10550, %v10550
      %v10553 = vcombine.high %v10457, %v10457
      %v10555 = vunpack.c.l.s4 1983009808
      %v10556 = vunpack.c.0.s8 %v10555
      %v10557 = vlaneseq
      %v10558 = vshrl.u32 %v10557, 7
      %v10559 = vsub.s32 %v10556, %v10558
      %v10560 = vrot.slane %v10457, %v10559
      %v10562 = vunpack.c.l.s4 1983009808
      %v10563 = vunpack.c.0.s8 %v10562
      %v10564 = vlaneseq
      %v10565 = vshrl.u32 %v10564, 7
      %v10566 = vsub.s32 %v10563, %v10565
      %v10567 = vrot.slane %v10553, %v10566
      %v10568 = vcombine.high %v10560, %v10560
      %v10569 = vcombine.high %v10567, %v10567
      %v10570 = vcombine.high %v10458, %v10458
      %v10572 = vunpack.c.l.s4 1983009808
      %v10573 = vunpack.c.0.s8 %v10572
      %v10574 = vlaneseq
      %v10575 = vshrl.u32 %v10574, 7
      %v10576 = vsub.s32 %v10573, %v10575
      %v10577 = vrot.slane %v10458, %v10576
      %v10579 = vunpack.c.l.s4 1983009808
      %v10580 = vunpack.c.0.s8 %v10579
      %v10581 = vlaneseq
      %v10582 = vshrl.u32 %v10581, 7
      %v10583 = vsub.s32 %v10580, %v10582
      %v10584 = vrot.slane %v10570, %v10583
      %v10585 = vcombine.high %v10577, %v10577
      %v10586 = vcombine.high %v10584, %v10584
      %v10587 = vcombine.high %v10459, %v10459
      %v10589 = vunpack.c.l.s4 1983009808
      %v10590 = vunpack.c.0.s8 %v10589
      %v10591 = vlaneseq
      %v10592 = vshrl.u32 %v10591, 7
      %v10593 = vsub.s32 %v10590, %v10592
      %v10594 = vrot.slane %v10459, %v10593
      %v10596 = vunpack.c.l.s4 1983009808
      %v10597 = vunpack.c.0.s8 %v10596
      %v10598 = vlaneseq
      %v10599 = vshrl.u32 %v10598, 7
      %v10600 = vsub.s32 %v10597, %v10599
      %v10601 = vrot.slane %v10587, %v10600
      %v10602 = vcombine.high %v10594, %v10594
      %v10603 = vcombine.high %v10601, %v10601
      %v10636 = vsel %vm8797, %v10475, -inf
      %v10637 = vrot.slane %v10636, 4
      %v10638 = vmax.f32 %v10636, %v10637
      %v10639 = vrot.slane %v10638, 2
      %v10640 = vmax.f32 %v10638, %v10639
      %v10641 = vrot.slane %v10640, 1
      %v10642 = vmax.f32 %v10640, %v10641
      %v10643 = vsel %vm8797, %v10483, -inf
      %v10644 = vrot.slane %v10643, 4
      %v10645 = vmax.f32 %v10643, %v10644
      %v10646 = vrot.slane %v10645, 2
      %v10647 = vmax.f32 %v10645, %v10646
      %v10648 = vrot.slane %v10647, 1
      %v10649 = vmax.f32 %v10647, %v10648
      %v10650 = vsel %vm8797, %v10482, -inf
      %v10651 = vrot.slane %v10650, 4
      %v10652 = vmax.f32 %v10650, %v10651
      %v10653 = vrot.slane %v10652, 2
      %v10654 = vmax.f32 %v10652, %v10653
      %v10655 = vrot.slane %v10654, 1
      %v10656 = vmax.f32 %v10654, %v10655
      %v10657 = vsel %vm8797, %v10484, -inf
      %v10658 = vrot.slane %v10657, 4
      %v10659 = vmax.f32 %v10657, %v10658
      %v10660 = vrot.slane %v10659, 2
      %v10661 = vmax.f32 %v10659, %v10660
      %v10662 = vrot.slane %v10661, 1
      %v10663 = vmax.f32 %v10661, %v10662
      %v10664 = vsel %vm8797, %v10492, -inf
      %v10665 = vrot.slane %v10664, 4
      %v10666 = vmax.f32 %v10664, %v10665
      %v10667 = vrot.slane %v10666, 2
      %v10668 = vmax.f32 %v10666, %v10667
      %v10669 = vrot.slane %v10668, 1
      %v10670 = vmax.f32 %v10668, %v10669
      %v10671 = vsel %vm8797, %v10500, -inf
      %v10672 = vrot.slane %v10671, 4
      %v10673 = vmax.f32 %v10671, %v10672
      %v10674 = vrot.slane %v10673, 2
      %v10675 = vmax.f32 %v10673, %v10674
      %v10676 = vrot.slane %v10675, 1
      %v10677 = vmax.f32 %v10675, %v10676
      %v10678 = vsel %vm8797, %v10499, -inf
      %v10679 = vrot.slane %v10678, 4
      %v10680 = vmax.f32 %v10678, %v10679
      %v10681 = vrot.slane %v10680, 2
      %v10682 = vmax.f32 %v10680, %v10681
      %v10683 = vrot.slane %v10682, 1
      %v10684 = vmax.f32 %v10682, %v10683
      %v10685 = vsel %vm8797, %v10501, -inf
      %v10686 = vrot.slane %v10685, 4
      %v10687 = vmax.f32 %v10685, %v10686
      %v10688 = vrot.slane %v10687, 2
      %v10689 = vmax.f32 %v10687, %v10688
      %v10690 = vrot.slane %v10689, 1
      %v10691 = vmax.f32 %v10689, %v10690
      %v10692 = vsel %vm8797, %v10509, -inf
      %v10693 = vrot.slane %v10692, 4
      %v10694 = vmax.f32 %v10692, %v10693
      %v10695 = vrot.slane %v10694, 2
      %v10696 = vmax.f32 %v10694, %v10695
      %v10697 = vrot.slane %v10696, 1
      %v10698 = vmax.f32 %v10696, %v10697
      %v10699 = vsel %vm8797, %v10517, -inf
      %v10700 = vrot.slane %v10699, 4
      %v10701 = vmax.f32 %v10699, %v10700
      %v10702 = vrot.slane %v10701, 2
      %v10703 = vmax.f32 %v10701, %v10702
      %v10704 = vrot.slane %v10703, 1
      %v10705 = vmax.f32 %v10703, %v10704
      %v10706 = vsel %vm8797, %v10516, -inf
      %v10707 = vrot.slane %v10706, 4
      %v10708 = vmax.f32 %v10706, %v10707
      %v10709 = vrot.slane %v10708, 2
      %v10710 = vmax.f32 %v10708, %v10709
      %v10711 = vrot.slane %v10710, 1
      %v10712 = vmax.f32 %v10710, %v10711
      %v10713 = vsel %vm8797, %v10518, -inf
      %v10714 = vrot.slane %v10713, 4
      %v10715 = vmax.f32 %v10713, %v10714
      %v10716 = vrot.slane %v10715, 2
      %v10717 = vmax.f32 %v10715, %v10716
      %v10718 = vrot.slane %v10717, 1
      %v10719 = vmax.f32 %v10717, %v10718
      %v10720 = vsel %vm8797, %v10526, -inf
      %v10721 = vrot.slane %v10720, 4
      %v10722 = vmax.f32 %v10720, %v10721
      %v10723 = vrot.slane %v10722, 2
      %v10724 = vmax.f32 %v10722, %v10723
      %v10725 = vrot.slane %v10724, 1
      %v10726 = vmax.f32 %v10724, %v10725
      %v10727 = vsel %vm8797, %v10534, -inf
      %v10728 = vrot.slane %v10727, 4
      %v10729 = vmax.f32 %v10727, %v10728
      %v10730 = vrot.slane %v10729, 2
      %v10731 = vmax.f32 %v10729, %v10730
      %v10732 = vrot.slane %v10731, 1
      %v10733 = vmax.f32 %v10731, %v10732
      %v10734 = vsel %vm8797, %v10533, -inf
      %v10735 = vrot.slane %v10734, 4
      %v10736 = vmax.f32 %v10734, %v10735
      %v10737 = vrot.slane %v10736, 2
      %v10738 = vmax.f32 %v10736, %v10737
      %v10739 = vrot.slane %v10738, 1
      %v10740 = vmax.f32 %v10738, %v10739
      %v10741 = vsel %vm8797, %v10535, -inf
      %v10742 = vrot.slane %v10741, 4
      %v10743 = vmax.f32 %v10741, %v10742
      %v10744 = vrot.slane %v10743, 2
      %v10745 = vmax.f32 %v10743, %v10744
      %v10746 = vrot.slane %v10745, 1
      %v10747 = vmax.f32 %v10745, %v10746
      %v10748 = vsel %vm8797, %v10543, -inf
      %v10749 = vrot.slane %v10748, 4
      %v10750 = vmax.f32 %v10748, %v10749
      %v10751 = vrot.slane %v10750, 2
      %v10752 = vmax.f32 %v10750, %v10751
      %v10753 = vrot.slane %v10752, 1
      %v10754 = vmax.f32 %v10752, %v10753
      %v10755 = vsel %vm8797, %v10551, -inf
      %v10756 = vrot.slane %v10755, 4
      %v10757 = vmax.f32 %v10755, %v10756
      %v10758 = vrot.slane %v10757, 2
      %v10759 = vmax.f32 %v10757, %v10758
      %v10760 = vrot.slane %v10759, 1
      %v10761 = vmax.f32 %v10759, %v10760
      %v10762 = vsel %vm8797, %v10550, -inf
      %v10763 = vrot.slane %v10762, 4
      %v10764 = vmax.f32 %v10762, %v10763
      %v10765 = vrot.slane %v10764, 2
      %v10766 = vmax.f32 %v10764, %v10765
      %v10767 = vrot.slane %v10766, 1
      %v10768 = vmax.f32 %v10766, %v10767
      %v10769 = vsel %vm8797, %v10552, -inf
      %v10770 = vrot.slane %v10769, 4
      %v10771 = vmax.f32 %v10769, %v10770
      %v10772 = vrot.slane %v10771, 2
      %v10773 = vmax.f32 %v10771, %v10772
      %v10774 = vrot.slane %v10773, 1
      %v10775 = vmax.f32 %v10773, %v10774
      %v10776 = vsel %vm8797, %v10560, -inf
      %v10777 = vrot.slane %v10776, 4
      %v10778 = vmax.f32 %v10776, %v10777
      %v10779 = vrot.slane %v10778, 2
      %v10780 = vmax.f32 %v10778, %v10779
      %v10781 = vrot.slane %v10780, 1
      %v10782 = vmax.f32 %v10780, %v10781
      %v10783 = vsel %vm8797, %v10568, -inf
      %v10784 = vrot.slane %v10783, 4
      %v10785 = vmax.f32 %v10783, %v10784
      %v10786 = vrot.slane %v10785, 2
      %v10787 = vmax.f32 %v10785, %v10786
      %v10788 = vrot.slane %v10787, 1
      %v10789 = vmax.f32 %v10787, %v10788
      %v10790 = vsel %vm8797, %v10567, -inf
      %v10791 = vrot.slane %v10790, 4
      %v10792 = vmax.f32 %v10790, %v10791
      %v10793 = vrot.slane %v10792, 2
      %v10794 = vmax.f32 %v10792, %v10793
      %v10795 = vrot.slane %v10794, 1
      %v10796 = vmax.f32 %v10794, %v10795
      %v10797 = vsel %vm8797, %v10569, -inf
      %v10798 = vrot.slane %v10797, 4
      %v10799 = vmax.f32 %v10797, %v10798
      %v10800 = vrot.slane %v10799, 2
      %v10801 = vmax.f32 %v10799, %v10800
      %v10802 = vrot.slane %v10801, 1
      %v10803 = vmax.f32 %v10801, %v10802
      %v10804 = vsel %vm8797, %v10577, -inf
      %v10805 = vrot.slane %v10804, 4
      %v10806 = vmax.f32 %v10804, %v10805
      %v10807 = vrot.slane %v10806, 2
      %v10808 = vmax.f32 %v10806, %v10807
      %v10809 = vrot.slane %v10808, 1
      %v10810 = vmax.f32 %v10808, %v10809
      %v10811 = vsel %vm8797, %v10585, -inf
      %v10812 = vrot.slane %v10811, 4
      %v10813 = vmax.f32 %v10811, %v10812
      %v10814 = vrot.slane %v10813, 2
      %v10815 = vmax.f32 %v10813, %v10814
      %v10816 = vrot.slane %v10815, 1
      %v10817 = vmax.f32 %v10815, %v10816
      %v10818 = vsel %vm8797, %v10584, -inf
      %v10819 = vrot.slane %v10818, 4
      %v10820 = vmax.f32 %v10818, %v10819
      %v10821 = vrot.slane %v10820, 2
      %v10822 = vmax.f32 %v10820, %v10821
      %v10823 = vrot.slane %v10822, 1
      %v10824 = vmax.f32 %v10822, %v10823
      %v10825 = vsel %vm8797, %v10586, -inf
      %v10826 = vrot.slane %v10825, 4
      %v10827 = vmax.f32 %v10825, %v10826
      %v10828 = vrot.slane %v10827, 2
      %v10829 = vmax.f32 %v10827, %v10828
      %v10830 = vrot.slane %v10829, 1
      %v10831 = vmax.f32 %v10829, %v10830
      %v10832 = vsel %vm8797, %v10594, -inf
      %v10833 = vrot.slane %v10832, 4
      %v10834 = vmax.f32 %v10832, %v10833
      %v10835 = vrot.slane %v10834, 2
      %v10836 = vmax.f32 %v10834, %v10835
      %v10837 = vrot.slane %v10836, 1
      %v10838 = vmax.f32 %v10836, %v10837
      %v10839 = vsel %vm8797, %v10602, -inf
      %v10840 = vrot.slane %v10839, 4
      %v10841 = vmax.f32 %v10839, %v10840
      %v10842 = vrot.slane %v10841, 2
      %v10843 = vmax.f32 %v10841, %v10842
      %v10844 = vrot.slane %v10843, 1
      %v10845 = vmax.f32 %v10843, %v10844
      %v10846 = vsel %vm8797, %v10601, -inf
      %v10847 = vrot.slane %v10846, 4
      %v10848 = vmax.f32 %v10846, %v10847
      %v10849 = vrot.slane %v10848, 2
      %v10850 = vmax.f32 %v10848, %v10849
      %v10851 = vrot.slane %v10850, 1
      %v10852 = vmax.f32 %v10850, %v10851
      %v10853 = vsel %vm8797, %v10603, -inf
      %v10854 = vrot.slane %v10853, 4
      %v10855 = vmax.f32 %v10853, %v10854
      %v10856 = vrot.slane %v10855, 2
      %v10857 = vmax.f32 %v10855, %v10856
      %v10858 = vrot.slane %v10857, 1
      %v10859 = vmax.f32 %v10857, %v10858
      %v10860 = vsel %vm2285, %v10642, -inf
      %v10861 = vsel %vm2285, %v10670, -inf
      %v10862 = vmax.f32 %v10860, %v10861
      %v10863 = vsel %vm2285, %v10649, -inf
      %v10864 = vsel %vm2285, %v10677, -inf
      %v10865 = vmax.f32 %v10863, %v10864
      %v10866 = vsel %vm2285, %v10656, -inf
      %v10867 = vsel %vm2285, %v10684, -inf
      %v10868 = vmax.f32 %v10866, %v10867
      %v10869 = vsel %vm2285, %v10663, -inf
      %v10870 = vsel %vm2285, %v10691, -inf
      %v10871 = vmax.f32 %v10869, %v10870
      %v10872 = vsel %vm2285, %v10698, -inf
      %v10873 = vsel %vm2285, %v10726, -inf
      %v10874 = vmax.f32 %v10872, %v10873
      %v10875 = vsel %vm2285, %v10705, -inf
      %v10876 = vsel %vm2285, %v10733, -inf
      %v10877 = vmax.f32 %v10875, %v10876
      %v10878 = vsel %vm2285, %v10712, -inf
      %v10879 = vsel %vm2285, %v10740, -inf
      %v10880 = vmax.f32 %v10878, %v10879
      %v10881 = vsel %vm2285, %v10719, -inf
      %v10882 = vsel %vm2285, %v10747, -inf
      %v10883 = vmax.f32 %v10881, %v10882
      %v10884 = vsel %vm2285, %v10754, -inf
      %v10885 = vsel %vm2285, %v10782, -inf
      %v10886 = vmax.f32 %v10884, %v10885
      %v10887 = vsel %vm2285, %v10761, -inf
      %v10888 = vsel %vm2285, %v10789, -inf
      %v10889 = vmax.f32 %v10887, %v10888
      %v10890 = vsel %vm2285, %v10768, -inf
      %v10891 = vsel %vm2285, %v10796, -inf
      %v10892 = vmax.f32 %v10890, %v10891
      %v10893 = vsel %vm2285, %v10775, -inf
      %v10894 = vsel %vm2285, %v10803, -inf
      %v10895 = vmax.f32 %v10893, %v10894
      %v10896 = vsel %vm2285, %v10810, -inf
      %v10897 = vsel %vm2285, %v10838, -inf
      %v10898 = vmax.f32 %v10896, %v10897
      %v10899 = vsel %vm2285, %v10817, -inf
      %v10900 = vsel %vm2285, %v10845, -inf
      %v10901 = vmax.f32 %v10899, %v10900
      %v10902 = vsel %vm2285, %v10824, -inf
      %v10903 = vsel %vm2285, %v10852, -inf
      %v10904 = vmax.f32 %v10902, %v10903
      %v10905 = vsel %vm2285, %v10831, -inf
      %v10906 = vsel %vm2285, %v10859, -inf
      %v10907 = vmax.f32 %v10905, %v10906
      %v10908 = vpack.c.bf16 %v10862, %v10862
      %v10909 = vpack.c.bf16 %v10865, %v10865
      %v10910 = vpack.c.bf16 %v10868, %v10868
      %v10911 = vpack.c.bf16 %v10871, %v10871
      %v10912 = vpack.c.bf16 %v10874, %v10874
      %v10913 = vpack.c.bf16 %v10877, %v10877
      %v10914 = vpack.c.bf16 %v10880, %v10880
      %v10915 = vpack.c.bf16 %v10883, %v10883
      %v10916 = vpack.c.bf16 %v10886, %v10886
      %v10917 = vpack.c.bf16 %v10889, %v10889
      %v10918 = vpack.c.bf16 %v10892, %v10892
      %v10919 = vpack.c.bf16 %v10895, %v10895
      %v10920 = vpack.c.bf16 %v10898, %v10898
      %v10921 = vpack.c.bf16 %v10901, %v10901
      %v10922 = vpack.c.bf16 %v10904, %v10904
      %v10923 = vpack.c.bf16 %v10907, %v10907
      %v10924 = vld [vmem:[%s11] sm:$0xf]
      %v10925 = vld [vmem:[%s12] sm:$0x1]
      %v10927 = vlaneseq
      %v10928 = vshrl.u32 %v10927, 7
      %v10929 = vsub.s32 0, %v10928
      %v10930 = vrot.slane %v10925, %v10929
      %v10948 = vunpack.c.l.b16 %v10908
      %v10949 = vunpack.c.l.b16 %v10909
      %v10950 = vunpack.c.l.b16 %v10910
      %v10951 = vunpack.c.l.b16 %v10911
      %v10952 = vunpack.c.l.b16 %v10912
      %v10953 = vunpack.c.l.b16 %v10913
      %v10954 = vunpack.c.l.b16 %v10914
      %v10955 = vunpack.c.l.b16 %v10915
      %v10956 = vunpack.c.l.b16 %v10916
      %v10957 = vunpack.c.l.b16 %v10917
      %v10958 = vunpack.c.l.b16 %v10918
      %v10959 = vunpack.c.l.b16 %v10919
      %v10960 = vunpack.c.l.b16 %v10920
      %v10961 = vunpack.c.l.b16 %v10921
      %v10962 = vunpack.c.l.b16 %v10922
      %v10963 = vunpack.c.l.b16 %v10923
      %v10964 = vsel %vm8649, %v10949, %v10948
      %v10965 = vsel %vm8651, %v10950, %v10964
      %v10966 = vsel %vm8653, %v10951, %v10965
      %v10967 = vsel %vm8655, %v10952, %v10966
      %v10968 = vsel %vm8657, %v10953, %v10967
      %v10969 = vsel %vm8659, %v10954, %v10968
      %v10970 = vsel %vm8661, %v10955, %v10969
      %v10971 = vsel %vm8649, %v10957, %v10956
      %v10972 = vsel %vm8651, %v10958, %v10971
      %v10973 = vsel %vm8653, %v10959, %v10972
      %v10974 = vsel %vm8655, %v10960, %v10973
      %v10975 = vsel %vm8657, %v10961, %v10974
      %v10976 = vsel %vm8659, %v10962, %v10975
      %v10977 = vsel %vm8661, %v10963, %v10976
      %v10978 = vpack.c.b16 %v10977, %v10970
      %v10980 = vsel %vm2285, %v10978, 0
      %v10983 = vsel %vm9283, %v10924, 0
      %10985 = vmatprep.subr.bf16.mxu0 0
      %10986 = vmatpush1.bf16.msra.mxu0 %v10983
      %10987 = vmatprep.subr.bf16.mxu0 0
      %10988 = vmatpush1.bf16.msra.mxu0 0
      %10989 = vmatprep.subr.bf16.mxu0 0
      %10990 = vmatpush1.bf16.msra.mxu0 0
      %10991 = vmatprep.subr.bf16.mxu0 0
      %10992 = vmatpush1.bf16.msra.mxu0 0
      %10993 = vmatprep.subr.bf16.mxu0 0
      %10994 = vmatpush1.bf16.msra.mxu0 0
      %10995 = vmatprep.subr.bf16.mxu0 0
      %10996 = vmatpush1.bf16.msra.mxu0 0
      %10997 = vmatprep.subr.bf16.mxu0 0
      %10998 = vmatpush1.bf16.msra.mxu0 0
      %10999 = vmatprep.subr.bf16.mxu0 0
      %11000 = vmatpush1.bf16.msra.mxu0 0
      %11001 = vmatprep.subr.bf16.mxu0 0
      %11002 = vmatpush1.bf16.msra.mxu0 0
      %11003 = vmatprep.subr.bf16.mxu0 0
      %11004 = vmatpush1.bf16.msra.mxu0 0
      %11005 = vmatprep.subr.bf16.mxu0 0
      %11006 = vmatpush1.bf16.msra.mxu0 0
      %11007 = vmatprep.subr.bf16.mxu0 0
      %11008 = vmatpush1.bf16.msra.mxu0 0
      %11009 = vmatprep.subr.bf16.mxu0 0
      %11010 = vmatpush1.bf16.msra.mxu0 0
      %11011 = vmatprep.subr.bf16.mxu0 0
      %11012 = vmatpush1.bf16.msra.mxu0 0
      %11013 = vmatprep.subr.bf16.mxu0 0
      %11014 = vmatpush1.bf16.msra.mxu0 0
      %11015 = vmatprep.subr.bf16.mxu0 0
      %11016 = vmatpush1.bf16.msra.mxu0 0
      %11017 = vmatprep.mubr.bf16.mxu0 0
      %11018 = vmatmul.mubr.bf16.gmra.mrb[0].mxu0 %v10980
      %v11019 = vpop.f32.mrb[0].mxu0
      %v11020 = vadd.f32 %v10930, %v11019
      %v11021 = vpop.f32.mrb[0].mxu0
      %v11022 = vpop.f32.mrb[0].mxu0
      %v11023 = vadd.f32 %v10930, %v11022
      %v11024 = vpop.f32.mrb[0].mxu0
      %11025 = vdwg.mxu0
      %vm11026 = vcmask 62464
      %11027 = vst.msk [vmem:[#allocation4] sm:$0x3f] %vm11026, 0.0
      %11028 = vst.msk [vmem:[#allocation4 + $0x8] sm:$0x3f] %vm11026, 0.0
      %11029 = vst.msk [vmem:[#allocation4 + $0x10] sm:$0x3f] %vm11026, 0.0
      %11030 = vst.msk [vmem:[#allocation4 + $0x18] sm:$0x3f] %vm11026, 0.0
      %11031 = vst.msk [vmem:[#allocation4 + $0x20] sm:$0x3f] %vm11026, 0.0
      %11032 = vst.msk [vmem:[#allocation4 + $0x28] sm:$0x3f] %vm11026, 0.0
      %v11035 = vcombine.high %v11020, %v11020
      %v11036 = vcombine.high %v11023, %v11023
      %s11039 = scalar_lea.vmem [#allocation4], 8
      %vm11040 = vcmask 60416
      %11041 = vst.msk [vmem:[%s11039 + $0x1] sm:$0xf] %vm11040, %v11020
      %11042 = vst.msk [vmem:[%s11039 + $0x9] sm:$0xf] %vm11040, %v11035
      %11043 = vst.msk [vmem:[%s11039 + $0x11] sm:$0xf] %vm11040, %v11023
      %11044 = vst.msk [vmem:[%s11039 + $0x19] sm:$0xf] %vm11040, %v11036
      %v11045 = vld [vmem:[#allocation4] sm:$0xf]
      %v11046 = vld [vmem:[#allocation4 + $0x8] sm:$0xf]
      %v11047 = vld [vmem:[#allocation4 + $0x10] sm:$0xf]
      %v11048 = vld [vmem:[#allocation4 + $0x18] sm:$0xf]
      %v11049 = vld [vmem:[#allocation4 + $0x1] sm:$0xf]
      %v11050 = vld [vmem:[#allocation4 + $0x9] sm:$0xf]
      %v11051 = vld [vmem:[#allocation4 + $0x11] sm:$0xf]
      %v11052 = vld [vmem:[#allocation4 + $0x19] sm:$0xf]
      %v11053 = vld [vmem:[#allocation4 + $0x2] sm:$0xf]
      %v11054 = vld [vmem:[#allocation4 + $0xa] sm:$0xf]
      %v11055 = vld [vmem:[#allocation4 + $0x12] sm:$0xf]
      %v11056 = vld [vmem:[#allocation4 + $0x1a] sm:$0xf]
      %v11057 = vld [vmem:[%s11039] sm:$0xf]
      %v11058 = vld [vmem:[%s11039 + $0x8] sm:$0xf]
      %v11059 = vld [vmem:[%s11039 + $0x10] sm:$0xf]
      %v11060 = vld [vmem:[%s11039 + $0x18] sm:$0xf]
      %v11061 = vld [vmem:[%s11039 + $0x1] sm:$0xf]
      %v11062 = vld [vmem:[%s11039 + $0x9] sm:$0xf]
      %v11063 = vld [vmem:[%s11039 + $0x11] sm:$0xf]
      %v11064 = vld [vmem:[%s11039 + $0x19] sm:$0xf]
      %v11065 = vld [vmem:[%s11039 + $0x2] sm:$0xf]
      %v11066 = vld [vmem:[%s11039 + $0xa] sm:$0xf]
      %v11067 = vld [vmem:[%s11039 + $0x12] sm:$0xf]
      %v11068 = vld [vmem:[%s11039 + $0x1a] sm:$0xf]
      %s11069 = scalar_lea.vmem [#allocation4], 16
      %v11070 = vld [vmem:[%s11069] sm:$0xf]
      %v11071 = vld [vmem:[%s11069 + $0x8] sm:$0xf]
      %v11072 = vld [vmem:[%s11069 + $0x10] sm:$0xf]
      %v11073 = vld [vmem:[%s11069 + $0x18] sm:$0xf]
      %v11074 = vld [vmem:[%s11069 + $0x1] sm:$0xf]
      %v11075 = vld [vmem:[%s11069 + $0x9] sm:$0xf]
      %v11076 = vld [vmem:[%s11069 + $0x11] sm:$0xf]
      %v11077 = vld [vmem:[%s11069 + $0x19] sm:$0xf]
      %v11078 = vld [vmem:[%s11069 + $0x2] sm:$0xf]
      %v11079 = vld [vmem:[%s11069 + $0xa] sm:$0xf]
      %v11080 = vld [vmem:[%s11069 + $0x12] sm:$0xf]
      %v11081 = vld [vmem:[%s11069 + $0x1a] sm:$0xf]
      %v11086 = vcombine.low %v11045, %v11046
      %v11087 = vcombine.low %v11047, %v11048
      %v11094 = vcombine.low %v11049, %v11050
      %v11095 = vcombine.low %v11051, %v11052
      %11096 = vrot.lane.b32.xlu0 %v11094, 8
      %v11097 = vpop.permute.xlu0 %11096
      %11098 = vrot.lane.b32.xlu0 %v11095, 8
      %v11099 = vpop.permute.xlu0 %11098
      %v11106 = vcombine.low %v11053, %v11054
      %v11107 = vcombine.low %v11055, %v11056
      %11108 = vrot.lane.b32.xlu0 %v11106, 16
      %v11109 = vpop.permute.xlu0 %11108
      %11110 = vrot.lane.b32.xlu0 %v11107, 16
      %v11111 = vpop.permute.xlu0 %11110
      %v11118 = vcombine.low %v11057, %v11058
      %v11119 = vcombine.low %v11059, %v11060
      %11120 = vrot.lane.b32.xlu0 %v11118, 24
      %v11121 = vpop.permute.xlu0 %11120
      %11122 = vrot.lane.b32.xlu0 %v11119, 24
      %v11123 = vpop.permute.xlu0 %11122
      %v11130 = vcombine.low %v11061, %v11062
      %v11131 = vcombine.low %v11063, %v11064
      %11132 = vrot.lane.b32.xlu0 %v11130, 32
      %v11133 = vpop.permute.xlu0 %11132
      %11134 = vrot.lane.b32.xlu0 %v11131, 32
      %v11135 = vpop.permute.xlu0 %11134
      %v11142 = vcombine.low %v11065, %v11066
      %v11143 = vcombine.low %v11067, %v11068
      %11144 = vrot.lane.b32.xlu0 %v11142, 40
      %v11145 = vpop.permute.xlu0 %11144
      %11146 = vrot.lane.b32.xlu0 %v11143, 40
      %v11147 = vpop.permute.xlu0 %11146
      %v11154 = vcombine.low %v11070, %v11071
      %v11155 = vcombine.low %v11072, %v11073
      %11156 = vrot.lane.b32.xlu0 %v11154, 48
      %v11157 = vpop.permute.xlu0 %11156
      %11158 = vrot.lane.b32.xlu0 %v11155, 48
      %v11159 = vpop.permute.xlu0 %11158
      %v11166 = vcombine.low %v11074, %v11075
      %v11167 = vcombine.low %v11076, %v11077
      %11168 = vrot.lane.b32.xlu0 %v11166, 56
      %v11169 = vpop.permute.xlu0 %11168
      %11170 = vrot.lane.b32.xlu0 %v11167, 56
      %v11171 = vpop.permute.xlu0 %11170
      %v11178 = vcombine.low %v11078, %v11079
      %v11179 = vcombine.low %v11080, %v11081
      %11180 = vrot.lane.b32.xlu0 %v11178, 64
      %v11181 = vpop.permute.xlu0 %11180
      %11182 = vrot.lane.b32.xlu0 %v11179, 64
      %v11183 = vpop.permute.xlu0 %11182
      %v11186 = vsel %vm2285, %v11086, %v11097
      %v11187 = vsel %vm2285, %v11087, %v11099
      %v11188 = vsel %vm2351, %v11186, %v11109
      %v11189 = vsel %vm2351, %v11187, %v11111
      %v11190 = vsel %vm2417, %v11188, %v11121
      %v11191 = vsel %vm2417, %v11189, %v11123
      %v11192 = vsel %vm2483, %v11190, %v11133
      %v11193 = vsel %vm2483, %v11191, %v11135
      %v11194 = vsel %vm9187, %v11192, %v11145
      %v11195 = vsel %vm9187, %v11193, %v11147
      %v11196 = vsel %vm9196, %v11194, %v11157
      %v11197 = vsel %vm9196, %v11195, %v11159
      %v11198 = vsel %vm9205, %v11196, %v11169
      %v11199 = vsel %vm9205, %v11197, %v11171
      %v11200 = vsel %vm9214, %v11198, %v11181
      %v11201 = vsel %vm9214, %v11199, %v11183
      %v11202 = vpack.c.bf16 %v11201, %v11200
      %v11203 = vld [vmem:[%s13] sm:$0xf]
      %v11204 = vld [vmem:[%s13 + $0x4] sm:$0xf]
      %v11205 = vld [vmem:[%s13 + $0x8] sm:$0xf]
      %v11206 = vld [vmem:[%s13 + $0xc] sm:$0xf]
      %v11207 = vld [vmem:[%s13 + $0x10] sm:$0xf]
      %v11208 = vld [vmem:[%s13 + $0x14] sm:$0xf]
      %v11209 = vld [vmem:[%s13 + $0x18] sm:$0xf]
      %v11210 = vld [vmem:[%s13 + $0x1c] sm:$0xf]
      %v11211 = vld [vmem:[%s13 + $0x20] sm:$0xf]
      %v11212 = vld [vmem:[%s14] sm:$0x1]
      %v11214 = vlaneseq
      %v11215 = vshrl.u32 %v11214, 7
      %v11216 = vsub.s32 0, %v11215
      %v11217 = vrot.slane %v11212, %v11216
      %v11228 = vunpack.c.l.b16 %v11203
      %v11229 = vunpack.c.l.b16 %v11204
      %v11230 = vunpack.c.l.b16 %v11205
      %v11231 = vunpack.c.l.b16 %v11206
      %v11232 = vunpack.c.l.b16 %v11207
      %v11233 = vunpack.c.l.b16 %v11208
      %v11234 = vunpack.c.l.b16 %v11209
      %v11235 = vunpack.c.l.b16 %v11210
      %v11236 = vunpack.c.l.b16 %v11211
      %v11237 = vpack.c.b16 %v11229, %v11228
      %v11238 = vpack.c.b16 %v11231, %v11230
      %v11239 = vpack.c.b16 %v11233, %v11232
      %v11240 = vpack.c.b16 %v11235, %v11234
      %v11241 = vpack.c.b16 %v11236, %v11236
      %v11247 = vsel %vm9270, %v11202, 0
      %v11250 = vsel %vm9283, %v11241, 0
      %11252 = vmatprep.subr.bf16.mxu0 0
      %11253 = vmatpush1.bf16.msra.mxu0 %v11237
      %11254 = vmatprep.subr.bf16.mxu0 0
      %11255 = vmatpush1.bf16.msra.mxu0 %v11238
      %11256 = vmatprep.subr.bf16.mxu0 0
      %11257 = vmatpush1.bf16.msra.mxu0 %v11239
      %11258 = vmatprep.subr.bf16.mxu0 0
      %11259 = vmatpush1.bf16.msra.mxu0 %v11240
      %11260 = vmatprep.subr.bf16.mxu0 0
      %11261 = vmatpush1.bf16.msra.mxu0 %v11250
      %11262 = vmatprep.subr.bf16.mxu0 0
      %11263 = vmatpush1.bf16.msra.mxu0 0
      %11264 = vmatprep.subr.bf16.mxu0 0
      %11265 = vmatpush1.bf16.msra.mxu0 0
      %11266 = vmatprep.subr.bf16.mxu0 0
      %11267 = vmatpush1.bf16.msra.mxu0 0
      %11268 = vmatprep.subr.bf16.mxu0 0
      %11269 = vmatpush1.bf16.msra.mxu0 0
      %11270 = vmatprep.subr.bf16.mxu0 0
      %11271 = vmatpush1.bf16.msra.mxu0 0
      %11272 = vmatprep.subr.bf16.mxu0 0
      %11273 = vmatpush1.bf16.msra.mxu0 0
      %11274 = vmatprep.subr.bf16.mxu0 0
      %11275 = vmatpush1.bf16.msra.mxu0 0
      %11276 = vmatprep.subr.bf16.mxu0 0
      %11277 = vmatpush1.bf16.msra.mxu0 0
      %11278 = vmatprep.subr.bf16.mxu0 0
      %11279 = vmatpush1.bf16.msra.mxu0 0
      %11280 = vmatprep.subr.bf16.mxu0 0
      %11281 = vmatpush1.bf16.msra.mxu0 0
      %11282 = vmatprep.subr.bf16.mxu0 0
      %11283 = vmatpush1.bf16.msra.mxu0 0
      %11284 = vmatprep.mubr.bf16.mxu0 0
      %11285 = vmatmul.mubr.bf16.gmra.mrb[0].mxu0 %v11247
      %v11286 = vpop.f32.mrb[0].mxu0
      %v11287 = vadd.f32 %v11217, %v11286
      %v11288 = vpop.f32.mrb[0].mxu0
      %v11289 = vpop.f32.mrb[0].mxu0
      %v11290 = vadd.f32 %v11217, %v11289
      %v11291 = vpop.f32.mrb[0].mxu0
      %11292 = vdwg.mxu0
      %v11293 = vmax.f32 %v11287, 0.0
      %v11294 = vmax.f32 %v11290, 0.0
      %v11297 = vcombine.high %v11293, %v11293
      %v11298 = vcombine.high %v11294, %v11294
      %11301 = vst.msk [vmem:[%s11039 + $0x1] sm:$0xf] %vm11040, %v11293
      %11302 = vst.msk [vmem:[%s11039 + $0x9] sm:$0xf] %vm11040, %v11297
      %11303 = vst.msk [vmem:[%s11039 + $0x11] sm:$0xf] %vm11040, %v11294
      %11304 = vst.msk [vmem:[%s11039 + $0x19] sm:$0xf] %vm11040, %v11298
      %v11305 = vld [vmem:[#allocation4] sm:$0xf]
      %v11306 = vld [vmem:[#allocation4 + $0x8] sm:$0xf]
      %v11307 = vld [vmem:[#allocation4 + $0x10] sm:$0xf]
      %v11308 = vld [vmem:[#allocation4 + $0x18] sm:$0xf]
      %v11309 = vld [vmem:[#allocation4 + $0x1] sm:$0xf]
      %v11310 = vld [vmem:[#allocation4 + $0x9] sm:$0xf]
      %v11311 = vld [vmem:[#allocation4 + $0x11] sm:$0xf]
      %v11312 = vld [vmem:[#allocation4 + $0x19] sm:$0xf]
      %v11313 = vld [vmem:[#allocation4 + $0x2] sm:$0xf]
      %v11314 = vld [vmem:[#allocation4 + $0xa] sm:$0xf]
      %v11315 = vld [vmem:[#allocation4 + $0x12] sm:$0xf]
      %v11316 = vld [vmem:[#allocation4 + $0x1a] sm:$0xf]
      %v11317 = vld [vmem:[%s11039] sm:$0xf]
      %v11318 = vld [vmem:[%s11039 + $0x8] sm:$0xf]
      %v11319 = vld [vmem:[%s11039 + $0x10] sm:$0xf]
      %v11320 = vld [vmem:[%s11039 + $0x18] sm:$0xf]
      %v11321 = vld [vmem:[%s11039 + $0x1] sm:$0xf]
      %v11322 = vld [vmem:[%s11039 + $0x9] sm:$0xf]
      %v11323 = vld [vmem:[%s11039 + $0x11] sm:$0xf]
      %v11324 = vld [vmem:[%s11039 + $0x19] sm:$0xf]
      %v11325 = vld [vmem:[%s11039 + $0x2] sm:$0xf]
      %v11326 = vld [vmem:[%s11039 + $0xa] sm:$0xf]
      %v11327 = vld [vmem:[%s11039 + $0x12] sm:$0xf]
      %v11328 = vld [vmem:[%s11039 + $0x1a] sm:$0xf]
      %v11329 = vld [vmem:[%s11069] sm:$0xf]
      %v11330 = vld [vmem:[%s11069 + $0x8] sm:$0xf]
      %v11331 = vld [vmem:[%s11069 + $0x10] sm:$0xf]
      %v11332 = vld [vmem:[%s11069 + $0x18] sm:$0xf]
      %v11333 = vld [vmem:[%s11069 + $0x1] sm:$0xf]
      %v11334 = vld [vmem:[%s11069 + $0x9] sm:$0xf]
      %v11335 = vld [vmem:[%s11069 + $0x11] sm:$0xf]
      %v11336 = vld [vmem:[%s11069 + $0x19] sm:$0xf]
      %v11337 = vld [vmem:[%s11069 + $0x2] sm:$0xf]
      %v11338 = vld [vmem:[%s11069 + $0xa] sm:$0xf]
      %v11339 = vld [vmem:[%s11069 + $0x12] sm:$0xf]
      %v11340 = vld [vmem:[%s11069 + $0x1a] sm:$0xf]
      %v11345 = vcombine.low %v11305, %v11306
      %v11346 = vcombine.low %v11307, %v11308
      %v11353 = vcombine.low %v11309, %v11310
      %v11354 = vcombine.low %v11311, %v11312
      %11355 = vrot.lane.b32.xlu0 %v11353, 8
      %v11356 = vpop.permute.xlu0 %11355
      %11357 = vrot.lane.b32.xlu0 %v11354, 8
      %v11358 = vpop.permute.xlu0 %11357
      %v11365 = vcombine.low %v11313, %v11314
      %v11366 = vcombine.low %v11315, %v11316
      %11367 = vrot.lane.b32.xlu0 %v11365, 16
      %v11368 = vpop.permute.xlu0 %11367
      %11369 = vrot.lane.b32.xlu0 %v11366, 16
      %v11370 = vpop.permute.xlu0 %11369
      %v11377 = vcombine.low %v11317, %v11318
      %v11378 = vcombine.low %v11319, %v11320
      %11379 = vrot.lane.b32.xlu0 %v11377, 24
      %v11380 = vpop.permute.xlu0 %11379
      %11381 = vrot.lane.b32.xlu0 %v11378, 24
      %v11382 = vpop.permute.xlu0 %11381
      %v11389 = vcombine.low %v11321, %v11322
      %v11390 = vcombine.low %v11323, %v11324
      %11391 = vrot.lane.b32.xlu0 %v11389, 32
      %v11392 = vpop.permute.xlu0 %11391
      %11393 = vrot.lane.b32.xlu0 %v11390, 32
      %v11394 = vpop.permute.xlu0 %11393
      %v11401 = vcombine.low %v11325, %v11326
      %v11402 = vcombine.low %v11327, %v11328
      %11403 = vrot.lane.b32.xlu0 %v11401, 40
      %v11404 = vpop.permute.xlu0 %11403
      %11405 = vrot.lane.b32.xlu0 %v11402, 40
      %v11406 = vpop.permute.xlu0 %11405
      %v11413 = vcombine.low %v11329, %v11330
      %v11414 = vcombine.low %v11331, %v11332
      %11415 = vrot.lane.b32.xlu0 %v11413, 48
      %v11416 = vpop.permute.xlu0 %11415
      %11417 = vrot.lane.b32.xlu0 %v11414, 48
      %v11418 = vpop.permute.xlu0 %11417
      %v11425 = vcombine.low %v11333, %v11334
      %v11426 = vcombine.low %v11335, %v11336
      %11427 = vrot.lane.b32.xlu0 %v11425, 56
      %v11428 = vpop.permute.xlu0 %11427
      %11429 = vrot.lane.b32.xlu0 %v11426, 56
      %v11430 = vpop.permute.xlu0 %11429
      %v11437 = vcombine.low %v11337, %v11338
      %v11438 = vcombine.low %v11339, %v11340
      %11439 = vrot.lane.b32.xlu0 %v11437, 64
      %v11440 = vpop.permute.xlu0 %11439
      %11441 = vrot.lane.b32.xlu0 %v11438, 64
      %v11442 = vpop.permute.xlu0 %11441
      %v11445 = vsel %vm2285, %v11345, %v11356
      %v11446 = vsel %vm2285, %v11346, %v11358
      %v11447 = vsel %vm2351, %v11445, %v11368
      %v11448 = vsel %vm2351, %v11446, %v11370
      %v11449 = vsel %vm2417, %v11447, %v11380
      %v11450 = vsel %vm2417, %v11448, %v11382
      %v11451 = vsel %vm2483, %v11449, %v11392
      %v11452 = vsel %vm2483, %v11450, %v11394
      %v11453 = vsel %vm9187, %v11451, %v11404
      %v11454 = vsel %vm9187, %v11452, %v11406
      %v11455 = vsel %vm9196, %v11453, %v11416
      %v11456 = vsel %vm9196, %v11454, %v11418
      %v11457 = vsel %vm9205, %v11455, %v11428
      %v11458 = vsel %vm9205, %v11456, %v11430
      %v11459 = vsel %vm9214, %v11457, %v11440
      %v11460 = vsel %vm9214, %v11458, %v11442
      %v11461 = vpack.c.bf16 %v11460, %v11459
      %s11462 = scalar_lea.vmem %s13, 36
      %v11463 = vld [vmem:[%s11462] sm:$0xf]
      %v11464 = vld [vmem:[%s11462 + $0x4] sm:$0xf]
      %v11465 = vld [vmem:[%s11462 + $0x8] sm:$0xf]
      %v11466 = vld [vmem:[%s11462 + $0xc] sm:$0xf]
      %v11467 = vld [vmem:[%s11462 + $0x10] sm:$0xf]
      %v11468 = vld [vmem:[%s11462 + $0x14] sm:$0xf]
      %v11469 = vld [vmem:[%s11462 + $0x18] sm:$0xf]
      %v11470 = vld [vmem:[%s11462 + $0x1c] sm:$0xf]
      %v11471 = vld [vmem:[%s11462 + $0x20] sm:$0xf]
      %s11472 = scalar_lea.vmem %s14, 1
      %v11473 = vld [vmem:[%s11472] sm:$0x1]
      %v11475 = vlaneseq
      %v11476 = vshrl.u32 %v11475, 7
      %v11477 = vsub.s32 0, %v11476
      %v11478 = vrot.slane %v11473, %v11477
      %v11489 = vunpack.c.l.b16 %v11463
      %v11490 = vunpack.c.l.b16 %v11464
      %v11491 = vunpack.c.l.b16 %v11465
      %v11492 = vunpack.c.l.b16 %v11466
      %v11493 = vunpack.c.l.b16 %v11467
      %v11494 = vunpack.c.l.b16 %v11468
      %v11495 = vunpack.c.l.b16 %v11469
      %v11496 = vunpack.c.l.b16 %v11470
      %v11497 = vunpack.c.l.b16 %v11471
      %v11498 = vpack.c.b16 %v11490, %v11489
      %v11499 = vpack.c.b16 %v11492, %v11491
      %v11500 = vpack.c.b16 %v11494, %v11493
      %v11501 = vpack.c.b16 %v11496, %v11495
      %v11502 = vpack.c.b16 %v11497, %v11497
      %v11508 = vsel %vm9270, %v11461, 0
      %v11511 = vsel %vm9283, %v11502, 0
      %11513 = vmatprep.subr.bf16.mxu0 0
      %11514 = vmatpush1.bf16.msra.mxu0 %v11498
      %11515 = vmatprep.subr.bf16.mxu0 0
      %11516 = vmatpush1.bf16.msra.mxu0 %v11499
      %11517 = vmatprep.subr.bf16.mxu0 0
      %11518 = vmatpush1.bf16.msra.mxu0 %v11500
      %11519 = vmatprep.subr.bf16.mxu0 0
      %11520 = vmatpush1.bf16.msra.mxu0 %v11501
      %11521 = vmatprep.subr.bf16.mxu0 0
      %11522 = vmatpush1.bf16.msra.mxu0 %v11511
      %11523 = vmatprep.subr.bf16.mxu0 0
      %11524 = vmatpush1.bf16.msra.mxu0 0
      %11525 = vmatprep.subr.bf16.mxu0 0
      %11526 = vmatpush1.bf16.msra.mxu0 0
      %11527 = vmatprep.subr.bf16.mxu0 0
      %11528 = vmatpush1.bf16.msra.mxu0 0
      %11529 = vmatprep.subr.bf16.mxu0 0
      %11530 = vmatpush1.bf16.msra.mxu0 0
      %11531 = vmatprep.subr.bf16.mxu0 0
      %11532 = vmatpush1.bf16.msra.mxu0 0
      %11533 = vmatprep.subr.bf16.mxu0 0
      %11534 = vmatpush1.bf16.msra.mxu0 0
      %11535 = vmatprep.subr.bf16.mxu0 0
      %11536 = vmatpush1.bf16.msra.mxu0 0
      %11537 = vmatprep.subr.bf16.mxu0 0
      %11538 = vmatpush1.bf16.msra.mxu0 0
      %11539 = vmatprep.subr.bf16.mxu0 0
      %11540 = vmatpush1.bf16.msra.mxu0 0
      %11541 = vmatprep.subr.bf16.mxu0 0
      %11542 = vmatpush1.bf16.msra.mxu0 0
      %11543 = vmatprep.subr.bf16.mxu0 0
      %11544 = vmatpush1.bf16.msra.mxu0 0
      %11545 = vmatprep.mubr.bf16.mxu0 0
      %11546 = vmatmul.mubr.bf16.gmra.mrb[0].mxu0 %v11508
      %v11547 = vpop.f32.mrb[0].mxu0
      %v11548 = vadd.f32 %v11478, %v11547
      %v11549 = vpop.f32.mrb[0].mxu0
      %v11550 = vpop.f32.mrb[0].mxu0
      %v11551 = vadd.f32 %v11478, %v11550
      %v11552 = vpop.f32.mrb[0].mxu0
      %11553 = vdwg.mxu0
      %v11554 = vmax.f32 %v11548, 0.0
      %v11555 = vmax.f32 %v11551, 0.0
      %v11558 = vcombine.high %v11554, %v11554
      %v11559 = vcombine.high %v11555, %v11555
      %11562 = vst.msk [vmem:[%s11039 + $0x1] sm:$0xf] %vm11040, %v11554
      %11563 = vst.msk [vmem:[%s11039 + $0x9] sm:$0xf] %vm11040, %v11558
      %11564 = vst.msk [vmem:[%s11039 + $0x11] sm:$0xf] %vm11040, %v11555
      %11565 = vst.msk [vmem:[%s11039 + $0x19] sm:$0xf] %vm11040, %v11559
      %v11566 = vld [vmem:[#allocation4] sm:$0xf]
      %v11567 = vld [vmem:[#allocation4 + $0x8] sm:$0xf]
      %v11568 = vld [vmem:[#allocation4 + $0x10] sm:$0xf]
      %v11569 = vld [vmem:[#allocation4 + $0x18] sm:$0xf]
      %v11570 = vld [vmem:[#allocation4 + $0x1] sm:$0xf]
      %v11571 = vld [vmem:[#allocation4 + $0x9] sm:$0xf]
      %v11572 = vld [vmem:[#allocation4 + $0x11] sm:$0xf]
      %v11573 = vld [vmem:[#allocation4 + $0x19] sm:$0xf]
      %v11574 = vld [vmem:[#allocation4 + $0x2] sm:$0xf]
      %v11575 = vld [vmem:[#allocation4 + $0xa] sm:$0xf]
      %v11576 = vld [vmem:[#allocation4 + $0x12] sm:$0xf]
      %v11577 = vld [vmem:[#allocation4 + $0x1a] sm:$0xf]
      %v11578 = vld [vmem:[%s11039] sm:$0xf]
      %v11579 = vld [vmem:[%s11039 + $0x8] sm:$0xf]
      %v11580 = vld [vmem:[%s11039 + $0x10] sm:$0xf]
      %v11581 = vld [vmem:[%s11039 + $0x18] sm:$0xf]
      %v11582 = vld [vmem:[%s11039 + $0x1] sm:$0xf]
      %v11583 = vld [vmem:[%s11039 + $0x9] sm:$0xf]
      %v11584 = vld [vmem:[%s11039 + $0x11] sm:$0xf]
      %v11585 = vld [vmem:[%s11039 + $0x19] sm:$0xf]
      %v11586 = vld [vmem:[%s11039 + $0x2] sm:$0xf]
      %v11587 = vld [vmem:[%s11039 + $0xa] sm:$0xf]
      %v11588 = vld [vmem:[%s11039 + $0x12] sm:$0xf]
      %v11589 = vld [vmem:[%s11039 + $0x1a] sm:$0xf]
      %v11590 = vld [vmem:[%s11069] sm:$0xf]
      %v11591 = vld [vmem:[%s11069 + $0x8] sm:$0xf]
      %v11592 = vld [vmem:[%s11069 + $0x10] sm:$0xf]
      %v11593 = vld [vmem:[%s11069 + $0x18] sm:$0xf]
      %v11594 = vld [vmem:[%s11069 + $0x1] sm:$0xf]
      %v11595 = vld [vmem:[%s11069 + $0x9] sm:$0xf]
      %v11596 = vld [vmem:[%s11069 + $0x11] sm:$0xf]
      %v11597 = vld [vmem:[%s11069 + $0x19] sm:$0xf]
      %v11598 = vld [vmem:[%s11069 + $0x2] sm:$0xf]
      %v11599 = vld [vmem:[%s11069 + $0xa] sm:$0xf]
      %v11600 = vld [vmem:[%s11069 + $0x12] sm:$0xf]
      %v11601 = vld [vmem:[%s11069 + $0x1a] sm:$0xf]
      %v11606 = vcombine.low %v11566, %v11567
      %v11607 = vcombine.low %v11568, %v11569
      %v11614 = vcombine.low %v11570, %v11571
      %v11615 = vcombine.low %v11572, %v11573
      %11616 = vrot.lane.b32.xlu0 %v11614, 8
      %v11617 = vpop.permute.xlu0 %11616
      %11618 = vrot.lane.b32.xlu0 %v11615, 8
      %v11619 = vpop.permute.xlu0 %11618
      %v11626 = vcombine.low %v11574, %v11575
      %v11627 = vcombine.low %v11576, %v11577
      %11628 = vrot.lane.b32.xlu0 %v11626, 16
      %v11629 = vpop.permute.xlu0 %11628
      %11630 = vrot.lane.b32.xlu0 %v11627, 16
      %v11631 = vpop.permute.xlu0 %11630
      %v11638 = vcombine.low %v11578, %v11579
      %v11639 = vcombine.low %v11580, %v11581
      %11640 = vrot.lane.b32.xlu0 %v11638, 24
      %v11641 = vpop.permute.xlu0 %11640
      %11642 = vrot.lane.b32.xlu0 %v11639, 24
      %v11643 = vpop.permute.xlu0 %11642
      %v11650 = vcombine.low %v11582, %v11583
      %v11651 = vcombine.low %v11584, %v11585
      %11652 = vrot.lane.b32.xlu0 %v11650, 32
      %v11653 = vpop.permute.xlu0 %11652
      %11654 = vrot.lane.b32.xlu0 %v11651, 32
      %v11655 = vpop.permute.xlu0 %11654
      %v11662 = vcombine.low %v11586, %v11587
      %v11663 = vcombine.low %v11588, %v11589
      %11664 = vrot.lane.b32.xlu0 %v11662, 40
      %v11665 = vpop.permute.xlu0 %11664
      %11666 = vrot.lane.b32.xlu0 %v11663, 40
      %v11667 = vpop.permute.xlu0 %11666
      %v11674 = vcombine.low %v11590, %v11591
      %v11675 = vcombine.low %v11592, %v11593
      %11676 = vrot.lane.b32.xlu0 %v11674, 48
      %v11677 = vpop.permute.xlu0 %11676
      %11678 = vrot.lane.b32.xlu0 %v11675, 48
      %v11679 = vpop.permute.xlu0 %11678
      %v11686 = vcombine.low %v11594, %v11595
      %v11687 = vcombine.low %v11596, %v11597
      %11688 = vrot.lane.b32.xlu0 %v11686, 56
      %v11689 = vpop.permute.xlu0 %11688
      %11690 = vrot.lane.b32.xlu0 %v11687, 56
      %v11691 = vpop.permute.xlu0 %11690
      %v11698 = vcombine.low %v11598, %v11599
      %v11699 = vcombine.low %v11600, %v11601
      %11700 = vrot.lane.b32.xlu0 %v11698, 64
      %v11701 = vpop.permute.xlu0 %11700
      %11702 = vrot.lane.b32.xlu0 %v11699, 64
      %v11703 = vpop.permute.xlu0 %11702
      %v11706 = vsel %vm2285, %v11606, %v11617
      %v11707 = vsel %vm2285, %v11607, %v11619
      %v11708 = vsel %vm2351, %v11706, %v11629
      %v11709 = vsel %vm2351, %v11707, %v11631
      %v11710 = vsel %vm2417, %v11708, %v11641
      %v11711 = vsel %vm2417, %v11709, %v11643
      %v11712 = vsel %vm2483, %v11710, %v11653
      %v11713 = vsel %vm2483, %v11711, %v11655
      %v11714 = vsel %vm9187, %v11712, %v11665
      %v11715 = vsel %vm9187, %v11713, %v11667
      %v11716 = vsel %vm9196, %v11714, %v11677
      %v11717 = vsel %vm9196, %v11715, %v11679
      %v11718 = vsel %vm9205, %v11716, %v11689
      %v11719 = vsel %vm9205, %v11717, %v11691
      %v11720 = vsel %vm9214, %v11718, %v11701
      %v11721 = vsel %vm9214, %v11719, %v11703
      %v11722 = vpack.c.bf16 %v11721, %v11720
      %s11723 = scalar_lea.vmem %s13, 72
      %v11724 = vld [vmem:[%s11723] sm:$0xf]
      %v11725 = vld [vmem:[%s11723 + $0x4] sm:$0xf]
      %v11726 = vld [vmem:[%s11723 + $0x8] sm:$0xf]
      %v11727 = vld [vmem:[%s11723 + $0xc] sm:$0xf]
      %v11728 = vld [vmem:[%s11723 + $0x10] sm:$0xf]
      %v11729 = vld [vmem:[%s11723 + $0x14] sm:$0xf]
      %v11730 = vld [vmem:[%s11723 + $0x18] sm:$0xf]
      %v11731 = vld [vmem:[%s11723 + $0x1c] sm:$0xf]
      %v11732 = vld [vmem:[%s11723 + $0x20] sm:$0xf]
      %s11733 = scalar_lea.vmem %s14, 2
      %v11734 = vld [vmem:[%s11733] sm:$0x1]
      %v11736 = vlaneseq
      %v11737 = vshrl.u32 %v11736, 7
      %v11738 = vsub.s32 0, %v11737
      %v11739 = vrot.slane %v11734, %v11738
      %v11750 = vunpack.c.l.b16 %v11724
      %v11751 = vunpack.c.l.b16 %v11725
      %v11752 = vunpack.c.l.b16 %v11726
      %v11753 = vunpack.c.l.b16 %v11727
      %v11754 = vunpack.c.l.b16 %v11728
      %v11755 = vunpack.c.l.b16 %v11729
      %v11756 = vunpack.c.l.b16 %v11730
      %v11757 = vunpack.c.l.b16 %v11731
      %v11758 = vunpack.c.l.b16 %v11732
      %v11759 = vpack.c.b16 %v11751, %v11750
      %v11760 = vpack.c.b16 %v11753, %v11752
      %v11761 = vpack.c.b16 %v11755, %v11754
      %v11762 = vpack.c.b16 %v11757, %v11756
      %v11763 = vpack.c.b16 %v11758, %v11758
      %v11769 = vsel %vm9270, %v11722, 0
      %v11772 = vsel %vm9283, %v11763, 0
      %11774 = vmatprep.subr.bf16.mxu0 0
      %11775 = vmatpush1.bf16.msra.mxu0 %v11759
      %11776 = vmatprep.subr.bf16.mxu0 0
      %11777 = vmatpush1.bf16.msra.mxu0 %v11760
      %11778 = vmatprep.subr.bf16.mxu0 0
      %11779 = vmatpush1.bf16.msra.mxu0 %v11761
      %11780 = vmatprep.subr.bf16.mxu0 0
      %11781 = vmatpush1.bf16.msra.mxu0 %v11762
      %11782 = vmatprep.subr.bf16.mxu0 0
      %11783 = vmatpush1.bf16.msra.mxu0 %v11772
      %11784 = vmatprep.subr.bf16.mxu0 0
      %11785 = vmatpush1.bf16.msra.mxu0 0
      %11786 = vmatprep.subr.bf16.mxu0 0
      %11787 = vmatpush1.bf16.msra.mxu0 0
      %11788 = vmatprep.subr.bf16.mxu0 0
      %11789 = vmatpush1.bf16.msra.mxu0 0
      %11790 = vmatprep.subr.bf16.mxu0 0
      %11791 = vmatpush1.bf16.msra.mxu0 0
      %11792 = vmatprep.subr.bf16.mxu0 0
      %11793 = vmatpush1.bf16.msra.mxu0 0
      %11794 = vmatprep.subr.bf16.mxu0 0
      %11795 = vmatpush1.bf16.msra.mxu0 0
      %11796 = vmatprep.subr.bf16.mxu0 0
      %11797 = vmatpush1.bf16.msra.mxu0 0
      %11798 = vmatprep.subr.bf16.mxu0 0
      %11799 = vmatpush1.bf16.msra.mxu0 0
      %11800 = vmatprep.subr.bf16.mxu0 0
      %11801 = vmatpush1.bf16.msra.mxu0 0
      %11802 = vmatprep.subr.bf16.mxu0 0
      %11803 = vmatpush1.bf16.msra.mxu0 0
      %11804 = vmatprep.subr.bf16.mxu0 0
      %11805 = vmatpush1.bf16.msra.mxu0 0
      %11806 = vmatprep.mubr.bf16.mxu0 0
      %11807 = vmatmul.mubr.bf16.gmra.mrb[0].mxu0 %v11769
      %v11808 = vpop.f32.mrb[0].mxu0
      %v11809 = vadd.f32 %v11739, %v11808
      %v11810 = vpop.f32.mrb[0].mxu0
      %v11811 = vpop.f32.mrb[0].mxu0
      %v11812 = vadd.f32 %v11739, %v11811
      %v11813 = vpop.f32.mrb[0].mxu0
      %11814 = vdwg.mxu0
      %v11815 = vmax.f32 %v11809, 0.0
      %v11816 = vmax.f32 %v11812, 0.0
      %v11817 = vld [vmem:[#allocation8] sm:$0x1]
      %v11819 = vlaneseq
      %v11820 = vshrl.u32 %v11819, 7
      %v11821 = vsub.s32 0, %v11820
      %v11822 = vrot.slane %v11817, %v11821
      %11823 = vset.pattern.permute.xlu0 0
      %11824 = vperm.xlu0 %11823, %v11822
      %v11825 = vpop.permute.xlu0 %11824
      %v11827 = vmul.f32 %v11825, %v11020
      %v11828 = vmul.f32 %v11825, %v11023
      %v11829 = vadd.f32 %v11815, %v11827
      %v11830 = vadd.f32 %v11816, %v11828
      %v11833 = vcombine.high %v11829, %v11829
      %v11835 = vunpack.c.l.s4 1983009808
      %v11836 = vunpack.c.0.s8 %v11835
      %v11837 = vlaneseq
      %v11838 = vshrl.u32 %v11837, 7
      %v11839 = vsub.s32 %v11836, %v11838
      %v11840 = vrot.slane %v11829, %v11839
      %v11842 = vunpack.c.l.s4 1983009808
      %v11843 = vunpack.c.0.s8 %v11842
      %v11844 = vlaneseq
      %v11845 = vshrl.u32 %v11844, 7
      %v11846 = vsub.s32 %v11843, %v11845
      %v11847 = vrot.slane %v11833, %v11846
      %v11848 = vcombine.high %v11840, %v11840
      %v11849 = vcombine.high %v11847, %v11847
      %v11850 = vcombine.high %v11830, %v11830
      %v11852 = vunpack.c.l.s4 1983009808
      %v11853 = vunpack.c.0.s8 %v11852
      %v11854 = vlaneseq
      %v11855 = vshrl.u32 %v11854, 7
      %v11856 = vsub.s32 %v11853, %v11855
      %v11857 = vrot.slane %v11830, %v11856
      %v11859 = vunpack.c.l.s4 1983009808
      %v11860 = vunpack.c.0.s8 %v11859
      %v11861 = vlaneseq
      %v11862 = vshrl.u32 %v11861, 7
      %v11863 = vsub.s32 %v11860, %v11862
      %v11864 = vrot.slane %v11850, %v11863
      %v11865 = vcombine.high %v11857, %v11857
      %v11866 = vcombine.high %v11864, %v11864
      %v11875 = vsel %vm8797, %v11840, -inf
      %v11876 = vrot.slane %v11875, 4
      %v11877 = vmax.f32 %v11875, %v11876
      %v11878 = vrot.slane %v11877, 2
      %v11879 = vmax.f32 %v11877, %v11878
      %v11880 = vrot.slane %v11879, 1
      %v11881 = vmax.f32 %v11879, %v11880
      %v11882 = vsel %vm8797, %v11848, -inf
      %v11883 = vrot.slane %v11882, 4
      %v11884 = vmax.f32 %v11882, %v11883
      %v11885 = vrot.slane %v11884, 2
      %v11886 = vmax.f32 %v11884, %v11885
      %v11887 = vrot.slane %v11886, 1
      %v11888 = vmax.f32 %v11886, %v11887
      %v11889 = vsel %vm8797, %v11847, -inf
      %v11890 = vrot.slane %v11889, 4
      %v11891 = vmax.f32 %v11889, %v11890
      %v11892 = vrot.slane %v11891, 2
      %v11893 = vmax.f32 %v11891, %v11892
      %v11894 = vrot.slane %v11893, 1
      %v11895 = vmax.f32 %v11893, %v11894
      %v11896 = vsel %vm8797, %v11849, -inf
      %v11897 = vrot.slane %v11896, 4
      %v11898 = vmax.f32 %v11896, %v11897
      %v11899 = vrot.slane %v11898, 2
      %v11900 = vmax.f32 %v11898, %v11899
      %v11901 = vrot.slane %v11900, 1
      %v11902 = vmax.f32 %v11900, %v11901
      %v11903 = vsel %vm8797, %v11857, -inf
      %v11904 = vrot.slane %v11903, 4
      %v11905 = vmax.f32 %v11903, %v11904
      %v11906 = vrot.slane %v11905, 2
      %v11907 = vmax.f32 %v11905, %v11906
      %v11908 = vrot.slane %v11907, 1
      %v11909 = vmax.f32 %v11907, %v11908
      %v11910 = vsel %vm8797, %v11865, -inf
      %v11911 = vrot.slane %v11910, 4
      %v11912 = vmax.f32 %v11910, %v11911
      %v11913 = vrot.slane %v11912, 2
      %v11914 = vmax.f32 %v11912, %v11913
      %v11915 = vrot.slane %v11914, 1
      %v11916 = vmax.f32 %v11914, %v11915
      %v11917 = vsel %vm8797, %v11864, -inf
      %v11918 = vrot.slane %v11917, 4
      %v11919 = vmax.f32 %v11917, %v11918
      %v11920 = vrot.slane %v11919, 2
      %v11921 = vmax.f32 %v11919, %v11920
      %v11922 = vrot.slane %v11921, 1
      %v11923 = vmax.f32 %v11921, %v11922
      %v11924 = vsel %vm8797, %v11866, -inf
      %v11925 = vrot.slane %v11924, 4
      %v11926 = vmax.f32 %v11924, %v11925
      %v11927 = vrot.slane %v11926, 2
      %v11928 = vmax.f32 %v11926, %v11927
      %v11929 = vrot.slane %v11928, 1
      %v11930 = vmax.f32 %v11928, %v11929
      %v11931 = vsel %vm2285, %v11881, -inf
      %v11932 = vsel %vm2285, %v11895, -inf
      %v11933 = vmax.f32 %v11931, %v11932
      %v11934 = vsel %vm2285, %v11888, -inf
      %v11935 = vsel %vm2285, %v11902, -inf
      %v11936 = vmax.f32 %v11934, %v11935
      %v11937 = vsel %vm2285, %v11909, -inf
      %v11938 = vsel %vm2285, %v11923, -inf
      %v11939 = vmax.f32 %v11937, %v11938
      %v11940 = vsel %vm2285, %v11916, -inf
      %v11941 = vsel %vm2285, %v11930, -inf
      %v11942 = vmax.f32 %v11940, %v11941
      %v11947 = vsel %vm8649, %v11936, %v11933
      %v11948 = vsel %vm8651, %v11939, %v11947
      %v11949 = vsel %vm8653, %v11942, %v11948
      %11951 = vst.msk [vmem:[#allocation5] sm:$0xf] %vm11040, %v11949
      %v11952 = vld [vmem:[#allocation5] sm:$0x1]
      %v11953 = vld [vmem:[#allocation5 + $0x1] sm:$0x1]
      %v11954 = vld [vmem:[#allocation5 + $0x2] sm:$0x1]
      %v11955 = vld [vmem:[#allocation5 + $0x3] sm:$0x1]
      %11957 = vrot.lane.b32.xlu0 %v11953, 8
      %v11958 = vpop.permute.xlu0 %11957
      %11961 = vrot.lane.b32.xlu0 %v11954, 16
      %v11962 = vpop.permute.xlu0 %11961
      %11965 = vrot.lane.b32.xlu0 %v11955, 24
      %v11966 = vpop.permute.xlu0 %11965
      %v11968 = vsel %vm2285, %v11952, %v11958
      %v11969 = vsel %vm2351, %v11968, %v11962
      %v11970 = vsel %vm2417, %v11969, %v11966
      %v11971 = vpack.c.bf16 %v11970, %v11970
      %v11972 = vld [vmem:[%s16] sm:$0xf]
      %v11973 = vld [vmem:[%s16 + $0x4] sm:$0xf]
      %v11974 = vld [vmem:[%s16 + $0x8] sm:$0xf]
      %v11975 = vld [vmem:[%s16 + $0xc] sm:$0xf]
      %v11976 = vld [vmem:[%s17] sm:$0x1]
      %v11981 = vunpack.c.l.b16 %v11972
      %v11982 = vunpack.c.l.b16 %v11973
      %v11983 = vunpack.c.l.b16 %v11974
      %v11984 = vunpack.c.l.b16 %v11975
      %v11985 = vpack.c.b16 %v11982, %v11981
      %v11986 = vpack.c.b16 %v11984, %v11983
      %v11990 = vsel %vm2483, %v11971, 0
      %11992 = vmatprep.subr.bf16.mxu0 0
      %11993 = vmatpush1.bf16.msra.mxu0 %v11985
      %11994 = vmatprep.subr.bf16.mxu0 0
      %11995 = vmatpush1.bf16.msra.mxu0 %v11986
      %11996 = vmatprep.subr.bf16.mxu0 0
      %11997 = vmatpush1.bf16.msra.mxu0 0
      %11998 = vmatprep.subr.bf16.mxu0 0
      %11999 = vmatpush1.bf16.msra.mxu0 0
      %12000 = vmatprep.subr.bf16.mxu0 0
      %12001 = vmatpush1.bf16.msra.mxu0 0
      %12002 = vmatprep.subr.bf16.mxu0 0
      %12003 = vmatpush1.bf16.msra.mxu0 0
      %12004 = vmatprep.subr.bf16.mxu0 0
      %12005 = vmatpush1.bf16.msra.mxu0 0
      %12006 = vmatprep.subr.bf16.mxu0 0
      %12007 = vmatpush1.bf16.msra.mxu0 0
      %12008 = vmatprep.subr.bf16.mxu0 0
      %12009 = vmatpush1.bf16.msra.mxu0 0
      %12010 = vmatprep.subr.bf16.mxu0 0
      %12011 = vmatpush1.bf16.msra.mxu0 0
      %12012 = vmatprep.subr.bf16.mxu0 0
      %12013 = vmatpush1.bf16.msra.mxu0 0
      %12014 = vmatprep.subr.bf16.mxu0 0
      %12015 = vmatpush1.bf16.msra.mxu0 0
      %12016 = vmatprep.subr.bf16.mxu0 0
      %12017 = vmatpush1.bf16.msra.mxu0 0
      %12018 = vmatprep.subr.bf16.mxu0 0
      %12019 = vmatpush1.bf16.msra.mxu0 0
      %12020 = vmatprep.subr.bf16.mxu0 0
      %12021 = vmatpush1.bf16.msra.mxu0 0
      %12022 = vmatprep.subr.bf16.mxu0 0
      %12023 = vmatpush1.bf16.msra.mxu0 0
      %12024 = vmatprep.mubr.bf16.mxu0 0
      %12025 = vmatmul.mubr.bf16.gmra.mrb[0].mxu0 %v11990
      %v12026 = vpop.f32.mrb[0].mxu0
      %v12027 = vadd.f32 %v11976, %v12026
      %v12028 = vpop.f32.mrb[0].mxu0
      %v12029 = vpop.f32.mrb[0].mxu0
      %v12030 = vpop.f32.mrb[0].mxu0
      %12031 = vdwg.mxu0
      %vm12032 = vcmask 122880
      %12033 = vst.msk [vmem:[%s577] sm:$0x1] %vm12032, %v12027
      %p12034 = scmp.lt.s32.totalorder %s35, 1
      %s12035 = scalar_select %p12034, %s35, 1
      %s12036 = scalar_lea.vmem %s18, %s12035
      // Predicated region
      $region93: #{encoder_forward.1} parent=91 // pred_check
        %p12037 = pneg %p436
      $region94: #{encoder_forward.1} parent=91 // pred_check_branch
        %12039 = sbr.rel (%p12037) target = $region96
      $region95: #{encoder_forward.1} parent=91 // pred_region
        _
      $region96: #{encoder_forward.1} parent=91 // pred_fallthru
        _
    $region92: #{encoder_forward.1} parent=5 // pred_fallthru
      _
    %p12040 = scmp.le.s32.totalorder 2, %s30
    // Predicated region
    $region97: #{encoder_forward.1} parent=5 // pred_check
      %p12041 = pneg %p12040
    $region98: #{encoder_forward.1} parent=5 // pred_check_branch
      %12043 = sbr.rel (%p12041) target = $region100
    $region99: #{encoder_forward.1} parent=5 // pred_region
      %s12044 = ssub.s32 %s30, 2
      // Predicated region
      $region101: #{encoder_forward.1} parent=99 // pred_check
        %p12045 = pneg %p442
      $region102: #{encoder_forward.1} parent=99 // pred_check_branch
        %12047 = sbr.rel (%p12045) target = $region104
      $region103: #{encoder_forward.1} parent=99 // pred_region
        %p12048 = scmp.lt.s32.totalorder %s36, 1
        %s12049 = scalar_select %p12048, %s36, 1
        %s12050 = scalar_lea.vmem %s18, %s12049
      $region104: #{encoder_forward.1} parent=99 // pred_fallthru
        _
    $region100: #{encoder_forward.1} parent=5 // pred_fallthru
      _
  $region6: #{encoder_forward.1} parent=0 // loop_footer
    %s34 = sadd.s32 1, %s30
  $region7: #{encoder_forward.1} parent=0 // loop_footer_branch
    %29 = sbr.rel target = $region3
  $region8: #{encoder_forward.1} parent=0 // loop_exit
    _

</llo_original>
